<compile_context>
chip_gen: v7x
topology: tpu7x:2x2x1
jax: 0.10.0
libtpu: 0.0.40
codegen_flags: <defaults>
</compile_context>

<pallas_src>
import math
import numpy as np
import jax
import jax.numpy as jnp
from jax.experimental import pallas as pl
from jax.experimental.pallas import tpu as pltpu

# ----------------------------- model hyper-params -----------------------------
MAX_L = 1
C = 32                     # num_channels
ATOMTYPES = 4
RCUTOFF = 3.0
NUM_BESSEL = 8
NUM_POLY = 6
HIDDEN = 64
INTERACTIONS = 2
PREFACTOR = math.sqrt(2.0 / RCUTOFF)
Y0 = 1.0 / (2.0 * math.sqrt(math.pi))      # l=0 spherical harmonic ('integral' norm)
Y1 = math.sqrt(3.0 / (4.0 * math.pi))      # l=1 spherical harmonic coefficient
INV_SQRT3 = 1.0 / math.sqrt(3.0)
INV_SQRT2 = 1.0 / math.sqrt(2.0)
F32 = jnp.float32


def _mm(a, b):
    return jnp.dot(a, b, preferred_element_type=jnp.float32)


# --------------------------- in-kernel helper blocks ---------------------------
def _edge_basis(geom, bw):
    """Bessel basis * poly cutoff and l=0/1 spherical harmonics, all in VMEM."""
    d = geom[:, 0:1]                       # (E, 1), self-edges excluded so d > 0
    inv_d = 1.0 / d
    ux = geom[:, 1:2] * inv_d              # unit vector components
    uy = geom[:, 2:3] * inv_d
    uz = geom[:, 3:4] * inv_d
    # Faithful to the torch module: the polynomial cutoff and the (< rcutoff) mask are
    # applied to bessel_out (not to the distance), and the result is poly * mask.
    bessel = PREFACTOR * jnp.sin(d * bw) * inv_d          # (E, NUM_BESSEL)
    r = bessel * (1.0 / RCUTOFF)
    p = float(NUM_POLY)
    c0 = (p + 1.0) * (p + 2.0) / 2.0
    c1 = p * (p + 2.0)
    c2 = p * (p + 1.0) / 2.0
    r2 = r * r
    r6 = r2 * r2 * r2
    poly = 1.0 - c0 * r6 + c1 * r6 * r - c2 * r6 * r2
    edge_feats = poly * (bessel < RCUTOFF).astype(F32)
    return edge_feats, ux, uy, uz


def _mlp4(x, w0, w1, w2, w3):
    """e3nn nn.FullyConnectedNet: 3 SiLU hidden layers + linear out, fused (MXU+VPU)."""
    h = _mm(x, w0)
    h = h * jax.nn.sigmoid(h)
    h = _mm(h, w1)
    h = h * jax.nn.sigmoid(h)
    h = _mm(h, w2)
    h = h * jax.nn.sigmoid(h)
    return _mm(h, w3)


def _symcon(s, vx, vy, vz, w):
    # Element-dependent symmetric contraction, correlation = 3, max_l = 1.
    # TODO(synk): MACE SymmetricContraction U-matrix (CG) coefficients are not available
    #             without e3nn/mace; a hand-derived correlation-3 equivariant polynomial
    #             with per-(element, channel) weights is used instead.
    vv = vx * vx + vy * vy + vz * vz
    s2 = s * s
    w1s, w2sa, w2sb = w[:, 0 * C:1 * C], w[:, 1 * C:2 * C], w[:, 2 * C:3 * C]
    w3sa, w3sb = w[:, 3 * C:4 * C], w[:, 4 * C:5 * C]
    w1v, w2v = w[:, 5 * C:6 * C], w[:, 6 * C:7 * C]
    w3va, w3vb = w[:, 7 * C:8 * C], w[:, 8 * C:9 * C]
    out_s = w1s * s + w2sa * s2 + w2sb * vv + w3sa * s2 * s + w3sb * s * vv
    coef = w1v + w2v * s + w3va * s2 + w3vb * vv
    return out_s, coef * vx, coef * vy, coef * vz


def _node_tail(s, vx, vy, vz, onehot, sym_w, lp0, lp1, o_ref):
    """symmetric_contraction -> linearproduct, output written with slice stores."""
    node_w = _mm(onehot, sym_w)            # per-element weights (N, 9C)
    s, vx, vy, vz = _symcon(s, vx, vy, vz, node_w)
    o_ref[:, 0 * C:1 * C] = _mm(s, lp0)
    o_ref[:, 1 * C:2 * C] = _mm(vx, lp1)
    o_ref[:, 2 * C:3 * C] = _mm(vy, lp1)
    o_ref[:, 3 * C:4 * C] = _mm(vz, lp1)


# ------------------------------- Pallas kernels -------------------------------
def _stage0_kernel(onehot_ref, geom_ref, bw_ref, gat_ref, sct_ref,
                   chem_ref, w_ref,
                   m0_ref, m1_ref, m2_ref, m3_ref,
                   li0_ref, li1_ref, sym_ref, lp0_ref, lp1_ref,
                   o_ref):
    """chemicalEmbedding -> W -> edge basis -> MLP -> conv_tp (first) -> scatter_sum
       -> linearinteraction -> symmetric_contraction -> linearproduct, all fused."""
    onehot = onehot_ref[...]
    nf = _mm(_mm(onehot, chem_ref[...]), w_ref[...])                    # (N, C) scalars
    edge_feats, ux, uy, uz = _edge_basis(geom_ref[...], bw_ref[...])
    tpw = _mlp4(edge_feats, m0_ref[...], m1_ref[...], m2_ref[...], m3_ref[...])  # (E, 2C)
    w0 = tpw[:, 0 * C:1 * C]
    w1 = tpw[:, 1 * C:2 * C]
    # gather node feats to edges via exact one-hot matmul (no XLA gather)
    xg = _mm(gat_ref[...], nf)                                          # (E, C)
    # conv_tp: Cx0e x (1x0e + 1x1e) -> Cx0e + Cx1e, 'uvu', external weights.
    # TODO(synk): e3nn TensorProduct path-normalization constants are not reproduced.
    s_mji = w0 * xg * Y0
    vbase = w1 * xg
    # scatter_sum via one-hot matmul, fused with linearinteraction (middle -> target)
    S = sct_ref[...]
    li0 = li0_ref[...]
    li1 = li1_ref[...]
    s = _mm(_mm(S, s_mji), li0)
    vx = _mm(_mm(S, vbase * (Y1 * ux)), li1)
    vy = _mm(_mm(S, vbase * (Y1 * uy)), li1)
    vz = _mm(_mm(S, vbase * (Y1 * uz)), li1)
    _node_tail(s, vx, vy, vz, onehot, sym_ref[...], lp0_ref[...], lp1_ref[...], o_ref)


def _block_kernel(x_ref, onehot_ref, geom_ref, bw_ref, gat_ref, sct_ref,
                  lu0_ref, lu1_ref,
                  m0_ref, m1_ref, m2_ref, m3_ref,
                  li0_ref, li1_ref, sym_ref, lp0_ref, lp1_ref,
                  o_ref):
    """InteractionBlock: linear_up -> edge basis -> MLP -> conv_tp -> scatter_sum
       -> linear -> symmetric_contraction -> linearproduct, all fused."""
    E = geom_ref.shape[0]
    x = x_ref[...]                                                      # (N, 4C) SoA
    # linear_up (o3.Linear target -> target): per-l channel mixing, component planes
    s = _mm(x[:, 0 * C:1 * C], lu0_ref[...])
    vx = _mm(x[:, 1 * C:2 * C], lu1_ref[...])
    vy = _mm(x[:, 2 * C:3 * C], lu1_ref[...])
    vz = _mm(x[:, 3 * C:4 * C], lu1_ref[...])
    edge_feats, ux, uy, uz = _edge_basis(geom_ref[...], bw_ref[...])
    tpw = _mlp4(edge_feats, m0_ref[...], m1_ref[...], m2_ref[...], m3_ref[...])  # (E, 5C)
    w0 = tpw[:, 0 * C:1 * C]
    w1 = tpw[:, 1 * C:2 * C]
    w2 = tpw[:, 2 * C:3 * C]
    w3 = tpw[:, 3 * C:4 * C]
    w4 = tpw[:, 4 * C:5 * C]
    # gather to edges (one-hot matmul)
    G = gat_ref[...]
    gs = _mm(G, s)
    gvx = _mm(G, vx)
    gvy = _mm(G, vy)
    gvz = _mm(G, vz)
    # hoisted (E,1)->(E,C) broadcasts of the l=1 edge attributes (reused below)
    bx = jnp.broadcast_to(Y1 * ux, (E, C))
    by = jnp.broadcast_to(Y1 * uy, (E, C))
    bz = jnp.broadcast_to(Y1 * uz, (E, C))
    # conv_tp: irreps_middle (sorted) = Cx0e + Cx0e + Cx1e + Cx1e + Cx1e
    # TODO(synk): e3nn TensorProduct path-normalization constants are not reproduced.
    slot0 = w0 * gs * Y0                                        # 0e x 0e -> 0e
    slot1 = w1 * (gvx * bx + gvy * by + gvz * bz) * INV_SQRT3   # 1e x 1e -> 0e (dot)
    w2s = w2 * gs
    s2x, s2y, s2z = w2s * bx, w2s * by, w2s * bz                # 0e x 1e -> 1e
    w3y0 = w3 * Y0
    s3x, s3y, s3z = w3y0 * gvx, w3y0 * gvy, w3y0 * gvz          # 1e x 0e -> 1e
    cx = gvy * bz - gvz * by                                    # 1e x 1e -> 1e (cross)
    cy = gvz * bx - gvx * bz
    cz = gvx * by - gvy * bx
    w4s = w4 * INV_SQRT2
    s4x, s4y, s4z = w4s * cx, w4s * cy, w4s * cz
    # scatter_sum (one-hot matmul) fused with self.linear (irreps_middle -> target)
    S = sct_ref[...]
    li0 = li0_ref[...]                     # (2C, C)
    li1 = li1_ref[...]                     # (3C, C)
    s = _mm(_mm(S, slot0), li0[0:C, :]) + _mm(_mm(S, slot1), li0[C:2 * C, :])
    vx = (_mm(_mm(S, s2x), li1[0:C, :]) + _mm(_mm(S, s3x), li1[C:2 * C, :])
          + _mm(_mm(S, s4x), li1[2 * C:3 * C, :]))
    vy = (_mm(_mm(S, s2y), li1[0:C, :]) + _mm(_mm(S, s3y), li1[C:2 * C, :])
          + _mm(_mm(S, s4y), li1[2 * C:3 * C, :]))
    vz = (_mm(_mm(S, s2z), li1[0:C, :]) + _mm(_mm(S, s3z), li1[C:2 * C, :])
          + _mm(_mm(S, s4z), li1[2 * C:3 * C, :]))
    _node_tail(s, vx, vy, vz, onehot_ref[...], sym_ref[...],
               lp0_ref[...], lp1_ref[...], o_ref)


def _final_kernel(x_ref, f1_ref, f2_ref, o_ref):
    # linearfinal1 -> silu -> linearfinal2 -> global sum
    # TODO(synk): e3nn nn.Activation's normalize2mom constant for silu is omitted.
    h = _mm(x_ref[:, 0:C], f1_ref[...])
    h = h * jax.nn.sigmoid(h)
    y = _mm(h, f2_ref[...])                # (N, 1)
    o_ref[...] = jnp.sum(y)[None, None]


# ------------------------------ pallas_call wrapper ------------------------------
def _call(kernel, out_shape, *args):
    """Single full-array VMEM block per input/output; shapes are tiny so grid=(1,)."""
    in_specs = [pl.BlockSpec(a.shape, lambda i: (0, 0)) for a in args]
    return pl.pallas_call(
        kernel,
        grid=(1,),
        in_specs=in_specs,
        out_specs=pl.BlockSpec(out_shape, lambda i: (0, 0)),
        out_shape=jax.ShapeDtypeStruct(out_shape, jnp.float32),
        compiler_params=pltpu.CompilerParams(dimension_semantics=("arbitrary",)),
    )(*args)


# -------------------------------- model forward --------------------------------
def mymace_forward(params, atomic_numbers, iedges, jedges, dist, vect):
    N = atomic_numbers.shape[0]
    E = dist.shape[0]
    onehot = jax.nn.one_hot(atomic_numbers, ATOMTYPES, dtype=F32)        # (N, A)
    geom = jnp.concatenate([dist.reshape(E, 1), vect], axis=1).astype(F32)  # (E, 4)
    bw = jnp.asarray(np.pi / RCUTOFF * np.linspace(1, NUM_BESSEL, NUM_BESSEL),
                     F32).reshape(1, NUM_BESSEL)
    gat = jax.nn.one_hot(iedges, N, dtype=F32)                           # (E, N) gather
    sct = jnp.transpose(jax.nn.one_hot(jedges, N, dtype=F32))            # (N, E) scatter-sum

    # first message pass + first node update (one fused kernel)
    m = params['mlp0']
    node_feats = _call(
        _stage0_kernel, (N, 4 * C),
        onehot, geom, bw, gat, sct,
        params['chem'], params['W'],
        m[0], m[1], m[2], m[3],
        params['lin_int_w0'], params['lin_int_w1'],
        params['symcon0'], params['lin_prod_w0'], params['lin_prod_w1'])

    # remaining interaction blocks (one fused kernel each)
    for p in params['blocks']:
        m = p['mlp']
        node_feats = _call(
            _block_kernel, (N, 4 * C),
            node_feats, onehot, geom, bw, gat, sct,
            p['lin_up_w0'], p['lin_up_w1'],
            m[0], m[1], m[2], m[3],
            p['lin_w0'], p['lin_w1'],
            p['symcon'], p['lin_prod_w0'], p['lin_prod_w1'])

    # reshapeo3to3d: component-plane layout -> (N, C, 4) = [scalar, x, y, z] per channel
    equivariancecheck = jnp.stack(
        [node_feats[:, 0 * C:1 * C], node_feats[:, 1 * C:2 * C],
         node_feats[:, 2 * C:3 * C], node_feats[:, 3 * C:4 * C]], axis=-1)

    energy = _call(_final_kernel, (1, 1),
                   node_feats, params['final1'], params['final2'])[0, 0]
    return energy, equivariancecheck


# ---------------------------- deterministic parameters --------------------------
def init_params(key):
    keys = jax.random.split(key, 64)
    kit = iter(keys)

    def w(shape):
        # unit-normal weights scaled by 1/sqrt(fan_in); e3nn's /sqrt(fan_in) factor
        # is folded into the stored weight (synthetic, deterministic init).
        return jax.random.normal(next(kit), shape, F32) / math.sqrt(shape[0])

    def mlp(out_dim):
        return [w((NUM_BESSEL, HIDDEN)), w((HIDDEN, HIDDEN)),
                w((HIDDEN, HIDDEN)), w((HIDDEN, out_dim))]

    params = dict(
        chem=w((ATOMTYPES, C)),
        W=w((C, C)),
        mlp0=mlp(C * (MAX_L + 1)),
        lin_int_w0=w((C, C)), lin_int_w1=w((C, C)),
        symcon0=w((ATOMTYPES, 9 * C)),
        lin_prod_w0=w((C, C)), lin_prod_w1=w((C, C)),
        final1=w((C, C // 2)),
        final2=w((C // 2, 1)),
        blocks=[],
    )
    for _ in range(INTERACTIONS - 1):
        params['blocks'].append(dict(
            lin_up_w0=w((C, C)), lin_up_w1=w((C, C)),
            mlp=mlp(5 * C),
            lin_w0=w((2 * C, C)), lin_w1=w((3 * C, C)),
            symcon=w((ATOMTYPES, 9 * C)),
            lin_prod_w0=w((C, C)), lin_prod_w1=w((C, C)),
        ))
    return params


# ------------------------------------- main -------------------------------------
if __name__ == "__main__":
    key = jax.random.PRNGKey(0)
    kpos, kz, kp = jax.random.split(key, 3)
    N_ATOMS = 8
    positions = np.asarray(jax.random.uniform(kpos, (N_ATOMS, 3), F32, 0.0, 2.0))
    atomic_numbers = np.asarray(jax.random.randint(kz, (N_ATOMS,), 0, ATOMTYPES))

    # neighbour_list replacement (glue, outside the kernels)
    # TODO(synk): periodic images from config.set_cell(np.eye(3)) are not reproduced;
    #             plain all-pairs cutoff is used.
    diff = positions[None, :, :] - positions[:, None, :]   # D = r_j - r_i
    dmat = np.linalg.norm(diff, axis=-1)
    mask = (dmat < RCUTOFF) & (~np.eye(N_ATOMS, dtype=bool))
    iedges_np, jedges_np = np.nonzero(mask)
    vect = jnp.asarray(diff[iedges_np, jedges_np], F32)
    dist = jnp.asarray(dmat[iedges_np, jedges_np], F32)
    iedges = jnp.asarray(iedges_np, jnp.int32)
    jedges = jnp.asarray(jedges_np, jnp.int32)

    params = init_params(kp)
    forward = jax.jit(mymace_forward)
    energy, equiv = forward(params, jnp.asarray(atomic_numbers, jnp.int32),
                            iedges, jedges, dist, vect)
    jax.block_until_ready((energy, equiv))
    assert energy.shape == ()
    assert equiv.shape == (N_ATOMS, C, (MAX_L + 1) ** 2)
    assert bool(jnp.isfinite(energy)) and bool(jnp.all(jnp.isfinite(equiv)))
    print("KERNEL_OK")
</pallas_src>

<mosaic_0001>
module attributes {stable_mosaic.version = 11 : i64} {
  func.func @_stage0_kernel(%arg0: i32, %arg1: memref<8x4xf32, #tpu.memory_space<vmem>>, %arg2: memref<56x4xf32, #tpu.memory_space<vmem>>, %arg3: memref<1x8xf32, #tpu.memory_space<vmem>>, %arg4: memref<56x8xf32, #tpu.memory_space<vmem>>, %arg5: memref<8x56xf32, #tpu.memory_space<vmem>>, %arg6: memref<4x32xf32, #tpu.memory_space<vmem>>, %arg7: memref<32x32xf32, #tpu.memory_space<vmem>>, %arg8: memref<8x64xf32, #tpu.memory_space<vmem>>, %arg9: memref<64x64xf32, #tpu.memory_space<vmem>>, %arg10: memref<64x64xf32, #tpu.memory_space<vmem>>, %arg11: memref<64x64xf32, #tpu.memory_space<vmem>>, %arg12: memref<32x32xf32, #tpu.memory_space<vmem>>, %arg13: memref<32x32xf32, #tpu.memory_space<vmem>>, %arg14: memref<4x288xf32, #tpu.memory_space<vmem>>, %arg15: memref<32x32xf32, #tpu.memory_space<vmem>>, %arg16: memref<32x32xf32, #tpu.memory_space<vmem>>, %arg17: memref<8x128xf32, #tpu.memory_space<vmem>>) attributes {dimension_semantics = [#tpu.dimension_semantics<arbitrary>], iteration_bounds = array<i64: 1>, scalar_prefetch = 0 : i64, scratch_operands = 0 : i64, tpu.core_type = #tpu.core_type<tc>, window_params = [{pipeline_mode = #tpu.pipeline_mode<synchronous>, transform_indices = @transform_0, window_bounds = array<i64: 8, 4>}, {pipeline_mode = #tpu.pipeline_mode<synchronous>, transform_indices = @transform_1, window_bounds = array<i64: 56, 4>}, {pipeline_mode = #tpu.pipeline_mode<synchronous>, transform_indices = @transform_2, window_bounds = array<i64: 1, 8>}, {pipeline_mode = #tpu.pipeline_mode<synchronous>, transform_indices = @transform_3, window_bounds = array<i64: 56, 8>}, {pipeline_mode = #tpu.pipeline_mode<synchronous>, transform_indices = @transform_4, window_bounds = array<i64: 8, 56>}, {pipeline_mode = #tpu.pipeline_mode<synchronous>, transform_indices = @transform_5, window_bounds = array<i64: 4, 32>}, {pipeline_mode = #tpu.pipeline_mode<synchronous>, transform_indices = @transform_6, window_bounds = array<i64: 32, 32>}, {pipeline_mode = #tpu.pipeline_mode<synchronous>, transform_indices = @transform_7, window_bounds = array<i64: 8, 64>}, {pipeline_mode = #tpu.pipeline_mode<synchronous>, transform_indices = @transform_8, window_bounds = array<i64: 64, 64>}, {pipeline_mode = #tpu.pipeline_mode<synchronous>, transform_indices = @transform_9, window_bounds = array<i64: 64, 64>}, {pipeline_mode = #tpu.pipeline_mode<synchronous>, transform_indices = @transform_10, window_bounds = array<i64: 64, 64>}, {pipeline_mode = #tpu.pipeline_mode<synchronous>, transform_indices = @transform_11, window_bounds = array<i64: 32, 32>}, {pipeline_mode = #tpu.pipeline_mode<synchronous>, transform_indices = @transform_12, window_bounds = array<i64: 32, 32>}, {pipeline_mode = #tpu.pipeline_mode<synchronous>, transform_indices = @transform_13, window_bounds = array<i64: 4, 288>}, {pipeline_mode = #tpu.pipeline_mode<synchronous>, transform_indices = @transform_14, window_bounds = array<i64: 32, 32>}, {pipeline_mode = #tpu.pipeline_mode<synchronous>, transform_indices = @transform_15, window_bounds = array<i64: 32, 32>}, {pipeline_mode = #tpu.pipeline_mode<synchronous>, transform_indices = @transform_16, window_bounds = array<i64: 8, 128>}]} {
    %c0 = arith.constant 0 : index
    %c0_0 = arith.constant 0 : index
    %0 = vector.load %arg1[%c0, %c0_0] : memref<8x4xf32, #tpu.memory_space<vmem>>, vector<8x4xf32>
    %c0_1 = arith.constant 0 : index
    %c0_2 = arith.constant 0 : index
    %1 = vector.load %arg6[%c0_1, %c0_2] : memref<4x32xf32, #tpu.memory_space<vmem>>, vector<4x32xf32>
    %cst = arith.constant dense<0.000000e+00> : vector<8x32xf32>
    %2 = tpu.matmul %0, %1, %cst {dimension_numbers = #tpu.dot_dimension_numbers<[1], [0], [0], [1], [0, 0, 1, 1], [], []>} : vector<8x4xf32>, vector<4x32xf32>, vector<8x32xf32> -> vector<8x32xf32>
    %c0_3 = arith.constant 0 : index
    %c0_4 = arith.constant 0 : index
    %3 = vector.load %arg7[%c0_3, %c0_4] : memref<32x32xf32, #tpu.memory_space<vmem>>, vector<32x32xf32>
    %cst_5 = arith.constant dense<0.000000e+00> : vector<8x32xf32>
    %4 = tpu.matmul %2, %3, %cst_5 {dimension_numbers = #tpu.dot_dimension_numbers<[1], [0], [0], [1], [0, 0, 1, 1], [], []>} : vector<8x32xf32>, vector<32x32xf32>, vector<8x32xf32> -> vector<8x32xf32>
    %c0_6 = arith.constant 0 : index
    %c0_7 = arith.constant 0 : index
    %5 = vector.load %arg2[%c0_6, %c0_7] : memref<56x4xf32, #tpu.memory_space<vmem>>, vector<56x4xf32>
    %c0_8 = arith.constant 0 : index
    %c0_9 = arith.constant 0 : index
    %6 = vector.load %arg3[%c0_8, %c0_9] : memref<1x8xf32, #tpu.memory_space<vmem>>, vector<1x8xf32>
    %7 = vector.extract_strided_slice %5 {offsets = [0, 0], sizes = [56, 1], strides = [1, 1]} : vector<56x4xf32> to vector<56x1xf32>
    %cst_10 = arith.constant 1.000000e+00 : f32
    %8 = vector.broadcast %cst_10 : f32 to vector<56x1xf32>
    %9 = arith.divf %8, %7 : vector<56x1xf32>
    %10 = vector.extract_strided_slice %5 {offsets = [0, 1], sizes = [56, 1], strides = [1, 1]} : vector<56x4xf32> to vector<56x1xf32>
    %11 = arith.mulf %10, %9 : vector<56x1xf32>
    %12 = vector.extract_strided_slice %5 {offsets = [0, 2], sizes = [56, 1], strides = [1, 1]} : vector<56x4xf32> to vector<56x1xf32>
    %13 = arith.mulf %12, %9 : vector<56x1xf32>
    %14 = vector.extract_strided_slice %5 {offsets = [0, 3], sizes = [56, 1], strides = [1, 1]} : vector<56x4xf32> to vector<56x1xf32>
    %15 = arith.mulf %14, %9 : vector<56x1xf32>
    %16 = vector.broadcast %7 : vector<56x1xf32> to vector<56x8xf32>
    %17 = vector.broadcast %6 : vector<1x8xf32> to vector<56x8xf32>
    %18 = arith.mulf %16, %17 : vector<56x8xf32>
    %19 = math.sin %18 : vector<56x8xf32>
    %cst_11 = arith.constant 0.816496611 : f32
    %20 = vector.broadcast %cst_11 : f32 to vector<56x8xf32>
    %21 = arith.mulf %20, %19 : vector<56x8xf32>
    %22 = vector.broadcast %9 : vector<56x1xf32> to vector<56x8xf32>
    %23 = arith.mulf %21, %22 : vector<56x8xf32>
    %cst_12 = arith.constant 0.333333343 : f32
    %24 = vector.broadcast %cst_12 : f32 to vector<56x8xf32>
    %25 = arith.mulf %23, %24 : vector<56x8xf32>
    %26 = arith.mulf %25, %25 : vector<56x8xf32>
    %27 = arith.mulf %26, %26 : vector<56x8xf32>
    %28 = arith.mulf %27, %26 : vector<56x8xf32>
    %cst_13 = arith.constant 2.800000e+01 : f32
    %29 = vector.broadcast %cst_13 : f32 to vector<56x8xf32>
    %30 = arith.mulf %29, %28 : vector<56x8xf32>
    %cst_14 = arith.constant 1.000000e+00 : f32
    %31 = vector.broadcast %cst_14 : f32 to vector<56x8xf32>
    %32 = arith.subf %31, %30 : vector<56x8xf32>
    %cst_15 = arith.constant 4.800000e+01 : f32
    %33 = vector.broadcast %cst_15 : f32 to vector<56x8xf32>
    %34 = arith.mulf %33, %28 : vector<56x8xf32>
    %35 = arith.mulf %34, %25 : vector<56x8xf32>
    %36 = arith.addf %32, %35 : vector<56x8xf32>
    %cst_16 = arith.constant 2.100000e+01 : f32
    %37 = vector.broadcast %cst_16 : f32 to vector<56x8xf32>
    %38 = arith.mulf %37, %28 : vector<56x8xf32>
    %39 = arith.mulf %38, %26 : vector<56x8xf32>
    %40 = arith.subf %36, %39 : vector<56x8xf32>
    %cst_17 = arith.constant 3.000000e+00 : f32
    %41 = vector.broadcast %cst_17 : f32 to vector<56x8xf32>
    %42 = arith.cmpf olt, %23, %41 : vector<56x8xf32>
    %43 = arith.extui %42 : vector<56x8xi1> to vector<56x8xi32>
    %44 = arith.sitofp %43 : vector<56x8xi32> to vector<56x8xf32>
    %45 = arith.mulf %40, %44 : vector<56x8xf32>
    %c0_18 = arith.constant 0 : index
    %c0_19 = arith.constant 0 : index
    %46 = vector.load %arg8[%c0_18, %c0_19] : memref<8x64xf32, #tpu.memory_space<vmem>>, vector<8x64xf32>
    %c0_20 = arith.constant 0 : index
    %c0_21 = arith.constant 0 : index
    %47 = vector.load %arg9[%c0_20, %c0_21] : memref<64x64xf32, #tpu.memory_space<vmem>>, vector<64x64xf32>
    %c0_22 = arith.constant 0 : index
    %c0_23 = arith.constant 0 : index
    %48 = vector.load %arg10[%c0_22, %c0_23] : memref<64x64xf32, #tpu.memory_space<vmem>>, vector<64x64xf32>
    %c0_24 = arith.constant 0 : index
    %c0_25 = arith.constant 0 : index
    %49 = vector.load %arg11[%c0_24, %c0_25] : memref<64x64xf32, #tpu.memory_space<vmem>>, vector<64x64xf32>
    %cst_26 = arith.constant dense<0.000000e+00> : vector<56x64xf32>
    %50 = tpu.matmul %45, %46, %cst_26 {dimension_numbers = #tpu.dot_dimension_numbers<[1], [0], [0], [1], [0, 0, 1, 1], [], []>} : vector<56x8xf32>, vector<8x64xf32>, vector<56x64xf32> -> vector<56x64xf32>
    %51 = arith.negf %50 : vector<56x64xf32>
    %52 = math.exp %51 : vector<56x64xf32>
    %cst_27 = arith.constant 1.000000e+00 : f32
    %53 = vector.broadcast %cst_27 : f32 to vector<56x64xf32>
    %54 = arith.addf %53, %52 : vector<56x64xf32>
    %55 = arith.divf %53, %54 : vector<56x64xf32>
    %56 = arith.mulf %50, %55 : vector<56x64xf32>
    %cst_28 = arith.constant dense<0.000000e+00> : vector<56x64xf32>
    %57 = tpu.matmul %56, %47, %cst_28 {dimension_numbers = #tpu.dot_dimension_numbers<[1], [0], [0], [1], [0, 0, 1, 1], [], []>} : vector<56x64xf32>, vector<64x64xf32>, vector<56x64xf32> -> vector<56x64xf32>
    %58 = arith.negf %57 : vector<56x64xf32>
    %59 = math.exp %58 : vector<56x64xf32>
    %cst_29 = arith.constant 1.000000e+00 : f32
    %60 = vector.broadcast %cst_29 : f32 to vector<56x64xf32>
    %61 = arith.addf %60, %59 : vector<56x64xf32>
    %62 = arith.divf %60, %61 : vector<56x64xf32>
    %63 = arith.mulf %57, %62 : vector<56x64xf32>
    %cst_30 = arith.constant dense<0.000000e+00> : vector<56x64xf32>
    %64 = tpu.matmul %63, %48, %cst_30 {dimension_numbers = #tpu.dot_dimension_numbers<[1], [0], [0], [1], [0, 0, 1, 1], [], []>} : vector<56x64xf32>, vector<64x64xf32>, vector<56x64xf32> -> vector<56x64xf32>
    %65 = arith.negf %64 : vector<56x64xf32>
    %66 = math.exp %65 : vector<56x64xf32>
    %cst_31 = arith.constant 1.000000e+00 : f32
    %67 = vector.broadcast %cst_31 : f32 to vector<56x64xf32>
    %68 = arith.addf %67, %66 : vector<56x64xf32>
    %69 = arith.divf %67, %68 : vector<56x64xf32>
    %70 = arith.mulf %64, %69 : vector<56x64xf32>
    %cst_32 = arith.constant dense<0.000000e+00> : vector<56x64xf32>
    %71 = tpu.matmul %70, %49, %cst_32 {dimension_numbers = #tpu.dot_dimension_numbers<[1], [0], [0], [1], [0, 0, 1, 1], [], []>} : vector<56x64xf32>, vector<64x64xf32>, vector<56x64xf32> -> vector<56x64xf32>
    %72 = vector.extract_strided_slice %71 {offsets = [0, 0], sizes = [56, 32], strides = [1, 1]} : vector<56x64xf32> to vector<56x32xf32>
    %73 = vector.extract_strided_slice %71 {offsets = [0, 32], sizes = [56, 32], strides = [1, 1]} : vector<56x64xf32> to vector<56x32xf32>
    %c0_33 = arith.constant 0 : index
    %c0_34 = arith.constant 0 : index
    %74 = vector.load %arg4[%c0_33, %c0_34] : memref<56x8xf32, #tpu.memory_space<vmem>>, vector<56x8xf32>
    %cst_35 = arith.constant dense<0.000000e+00> : vector<56x32xf32>
    %75 = tpu.matmul %74, %4, %cst_35 {dimension_numbers = #tpu.dot_dimension_numbers<[1], [0], [0], [1], [0, 0, 1, 1], [], []>} : vector<56x8xf32>, vector<8x32xf32>, vector<56x32xf32> -> vector<56x32xf32>
    %76 = arith.mulf %72, %75 : vector<56x32xf32>
    %cst_36 = arith.constant 0.282094806 : f32
    %77 = vector.broadcast %cst_36 : f32 to vector<56x32xf32>
    %78 = arith.mulf %76, %77 : vector<56x32xf32>
    %79 = arith.mulf %73, %75 : vector<56x32xf32>
    %c0_37 = arith.constant 0 : index
    %c0_38 = arith.constant 0 : index
    %80 = vector.load %arg5[%c0_37, %c0_38] : memref<8x56xf32, #tpu.memory_space<vmem>>, vector<8x56xf32>
    %c0_39 = arith.constant 0 : index
    %c0_40 = arith.constant 0 : index
    %81 = vector.load %arg12[%c0_39, %c0_40] : memref<32x32xf32, #tpu.memory_space<vmem>>, vector<32x32xf32>
    %c0_41 = arith.constant 0 : index
    %c0_42 = arith.constant 0 : index
    %82 = vector.load %arg13[%c0_41, %c0_42] : memref<32x32xf32, #tpu.memory_space<vmem>>, vector<32x32xf32>
    %cst_43 = arith.constant dense<0.000000e+00> : vector<8x32xf32>
    %83 = tpu.matmul %80, %78, %cst_43 {dimension_numbers = #tpu.dot_dimension_numbers<[1], [0], [0], [1], [0, 0, 1, 1], [], []>} : vector<8x56xf32>, vector<56x32xf32>, vector<8x32xf32> -> vector<8x32xf32>
    %cst_44 = arith.constant dense<0.000000e+00> : vector<8x32xf32>
    %84 = tpu.matmul %83, %81, %cst_44 {dimension_numbers = #tpu.dot_dimension_numbers<[1], [0], [0], [1], [0, 0, 1, 1], [], []>} : vector<8x32xf32>, vector<32x32xf32>, vector<8x32xf32> -> vector<8x32xf32>
    %cst_45 = arith.constant 0.488602519 : f32
    %85 = vector.broadcast %cst_45 : f32 to vector<56x1xf32>
    %86 = arith.mulf %85, %11 : vector<56x1xf32>
    %87 = vector.broadcast %86 : vector<56x1xf32> to vector<56x32xf32>
    %88 = arith.mulf %79, %87 : vector<56x32xf32>
    %cst_46 = arith.constant dense<0.000000e+00> : vector<8x32xf32>
    %89 = tpu.matmul %80, %88, %cst_46 {dimension_numbers = #tpu.dot_dimension_numbers<[1], [0], [0], [1], [0, 0, 1, 1], [], []>} : vector<8x56xf32>, vector<56x32xf32>, vector<8x32xf32> -> vector<8x32xf32>
    %cst_47 = arith.constant dense<0.000000e+00> : vector<8x32xf32>
    %90 = tpu.matmul %89, %82, %cst_47 {dimension_numbers = #tpu.dot_dimension_numbers<[1], [0], [0], [1], [0, 0, 1, 1], [], []>} : vector<8x32xf32>, vector<32x32xf32>, vector<8x32xf32> -> vector<8x32xf32>
    %cst_48 = arith.constant 0.488602519 : f32
    %91 = vector.broadcast %cst_48 : f32 to vector<56x1xf32>
    %92 = arith.mulf %91, %13 : vector<56x1xf32>
    %93 = vector.broadcast %92 : vector<56x1xf32> to vector<56x32xf32>
    %94 = arith.mulf %79, %93 : vector<56x32xf32>
    %cst_49 = arith.constant dense<0.000000e+00> : vector<8x32xf32>
    %95 = tpu.matmul %80, %94, %cst_49 {dimension_numbers = #tpu.dot_dimension_numbers<[1], [0], [0], [1], [0, 0, 1, 1], [], []>} : vector<8x56xf32>, vector<56x32xf32>, vector<8x32xf32> -> vector<8x32xf32>
    %cst_50 = arith.constant dense<0.000000e+00> : vector<8x32xf32>
    %96 = tpu.matmul %95, %82, %cst_50 {dimension_numbers = #tpu.dot_dimension_numbers<[1], [0], [0], [1], [0, 0, 1, 1], [], []>} : vector<8x32xf32>, vector<32x32xf32>, vector<8x32xf32> -> vector<8x32xf32>
    %cst_51 = arith.constant 0.488602519 : f32
    %97 = vector.broadcast %cst_51 : f32 to vector<56x1xf32>
    %98 = arith.mulf %97, %15 : vector<56x1xf32>
    %99 = vector.broadcast %98 : vector<56x1xf32> to vector<56x32xf32>
    %100 = arith.mulf %79, %99 : vector<56x32xf32>
    %cst_52 = arith.constant dense<0.000000e+00> : vector<8x32xf32>
    %101 = tpu.matmul %80, %100, %cst_52 {dimension_numbers = #tpu.dot_dimension_numbers<[1], [0], [0], [1], [0, 0, 1, 1], [], []>} : vector<8x56xf32>, vector<56x32xf32>, vector<8x32xf32> -> vector<8x32xf32>
    %cst_53 = arith.constant dense<0.000000e+00> : vector<8x32xf32>
    %102 = tpu.matmul %101, %82, %cst_53 {dimension_numbers = #tpu.dot_dimension_numbers<[1], [0], [0], [1], [0, 0, 1, 1], [], []>} : vector<8x32xf32>, vector<32x32xf32>, vector<8x32xf32> -> vector<8x32xf32>
    %c0_54 = arith.constant 0 : index
    %c0_55 = arith.constant 0 : index
    %103 = vector.load %arg14[%c0_54, %c0_55] : memref<4x288xf32, #tpu.memory_space<vmem>>, vector<4x288xf32>
    %c0_56 = arith.constant 0 : index
    %c0_57 = arith.constant 0 : index
    %104 = vector.load %arg15[%c0_56, %c0_57] : memref<32x32xf32, #tpu.memory_space<vmem>>, vector<32x32xf32>
    %c0_58 = arith.constant 0 : index
    %c0_59 = arith.constant 0 : index
    %105 = vector.load %arg16[%c0_58, %c0_59] : memref<32x32xf32, #tpu.memory_space<vmem>>, vector<32x32xf32>
    %cst_60 = arith.constant dense<0.000000e+00> : vector<8x288xf32>
    %106 = tpu.matmul %0, %103, %cst_60 {dimension_numbers = #tpu.dot_dimension_numbers<[1], [0], [0], [1], [0, 0, 1, 1], [], []>} : vector<8x4xf32>, vector<4x288xf32>, vector<8x288xf32> -> vector<8x288xf32>
    %107 = arith.mulf %90, %90 : vector<8x32xf32>
    %108 = arith.mulf %96, %96 : vector<8x32xf32>
    %109 = arith.addf %107, %108 : vector<8x32xf32>
    %110 = arith.mulf %102, %102 : vector<8x32xf32>
    %111 = arith.addf %109, %110 : vector<8x32xf32>
    %112 = arith.mulf %84, %84 : vector<8x32xf32>
    %113 = vector.extract_strided_slice %106 {offsets = [0, 0], sizes = [8, 32], strides = [1, 1]} : vector<8x288xf32> to vector<8x32xf32>
    %114 = vector.extract_strided_slice %106 {offsets = [0, 32], sizes = [8, 32], strides = [1, 1]} : vector<8x288xf32> to vector<8x32xf32>
    %115 = vector.extract_strided_slice %106 {offsets = [0, 64], sizes = [8, 32], strides = [1, 1]} : vector<8x288xf32> to vector<8x32xf32>
    %116 = vector.extract_strided_slice %106 {offsets = [0, 96], sizes = [8, 32], strides = [1, 1]} : vector<8x288xf32> to vector<8x32xf32>
    %117 = vector.extract_strided_slice %106 {offsets = [0, 128], sizes = [8, 32], strides = [1, 1]} : vector<8x288xf32> to vector<8x32xf32>
    %118 = vector.extract_strided_slice %106 {offsets = [0, 160], sizes = [8, 32], strides = [1, 1]} : vector<8x288xf32> to vector<8x32xf32>
    %119 = vector.extract_strided_slice %106 {offsets = [0, 192], sizes = [8, 32], strides = [1, 1]} : vector<8x288xf32> to vector<8x32xf32>
    %120 = vector.extract_strided_slice %106 {offsets = [0, 224], sizes = [8, 32], strides = [1, 1]} : vector<8x288xf32> to vector<8x32xf32>
    %121 = vector.extract_strided_slice %106 {offsets = [0, 256], sizes = [8, 32], strides = [1, 1]} : vector<8x288xf32> to vector<8x32xf32>
    %122 = arith.mulf %113, %84 : vector<8x32xf32>
    %123 = arith.mulf %114, %112 : vector<8x32xf32>
    %124 = arith.addf %122, %123 : vector<8x32xf32>
    %125 = arith.mulf %115, %111 : vector<8x32xf32>
    %126 = arith.addf %124, %125 : vector<8x32xf32>
    %127 = arith.mulf %116, %112 : vector<8x32xf32>
    %128 = arith.mulf %127, %84 : vector<8x32xf32>
    %129 = arith.addf %126, %128 : vector<8x32xf32>
    %130 = arith.mulf %117, %84 : vector<8x32xf32>
    %131 = arith.mulf %130, %111 : vector<8x32xf32>
    %132 = arith.addf %129, %131 : vector<8x32xf32>
    %133 = arith.mulf %119, %84 : vector<8x32xf32>
    %134 = arith.addf %118, %133 : vector<8x32xf32>
    %135 = arith.mulf %120, %112 : vector<8x32xf32>
    %136 = arith.addf %134, %135 : vector<8x32xf32>
    %137 = arith.mulf %121, %111 : vector<8x32xf32>
    %138 = arith.addf %136, %137 : vector<8x32xf32>
    %139 = arith.mulf %138, %90 : vector<8x32xf32>
    %140 = arith.mulf %138, %96 : vector<8x32xf32>
    %141 = arith.mulf %138, %102 : vector<8x32xf32>
    %cst_61 = arith.constant dense<0.000000e+00> : vector<8x32xf32>
    %142 = tpu.matmul %132, %104, %cst_61 {dimension_numbers = #tpu.dot_dimension_numbers<[1], [0], [0], [1], [0, 0, 1, 1], [], []>} : vector<8x32xf32>, vector<32x32xf32>, vector<8x32xf32> -> vector<8x32xf32>
    %c0_62 = arith.constant 0 : index
    %c0_63 = arith.constant 0 : index
    %143 = vector.load %arg17[%c0_62, %c0_63] : memref<8x128xf32, #tpu.memory_space<vmem>>, vector<8x32xf32>
    tpu.vector_store %arg17[%c0_62, %c0_63], %142 {strides = array<i32>} : memref<8x128xf32, #tpu.memory_space<vmem>>, vector<8x32xf32>,
    %cst_64 = arith.constant dense<0.000000e+00> : vector<8x32xf32>
    %144 = tpu.matmul %139, %105, %cst_64 {dimension_numbers = #tpu.dot_dimension_numbers<[1], [0], [0], [1], [0, 0, 1, 1], [], []>} : vector<8x32xf32>, vector<32x32xf32>, vector<8x32xf32> -> vector<8x32xf32>
    %c0_65 = arith.constant 0 : index
    %c32 = arith.constant 32 : index
    %145 = vector.load %arg17[%c0_65, %c32] : memref<8x128xf32, #tpu.memory_space<vmem>>, vector<8x32xf32>
    tpu.vector_store %arg17[%c0_65, %c32], %144 {strides = array<i32>} : memref<8x128xf32, #tpu.memory_space<vmem>>, vector<8x32xf32>,
    %cst_66 = arith.constant dense<0.000000e+00> : vector<8x32xf32>
    %146 = tpu.matmul %140, %105, %cst_66 {dimension_numbers = #tpu.dot_dimension_numbers<[1], [0], [0], [1], [0, 0, 1, 1], [], []>} : vector<8x32xf32>, vector<32x32xf32>, vector<8x32xf32> -> vector<8x32xf32>
    %c0_67 = arith.constant 0 : index
    %c64 = arith.constant 64 : index
    %147 = vector.load %arg17[%c0_67, %c64] : memref<8x128xf32, #tpu.memory_space<vmem>>, vector<8x32xf32>
    tpu.vector_store %arg17[%c0_67, %c64], %146 {strides = array<i32>} : memref<8x128xf32, #tpu.memory_space<vmem>>, vector<8x32xf32>,
    %cst_68 = arith.constant dense<0.000000e+00> : vector<8x32xf32>
    %148 = tpu.matmul %141, %105, %cst_68 {dimension_numbers = #tpu.dot_dimension_numbers<[1], [0], [0], [1], [0, 0, 1, 1], [], []>} : vector<8x32xf32>, vector<32x32xf32>, vector<8x32xf32> -> vector<8x32xf32>
    %c0_69 = arith.constant 0 : index
    %c96 = arith.constant 96 : index
    %149 = vector.load %arg17[%c0_69, %c96] : memref<8x128xf32, #tpu.memory_space<vmem>>, vector<8x32xf32>
    tpu.vector_store %arg17[%c0_69, %c96], %148 {strides = array<i32>} : memref<8x128xf32, #tpu.memory_space<vmem>>, vector<8x32xf32>,
    return
  }
  func.func @transform_0(%arg0: i32) -> (i32, i32) {
    %c0_i32 = arith.constant 0 : i32
    %c0_i32_0 = arith.constant 0 : i32
    %c0_i32_1 = arith.constant 0 : i32
    return %c0_i32, %c0_i32_0 : i32, i32
  }
  func.func @transform_1(%arg0: i32) -> (i32, i32) {
    %c0_i32 = arith.constant 0 : i32
    %c0_i32_0 = arith.constant 0 : i32
    %c0_i32_1 = arith.constant 0 : i32
    return %c0_i32, %c0_i32_0 : i32, i32
  }
  func.func @transform_2(%arg0: i32) -> (i32, i32) {
    %c0_i32 = arith.constant 0 : i32
    %c0_i32_0 = arith.constant 0 : i32
    %c0_i32_1 = arith.constant 0 : i32
    return %c0_i32, %c0_i32_0 : i32, i32
  }
  func.func @transform_3(%arg0: i32) -> (i32, i32) {
    %c0_i32 = arith.constant 0 : i32
    %c0_i32_0 = arith.constant 0 : i32
    %c0_i32_1 = arith.constant 0 : i32
    return %c0_i32, %c0_i32_0 : i32, i32
  }
  func.func @transform_4(%arg0: i32) -> (i32, i32) {
    %c0_i32 = arith.constant 0 : i32
    %c0_i32_0 = arith.constant 0 : i32
    %c0_i32_1 = arith.constant 0 : i32
    return %c0_i32, %c0_i32_0 : i32, i32
  }
  func.func @transform_5(%arg0: i32) -> (i32, i32) {
    %c0_i32 = arith.constant 0 : i32
    %c0_i32_0 = arith.constant 0 : i32
    %c0_i32_1 = arith.constant 0 : i32
    return %c0_i32, %c0_i32_0 : i32, i32
  }
  func.func @transform_6(%arg0: i32) -> (i32, i32) {
    %c0_i32 = arith.constant 0 : i32
    %c0_i32_0 = arith.constant 0 : i32
    %c0_i32_1 = arith.constant 0 : i32
    return %c0_i32, %c0_i32_0 : i32, i32
  }
  func.func @transform_7(%arg0: i32) -> (i32, i32) {
    %c0_i32 = arith.constant 0 : i32
    %c0_i32_0 = arith.constant 0 : i32
    %c0_i32_1 = arith.constant 0 : i32
    return %c0_i32, %c0_i32_0 : i32, i32
  }
  func.func @transform_8(%arg0: i32) -> (i32, i32) {
    %c0_i32 = arith.constant 0 : i32
    %c0_i32_0 = arith.constant 0 : i32
    %c0_i32_1 = arith.constant 0 : i32
    return %c0_i32, %c0_i32_0 : i32, i32
  }
  func.func @transform_9(%arg0: i32) -> (i32, i32) {
    %c0_i32 = arith.constant 0 : i32
    %c0_i32_0 = arith.constant 0 : i32
    %c0_i32_1 = arith.constant 0 : i32
    return %c0_i32, %c0_i32_0 : i32, i32
  }
  func.func @transform_10(%arg0: i32) -> (i32, i32) {
    %c0_i32 = arith.constant 0 : i32
    %c0_i32_0 = arith.constant 0 : i32
    %c0_i32_1 = arith.constant 0 : i32
    return %c0_i32, %c0_i32_0 : i32, i32
  }
  func.func @transform_11(%arg0: i32) -> (i32, i32) {
    %c0_i32 = arith.constant 0 : i32
    %c0_i32_0 = arith.constant 0 : i32
    %c0_i32_1 = arith.constant 0 : i32
    return %c0_i32, %c0_i32_0 : i32, i32
  }
  func.func @transform_12(%arg0: i32) -> (i32, i32) {
    %c0_i32 = arith.constant 0 : i32
    %c0_i32_0 = arith.constant 0 : i32
    %c0_i32_1 = arith.constant 0 : i32
    return %c0_i32, %c0_i32_0 : i32, i32
  }
  func.func @transform_13(%arg0: i32) -> (i32, i32) {
    %c0_i32 = arith.constant 0 : i32
    %c0_i32_0 = arith.constant 0 : i32
    %c0_i32_1 = arith.constant 0 : i32
    return %c0_i32, %c0_i32_0 : i32, i32
  }
  func.func @transform_14(%arg0: i32) -> (i32, i32) {
    %c0_i32 = arith.constant 0 : i32
    %c0_i32_0 = arith.constant 0 : i32
    %c0_i32_1 = arith.constant 0 : i32
    return %c0_i32, %c0_i32_0 : i32, i32
  }
  func.func @transform_15(%arg0: i32) -> (i32, i32) {
    %c0_i32 = arith.constant 0 : i32
    %c0_i32_0 = arith.constant 0 : i32
    %c0_i32_1 = arith.constant 0 : i32
    return %c0_i32, %c0_i32_0 : i32, i32
  }
  func.func @transform_16(%arg0: i32) -> (i32, i32) {
    %c0_i32 = arith.constant 0 : i32
    %c0_i32_0 = arith.constant 0 : i32
    %c0_i32_1 = arith.constant 0 : i32
    return %c0_i32, %c0_i32_0 : i32, i32
  }
}

module attributes {stable_mosaic.version = 11 : i64} {
  func.func @_block_kernel(%arg0: i32, %arg1: memref<8x128xf32, #tpu.memory_space<vmem>>, %arg2: memref<8x4xf32, #tpu.memory_space<vmem>>, %arg3: memref<56x4xf32, #tpu.memory_space<vmem>>, %arg4: memref<1x8xf32, #tpu.memory_space<vmem>>, %arg5: memref<56x8xf32, #tpu.memory_space<vmem>>, %arg6: memref<8x56xf32, #tpu.memory_space<vmem>>, %arg7: memref<32x32xf32, #tpu.memory_space<vmem>>, %arg8: memref<32x32xf32, #tpu.memory_space<vmem>>, %arg9: memref<8x64xf32, #tpu.memory_space<vmem>>, %arg10: memref<64x64xf32, #tpu.memory_space<vmem>>, %arg11: memref<64x64xf32, #tpu.memory_space<vmem>>, %arg12: memref<64x160xf32, #tpu.memory_space<vmem>>, %arg13: memref<64x32xf32, #tpu.memory_space<vmem>>, %arg14: memref<96x32xf32, #tpu.memory_space<vmem>>, %arg15: memref<4x288xf32, #tpu.memory_space<vmem>>, %arg16: memref<32x32xf32, #tpu.memory_space<vmem>>, %arg17: memref<32x32xf32, #tpu.memory_space<vmem>>, %arg18: memref<8x128xf32, #tpu.memory_space<vmem>>) attributes {dimension_semantics = [#tpu.dimension_semantics<arbitrary>], iteration_bounds = array<i64: 1>, scalar_prefetch = 0 : i64, scratch_operands = 0 : i64, tpu.core_type = #tpu.core_type<tc>, window_params = [{pipeline_mode = #tpu.pipeline_mode<synchronous>, transform_indices = @transform_0, window_bounds = array<i64: 8, 128>}, {pipeline_mode = #tpu.pipeline_mode<synchronous>, transform_indices = @transform_1, window_bounds = array<i64: 8, 4>}, {pipeline_mode = #tpu.pipeline_mode<synchronous>, transform_indices = @transform_2, window_bounds = array<i64: 56, 4>}, {pipeline_mode = #tpu.pipeline_mode<synchronous>, transform_indices = @transform_3, window_bounds = array<i64: 1, 8>}, {pipeline_mode = #tpu.pipeline_mode<synchronous>, transform_indices = @transform_4, window_bounds = array<i64: 56, 8>}, {pipeline_mode = #tpu.pipeline_mode<synchronous>, transform_indices = @transform_5, window_bounds = array<i64: 8, 56>}, {pipeline_mode = #tpu.pipeline_mode<synchronous>, transform_indices = @transform_6, window_bounds = array<i64: 32, 32>}, {pipeline_mode = #tpu.pipeline_mode<synchronous>, transform_indices = @transform_7, window_bounds = array<i64: 32, 32>}, {pipeline_mode = #tpu.pipeline_mode<synchronous>, transform_indices = @transform_8, window_bounds = array<i64: 8, 64>}, {pipeline_mode = #tpu.pipeline_mode<synchronous>, transform_indices = @transform_9, window_bounds = array<i64: 64, 64>}, {pipeline_mode = #tpu.pipeline_mode<synchronous>, transform_indices = @transform_10, window_bounds = array<i64: 64, 64>}, {pipeline_mode = #tpu.pipeline_mode<synchronous>, transform_indices = @transform_11, window_bounds = array<i64: 64, 160>}, {pipeline_mode = #tpu.pipeline_mode<synchronous>, transform_indices = @transform_12, window_bounds = array<i64: 64, 32>}, {pipeline_mode = #tpu.pipeline_mode<synchronous>, transform_indices = @transform_13, window_bounds = array<i64: 96, 32>}, {pipeline_mode = #tpu.pipeline_mode<synchronous>, transform_indices = @transform_14, window_bounds = array<i64: 4, 288>}, {pipeline_mode = #tpu.pipeline_mode<synchronous>, transform_indices = @transform_15, window_bounds = array<i64: 32, 32>}, {pipeline_mode = #tpu.pipeline_mode<synchronous>, transform_indices = @transform_16, window_bounds = array<i64: 32, 32>}, {pipeline_mode = #tpu.pipeline_mode<synchronous>, transform_indices = @transform_17, window_bounds = array<i64: 8, 128>}]} {
    %c0 = arith.constant 0 : index
    %c0_0 = arith.constant 0 : index
    %0 = vector.load %arg1[%c0, %c0_0] : memref<8x128xf32, #tpu.memory_space<vmem>>, vector<8x128xf32>
    %1 = vector.extract_strided_slice %0 {offsets = [0, 0], sizes = [8, 32], strides = [1, 1]} : vector<8x128xf32> to vector<8x32xf32>
    %c0_1 = arith.constant 0 : index
    %c0_2 = arith.constant 0 : index
    %2 = vector.load %arg7[%c0_1, %c0_2] : memref<32x32xf32, #tpu.memory_space<vmem>>, vector<32x32xf32>
    %cst = arith.constant dense<0.000000e+00> : vector<8x32xf32>
    %3 = tpu.matmul %1, %2, %cst {dimension_numbers = #tpu.dot_dimension_numbers<[1], [0], [0], [1], [0, 0, 1, 1], [], []>} : vector<8x32xf32>, vector<32x32xf32>, vector<8x32xf32> -> vector<8x32xf32>
    %4 = vector.extract_strided_slice %0 {offsets = [0, 32], sizes = [8, 32], strides = [1, 1]} : vector<8x128xf32> to vector<8x32xf32>
    %c0_3 = arith.constant 0 : index
    %c0_4 = arith.constant 0 : index
    %5 = vector.load %arg8[%c0_3, %c0_4] : memref<32x32xf32, #tpu.memory_space<vmem>>, vector<32x32xf32>
    %cst_5 = arith.constant dense<0.000000e+00> : vector<8x32xf32>
    %6 = tpu.matmul %4, %5, %cst_5 {dimension_numbers = #tpu.dot_dimension_numbers<[1], [0], [0], [1], [0, 0, 1, 1], [], []>} : vector<8x32xf32>, vector<32x32xf32>, vector<8x32xf32> -> vector<8x32xf32>
    %7 = vector.extract_strided_slice %0 {offsets = [0, 64], sizes = [8, 32], strides = [1, 1]} : vector<8x128xf32> to vector<8x32xf32>
    %c0_6 = arith.constant 0 : index
    %c0_7 = arith.constant 0 : index
    %8 = vector.load %arg8[%c0_6, %c0_7] : memref<32x32xf32, #tpu.memory_space<vmem>>, vector<32x32xf32>
    %cst_8 = arith.constant dense<0.000000e+00> : vector<8x32xf32>
    %9 = tpu.matmul %7, %8, %cst_8 {dimension_numbers = #tpu.dot_dimension_numbers<[1], [0], [0], [1], [0, 0, 1, 1], [], []>} : vector<8x32xf32>, vector<32x32xf32>, vector<8x32xf32> -> vector<8x32xf32>
    %10 = vector.extract_strided_slice %0 {offsets = [0, 96], sizes = [8, 32], strides = [1, 1]} : vector<8x128xf32> to vector<8x32xf32>
    %c0_9 = arith.constant 0 : index
    %c0_10 = arith.constant 0 : index
    %11 = vector.load %arg8[%c0_9, %c0_10] : memref<32x32xf32, #tpu.memory_space<vmem>>, vector<32x32xf32>
    %cst_11 = arith.constant dense<0.000000e+00> : vector<8x32xf32>
    %12 = tpu.matmul %10, %11, %cst_11 {dimension_numbers = #tpu.dot_dimension_numbers<[1], [0], [0], [1], [0, 0, 1, 1], [], []>} : vector<8x32xf32>, vector<32x32xf32>, vector<8x32xf32> -> vector<8x32xf32>
    %c0_12 = arith.constant 0 : index
    %c0_13 = arith.constant 0 : index
    %13 = vector.load %arg3[%c0_12, %c0_13] : memref<56x4xf32, #tpu.memory_space<vmem>>, vector<56x4xf32>
    %c0_14 = arith.constant 0 : index
    %c0_15 = arith.constant 0 : index
    %14 = vector.load %arg4[%c0_14, %c0_15] : memref<1x8xf32, #tpu.memory_space<vmem>>, vector<1x8xf32>
    %15 = vector.extract_strided_slice %13 {offsets = [0, 0], sizes = [56, 1], strides = [1, 1]} : vector<56x4xf32> to vector<56x1xf32>
    %cst_16 = arith.constant 1.000000e+00 : f32
    %16 = vector.broadcast %cst_16 : f32 to vector<56x1xf32>
    %17 = arith.divf %16, %15 : vector<56x1xf32>
    %18 = vector.extract_strided_slice %13 {offsets = [0, 1], sizes = [56, 1], strides = [1, 1]} : vector<56x4xf32> to vector<56x1xf32>
    %19 = arith.mulf %18, %17 : vector<56x1xf32>
    %20 = vector.extract_strided_slice %13 {offsets = [0, 2], sizes = [56, 1], strides = [1, 1]} : vector<56x4xf32> to vector<56x1xf32>
    %21 = arith.mulf %20, %17 : vector<56x1xf32>
    %22 = vector.extract_strided_slice %13 {offsets = [0, 3], sizes = [56, 1], strides = [1, 1]} : vector<56x4xf32> to vector<56x1xf32>
    %23 = arith.mulf %22, %17 : vector<56x1xf32>
    %24 = vector.broadcast %15 : vector<56x1xf32> to vector<56x8xf32>
    %25 = vector.broadcast %14 : vector<1x8xf32> to vector<56x8xf32>
    %26 = arith.mulf %24, %25 : vector<56x8xf32>
    %27 = math.sin %26 : vector<56x8xf32>
    %cst_17 = arith.constant 0.816496611 : f32
    %28 = vector.broadcast %cst_17 : f32 to vector<56x8xf32>
    %29 = arith.mulf %28, %27 : vector<56x8xf32>
    %30 = vector.broadcast %17 : vector<56x1xf32> to vector<56x8xf32>
    %31 = arith.mulf %29, %30 : vector<56x8xf32>
    %cst_18 = arith.constant 0.333333343 : f32
    %32 = vector.broadcast %cst_18 : f32 to vector<56x8xf32>
    %33 = arith.mulf %31, %32 : vector<56x8xf32>
    %34 = arith.mulf %33, %33 : vector<56x8xf32>
    %35 = arith.mulf %34, %34 : vector<56x8xf32>
    %36 = arith.mulf %35, %34 : vector<56x8xf32>
    %cst_19 = arith.constant 2.800000e+01 : f32
    %37 = vector.broadcast %cst_19 : f32 to vector<56x8xf32>
    %38 = arith.mulf %37, %36 : vector<56x8xf32>
    %cst_20 = arith.constant 1.000000e+00 : f32
    %39 = vector.broadcast %cst_20 : f32 to vector<56x8xf32>
    %40 = arith.subf %39, %38 : vector<56x8xf32>
    %cst_21 = arith.constant 4.800000e+01 : f32
    %41 = vector.broadcast %cst_21 : f32 to vector<56x8xf32>
    %42 = arith.mulf %41, %36 : vector<56x8xf32>
    %43 = arith.mulf %42, %33 : vector<56x8xf32>
    %44 = arith.addf %40, %43 : vector<56x8xf32>
    %cst_22 = arith.constant 2.100000e+01 : f32
    %45 = vector.broadcast %cst_22 : f32 to vector<56x8xf32>
    %46 = arith.mulf %45, %36 : vector<56x8xf32>
    %47 = arith.mulf %46, %34 : vector<56x8xf32>
    %48 = arith.subf %44, %47 : vector<56x8xf32>
    %cst_23 = arith.constant 3.000000e+00 : f32
    %49 = vector.broadcast %cst_23 : f32 to vector<56x8xf32>
    %50 = arith.cmpf olt, %31, %49 : vector<56x8xf32>
    %51 = arith.extui %50 : vector<56x8xi1> to vector<56x8xi32>
    %52 = arith.sitofp %51 : vector<56x8xi32> to vector<56x8xf32>
    %53 = arith.mulf %48, %52 : vector<56x8xf32>
    %c0_24 = arith.constant 0 : index
    %c0_25 = arith.constant 0 : index
    %54 = vector.load %arg9[%c0_24, %c0_25] : memref<8x64xf32, #tpu.memory_space<vmem>>, vector<8x64xf32>
    %c0_26 = arith.constant 0 : index
    %c0_27 = arith.constant 0 : index
    %55 = vector.load %arg10[%c0_26, %c0_27] : memref<64x64xf32, #tpu.memory_space<vmem>>, vector<64x64xf32>
    %c0_28 = arith.constant 0 : index
    %c0_29 = arith.constant 0 : index
    %56 = vector.load %arg11[%c0_28, %c0_29] : memref<64x64xf32, #tpu.memory_space<vmem>>, vector<64x64xf32>
    %c0_30 = arith.constant 0 : index
    %c0_31 = arith.constant 0 : index
    %57 = vector.load %arg12[%c0_30, %c0_31] : memref<64x160xf32, #tpu.memory_space<vmem>>, vector<64x160xf32>
    %cst_32 = arith.constant dense<0.000000e+00> : vector<56x64xf32>
    %58 = tpu.matmul %53, %54, %cst_32 {dimension_numbers = #tpu.dot_dimension_numbers<[1], [0], [0], [1], [0, 0, 1, 1], [], []>} : vector<56x8xf32>, vector<8x64xf32>, vector<56x64xf32> -> vector<56x64xf32>
    %59 = arith.negf %58 : vector<56x64xf32>
    %60 = math.exp %59 : vector<56x64xf32>
    %cst_33 = arith.constant 1.000000e+00 : f32
    %61 = vector.broadcast %cst_33 : f32 to vector<56x64xf32>
    %62 = arith.addf %61, %60 : vector<56x64xf32>
    %63 = arith.divf %61, %62 : vector<56x64xf32>
    %64 = arith.mulf %58, %63 : vector<56x64xf32>
    %cst_34 = arith.constant dense<0.000000e+00> : vector<56x64xf32>
    %65 = tpu.matmul %64, %55, %cst_34 {dimension_numbers = #tpu.dot_dimension_numbers<[1], [0], [0], [1], [0, 0, 1, 1], [], []>} : vector<56x64xf32>, vector<64x64xf32>, vector<56x64xf32> -> vector<56x64xf32>
    %66 = arith.negf %65 : vector<56x64xf32>
    %67 = math.exp %66 : vector<56x64xf32>
    %cst_35 = arith.constant 1.000000e+00 : f32
    %68 = vector.broadcast %cst_35 : f32 to vector<56x64xf32>
    %69 = arith.addf %68, %67 : vector<56x64xf32>
    %70 = arith.divf %68, %69 : vector<56x64xf32>
    %71 = arith.mulf %65, %70 : vector<56x64xf32>
    %cst_36 = arith.constant dense<0.000000e+00> : vector<56x64xf32>
    %72 = tpu.matmul %71, %56, %cst_36 {dimension_numbers = #tpu.dot_dimension_numbers<[1], [0], [0], [1], [0, 0, 1, 1], [], []>} : vector<56x64xf32>, vector<64x64xf32>, vector<56x64xf32> -> vector<56x64xf32>
    %73 = arith.negf %72 : vector<56x64xf32>
    %74 = math.exp %73 : vector<56x64xf32>
    %cst_37 = arith.constant 1.000000e+00 : f32
    %75 = vector.broadcast %cst_37 : f32 to vector<56x64xf32>
    %76 = arith.addf %75, %74 : vector<56x64xf32>
    %77 = arith.divf %75, %76 : vector<56x64xf32>
    %78 = arith.mulf %72, %77 : vector<56x64xf32>
    %cst_38 = arith.constant dense<0.000000e+00> : vector<56x160xf32>
    %79 = tpu.matmul %78, %57, %cst_38 {dimension_numbers = #tpu.dot_dimension_numbers<[1], [0], [0], [1], [0, 0, 1, 1], [], []>} : vector<56x64xf32>, vector<64x160xf32>, vector<56x160xf32> -> vector<56x160xf32>
    %80 = vector.extract_strided_slice %79 {offsets = [0, 0], sizes = [56, 32], strides = [1, 1]} : vector<56x160xf32> to vector<56x32xf32>
    %81 = vector.extract_strided_slice %79 {offsets = [0, 32], sizes = [56, 32], strides = [1, 1]} : vector<56x160xf32> to vector<56x32xf32>
    %82 = vector.extract_strided_slice %79 {offsets = [0, 64], sizes = [56, 32], strides = [1, 1]} : vector<56x160xf32> to vector<56x32xf32>
    %83 = vector.extract_strided_slice %79 {offsets = [0, 96], sizes = [56, 32], strides = [1, 1]} : vector<56x160xf32> to vector<56x32xf32>
    %84 = vector.extract_strided_slice %79 {offsets = [0, 128], sizes = [56, 32], strides = [1, 1]} : vector<56x160xf32> to vector<56x32xf32>
    %c0_39 = arith.constant 0 : index
    %c0_40 = arith.constant 0 : index
    %85 = vector.load %arg5[%c0_39, %c0_40] : memref<56x8xf32, #tpu.memory_space<vmem>>, vector<56x8xf32>
    %cst_41 = arith.constant dense<0.000000e+00> : vector<56x32xf32>
    %86 = tpu.matmul %85, %3, %cst_41 {dimension_numbers = #tpu.dot_dimension_numbers<[1], [0], [0], [1], [0, 0, 1, 1], [], []>} : vector<56x8xf32>, vector<8x32xf32>, vector<56x32xf32> -> vector<56x32xf32>
    %cst_42 = arith.constant dense<0.000000e+00> : vector<56x32xf32>
    %87 = tpu.matmul %85, %6, %cst_42 {dimension_numbers = #tpu.dot_dimension_numbers<[1], [0], [0], [1], [0, 0, 1, 1], [], []>} : vector<56x8xf32>, vector<8x32xf32>, vector<56x32xf32> -> vector<56x32xf32>
    %cst_43 = arith.constant dense<0.000000e+00> : vector<56x32xf32>
    %88 = tpu.matmul %85, %9, %cst_43 {dimension_numbers = #tpu.dot_dimension_numbers<[1], [0], [0], [1], [0, 0, 1, 1], [], []>} : vector<56x8xf32>, vector<8x32xf32>, vector<56x32xf32> -> vector<56x32xf32>
    %cst_44 = arith.constant dense<0.000000e+00> : vector<56x32xf32>
    %89 = tpu.matmul %85, %12, %cst_44 {dimension_numbers = #tpu.dot_dimension_numbers<[1], [0], [0], [1], [0, 0, 1, 1], [], []>} : vector<56x8xf32>, vector<8x32xf32>, vector<56x32xf32> -> vector<56x32xf32>
    %cst_45 = arith.constant 0.488602519 : f32
    %90 = vector.broadcast %cst_45 : f32 to vector<56x1xf32>
    %91 = arith.mulf %90, %19 : vector<56x1xf32>
    %92 = vector.shape_cast %91 : vector<56x1xf32> to vector<56x1xf32>
    %93 = vector.broadcast %92 : vector<56x1xf32> to vector<56x32xf32>
    %cst_46 = arith.constant 0.488602519 : f32
    %94 = vector.broadcast %cst_46 : f32 to vector<56x1xf32>
    %95 = arith.mulf %94, %21 : vector<56x1xf32>
    %96 = vector.shape_cast %95 : vector<56x1xf32> to vector<56x1xf32>
    %97 = vector.broadcast %96 : vector<56x1xf32> to vector<56x32xf32>
    %cst_47 = arith.constant 0.488602519 : f32
    %98 = vector.broadcast %cst_47 : f32 to vector<56x1xf32>
    %99 = arith.mulf %98, %23 : vector<56x1xf32>
    %100 = vector.shape_cast %99 : vector<56x1xf32> to vector<56x1xf32>
    %101 = vector.broadcast %100 : vector<56x1xf32> to vector<56x32xf32>
    %102 = arith.mulf %80, %86 : vector<56x32xf32>
    %cst_48 = arith.constant 0.282094806 : f32
    %103 = vector.broadcast %cst_48 : f32 to vector<56x32xf32>
    %104 = arith.mulf %102, %103 : vector<56x32xf32>
    %105 = arith.mulf %87, %93 : vector<56x32xf32>
    %106 = arith.mulf %88, %97 : vector<56x32xf32>
    %107 = arith.addf %105, %106 : vector<56x32xf32>
    %108 = arith.mulf %89, %101 : vector<56x32xf32>
    %109 = arith.addf %107, %108 : vector<56x32xf32>
    %110 = arith.mulf %81, %109 : vector<56x32xf32>
    %cst_49 = arith.constant 0.577350259 : f32
    %111 = vector.broadcast %cst_49 : f32 to vector<56x32xf32>
    %112 = arith.mulf %110, %111 : vector<56x32xf32>
    %113 = arith.mulf %82, %86 : vector<56x32xf32>
    %114 = arith.mulf %113, %93 : vector<56x32xf32>
    %115 = arith.mulf %113, %97 : vector<56x32xf32>
    %116 = arith.mulf %113, %101 : vector<56x32xf32>
    %cst_50 = arith.constant 0.282094806 : f32
    %117 = vector.broadcast %cst_50 : f32 to vector<56x32xf32>
    %118 = arith.mulf %83, %117 : vector<56x32xf32>
    %119 = arith.mulf %118, %87 : vector<56x32xf32>
    %120 = arith.mulf %118, %88 : vector<56x32xf32>
    %121 = arith.mulf %118, %89 : vector<56x32xf32>
    %122 = arith.mulf %88, %101 : vector<56x32xf32>
    %123 = arith.mulf %89, %97 : vector<56x32xf32>
    %124 = arith.subf %122, %123 : vector<56x32xf32>
    %125 = arith.mulf %89, %93 : vector<56x32xf32>
    %126 = arith.mulf %87, %101 : vector<56x32xf32>
    %127 = arith.subf %125, %126 : vector<56x32xf32>
    %128 = arith.mulf %87, %97 : vector<56x32xf32>
    %129 = arith.mulf %88, %93 : vector<56x32xf32>
    %130 = arith.subf %128, %129 : vector<56x32xf32>
    %cst_51 = arith.constant 0.707106769 : f32
    %131 = vector.broadcast %cst_51 : f32 to vector<56x32xf32>
    %132 = arith.mulf %84, %131 : vector<56x32xf32>
    %133 = arith.mulf %132, %124 : vector<56x32xf32>
    %134 = arith.mulf %132, %127 : vector<56x32xf32>
    %135 = arith.mulf %132, %130 : vector<56x32xf32>
    %c0_52 = arith.constant 0 : index
    %c0_53 = arith.constant 0 : index
    %136 = vector.load %arg6[%c0_52, %c0_53] : memref<8x56xf32, #tpu.memory_space<vmem>>, vector<8x56xf32>
    %c0_54 = arith.constant 0 : index
    %c0_55 = arith.constant 0 : index
    %137 = vector.load %arg13[%c0_54, %c0_55] : memref<64x32xf32, #tpu.memory_space<vmem>>, vector<64x32xf32>
    %c0_56 = arith.constant 0 : index
    %c0_57 = arith.constant 0 : index
    %138 = vector.load %arg14[%c0_56, %c0_57] : memref<96x32xf32, #tpu.memory_space<vmem>>, vector<96x32xf32>
    %cst_58 = arith.constant dense<0.000000e+00> : vector<8x32xf32>
    %139 = tpu.matmul %136, %104, %cst_58 {dimension_numbers = #tpu.dot_dimension_numbers<[1], [0], [0], [1], [0, 0, 1, 1], [], []>} : vector<8x56xf32>, vector<56x32xf32>, vector<8x32xf32> -> vector<8x32xf32>
    %140 = vector.extract_strided_slice %137 {offsets = [0, 0], sizes = [32, 32], strides = [1, 1]} : vector<64x32xf32> to vector<32x32xf32>
    %cst_59 = arith.constant dense<0.000000e+00> : vector<8x32xf32>
    %141 = tpu.matmul %139, %140, %cst_59 {dimension_numbers = #tpu.dot_dimension_numbers<[1], [0], [0], [1], [0, 0, 1, 1], [], []>} : vector<8x32xf32>, vector<32x32xf32>, vector<8x32xf32> -> vector<8x32xf32>
    %cst_60 = arith.constant dense<0.000000e+00> : vector<8x32xf32>
    %142 = tpu.matmul %136, %112, %cst_60 {dimension_numbers = #tpu.dot_dimension_numbers<[1], [0], [0], [1], [0, 0, 1, 1], [], []>} : vector<8x56xf32>, vector<56x32xf32>, vector<8x32xf32> -> vector<8x32xf32>
    %143 = vector.extract_strided_slice %137 {offsets = [32, 0], sizes = [32, 32], strides = [1, 1]} : vector<64x32xf32> to vector<32x32xf32>
    %cst_61 = arith.constant dense<0.000000e+00> : vector<8x32xf32>
    %144 = tpu.matmul %142, %143, %cst_61 {dimension_numbers = #tpu.dot_dimension_numbers<[1], [0], [0], [1], [0, 0, 1, 1], [], []>} : vector<8x32xf32>, vector<32x32xf32>, vector<8x32xf32> -> vector<8x32xf32>
    %145 = arith.addf %141, %144 : vector<8x32xf32>
    %cst_62 = arith.constant dense<0.000000e+00> : vector<8x32xf32>
    %146 = tpu.matmul %136, %114, %cst_62 {dimension_numbers = #tpu.dot_dimension_numbers<[1], [0], [0], [1], [0, 0, 1, 1], [], []>} : vector<8x56xf32>, vector<56x32xf32>, vector<8x32xf32> -> vector<8x32xf32>
    %147 = vector.extract_strided_slice %138 {offsets = [0, 0], sizes = [32, 32], strides = [1, 1]} : vector<96x32xf32> to vector<32x32xf32>
    %cst_63 = arith.constant dense<0.000000e+00> : vector<8x32xf32>
    %148 = tpu.matmul %146, %147, %cst_63 {dimension_numbers = #tpu.dot_dimension_numbers<[1], [0], [0], [1], [0, 0, 1, 1], [], []>} : vector<8x32xf32>, vector<32x32xf32>, vector<8x32xf32> -> vector<8x32xf32>
    %cst_64 = arith.constant dense<0.000000e+00> : vector<8x32xf32>
    %149 = tpu.matmul %136, %119, %cst_64 {dimension_numbers = #tpu.dot_dimension_numbers<[1], [0], [0], [1], [0, 0, 1, 1], [], []>} : vector<8x56xf32>, vector<56x32xf32>, vector<8x32xf32> -> vector<8x32xf32>
    %150 = vector.extract_strided_slice %138 {offsets = [32, 0], sizes = [32, 32], strides = [1, 1]} : vector<96x32xf32> to vector<32x32xf32>
    %cst_65 = arith.constant dense<0.000000e+00> : vector<8x32xf32>
    %151 = tpu.matmul %149, %150, %cst_65 {dimension_numbers = #tpu.dot_dimension_numbers<[1], [0], [0], [1], [0, 0, 1, 1], [], []>} : vector<8x32xf32>, vector<32x32xf32>, vector<8x32xf32> -> vector<8x32xf32>
    %152 = arith.addf %148, %151 : vector<8x32xf32>
    %cst_66 = arith.constant dense<0.000000e+00> : vector<8x32xf32>
    %153 = tpu.matmul %136, %133, %cst_66 {dimension_numbers = #tpu.dot_dimension_numbers<[1], [0], [0], [1], [0, 0, 1, 1], [], []>} : vector<8x56xf32>, vector<56x32xf32>, vector<8x32xf32> -> vector<8x32xf32>
    %154 = vector.extract_strided_slice %138 {offsets = [64, 0], sizes = [32, 32], strides = [1, 1]} : vector<96x32xf32> to vector<32x32xf32>
    %cst_67 = arith.constant dense<0.000000e+00> : vector<8x32xf32>
    %155 = tpu.matmul %153, %154, %cst_67 {dimension_numbers = #tpu.dot_dimension_numbers<[1], [0], [0], [1], [0, 0, 1, 1], [], []>} : vector<8x32xf32>, vector<32x32xf32>, vector<8x32xf32> -> vector<8x32xf32>
    %156 = arith.addf %152, %155 : vector<8x32xf32>
    %cst_68 = arith.constant dense<0.000000e+00> : vector<8x32xf32>
    %157 = tpu.matmul %136, %115, %cst_68 {dimension_numbers = #tpu.dot_dimension_numbers<[1], [0], [0], [1], [0, 0, 1, 1], [], []>} : vector<8x56xf32>, vector<56x32xf32>, vector<8x32xf32> -> vector<8x32xf32>
    %158 = vector.extract_strided_slice %138 {offsets = [0, 0], sizes = [32, 32], strides = [1, 1]} : vector<96x32xf32> to vector<32x32xf32>
    %cst_69 = arith.constant dense<0.000000e+00> : vector<8x32xf32>
    %159 = tpu.matmul %157, %158, %cst_69 {dimension_numbers = #tpu.dot_dimension_numbers<[1], [0], [0], [1], [0, 0, 1, 1], [], []>} : vector<8x32xf32>, vector<32x32xf32>, vector<8x32xf32> -> vector<8x32xf32>
    %cst_70 = arith.constant dense<0.000000e+00> : vector<8x32xf32>
    %160 = tpu.matmul %136, %120, %cst_70 {dimension_numbers = #tpu.dot_dimension_numbers<[1], [0], [0], [1], [0, 0, 1, 1], [], []>} : vector<8x56xf32>, vector<56x32xf32>, vector<8x32xf32> -> vector<8x32xf32>
    %161 = vector.extract_strided_slice %138 {offsets = [32, 0], sizes = [32, 32], strides = [1, 1]} : vector<96x32xf32> to vector<32x32xf32>
    %cst_71 = arith.constant dense<0.000000e+00> : vector<8x32xf32>
    %162 = tpu.matmul %160, %161, %cst_71 {dimension_numbers = #tpu.dot_dimension_numbers<[1], [0], [0], [1], [0, 0, 1, 1], [], []>} : vector<8x32xf32>, vector<32x32xf32>, vector<8x32xf32> -> vector<8x32xf32>
    %163 = arith.addf %159, %162 : vector<8x32xf32>
    %cst_72 = arith.constant dense<0.000000e+00> : vector<8x32xf32>
    %164 = tpu.matmul %136, %134, %cst_72 {dimension_numbers = #tpu.dot_dimension_numbers<[1], [0], [0], [1], [0, 0, 1, 1], [], []>} : vector<8x56xf32>, vector<56x32xf32>, vector<8x32xf32> -> vector<8x32xf32>
    %165 = vector.extract_strided_slice %138 {offsets = [64, 0], sizes = [32, 32], strides = [1, 1]} : vector<96x32xf32> to vector<32x32xf32>
    %cst_73 = arith.constant dense<0.000000e+00> : vector<8x32xf32>
    %166 = tpu.matmul %164, %165, %cst_73 {dimension_numbers = #tpu.dot_dimension_numbers<[1], [0], [0], [1], [0, 0, 1, 1], [], []>} : vector<8x32xf32>, vector<32x32xf32>, vector<8x32xf32> -> vector<8x32xf32>
    %167 = arith.addf %163, %166 : vector<8x32xf32>
    %cst_74 = arith.constant dense<0.000000e+00> : vector<8x32xf32>
    %168 = tpu.matmul %136, %116, %cst_74 {dimension_numbers = #tpu.dot_dimension_numbers<[1], [0], [0], [1], [0, 0, 1, 1], [], []>} : vector<8x56xf32>, vector<56x32xf32>, vector<8x32xf32> -> vector<8x32xf32>
    %169 = vector.extract_strided_slice %138 {offsets = [0, 0], sizes = [32, 32], strides = [1, 1]} : vector<96x32xf32> to vector<32x32xf32>
    %cst_75 = arith.constant dense<0.000000e+00> : vector<8x32xf32>
    %170 = tpu.matmul %168, %169, %cst_75 {dimension_numbers = #tpu.dot_dimension_numbers<[1], [0], [0], [1], [0, 0, 1, 1], [], []>} : vector<8x32xf32>, vector<32x32xf32>, vector<8x32xf32> -> vector<8x32xf32>
    %cst_76 = arith.constant dense<0.000000e+00> : vector<8x32xf32>
    %171 = tpu.matmul %136, %121, %cst_76 {dimension_numbers = #tpu.dot_dimension_numbers<[1], [0], [0], [1], [0, 0, 1, 1], [], []>} : vector<8x56xf32>, vector<56x32xf32>, vector<8x32xf32> -> vector<8x32xf32>
    %172 = vector.extract_strided_slice %138 {offsets = [32, 0], sizes = [32, 32], strides = [1, 1]} : vector<96x32xf32> to vector<32x32xf32>
    %cst_77 = arith.constant dense<0.000000e+00> : vector<8x32xf32>
    %173 = tpu.matmul %171, %172, %cst_77 {dimension_numbers = #tpu.dot_dimension_numbers<[1], [0], [0], [1], [0, 0, 1, 1], [], []>} : vector<8x32xf32>, vector<32x32xf32>, vector<8x32xf32> -> vector<8x32xf32>
    %174 = arith.addf %170, %173 : vector<8x32xf32>
    %cst_78 = arith.constant dense<0.000000e+00> : vector<8x32xf32>
    %175 = tpu.matmul %136, %135, %cst_78 {dimension_numbers = #tpu.dot_dimension_numbers<[1], [0], [0], [1], [0, 0, 1, 1], [], []>} : vector<8x56xf32>, vector<56x32xf32>, vector<8x32xf32> -> vector<8x32xf32>
    %176 = vector.extract_strided_slice %138 {offsets = [64, 0], sizes = [32, 32], strides = [1, 1]} : vector<96x32xf32> to vector<32x32xf32>
    %cst_79 = arith.constant dense<0.000000e+00> : vector<8x32xf32>
    %177 = tpu.matmul %175, %176, %cst_79 {dimension_numbers = #tpu.dot_dimension_numbers<[1], [0], [0], [1], [0, 0, 1, 1], [], []>} : vector<8x32xf32>, vector<32x32xf32>, vector<8x32xf32> -> vector<8x32xf32>
    %178 = arith.addf %174, %177 : vector<8x32xf32>
    %c0_80 = arith.constant 0 : index
    %c0_81 = arith.constant 0 : index
    %179 = vector.load %arg2[%c0_80, %c0_81] : memref<8x4xf32, #tpu.memory_space<vmem>>, vector<8x4xf32>
    %c0_82 = arith.constant 0 : index
    %c0_83 = arith.constant 0 : index
    %180 = vector.load %arg15[%c0_82, %c0_83] : memref<4x288xf32, #tpu.memory_space<vmem>>, vector<4x288xf32>
    %c0_84 = arith.constant 0 : index
    %c0_85 = arith.constant 0 : index
    %181 = vector.load %arg16[%c0_84, %c0_85] : memref<32x32xf32, #tpu.memory_space<vmem>>, vector<32x32xf32>
    %c0_86 = arith.constant 0 : index
    %c0_87 = arith.constant 0 : index
    %182 = vector.load %arg17[%c0_86, %c0_87] : memref<32x32xf32, #tpu.memory_space<vmem>>, vector<32x32xf32>
    %cst_88 = arith.constant dense<0.000000e+00> : vector<8x288xf32>
    %183 = tpu.matmul %179, %180, %cst_88 {dimension_numbers = #tpu.dot_dimension_numbers<[1], [0], [0], [1], [0, 0, 1, 1], [], []>} : vector<8x4xf32>, vector<4x288xf32>, vector<8x288xf32> -> vector<8x288xf32>
    %184 = arith.mulf %156, %156 : vector<8x32xf32>
    %185 = arith.mulf %167, %167 : vector<8x32xf32>
    %186 = arith.addf %184, %185 : vector<8x32xf32>
    %187 = arith.mulf %178, %178 : vector<8x32xf32>
    %188 = arith.addf %186, %187 : vector<8x32xf32>
    %189 = arith.mulf %145, %145 : vector<8x32xf32>
    %190 = vector.extract_strided_slice %183 {offsets = [0, 0], sizes = [8, 32], strides = [1, 1]} : vector<8x288xf32> to vector<8x32xf32>
    %191 = vector.extract_strided_slice %183 {offsets = [0, 32], sizes = [8, 32], strides = [1, 1]} : vector<8x288xf32> to vector<8x32xf32>
    %192 = vector.extract_strided_slice %183 {offsets = [0, 64], sizes = [8, 32], strides = [1, 1]} : vector<8x288xf32> to vector<8x32xf32>
    %193 = vector.extract_strided_slice %183 {offsets = [0, 96], sizes = [8, 32], strides = [1, 1]} : vector<8x288xf32> to vector<8x32xf32>
    %194 = vector.extract_strided_slice %183 {offsets = [0, 128], sizes = [8, 32], strides = [1, 1]} : vector<8x288xf32> to vector<8x32xf32>
    %195 = vector.extract_strided_slice %183 {offsets = [0, 160], sizes = [8, 32], strides = [1, 1]} : vector<8x288xf32> to vector<8x32xf32>
    %196 = vector.extract_strided_slice %183 {offsets = [0, 192], sizes = [8, 32], strides = [1, 1]} : vector<8x288xf32> to vector<8x32xf32>
    %197 = vector.extract_strided_slice %183 {offsets = [0, 224], sizes = [8, 32], strides = [1, 1]} : vector<8x288xf32> to vector<8x32xf32>
    %198 = vector.extract_strided_slice %183 {offsets = [0, 256], sizes = [8, 32], strides = [1, 1]} : vector<8x288xf32> to vector<8x32xf32>
    %199 = arith.mulf %190, %145 : vector<8x32xf32>
    %200 = arith.mulf %191, %189 : vector<8x32xf32>
    %201 = arith.addf %199, %200 : vector<8x32xf32>
    %202 = arith.mulf %192, %188 : vector<8x32xf32>
    %203 = arith.addf %201, %202 : vector<8x32xf32>
    %204 = arith.mulf %193, %189 : vector<8x32xf32>
    %205 = arith.mulf %204, %145 : vector<8x32xf32>
    %206 = arith.addf %203, %205 : vector<8x32xf32>
    %207 = arith.mulf %194, %145 : vector<8x32xf32>
    %208 = arith.mulf %207, %188 : vector<8x32xf32>
    %209 = arith.addf %206, %208 : vector<8x32xf32>
    %210 = arith.mulf %196, %145 : vector<8x32xf32>
    %211 = arith.addf %195, %210 : vector<8x32xf32>
    %212 = arith.mulf %197, %189 : vector<8x32xf32>
    %213 = arith.addf %211, %212 : vector<8x32xf32>
    %214 = arith.mulf %198, %188 : vector<8x32xf32>
    %215 = arith.addf %213, %214 : vector<8x32xf32>
    %216 = arith.mulf %215, %156 : vector<8x32xf32>
    %217 = arith.mulf %215, %167 : vector<8x32xf32>
    %218 = arith.mulf %215, %178 : vector<8x32xf32>
    %cst_89 = arith.constant dense<0.000000e+00> : vector<8x32xf32>
    %219 = tpu.matmul %209, %181, %cst_89 {dimension_numbers = #tpu.dot_dimension_numbers<[1], [0], [0], [1], [0, 0, 1, 1], [], []>} : vector<8x32xf32>, vector<32x32xf32>, vector<8x32xf32> -> vector<8x32xf32>
    %c0_90 = arith.constant 0 : index
    %c0_91 = arith.constant 0 : index
    %220 = vector.load %arg18[%c0_90, %c0_91] : memref<8x128xf32, #tpu.memory_space<vmem>>, vector<8x32xf32>
    tpu.vector_store %arg18[%c0_90, %c0_91], %219 {strides = array<i32>} : memref<8x128xf32, #tpu.memory_space<vmem>>, vector<8x32xf32>,
    %cst_92 = arith.constant dense<0.000000e+00> : vector<8x32xf32>
    %221 = tpu.matmul %216, %182, %cst_92 {dimension_numbers = #tpu.dot_dimension_numbers<[1], [0], [0], [1], [0, 0, 1, 1], [], []>} : vector<8x32xf32>, vector<32x32xf32>, vector<8x32xf32> -> vector<8x32xf32>
    %c0_93 = arith.constant 0 : index
    %c32 = arith.constant 32 : index
    %222 = vector.load %arg18[%c0_93, %c32] : memref<8x128xf32, #tpu.memory_space<vmem>>, vector<8x32xf32>
    tpu.vector_store %arg18[%c0_93, %c32], %221 {strides = array<i32>} : memref<8x128xf32, #tpu.memory_space<vmem>>, vector<8x32xf32>,
    %cst_94 = arith.constant dense<0.000000e+00> : vector<8x32xf32>
    %223 = tpu.matmul %217, %182, %cst_94 {dimension_numbers = #tpu.dot_dimension_numbers<[1], [0], [0], [1], [0, 0, 1, 1], [], []>} : vector<8x32xf32>, vector<32x32xf32>, vector<8x32xf32> -> vector<8x32xf32>
    %c0_95 = arith.constant 0 : index
    %c64 = arith.constant 64 : index
    %224 = vector.load %arg18[%c0_95, %c64] : memref<8x128xf32, #tpu.memory_space<vmem>>, vector<8x32xf32>
    tpu.vector_store %arg18[%c0_95, %c64], %223 {strides = array<i32>} : memref<8x128xf32, #tpu.memory_space<vmem>>, vector<8x32xf32>,
    %cst_96 = arith.constant dense<0.000000e+00> : vector<8x32xf32>
    %225 = tpu.matmul %218, %182, %cst_96 {dimension_numbers = #tpu.dot_dimension_numbers<[1], [0], [0], [1], [0, 0, 1, 1], [], []>} : vector<8x32xf32>, vector<32x32xf32>, vector<8x32xf32> -> vector<8x32xf32>
    %c0_97 = arith.constant 0 : index
    %c96 = arith.constant 96 : index
    %226 = vector.load %arg18[%c0_97, %c96] : memref<8x128xf32, #tpu.memory_space<vmem>>, vector<8x32xf32>
    tpu.vector_store %arg18[%c0_97, %c96], %225 {strides = array<i32>} : memref<8x128xf32, #tpu.memory_space<vmem>>, vector<8x32xf32>,
    return
  }
  func.func @transform_0(%arg0: i32) -> (i32, i32) {
    %c0_i32 = arith.constant 0 : i32
    %c0_i32_0 = arith.constant 0 : i32
    %c0_i32_1 = arith.constant 0 : i32
    return %c0_i32, %c0_i32_0 : i32, i32
  }
  func.func @transform_1(%arg0: i32) -> (i32, i32) {
    %c0_i32 = arith.constant 0 : i32
    %c0_i32_0 = arith.constant 0 : i32
    %c0_i32_1 = arith.constant 0 : i32
    return %c0_i32, %c0_i32_0 : i32, i32
  }
  func.func @transform_2(%arg0: i32) -> (i32, i32) {
    %c0_i32 = arith.constant 0 : i32
    %c0_i32_0 = arith.constant 0 : i32
    %c0_i32_1 = arith.constant 0 : i32
    return %c0_i32, %c0_i32_0 : i32, i32
  }
  func.func @transform_3(%arg0: i32) -> (i32, i32) {
    %c0_i32 = arith.constant 0 : i32
    %c0_i32_0 = arith.constant 0 : i32
    %c0_i32_1 = arith.constant 0 : i32
    return %c0_i32, %c0_i32_0 : i32, i32
  }
  func.func @transform_4(%arg0: i32) -> (i32, i32) {
    %c0_i32 = arith.constant 0 : i32
    %c0_i32_0 = arith.constant 0 : i32
    %c0_i32_1 = arith.constant 0 : i32
    return %c0_i32, %c0_i32_0 : i32, i32
  }
  func.func @transform_5(%arg0: i32) -> (i32, i32) {
    %c0_i32 = arith.constant 0 : i32
    %c0_i32_0 = arith.constant 0 : i32
    %c0_i32_1 = arith.constant 0 : i32
    return %c0_i32, %c0_i32_0 : i32, i32
  }
  func.func @transform_6(%arg0: i32) -> (i32, i32) {
    %c0_i32 = arith.constant 0 : i32
    %c0_i32_0 = arith.constant 0 : i32
    %c0_i32_1 = arith.constant 0 : i32
    return %c0_i32, %c0_i32_0 : i32, i32
  }
  func.func @transform_7(%arg0: i32) -> (i32, i32) {
    %c0_i32 = arith.constant 0 : i32
    %c0_i32_0 = arith.constant 0 : i32
    %c0_i32_1 = arith.constant 0 : i32
    return %c0_i32, %c0_i32_0 : i32, i32
  }
  func.func @transform_8(%arg0: i32) -> (i32, i32) {
    %c0_i32 = arith.constant 0 : i32
    %c0_i32_0 = arith.constant 0 : i32
    %c0_i32_1 = arith.constant 0 : i32
    return %c0_i32, %c0_i32_0 : i32, i32
  }
  func.func @transform_9(%arg0: i32) -> (i32, i32) {
    %c0_i32 = arith.constant 0 : i32
    %c0_i32_0 = arith.constant 0 : i32
    %c0_i32_1 = arith.constant 0 : i32
    return %c0_i32, %c0_i32_0 : i32, i32
  }
  func.func @transform_10(%arg0: i32) -> (i32, i32) {
    %c0_i32 = arith.constant 0 : i32
    %c0_i32_0 = arith.constant 0 : i32
    %c0_i32_1 = arith.constant 0 : i32
    return %c0_i32, %c0_i32_0 : i32, i32
  }
  func.func @transform_11(%arg0: i32) -> (i32, i32) {
    %c0_i32 = arith.constant 0 : i32
    %c0_i32_0 = arith.constant 0 : i32
    %c0_i32_1 = arith.constant 0 : i32
    return %c0_i32, %c0_i32_0 : i32, i32
  }
  func.func @transform_12(%arg0: i32) -> (i32, i32) {
    %c0_i32 = arith.constant 0 : i32
    %c0_i32_0 = arith.constant 0 : i32
    %c0_i32_1 = arith.constant 0 : i32
    return %c0_i32, %c0_i32_0 : i32, i32
  }
  func.func @transform_13(%arg0: i32) -> (i32, i32) {
    %c0_i32 = arith.constant 0 : i32
    %c0_i32_0 = arith.constant 0 : i32
    %c0_i32_1 = arith.constant 0 : i32
    return %c0_i32, %c0_i32_0 : i32, i32
  }
  func.func @transform_14(%arg0: i32) -> (i32, i32) {
    %c0_i32 = arith.constant 0 : i32
    %c0_i32_0 = arith.constant 0 : i32
    %c0_i32_1 = arith.constant 0 : i32
    return %c0_i32, %c0_i32_0 : i32, i32
  }
  func.func @transform_15(%arg0: i32) -> (i32, i32) {
    %c0_i32 = arith.constant 0 : i32
    %c0_i32_0 = arith.constant 0 : i32
    %c0_i32_1 = arith.constant 0 : i32
    return %c0_i32, %c0_i32_0 : i32, i32
  }
  func.func @transform_16(%arg0: i32) -> (i32, i32) {
    %c0_i32 = arith.constant 0 : i32
    %c0_i32_0 = arith.constant 0 : i32
    %c0_i32_1 = arith.constant 0 : i32
    return %c0_i32, %c0_i32_0 : i32, i32
  }
  func.func @transform_17(%arg0: i32) -> (i32, i32) {
    %c0_i32 = arith.constant 0 : i32
    %c0_i32_0 = arith.constant 0 : i32
    %c0_i32_1 = arith.constant 0 : i32
    return %c0_i32, %c0_i32_0 : i32, i32
  }
}

module attributes {stable_mosaic.version = 11 : i64} {
  func.func @_final_kernel(%arg0: i32, %arg1: memref<8x128xf32, #tpu.memory_space<vmem>>, %arg2: memref<32x16xf32, #tpu.memory_space<vmem>>, %arg3: memref<16x1xf32, #tpu.memory_space<vmem>>, %arg4: memref<1x1xf32, #tpu.memory_space<vmem>>) attributes {dimension_semantics = [#tpu.dimension_semantics<arbitrary>], iteration_bounds = array<i64: 1>, scalar_prefetch = 0 : i64, scratch_operands = 0 : i64, tpu.core_type = #tpu.core_type<tc>, window_params = [{pipeline_mode = #tpu.pipeline_mode<synchronous>, transform_indices = @transform_0, window_bounds = array<i64: 8, 128>}, {pipeline_mode = #tpu.pipeline_mode<synchronous>, transform_indices = @transform_1, window_bounds = array<i64: 32, 16>}, {pipeline_mode = #tpu.pipeline_mode<synchronous>, transform_indices = @transform_2, window_bounds = array<i64: 16, 1>}, {pipeline_mode = #tpu.pipeline_mode<synchronous>, transform_indices = @transform_3, window_bounds = array<i64: 1, 1>}]} {
    %c0 = arith.constant 0 : index
    %c0_0 = arith.constant 0 : index
    %0 = vector.load %arg1[%c0, %c0_0] : memref<8x128xf32, #tpu.memory_space<vmem>>, vector<8x32xf32>
    %c0_1 = arith.constant 0 : index
    %c0_2 = arith.constant 0 : index
    %1 = vector.load %arg2[%c0_1, %c0_2] : memref<32x16xf32, #tpu.memory_space<vmem>>, vector<32x16xf32>
    %cst = arith.constant dense<0.000000e+00> : vector<8x16xf32>
    %2 = tpu.matmul %0, %1, %cst {dimension_numbers = #tpu.dot_dimension_numbers<[1], [0], [0], [1], [0, 0, 1, 1], [], []>} : vector<8x32xf32>, vector<32x16xf32>, vector<8x16xf32> -> vector<8x16xf32>
    %3 = arith.negf %2 : vector<8x16xf32>
    %4 = math.exp %3 : vector<8x16xf32>
    %cst_3 = arith.constant 1.000000e+00 : f32
    %5 = vector.broadcast %cst_3 : f32 to vector<8x16xf32>
    %6 = arith.addf %5, %4 : vector<8x16xf32>
    %7 = arith.divf %5, %6 : vector<8x16xf32>
    %8 = arith.mulf %2, %7 : vector<8x16xf32>
    %c0_4 = arith.constant 0 : index
    %c0_5 = arith.constant 0 : index
    %9 = vector.load %arg3[%c0_4, %c0_5] : memref<16x1xf32, #tpu.memory_space<vmem>>, vector<16x1xf32>
    %cst_6 = arith.constant dense<0.000000e+00> : vector<8x1xf32>
    %10 = tpu.matmul %8, %9, %cst_6 {dimension_numbers = #tpu.dot_dimension_numbers<[1], [0], [0], [1], [0, 0, 1, 1], [], []>} : vector<8x16xf32>, vector<16x1xf32>, vector<8x1xf32> -> vector<8x1xf32>
    %11 = vector.shape_cast %10 : vector<8x1xf32> to vector<1x8x1xf32>
    %cst_7 = arith.constant dense<0.000000e+00> : vector<1xf32>
    %12 = vector.multi_reduction <add>, %11, %cst_7 [1, 2] : vector<1x8x1xf32> to vector<1xf32>
    %13 = vector.shape_cast %12 : vector<1xf32> to vector<1x1x1xf32>
    %14 = vector.extract %13[0, 0, 0] : f32 from vector<1x1x1xf32>
    %15 = vector.broadcast %14 : f32 to vector<1x1xf32>
    %c0_8 = arith.constant 0 : index
    %c0_9 = arith.constant 0 : index
    %16 = vector.load %arg4[%c0_8, %c0_9] : memref<1x1xf32, #tpu.memory_space<vmem>>, vector<1x1xf32>
    tpu.vector_store %arg4[%c0_8, %c0_9], %15 {strides = array<i32>} : memref<1x1xf32, #tpu.memory_space<vmem>>, vector<1x1xf32>,
    return
  }
  func.func @transform_0(%arg0: i32) -> (i32, i32) {
    %c0_i32 = arith.constant 0 : i32
    %c0_i32_0 = arith.constant 0 : i32
    %c0_i32_1 = arith.constant 0 : i32
    return %c0_i32, %c0_i32_0 : i32, i32
  }
  func.func @transform_1(%arg0: i32) -> (i32, i32) {
    %c0_i32 = arith.constant 0 : i32
    %c0_i32_0 = arith.constant 0 : i32
    %c0_i32_1 = arith.constant 0 : i32
    return %c0_i32, %c0_i32_0 : i32, i32
  }
  func.func @transform_2(%arg0: i32) -> (i32, i32) {
    %c0_i32 = arith.constant 0 : i32
    %c0_i32_0 = arith.constant 0 : i32
    %c0_i32_1 = arith.constant 0 : i32
    return %c0_i32, %c0_i32_0 : i32, i32
  }
  func.func @transform_3(%arg0: i32) -> (i32, i32) {
    %c0_i32 = arith.constant 0 : i32
    %c0_i32_0 = arith.constant 0 : i32
    %c0_i32_1 = arith.constant 0 : i32
    return %c0_i32, %c0_i32_0 : i32, i32
  }
}

</mosaic_0001>

<llo_original>
// kernel: mymace_forward.5
$region0: #{mymace_forward.5}
  #allocation0 [shape = 'u32[]', space=smem, size = 0x4, offset = 0x4, fixed_abs, tag = 'smem constant byte address 0x4 - core index']
  #allocation1 [shape = 'u32[144,128]{1,0:T(1,128)}', space=vmem, size = 0x12000, scoped, tag = 'internal scratch']
  %s0 = inlined_call_operand.vmem [shape: f32[8,128], index: 0, kind: input, shape index: {}]
  %s1 = inlined_call_operand.vmem [shape: f32[32,16], index: 1, kind: input, shape index: {}]
  %s2 = inlined_call_operand.vmem [shape: f32[16,1], index: 2, kind: input, shape index: {}]
  %s3 = inlined_call_operand.hbm [shape: f32[1,1], index: 3, kind: output, shape index: {}]
  %s4 = sld [smem:[#allocation0]]
  $region22: #{mymace_forward.5} parent=0
    _
  %s6 = ssub.s32 1, %s4
  %s7 = scalar_select 0, %s6, %s4
  $region1: #{mymace_forward.5} parent=0
    #allocation2 [shape = 'u8[512]{0}', space=vmem, size = 0x400, scoped, tag = 'output window, operand 0, single buffered']
    #allocation3 [shape = 's32[1]{0}', space=sflag, size = 0x4, scoped, tag = 'scoped memory for mymace_forward.5']
    %8 = vsyncpa [#allocation3], 0
    // Predicated region
    $region2: #{mymace_forward.5} parent=1 // pred_check
      _
    $region3: #{mymace_forward.5} parent=1 // pred_check_branch
      %10 = sbr.rel (0) target = $region5
    $region4: #{mymace_forward.5} parent=1 // pred_region
      _
    $region5: #{mymace_forward.5} parent=1 // pred_fallthru
      _
    // Predicated region
    $region6: #{mymace_forward.5} parent=1 // pred_check
      _
    $region7: #{mymace_forward.5} parent=1 // pred_check_branch
      %12 = sbr.rel (0) target = $region9
    $region8: #{mymace_forward.5} parent=1 // pred_region
      _
    $region9: #{mymace_forward.5} parent=1 // pred_fallthru
      _
    // Predicated region
    $region10: #{mymace_forward.5} parent=1 // pred_check
      _
    $region11: #{mymace_forward.5} parent=1 // pred_check_branch
      %14 = sbr.rel (0) target = $region13
    $region12: #{mymace_forward.5} parent=1 // pred_region
      _
    $region13: #{mymace_forward.5} parent=1 // pred_fallthru
      _
    %v15 = vld [vmem:[%s0] sm:$0xff]
    %v16 = vld [vmem:[%s1] sm:$0xff]
    %v17 = vld [vmem:[%s1 + $0x8] sm:$0xff]
    %v18 = vld [vmem:[%s1 + $0x10] sm:$0xff]
    %v19 = vld [vmem:[%s1 + $0x18] sm:$0xff]
    %vm20 = vcmask 261120
    %v22 = vsel %vm20, %v15, 0
    %24 = vmatprep.subr.mxu0 0.0
    %25 = vmatpush1.msra.mxu0 %v16
    %26 = vmatprep.subr.mxu0 0.0
    %27 = vmatpush1.msra.mxu0 %v17
    %28 = vmatprep.subr.mxu0 0.0
    %29 = vmatpush1.msra.mxu0 %v18
    %30 = vmatprep.subr.mxu0 0.0
    %31 = vmatpush1.msra.mxu0 %v19
    %32 = vmatprep.subr.mxu0 0.0
    %33 = vmatpush1.msra.mxu0 0.0
    %34 = vmatprep.subr.mxu0 0.0
    %35 = vmatpush1.msra.mxu0 0.0
    %36 = vmatprep.subr.mxu0 0.0
    %37 = vmatpush1.msra.mxu0 0.0
    %38 = vmatprep.subr.mxu0 0.0
    %39 = vmatpush1.msra.mxu0 0.0
    %40 = vmatprep.subr.mxu0 0.0
    %41 = vmatpush1.msra.mxu0 0.0
    %42 = vmatprep.subr.mxu0 0.0
    %43 = vmatpush1.msra.mxu0 0.0
    %44 = vmatprep.subr.mxu0 0.0
    %45 = vmatpush1.msra.mxu0 0.0
    %46 = vmatprep.subr.mxu0 0.0
    %47 = vmatpush1.msra.mxu0 0.0
    %48 = vmatprep.subr.mxu0 0.0
    %49 = vmatpush1.msra.mxu0 0.0
    %50 = vmatprep.subr.mxu0 0.0
    %51 = vmatpush1.msra.mxu0 0.0
    %52 = vmatprep.subr.mxu0 0.0
    %53 = vmatpush1.msra.mxu0 0.0
    %54 = vmatprep.subr.mxu0 0.0
    %55 = vmatpush1.msra.mxu0 0.0
    %56 = vmatprep.subr.mxu0 0.0
    %57 = vmatpush1.msra.mxu0 0.0
    %58 = vmatprep.subr.mxu0 0.0
    %59 = vmatpush1.msra.mxu0 0.0
    %60 = vmatprep.subr.mxu0 0.0
    %61 = vmatpush1.msra.mxu0 0.0
    %62 = vmatprep.subr.mxu0 0.0
    %63 = vmatpush1.msra.mxu0 0.0
    %64 = vmatprep.subr.mxu0 0.0
    %65 = vmatpush1.msra.mxu0 0.0
    %66 = vmatprep.subr.mxu0 0.0
    %67 = vmatpush1.msra.mxu0 0.0
    %68 = vmatprep.subr.mxu0 0.0
    %69 = vmatpush1.msra.mxu0 0.0
    %70 = vmatprep.subr.mxu0 0.0
    %71 = vmatpush1.msra.mxu0 0.0
    %72 = vmatprep.subr.mxu0 0.0
    %73 = vmatpush1.msra.mxu0 0.0
    %74 = vmatprep.subr.mxu0 0.0
    %75 = vmatpush1.msra.mxu0 0.0
    %76 = vmatprep.subr.mxu0 0.0
    %77 = vmatpush1.msra.mxu0 0.0
    %78 = vmatprep.subr.mxu0 0.0
    %79 = vmatpush1.msra.mxu0 0.0
    %80 = vmatprep.subr.mxu0 0.0
    %81 = vmatpush1.msra.mxu0 0.0
    %82 = vmatprep.subr.mxu0 0.0
    %83 = vmatpush1.msra.mxu0 0.0
    %84 = vmatprep.subr.mxu0 0.0
    %85 = vmatpush1.msra.mxu0 0.0
    %86 = vmatprep.subr.mxu0 0.0
    %87 = vmatpush1.msra.mxu0 0.0
    %88 = vmatprep.mubr.f32.mxu0 0.0
    %89 = vmatmul.mubr.f32.gmra.mrb[0].mxu0 %v22
    %v90 = vpop.f32.mrb[0].mxu0
    %v91 = vadd.f32 0.0, %v90
    %v92 = vpop.f32.mrb[0].mxu0
    %93 = vdwg.mxu0
    %v94 = vxor.u32 %v91, 2147483648
    %v95 = vmul.f32 %v94, 1.442695
    %v96 = vpow.pop %v95
    %v97 = vadd.f32 %v96, 1.0
    %v98 = vrcp.pop %v97
    %v99 = vmul.f32 1.0, %v98
    %v100 = vmul.f32 %v91, %v99
    %v101 = vld [vmem:[%s2] sm:$0xff]
    %v102 = vld [vmem:[%s2 + $0x8] sm:$0xff]
    %vm103 = vcmask 130048
    %v105 = vsel %vm103, %v100, 0
    %107 = vmatprep.subr.mxu0 0.0
    %108 = vmatpush1.msra.mxu0 %v101
    %109 = vmatprep.subr.mxu0 0.0
    %110 = vmatpush1.msra.mxu0 %v102
    %111 = vmatprep.subr.mxu0 0.0
    %112 = vmatpush1.msra.mxu0 0.0
    %113 = vmatprep.subr.mxu0 0.0
    %114 = vmatpush1.msra.mxu0 0.0
    %115 = vmatprep.subr.mxu0 0.0
    %116 = vmatpush1.msra.mxu0 0.0
    %117 = vmatprep.subr.mxu0 0.0
    %118 = vmatpush1.msra.mxu0 0.0
    %119 = vmatprep.subr.mxu0 0.0
    %120 = vmatpush1.msra.mxu0 0.0
    %121 = vmatprep.subr.mxu0 0.0
    %122 = vmatpush1.msra.mxu0 0.0
    %123 = vmatprep.subr.mxu0 0.0
    %124 = vmatpush1.msra.mxu0 0.0
    %125 = vmatprep.subr.mxu0 0.0
    %126 = vmatpush1.msra.mxu0 0.0
    %127 = vmatprep.subr.mxu0 0.0
    %128 = vmatpush1.msra.mxu0 0.0
    %129 = vmatprep.subr.mxu0 0.0
    %130 = vmatpush1.msra.mxu0 0.0
    %131 = vmatprep.subr.mxu0 0.0
    %132 = vmatpush1.msra.mxu0 0.0
    %133 = vmatprep.subr.mxu0 0.0
    %134 = vmatpush1.msra.mxu0 0.0
    %135 = vmatprep.subr.mxu0 0.0
    %136 = vmatpush1.msra.mxu0 0.0
    %137 = vmatprep.subr.mxu0 0.0
    %138 = vmatpush1.msra.mxu0 0.0
    %139 = vmatprep.subr.mxu0 0.0
    %140 = vmatpush1.msra.mxu0 0.0
    %141 = vmatprep.subr.mxu0 0.0
    %142 = vmatpush1.msra.mxu0 0.0
    %143 = vmatprep.subr.mxu0 0.0
    %144 = vmatpush1.msra.mxu0 0.0
    %145 = vmatprep.subr.mxu0 0.0
    %146 = vmatpush1.msra.mxu0 0.0
    %147 = vmatprep.subr.mxu0 0.0
    %148 = vmatpush1.msra.mxu0 0.0
    %149 = vmatprep.subr.mxu0 0.0
    %150 = vmatpush1.msra.mxu0 0.0
    %151 = vmatprep.subr.mxu0 0.0
    %152 = vmatpush1.msra.mxu0 0.0
    %153 = vmatprep.subr.mxu0 0.0
    %154 = vmatpush1.msra.mxu0 0.0
    %155 = vmatprep.subr.mxu0 0.0
    %156 = vmatpush1.msra.mxu0 0.0
    %157 = vmatprep.subr.mxu0 0.0
    %158 = vmatpush1.msra.mxu0 0.0
    %159 = vmatprep.subr.mxu0 0.0
    %160 = vmatpush1.msra.mxu0 0.0
    %161 = vmatprep.subr.mxu0 0.0
    %162 = vmatpush1.msra.mxu0 0.0
    %163 = vmatprep.subr.mxu0 0.0
    %164 = vmatpush1.msra.mxu0 0.0
    %165 = vmatprep.subr.mxu0 0.0
    %166 = vmatpush1.msra.mxu0 0.0
    %167 = vmatprep.subr.mxu0 0.0
    %168 = vmatpush1.msra.mxu0 0.0
    %169 = vmatprep.subr.mxu0 0.0
    %170 = vmatpush1.msra.mxu0 0.0
    %171 = vmatprep.mubr.f32.mxu0 0.0
    %172 = vmatmul.mubr.f32.gmra.mrb[0].mxu0 %v105
    %v173 = vpop.f32.mrb[0].mxu0
    %v174 = vadd.f32 0.0, %v173
    %v175 = vpop.f32.mrb[0].mxu0
    %176 = vdwg.mxu0
    %vm177 = vcmask 7168
    %v178 = vsel %vm177, %v174, 0.0
    %179 = vadd.xlane.f32.xlu0 %v178
    %v180 = vpop.xlane.xlu0 %179
    %v181 = vrot.slane %v180, 4
    %v182 = vadd.f32 %v180, %v181
    %v183 = vrot.slane %v182, 2
    %v184 = vadd.f32 %v182, %v183
    %v185 = vrot.slane %v184, 1
    %v186 = vadd.f32 %v184, %v185
    %s187 = vtos %v186
    %v188 = vstv %s187
    %vm189 = vcmask 0
    %190 = vst.msk [vmem:[#allocation2] sm:$0x1] %vm189, %v188
    // Predicated region
    $region14: #{mymace_forward.5} parent=1 // pred_check
      _
    $region15: #{mymace_forward.5} parent=1 // pred_check_branch
      %192 = sbr.rel (0) target = $region17
    $region16: #{mymace_forward.5} parent=1 // pred_region
      %s194 = ssub.s32 16, 16
      %195 = vsyncadd [#allocation3], %s194
      %s197 = sshll.u32 [#allocation2], 4
      %s198 = int_to_ptr.vmem [resolvable:$true] %s197
      %200 = dma.vmem_to_hbm [thread:$0]  %s198, 16, %s3, [#allocation3]
    $region17: #{mymace_forward.5} parent=1 // pred_fallthru
      _
    // Predicated region
    $region18: #{mymace_forward.5} parent=1 // pred_check
      _
    $region19: #{mymace_forward.5} parent=1 // pred_check_branch
      %202 = sbr.rel (0) target = $region21
    $region20: #{mymace_forward.5} parent=1 // pred_region
      %203 = dma.done [#allocation3], 16
    $region21: #{mymace_forward.5} parent=1 // pred_fallthru
      _
    %204 = vsyncpa [#allocation3], 1

// kernel: mymace_forward.3
$region0: #{mymace_forward.3}
  #allocation0 [shape = 'u32[]', space=smem, size = 0x4, offset = 0x4, fixed_abs, tag = 'smem constant byte address 0x4 - core index']
  #allocation1 [shape = 'u32[144,128]{1,0:T(1,128)}', space=vmem, size = 0x12000, scoped, tag = 'internal scratch']
  %s0 = inlined_call_operand.vmem [shape: f32[8,4], index: 0, kind: input, shape index: {}]
  %s1 = inlined_call_operand.vmem [shape: f32[56,4], index: 1, kind: input, shape index: {}]
  %s2 = inlined_call_operand.vmem [shape: f32[1,8], index: 2, kind: input, shape index: {}]
  %s3 = inlined_call_operand.vmem [shape: f32[56,8], index: 3, kind: input, shape index: {}]
  %s4 = inlined_call_operand.vmem [shape: f32[8,56], index: 4, kind: input, shape index: {}]
  %s5 = inlined_call_operand.vmem [shape: f32[4,32], index: 5, kind: input, shape index: {}]
  %s6 = inlined_call_operand.vmem [shape: f32[32,32], index: 6, kind: input, shape index: {}]
  %s7 = inlined_call_operand.hbm [shape: f32[8,64], index: 7, kind: input, shape index: {}]
  %s8 = inlined_call_operand.vmem [shape: f32[64,64], index: 8, kind: input, shape index: {}]
  %s9 = inlined_call_operand.vmem [shape: f32[64,64], index: 9, kind: input, shape index: {}]
  %s10 = inlined_call_operand.vmem [shape: f32[64,64], index: 10, kind: input, shape index: {}]
  %s11 = inlined_call_operand.hbm [shape: f32[32,32], index: 11, kind: input, shape index: {}]
  %s12 = inlined_call_operand.hbm [shape: f32[32,32], index: 12, kind: input, shape index: {}]
  %s13 = inlined_call_operand.hbm [shape: f32[4,288], index: 13, kind: input, shape index: {}]
  %s14 = inlined_call_operand.hbm [shape: f32[32,32], index: 14, kind: input, shape index: {}]
  %s15 = inlined_call_operand.hbm [shape: f32[32,32], index: 15, kind: input, shape index: {}]
  %s16 = inlined_call_operand.vmem [shape: f32[8,128], index: 16, kind: output, shape index: {}]
  %s17 = sld [smem:[#allocation0]]
  $region98: #{mymace_forward.3} parent=0
    _
  %s19 = ssub.s32 1, %s17
  %s20 = scalar_select 0, %s19, %s17
  $region1: #{mymace_forward.3} parent=0
    #allocation2 [shape = 'u8[4096]{0}', space=vmem, size = 0x1000, scoped, tag = 'input window, operand 7, single buffered']
    #allocation3 [shape = 's32[1]{0}', space=sflag, size = 0x4, scoped, tag = 'scoped memory for mymace_forward.3']
    #allocation4 [shape = 'u8[16384]{0}', space=vmem, size = 0x4000, scoped, tag = 'input window, operand 11, single buffered']
    #allocation5 [shape = 's32[1]{0}', space=sflag, size = 0x4, scoped, tag = 'scoped memory for mymace_forward.3']
    #allocation6 [shape = 'u8[16384]{0}', space=vmem, size = 0x4000, scoped, tag = 'input window, operand 12, single buffered']
    #allocation7 [shape = 'u8[6144]{0}', space=vmem, size = 0x1800, scoped, tag = 'input window, operand 13, single buffered']
    #allocation8 [shape = 's32[1]{0}', space=sflag, size = 0x4, scoped, tag = 'scoped memory for mymace_forward.3']
    #allocation9 [shape = 'u8[16384]{0}', space=vmem, size = 0x4000, scoped, tag = 'input window, operand 14, single buffered']
    #allocation10 [shape = 'u8[16384]{0}', space=vmem, size = 0x4000, scoped, tag = 'input window, operand 15, single buffered']
    #allocation11 [shape = 's32[1]{0}', space=sflag, size = 0x4, scoped, tag = 'scoped memory for mymace_forward.3']
    %21 = vsyncpa [#allocation3], 0
    %22 = vsyncpa [#allocation5], 0
    %23 = vsyncpa [#allocation8], 0
    %24 = vsyncpa [#allocation11], 0
    // Predicated region
    $region2: #{mymace_forward.3} parent=1 // pred_check
      _
    $region3: #{mymace_forward.3} parent=1 // pred_check_branch
      %26 = sbr.rel (0) target = $region5
    $region4: #{mymace_forward.3} parent=1 // pred_region
      _
    $region5: #{mymace_forward.3} parent=1 // pred_fallthru
      _
    // Predicated region
    $region6: #{mymace_forward.3} parent=1 // pred_check
      _
    $region7: #{mymace_forward.3} parent=1 // pred_check_branch
      %28 = sbr.rel (0) target = $region9
    $region8: #{mymace_forward.3} parent=1 // pred_region
      _
    $region9: #{mymace_forward.3} parent=1 // pred_fallthru
      _
    // Predicated region
    $region10: #{mymace_forward.3} parent=1 // pred_check
      _
    $region11: #{mymace_forward.3} parent=1 // pred_check_branch
      %30 = sbr.rel (0) target = $region13
    $region12: #{mymace_forward.3} parent=1 // pred_region
      _
    $region13: #{mymace_forward.3} parent=1 // pred_fallthru
      _
    // Predicated region
    $region14: #{mymace_forward.3} parent=1 // pred_check
      _
    $region15: #{mymace_forward.3} parent=1 // pred_check_branch
      %32 = sbr.rel (0) target = $region17
    $region16: #{mymace_forward.3} parent=1 // pred_region
      _
    $region17: #{mymace_forward.3} parent=1 // pred_fallthru
      _
    // Predicated region
    $region18: #{mymace_forward.3} parent=1 // pred_check
      _
    $region19: #{mymace_forward.3} parent=1 // pred_check_branch
      %34 = sbr.rel (0) target = $region21
    $region20: #{mymace_forward.3} parent=1 // pred_region
      _
    $region21: #{mymace_forward.3} parent=1 // pred_fallthru
      _
    // Predicated region
    $region22: #{mymace_forward.3} parent=1 // pred_check
      _
    $region23: #{mymace_forward.3} parent=1 // pred_check_branch
      %36 = sbr.rel (0) target = $region25
    $region24: #{mymace_forward.3} parent=1 // pred_region
      _
    $region25: #{mymace_forward.3} parent=1 // pred_fallthru
      _
    // Predicated region
    $region26: #{mymace_forward.3} parent=1 // pred_check
      _
    $region27: #{mymace_forward.3} parent=1 // pred_check_branch
      %38 = sbr.rel (0) target = $region29
    $region28: #{mymace_forward.3} parent=1 // pred_region
      _
    $region29: #{mymace_forward.3} parent=1 // pred_fallthru
      _
    // Predicated region
    $region30: #{mymace_forward.3} parent=1 // pred_check
      _
    $region31: #{mymace_forward.3} parent=1 // pred_check_branch
      %40 = sbr.rel (0) target = $region33
    $region32: #{mymace_forward.3} parent=1 // pred_region
      %s42 = ssub.s32 128, 128
      %43 = vsyncadd [#allocation3], %s42
      %s45 = sshll.u32 [#allocation2], 4
      %s46 = int_to_ptr.vmem [resolvable:$true] %s45
      %48 = dma.hbm_to_vmem [thread:$0]  %s7, 128, %s46, [#allocation3]
    $region33: #{mymace_forward.3} parent=1 // pred_fallthru
      _
    // Predicated region
    $region34: #{mymace_forward.3} parent=1 // pred_check
      _
    $region35: #{mymace_forward.3} parent=1 // pred_check_branch
      %50 = sbr.rel (0) target = $region37
    $region36: #{mymace_forward.3} parent=1 // pred_region
      _
    $region37: #{mymace_forward.3} parent=1 // pred_fallthru
      _
    // Predicated region
    $region38: #{mymace_forward.3} parent=1 // pred_check
      _
    $region39: #{mymace_forward.3} parent=1 // pred_check_branch
      %52 = sbr.rel (0) target = $region41
    $region40: #{mymace_forward.3} parent=1 // pred_region
      _
    $region41: #{mymace_forward.3} parent=1 // pred_fallthru
      _
    // Predicated region
    $region42: #{mymace_forward.3} parent=1 // pred_check
      _
    $region43: #{mymace_forward.3} parent=1 // pred_check_branch
      %54 = sbr.rel (0) target = $region45
    $region44: #{mymace_forward.3} parent=1 // pred_region
      _
    $region45: #{mymace_forward.3} parent=1 // pred_fallthru
      _
    // Predicated region
    $region46: #{mymace_forward.3} parent=1 // pred_check
      _
    $region47: #{mymace_forward.3} parent=1 // pred_check_branch
      %56 = sbr.rel (0) target = $region49
    $region48: #{mymace_forward.3} parent=1 // pred_region
      %s58 = ssub.s32 512, 512
      %59 = vsyncadd [#allocation5], %s58
      %s60 = sshll.u32 [#allocation4], 4
      %s61 = int_to_ptr.vmem [resolvable:$true] %s60
      %66 = dma.hbm_to_vmem [thread:$0]  %s11, 512, %s61, [#allocation5], 128, 128, 8
    $region49: #{mymace_forward.3} parent=1 // pred_fallthru
      _
    // Predicated region
    $region50: #{mymace_forward.3} parent=1 // pred_check
      _
    $region51: #{mymace_forward.3} parent=1 // pred_check_branch
      %68 = sbr.rel (0) target = $region53
    $region52: #{mymace_forward.3} parent=1 // pred_region
      %s70 = ssub.s32 512, 512
      %71 = vsyncadd [#allocation5], %s70
      %s72 = sshll.u32 [#allocation6], 4
      %s73 = int_to_ptr.vmem [resolvable:$true] %s72
      %78 = dma.hbm_to_vmem [thread:$0]  %s12, 512, %s73, [#allocation5], 128, 128, 8
    $region53: #{mymace_forward.3} parent=1 // pred_fallthru
      _
    // Predicated region
    $region54: #{mymace_forward.3} parent=1 // pred_check
      _
    $region55: #{mymace_forward.3} parent=1 // pred_check_branch
      %80 = sbr.rel (0) target = $region57
    $region56: #{mymace_forward.3} parent=1 // pred_region
      %s82 = ssub.s32 192, 192
      %83 = vsyncadd [#allocation8], %s82
      %s85 = sshll.u32 [#allocation7], 4
      %s86 = int_to_ptr.vmem [resolvable:$true] %s85
      %88 = dma.hbm_to_vmem [thread:$0]  %s13, 192, %s86, [#allocation8]
    $region57: #{mymace_forward.3} parent=1 // pred_fallthru
      _
    // Predicated region
    $region58: #{mymace_forward.3} parent=1 // pred_check
      _
    $region59: #{mymace_forward.3} parent=1 // pred_check_branch
      %90 = sbr.rel (0) target = $region61
    $region60: #{mymace_forward.3} parent=1 // pred_region
      %s92 = ssub.s32 512, 512
      %93 = vsyncadd [#allocation8], %s92
      %s94 = sshll.u32 [#allocation9], 4
      %s95 = int_to_ptr.vmem [resolvable:$true] %s94
      %100 = dma.hbm_to_vmem [thread:$0]  %s14, 512, %s95, [#allocation8], 128, 128, 8
    $region61: #{mymace_forward.3} parent=1 // pred_fallthru
      _
    // Predicated region
    $region62: #{mymace_forward.3} parent=1 // pred_check
      _
    $region63: #{mymace_forward.3} parent=1 // pred_check_branch
      %102 = sbr.rel (0) target = $region65
    $region64: #{mymace_forward.3} parent=1 // pred_region
      %s104 = ssub.s32 512, 512
      %105 = vsyncadd [#allocation11], %s104
      %s106 = sshll.u32 [#allocation10], 4
      %s107 = int_to_ptr.vmem [resolvable:$true] %s106
      %112 = dma.hbm_to_vmem [thread:$0]  %s15, 512, %s107, [#allocation11], 128, 128, 8
    $region65: #{mymace_forward.3} parent=1 // pred_fallthru
      _
    // Predicated region
    $region66: #{mymace_forward.3} parent=1 // pred_check
      _
    $region67: #{mymace_forward.3} parent=1 // pred_check_branch
      %114 = sbr.rel (0) target = $region69
    $region68: #{mymace_forward.3} parent=1 // pred_region
      %115 = dma.done [#allocation3], 128
    $region69: #{mymace_forward.3} parent=1 // pred_fallthru
      _
    // Predicated region
    $region70: #{mymace_forward.3} parent=1 // pred_check
      _
    $region71: #{mymace_forward.3} parent=1 // pred_check_branch
      %117 = sbr.rel (0) target = $region73
    $region72: #{mymace_forward.3} parent=1 // pred_region
      %118 = dma.done [#allocation5], 512
    $region73: #{mymace_forward.3} parent=1 // pred_fallthru
      _
    // Predicated region
    $region74: #{mymace_forward.3} parent=1 // pred_check
      _
    $region75: #{mymace_forward.3} parent=1 // pred_check_branch
      %120 = sbr.rel (0) target = $region77
    $region76: #{mymace_forward.3} parent=1 // pred_region
      %121 = dma.done [#allocation5], 512
    $region77: #{mymace_forward.3} parent=1 // pred_fallthru
      _
    // Predicated region
    $region78: #{mymace_forward.3} parent=1 // pred_check
      _
    $region79: #{mymace_forward.3} parent=1 // pred_check_branch
      %123 = sbr.rel (0) target = $region81
    $region80: #{mymace_forward.3} parent=1 // pred_region
      %124 = dma.done [#allocation8], 192
    $region81: #{mymace_forward.3} parent=1 // pred_fallthru
      _
    // Predicated region
    $region82: #{mymace_forward.3} parent=1 // pred_check
      _
    $region83: #{mymace_forward.3} parent=1 // pred_check_branch
      %126 = sbr.rel (0) target = $region85
    $region84: #{mymace_forward.3} parent=1 // pred_region
      %127 = dma.done [#allocation8], 512
    $region85: #{mymace_forward.3} parent=1 // pred_fallthru
      _
    // Predicated region
    $region86: #{mymace_forward.3} parent=1 // pred_check
      _
    $region87: #{mymace_forward.3} parent=1 // pred_check_branch
      %129 = sbr.rel (0) target = $region89
    $region88: #{mymace_forward.3} parent=1 // pred_region
      %130 = dma.done [#allocation11], 512
    $region89: #{mymace_forward.3} parent=1 // pred_fallthru
      _
    %v131 = vld [vmem:[%s0] sm:$0xff]
    %v132 = vld [vmem:[%s5] sm:$0xf]
    %vm133 = vcmask 31744
    %v135 = vsel %vm133, %v131, 0
    %vm137 = vcmask 1043456
    %v139 = vsel %vm137, %v132, 0
    %141 = vmatprep.subr.mxu0 0.0
    %142 = vmatpush1.msra.mxu0 %v139
    %143 = vmatprep.subr.mxu0 0.0
    %144 = vmatpush1.msra.mxu0 0.0
    %145 = vmatprep.subr.mxu0 0.0
    %146 = vmatpush1.msra.mxu0 0.0
    %147 = vmatprep.subr.mxu0 0.0
    %148 = vmatpush1.msra.mxu0 0.0
    %149 = vmatprep.subr.mxu0 0.0
    %150 = vmatpush1.msra.mxu0 0.0
    %151 = vmatprep.subr.mxu0 0.0
    %152 = vmatpush1.msra.mxu0 0.0
    %153 = vmatprep.subr.mxu0 0.0
    %154 = vmatpush1.msra.mxu0 0.0
    %155 = vmatprep.subr.mxu0 0.0
    %156 = vmatpush1.msra.mxu0 0.0
    %157 = vmatprep.subr.mxu0 0.0
    %158 = vmatpush1.msra.mxu0 0.0
    %159 = vmatprep.subr.mxu0 0.0
    %160 = vmatpush1.msra.mxu0 0.0
    %161 = vmatprep.subr.mxu0 0.0
    %162 = vmatpush1.msra.mxu0 0.0
    %163 = vmatprep.subr.mxu0 0.0
    %164 = vmatpush1.msra.mxu0 0.0
    %165 = vmatprep.subr.mxu0 0.0
    %166 = vmatpush1.msra.mxu0 0.0
    %167 = vmatprep.subr.mxu0 0.0
    %168 = vmatpush1.msra.mxu0 0.0
    %169 = vmatprep.subr.mxu0 0.0
    %170 = vmatpush1.msra.mxu0 0.0
    %171 = vmatprep.subr.mxu0 0.0
    %172 = vmatpush1.msra.mxu0 0.0
    %173 = vmatprep.subr.mxu0 0.0
    %174 = vmatpush1.msra.mxu0 0.0
    %175 = vmatprep.subr.mxu0 0.0
    %176 = vmatpush1.msra.mxu0 0.0
    %177 = vmatprep.subr.mxu0 0.0
    %178 = vmatpush1.msra.mxu0 0.0
    %179 = vmatprep.subr.mxu0 0.0
    %180 = vmatpush1.msra.mxu0 0.0
    %181 = vmatprep.subr.mxu0 0.0
    %182 = vmatpush1.msra.mxu0 0.0
    %183 = vmatprep.subr.mxu0 0.0
    %184 = vmatpush1.msra.mxu0 0.0
    %185 = vmatprep.subr.mxu0 0.0
    %186 = vmatpush1.msra.mxu0 0.0
    %187 = vmatprep.subr.mxu0 0.0
    %188 = vmatpush1.msra.mxu0 0.0
    %189 = vmatprep.subr.mxu0 0.0
    %190 = vmatpush1.msra.mxu0 0.0
    %191 = vmatprep.subr.mxu0 0.0
    %192 = vmatpush1.msra.mxu0 0.0
    %193 = vmatprep.subr.mxu0 0.0
    %194 = vmatpush1.msra.mxu0 0.0
    %195 = vmatprep.subr.mxu0 0.0
    %196 = vmatpush1.msra.mxu0 0.0
    %197 = vmatprep.subr.mxu0 0.0
    %198 = vmatpush1.msra.mxu0 0.0
    %199 = vmatprep.subr.mxu0 0.0
    %200 = vmatpush1.msra.mxu0 0.0
    %201 = vmatprep.subr.mxu0 0.0
    %202 = vmatpush1.msra.mxu0 0.0
    %203 = vmatprep.subr.mxu0 0.0
    %204 = vmatpush1.msra.mxu0 0.0
    %205 = vmatprep.mubr.f32.mxu0 0.0
    %206 = vmatmul.mubr.f32.gmra.mrb[0].mxu0 %v135
    %v207 = vpop.f32.mrb[0].mxu0
    %v208 = vadd.f32 0.0, %v207
    %v209 = vpop.f32.mrb[0].mxu0
    %210 = vdwg.mxu0
    %v211 = vld [vmem:[%s6] sm:$0xff]
    %v212 = vld [vmem:[%s6 + $0x8] sm:$0xff]
    %v213 = vld [vmem:[%s6 + $0x10] sm:$0xff]
    %v214 = vld [vmem:[%s6 + $0x18] sm:$0xff]
    %vm215 = vcmask 261120
    %v217 = vsel %vm215, %v208, 0
    %219 = vmatprep.subr.mxu0 0.0
    %220 = vmatpush1.msra.mxu0 %v211
    %221 = vmatprep.subr.mxu0 0.0
    %222 = vmatpush1.msra.mxu0 %v212
    %223 = vmatprep.subr.mxu0 0.0
    %224 = vmatpush1.msra.mxu0 %v213
    %225 = vmatprep.subr.mxu0 0.0
    %226 = vmatpush1.msra.mxu0 %v214
    %227 = vmatprep.subr.mxu0 0.0
    %228 = vmatpush1.msra.mxu0 0.0
    %229 = vmatprep.subr.mxu0 0.0
    %230 = vmatpush1.msra.mxu0 0.0
    %231 = vmatprep.subr.mxu0 0.0
    %232 = vmatpush1.msra.mxu0 0.0
    %233 = vmatprep.subr.mxu0 0.0
    %234 = vmatpush1.msra.mxu0 0.0
    %235 = vmatprep.subr.mxu0 0.0
    %236 = vmatpush1.msra.mxu0 0.0
    %237 = vmatprep.subr.mxu0 0.0
    %238 = vmatpush1.msra.mxu0 0.0
    %239 = vmatprep.subr.mxu0 0.0
    %240 = vmatpush1.msra.mxu0 0.0
    %241 = vmatprep.subr.mxu0 0.0
    %242 = vmatpush1.msra.mxu0 0.0
    %243 = vmatprep.subr.mxu0 0.0
    %244 = vmatpush1.msra.mxu0 0.0
    %245 = vmatprep.subr.mxu0 0.0
    %246 = vmatpush1.msra.mxu0 0.0
    %247 = vmatprep.subr.mxu0 0.0
    %248 = vmatpush1.msra.mxu0 0.0
    %249 = vmatprep.subr.mxu0 0.0
    %250 = vmatpush1.msra.mxu0 0.0
    %251 = vmatprep.subr.mxu0 0.0
    %252 = vmatpush1.msra.mxu0 0.0
    %253 = vmatprep.subr.mxu0 0.0
    %254 = vmatpush1.msra.mxu0 0.0
    %255 = vmatprep.subr.mxu0 0.0
    %256 = vmatpush1.msra.mxu0 0.0
    %257 = vmatprep.subr.mxu0 0.0
    %258 = vmatpush1.msra.mxu0 0.0
    %259 = vmatprep.subr.mxu0 0.0
    %260 = vmatpush1.msra.mxu0 0.0
    %261 = vmatprep.subr.mxu0 0.0
    %262 = vmatpush1.msra.mxu0 0.0
    %263 = vmatprep.subr.mxu0 0.0
    %264 = vmatpush1.msra.mxu0 0.0
    %265 = vmatprep.subr.mxu0 0.0
    %266 = vmatpush1.msra.mxu0 0.0
    %267 = vmatprep.subr.mxu0 0.0
    %268 = vmatpush1.msra.mxu0 0.0
    %269 = vmatprep.subr.mxu0 0.0
    %270 = vmatpush1.msra.mxu0 0.0
    %271 = vmatprep.subr.mxu0 0.0
    %272 = vmatpush1.msra.mxu0 0.0
    %273 = vmatprep.subr.mxu0 0.0
    %274 = vmatpush1.msra.mxu0 0.0
    %275 = vmatprep.subr.mxu0 0.0
    %276 = vmatpush1.msra.mxu0 0.0
    %277 = vmatprep.subr.mxu0 0.0
    %278 = vmatpush1.msra.mxu0 0.0
    %279 = vmatprep.subr.mxu0 0.0
    %280 = vmatpush1.msra.mxu0 0.0
    %281 = vmatprep.subr.mxu0 0.0
    %282 = vmatpush1.msra.mxu0 0.0
    %283 = vmatprep.mubr.f32.mxu0 0.0
    %284 = vmatmul.mubr.f32.gmra.mrb[0].mxu0 %v217
    %v285 = vpop.f32.mrb[0].mxu0
    %v286 = vadd.f32 0.0, %v285
    %v287 = vpop.f32.mrb[0].mxu0
    %288 = vdwg.mxu0
    %v289 = vld [vmem:[%s1] sm:$0xff]
    %v290 = vld [vmem:[%s1 + $0x8] sm:$0xff]
    %v291 = vld [vmem:[%s1 + $0x10] sm:$0xff]
    %v292 = vld [vmem:[%s1 + $0x18] sm:$0xff]
    %v293 = vld [vmem:[%s1 + $0x20] sm:$0xff]
    %v294 = vld [vmem:[%s1 + $0x28] sm:$0xff]
    %v295 = vld [vmem:[%s1 + $0x30] sm:$0xff]
    %v296 = vld [vmem:[%s2] sm:$0x1]
    %v297 = vrcp.pop %v289
    %v298 = vmul.f32 1.0, %v297
    %v299 = vrcp.pop %v290
    %v300 = vmul.f32 1.0, %v299
    %v301 = vrcp.pop %v291
    %v302 = vmul.f32 1.0, %v301
    %v303 = vrcp.pop %v292
    %v304 = vmul.f32 1.0, %v303
    %v305 = vrcp.pop %v293
    %v306 = vmul.f32 1.0, %v305
    %v307 = vrcp.pop %v294
    %v308 = vmul.f32 1.0, %v307
    %v309 = vrcp.pop %v295
    %v310 = vmul.f32 1.0, %v309
    %318 = vrot.lane.b32.xlu0 %v298, 1
    %v319 = vpop.permute.xlu0 %318
    %320 = vrot.lane.b32.xlu0 %v300, 1
    %v321 = vpop.permute.xlu0 %320
    %322 = vrot.lane.b32.xlu0 %v302, 1
    %v323 = vpop.permute.xlu0 %322
    %324 = vrot.lane.b32.xlu0 %v304, 1
    %v325 = vpop.permute.xlu0 %324
    %326 = vrot.lane.b32.xlu0 %v306, 1
    %v327 = vpop.permute.xlu0 %326
    %328 = vrot.lane.b32.xlu0 %v308, 1
    %v329 = vpop.permute.xlu0 %328
    %330 = vrot.lane.b32.xlu0 %v310, 1
    %v331 = vpop.permute.xlu0 %330
    %v339 = vmul.f32 %v289, %v319
    %v340 = vmul.f32 %v290, %v321
    %v341 = vmul.f32 %v291, %v323
    %v342 = vmul.f32 %v292, %v325
    %v343 = vmul.f32 %v293, %v327
    %v344 = vmul.f32 %v294, %v329
    %v345 = vmul.f32 %v295, %v331
    %346 = vrot.lane.b32.xlu0 %v298, 2
    %v347 = vpop.permute.xlu0 %346
    %348 = vrot.lane.b32.xlu0 %v300, 2
    %v349 = vpop.permute.xlu0 %348
    %350 = vrot.lane.b32.xlu0 %v302, 2
    %v351 = vpop.permute.xlu0 %350
    %352 = vrot.lane.b32.xlu0 %v304, 2
    %v353 = vpop.permute.xlu0 %352
    %354 = vrot.lane.b32.xlu0 %v306, 2
    %v355 = vpop.permute.xlu0 %354
    %356 = vrot.lane.b32.xlu0 %v308, 2
    %v357 = vpop.permute.xlu0 %356
    %358 = vrot.lane.b32.xlu0 %v310, 2
    %v359 = vpop.permute.xlu0 %358
    %v367 = vmul.f32 %v289, %v347
    %v368 = vmul.f32 %v290, %v349
    %v369 = vmul.f32 %v291, %v351
    %v370 = vmul.f32 %v292, %v353
    %v371 = vmul.f32 %v293, %v355
    %v372 = vmul.f32 %v294, %v357
    %v373 = vmul.f32 %v295, %v359
    %374 = vrot.lane.b32.xlu0 %v298, 3
    %v375 = vpop.permute.xlu0 %374
    %376 = vrot.lane.b32.xlu0 %v300, 3
    %v377 = vpop.permute.xlu0 %376
    %378 = vrot.lane.b32.xlu0 %v302, 3
    %v379 = vpop.permute.xlu0 %378
    %380 = vrot.lane.b32.xlu0 %v304, 3
    %v381 = vpop.permute.xlu0 %380
    %382 = vrot.lane.b32.xlu0 %v306, 3
    %v383 = vpop.permute.xlu0 %382
    %384 = vrot.lane.b32.xlu0 %v308, 3
    %v385 = vpop.permute.xlu0 %384
    %386 = vrot.lane.b32.xlu0 %v310, 3
    %v387 = vpop.permute.xlu0 %386
    %v395 = vmul.f32 %v289, %v375
    %v396 = vmul.f32 %v290, %v377
    %v397 = vmul.f32 %v291, %v379
    %v398 = vmul.f32 %v292, %v381
    %v399 = vmul.f32 %v293, %v383
    %v400 = vmul.f32 %v294, %v385
    %v401 = vmul.f32 %v295, %v387
    %403 = vset.pattern.permute.xlu0 0
    %404 = vperm.xlu0 %403, %v289
    %v405 = vpop.permute.xlu0 %404
    %408 = vset.pattern.permute.xlu0 0
    %409 = vperm.xlu0 %408, %v290
    %v410 = vpop.permute.xlu0 %409
    %413 = vset.pattern.permute.xlu0 0
    %414 = vperm.xlu0 %413, %v291
    %v415 = vpop.permute.xlu0 %414
    %418 = vset.pattern.permute.xlu0 0
    %419 = vperm.xlu0 %418, %v292
    %v420 = vpop.permute.xlu0 %419
    %423 = vset.pattern.permute.xlu0 0
    %424 = vperm.xlu0 %423, %v293
    %v425 = vpop.permute.xlu0 %424
    %428 = vset.pattern.permute.xlu0 0
    %429 = vperm.xlu0 %428, %v294
    %v430 = vpop.permute.xlu0 %429
    %433 = vset.pattern.permute.xlu0 0
    %434 = vperm.xlu0 %433, %v295
    %v435 = vpop.permute.xlu0 %434
    %v438 = vlaneseq
    %v439 = vshrl.u32 %v438, 7
    %v440 = vsub.s32 0, %v439
    %v441 = vrot.slane %v296, %v440
    %v443 = vmul.f32 %v405, %v441
    %v444 = vmul.f32 %v410, %v441
    %v445 = vmul.f32 %v415, %v441
    %v446 = vmul.f32 %v420, %v441
    %v447 = vmul.f32 %v425, %v441
    %v448 = vmul.f32 %v430, %v441
    %v449 = vmul.f32 %v435, %v441
    %v450 = vand.u32 2147483647, %v443
    %vm451 = vcmp.le.f32.partialorder %v450, 0.7853982
    %vm452 = vcmp.lt.s32.totalorder %v443, 0
    %v453 = vand.u32 %v443, 2139095040
    %v454 = vshrl.u32 %v453, 23
    %v455 = vsub.s32 %v454, 127
    %v456 = vand.u32 2147483647, %v443
    %v457 = vand.u32 %v456, 8388607
    %v458 = vor.u32 %v457, 8388608
    %v459 = vsub.s32 0, %v458
    %v460 = vadd.s32 %v455, 1
    %vm461 = vcmp.gt.s32.totalorder %v460, 0
    %v462 = vsel %vm461, %v460, 0
    %v463 = vshrl.u32 %v462, 5
    %v464 = vand.u32 %v462, 31
    %v465 = vsub.s32 32, %v464
    %v466 = vshrl.u32 683565275, %v465
    %v467 = vshll.u32 683565275, %v464
    %v468 = vshrl.u32 2475754826, %v465
    %v469 = vor.u32 %v467, %v468
    %v470 = vshll.u32 2475754826, %v464
    %v471 = vshrl.u32 2131351028, %v465
    %v472 = vor.u32 %v470, %v471
    %v473 = vshll.u32 2131351028, %v464
    %v474 = vshrl.u32 2102212464, %v465
    %v475 = vor.u32 %v473, %v474
    %v476 = vshll.u32 2102212464, %v464
    %v477 = vshrl.u32 920167782, %v465
    %v478 = vor.u32 %v476, %v477
    %v479 = vshll.u32 920167782, %v464
    %v480 = vshrl.u32 1326507024, %v465
    %v481 = vor.u32 %v479, %v480
    %vm482 = vcmp.lt.s32.totalorder %v463, 1
    %vm483 = vcmp.lt.s32.totalorder %v463, 2
    %vm484 = vcmp.lt.s32.totalorder %v463, 3
    %vm485 = vcmp.lt.s32.totalorder %v463, 4
    %v486 = vsel %vm482, %v466, %v469
    %v487 = vsel %vm485, %v475, 2102212464
    %v488 = vsel %vm484, %v472, %v487
    %v489 = vsel %vm483, %v486, %v488
    %v490 = vsel %vm482, %v469, %v472
    %v491 = vsel %vm485, %v478, 920167782
    %v492 = vsel %vm484, %v475, %v491
    %v493 = vsel %vm483, %v490, %v492
    %v494 = vsel %vm482, %v472, %v475
    %v495 = vsel %vm485, %v481, 1326507024
    %v496 = vsel %vm484, %v478, %v495
    %v497 = vsel %vm483, %v494, %v496
    %v498 = vshll.u32 %v458, 8
    %v499 = vmul.u32.u64.compose %v498, %v497
    %v500 = vextract.low.u32 %v499
    %v501 = vextract.high.u32 %v499
    %v502 = vmul.u32.u64.compose %v498, %v493
    %v503 = vextract.low.u32 %v502
    %v504 = vextract.high.u32 %v502
    %v505 = vmul.u32 %v498, %v489
    %v506 = vadd.s32 %v501, %v503
    %vm507 = vc.u32 %v501, %v503
    %v508 = vadd.s32 %v504, 1
    %v509 = vsel %vm507, %v508, %v504
    %v510 = vadd.s32 %v505, %v509
    %v511 = vadd.s32 %v510, 536870912
    %v512 = vshrl.u32 %v511, 30
    %v513 = vshll.u32 %v512, 30
    %v514 = vsub.s32 %v510, %v513
    %vm515 = vcmp.lt.s32.totalorder %v514, 0
    %v516 = vsub.s32 0, %v514
    %v517 = vsel %vm515, %v516, %v514
    %v518 = vclz %v517
    %v519 = vsub.s32 %v518, 2
    %vm520 = vcmp.gt.s32.totalorder 0, %v519
    %v521 = vsel %vm520, 0, %v519
    %v522 = vsub.s32 32, %v521
    %v523 = vshll.u32 %v514, %v521
    %v524 = vshrl.u32 %v506, %v522
    %v525 = vor.u32 %v523, %v524
    %v526 = vsub.s32 4294967266, %v521
    %v527 = vadd.s32 %v526, 127
    %v528 = vshll.u32 %v527, 23
    %v529 = vor.u32 4788187, %v528
    %v530 = vand.u32 2147483647, %v529
    %v532 = vcvt.s32.f32 %v525
    %v533 = vmul.f32 %v532, %v530
    %v534 = vxor.u32 %v533, 2147483648
    %v535 = vsel %vm452, %v534, %v533
    %v536 = vsub.s32 4, %v512
    %v537 = vsel %vm452, %v536, %v512
    %v538 = vsel %vm451, %v443, %v535
    %v539 = vsel %vm451, 0, %v537
    %v540 = vcosq.f32.pop %v538
    %v541 = vsinq.f32.pop %v538
    %vm542 = vweird.f32 %v443
    %v543 = vadd.s32 %v539, 3
    %v544 = vand.u32 %v543, 3
    %vm545 = vcmp.lt.s32.totalorder %v544, 2
    %vm546 = vcmp.eq.s32.totalorder %v544, 0
    %v547 = vxor.u32 %v541, 2147483648
    %v548 = vsel %vm546, %v540, %v547
    %vm549 = vcmp.eq.s32.totalorder %v544, 2
    %v550 = vxor.u32 %v540, 2147483648
    %v551 = vsel %vm549, %v550, %v541
    %v552 = vsel %vm545, %v548, %v551
    %v553 = vsel %vm542, nan, %v552
    %v554 = vand.u32 2147483647, %v444
    %vm555 = vcmp.le.f32.partialorder %v554, 0.7853982
    %vm556 = vcmp.lt.s32.totalorder %v444, 0
    %v557 = vand.u32 %v444, 2139095040
    %v558 = vshrl.u32 %v557, 23
    %v559 = vsub.s32 %v558, 127
    %v560 = vand.u32 2147483647, %v444
    %v561 = vand.u32 %v560, 8388607
    %v562 = vor.u32 %v561, 8388608
    %v563 = vsub.s32 0, %v562
    %v564 = vadd.s32 %v559, 1
    %vm565 = vcmp.gt.s32.totalorder %v564, 0
    %v566 = vsel %vm565, %v564, 0
    %v567 = vshrl.u32 %v566, 5
    %v568 = vand.u32 %v566, 31
    %v569 = vsub.s32 32, %v568
    %v570 = vshrl.u32 683565275, %v569
    %v571 = vshll.u32 683565275, %v568
    %v572 = vshrl.u32 2475754826, %v569
    %v573 = vor.u32 %v571, %v572
    %v574 = vshll.u32 2475754826, %v568
    %v575 = vshrl.u32 2131351028, %v569
    %v576 = vor.u32 %v574, %v575
    %v577 = vshll.u32 2131351028, %v568
    %v578 = vshrl.u32 2102212464, %v569
    %v579 = vor.u32 %v577, %v578
    %v580 = vshll.u32 2102212464, %v568
    %v581 = vshrl.u32 920167782, %v569
    %v582 = vor.u32 %v580, %v581
    %v583 = vshll.u32 920167782, %v568
    %v584 = vshrl.u32 1326507024, %v569
    %v585 = vor.u32 %v583, %v584
    %vm586 = vcmp.lt.s32.totalorder %v567, 1
    %vm587 = vcmp.lt.s32.totalorder %v567, 2
    %vm588 = vcmp.lt.s32.totalorder %v567, 3
    %vm589 = vcmp.lt.s32.totalorder %v567, 4
    %v590 = vsel %vm586, %v570, %v573
    %v591 = vsel %vm589, %v579, 2102212464
    %v592 = vsel %vm588, %v576, %v591
    %v593 = vsel %vm587, %v590, %v592
    %v594 = vsel %vm586, %v573, %v576
    %v595 = vsel %vm589, %v582, 920167782
    %v596 = vsel %vm588, %v579, %v595
    %v597 = vsel %vm587, %v594, %v596
    %v598 = vsel %vm586, %v576, %v579
    %v599 = vsel %vm589, %v585, 1326507024
    %v600 = vsel %vm588, %v582, %v599
    %v601 = vsel %vm587, %v598, %v600
    %v602 = vshll.u32 %v562, 8
    %v603 = vmul.u32.u64.compose %v602, %v601
    %v604 = vextract.low.u32 %v603
    %v605 = vextract.high.u32 %v603
    %v606 = vmul.u32.u64.compose %v602, %v597
    %v607 = vextract.low.u32 %v606
    %v608 = vextract.high.u32 %v606
    %v609 = vmul.u32 %v602, %v593
    %v610 = vadd.s32 %v605, %v607
    %vm611 = vc.u32 %v605, %v607
    %v612 = vadd.s32 %v608, 1
    %v613 = vsel %vm611, %v612, %v608
    %v614 = vadd.s32 %v609, %v613
    %v615 = vadd.s32 %v614, 536870912
    %v616 = vshrl.u32 %v615, 30
    %v617 = vshll.u32 %v616, 30
    %v618 = vsub.s32 %v614, %v617
    %vm619 = vcmp.lt.s32.totalorder %v618, 0
    %v620 = vsub.s32 0, %v618
    %v621 = vsel %vm619, %v620, %v618
    %v622 = vclz %v621
    %v623 = vsub.s32 %v622, 2
    %vm624 = vcmp.gt.s32.totalorder 0, %v623
    %v625 = vsel %vm624, 0, %v623
    %v626 = vsub.s32 32, %v625
    %v627 = vshll.u32 %v618, %v625
    %v628 = vshrl.u32 %v610, %v626
    %v629 = vor.u32 %v627, %v628
    %v630 = vsub.s32 4294967266, %v625
    %v631 = vadd.s32 %v630, 127
    %v632 = vshll.u32 %v631, 23
    %v633 = vor.u32 4788187, %v632
    %v634 = vand.u32 2147483647, %v633
    %v636 = vcvt.s32.f32 %v629
    %v637 = vmul.f32 %v636, %v634
    %v638 = vxor.u32 %v637, 2147483648
    %v639 = vsel %vm556, %v638, %v637
    %v640 = vsub.s32 4, %v616
    %v641 = vsel %vm556, %v640, %v616
    %v642 = vsel %vm555, %v444, %v639
    %v643 = vsel %vm555, 0, %v641
    %v644 = vcosq.f32.pop %v642
    %v645 = vsinq.f32.pop %v642
    %vm646 = vweird.f32 %v444
    %v647 = vadd.s32 %v643, 3
    %v648 = vand.u32 %v647, 3
    %vm649 = vcmp.lt.s32.totalorder %v648, 2
    %vm650 = vcmp.eq.s32.totalorder %v648, 0
    %v651 = vxor.u32 %v645, 2147483648
    %v652 = vsel %vm650, %v644, %v651
    %vm653 = vcmp.eq.s32.totalorder %v648, 2
    %v654 = vxor.u32 %v644, 2147483648
    %v655 = vsel %vm653, %v654, %v645
    %v656 = vsel %vm649, %v652, %v655
    %v657 = vsel %vm646, nan, %v656
    %v658 = vand.u32 2147483647, %v445
    %vm659 = vcmp.le.f32.partialorder %v658, 0.7853982
    %vm660 = vcmp.lt.s32.totalorder %v445, 0
    %v661 = vand.u32 %v445, 2139095040
    %v662 = vshrl.u32 %v661, 23
    %v663 = vsub.s32 %v662, 127
    %v664 = vand.u32 2147483647, %v445
    %v665 = vand.u32 %v664, 8388607
    %v666 = vor.u32 %v665, 8388608
    %v667 = vsub.s32 0, %v666
    %v668 = vadd.s32 %v663, 1
    %vm669 = vcmp.gt.s32.totalorder %v668, 0
    %v670 = vsel %vm669, %v668, 0
    %v671 = vshrl.u32 %v670, 5
    %v672 = vand.u32 %v670, 31
    %v673 = vsub.s32 32, %v672
    %v674 = vshrl.u32 683565275, %v673
    %v675 = vshll.u32 683565275, %v672
    %v676 = vshrl.u32 2475754826, %v673
    %v677 = vor.u32 %v675, %v676
    %v678 = vshll.u32 2475754826, %v672
    %v679 = vshrl.u32 2131351028, %v673
    %v680 = vor.u32 %v678, %v679
    %v681 = vshll.u32 2131351028, %v672
    %v682 = vshrl.u32 2102212464, %v673
    %v683 = vor.u32 %v681, %v682
    %v684 = vshll.u32 2102212464, %v672
    %v685 = vshrl.u32 920167782, %v673
    %v686 = vor.u32 %v684, %v685
    %v687 = vshll.u32 920167782, %v672
    %v688 = vshrl.u32 1326507024, %v673
    %v689 = vor.u32 %v687, %v688
    %vm690 = vcmp.lt.s32.totalorder %v671, 1
    %vm691 = vcmp.lt.s32.totalorder %v671, 2
    %vm692 = vcmp.lt.s32.totalorder %v671, 3
    %vm693 = vcmp.lt.s32.totalorder %v671, 4
    %v694 = vsel %vm690, %v674, %v677
    %v695 = vsel %vm693, %v683, 2102212464
    %v696 = vsel %vm692, %v680, %v695
    %v697 = vsel %vm691, %v694, %v696
    %v698 = vsel %vm690, %v677, %v680
    %v699 = vsel %vm693, %v686, 920167782
    %v700 = vsel %vm692, %v683, %v699
    %v701 = vsel %vm691, %v698, %v700
    %v702 = vsel %vm690, %v680, %v683
    %v703 = vsel %vm693, %v689, 1326507024
    %v704 = vsel %vm692, %v686, %v703
    %v705 = vsel %vm691, %v702, %v704
    %v706 = vshll.u32 %v666, 8
    %v707 = vmul.u32.u64.compose %v706, %v705
    %v708 = vextract.low.u32 %v707
    %v709 = vextract.high.u32 %v707
    %v710 = vmul.u32.u64.compose %v706, %v701
    %v711 = vextract.low.u32 %v710
    %v712 = vextract.high.u32 %v710
    %v713 = vmul.u32 %v706, %v697
    %v714 = vadd.s32 %v709, %v711
    %vm715 = vc.u32 %v709, %v711
    %v716 = vadd.s32 %v712, 1
    %v717 = vsel %vm715, %v716, %v712
    %v718 = vadd.s32 %v713, %v717
    %v719 = vadd.s32 %v718, 536870912
    %v720 = vshrl.u32 %v719, 30
    %v721 = vshll.u32 %v720, 30
    %v722 = vsub.s32 %v718, %v721
    %vm723 = vcmp.lt.s32.totalorder %v722, 0
    %v724 = vsub.s32 0, %v722
    %v725 = vsel %vm723, %v724, %v722
    %v726 = vclz %v725
    %v727 = vsub.s32 %v726, 2
    %vm728 = vcmp.gt.s32.totalorder 0, %v727
    %v729 = vsel %vm728, 0, %v727
    %v730 = vsub.s32 32, %v729
    %v731 = vshll.u32 %v722, %v729
    %v732 = vshrl.u32 %v714, %v730
    %v733 = vor.u32 %v731, %v732
    %v734 = vsub.s32 4294967266, %v729
    %v735 = vadd.s32 %v734, 127
    %v736 = vshll.u32 %v735, 23
    %v737 = vor.u32 4788187, %v736
    %v738 = vand.u32 2147483647, %v737
    %v740 = vcvt.s32.f32 %v733
    %v741 = vmul.f32 %v740, %v738
    %v742 = vxor.u32 %v741, 2147483648
    %v743 = vsel %vm660, %v742, %v741
    %v744 = vsub.s32 4, %v720
    %v745 = vsel %vm660, %v744, %v720
    %v746 = vsel %vm659, %v445, %v743
    %v747 = vsel %vm659, 0, %v745
    %v748 = vcosq.f32.pop %v746
    %v749 = vsinq.f32.pop %v746
    %vm750 = vweird.f32 %v445
    %v751 = vadd.s32 %v747, 3
    %v752 = vand.u32 %v751, 3
    %vm753 = vcmp.lt.s32.totalorder %v752, 2
    %vm754 = vcmp.eq.s32.totalorder %v752, 0
    %v755 = vxor.u32 %v749, 2147483648
    %v756 = vsel %vm754, %v748, %v755
    %vm757 = vcmp.eq.s32.totalorder %v752, 2
    %v758 = vxor.u32 %v748, 2147483648
    %v759 = vsel %vm757, %v758, %v749
    %v760 = vsel %vm753, %v756, %v759
    %v761 = vsel %vm750, nan, %v760
    %v762 = vand.u32 2147483647, %v446
    %vm763 = vcmp.le.f32.partialorder %v762, 0.7853982
    %vm764 = vcmp.lt.s32.totalorder %v446, 0
    %v765 = vand.u32 %v446, 2139095040
    %v766 = vshrl.u32 %v765, 23
    %v767 = vsub.s32 %v766, 127
    %v768 = vand.u32 2147483647, %v446
    %v769 = vand.u32 %v768, 8388607
    %v770 = vor.u32 %v769, 8388608
    %v771 = vsub.s32 0, %v770
    %v772 = vadd.s32 %v767, 1
    %vm773 = vcmp.gt.s32.totalorder %v772, 0
    %v774 = vsel %vm773, %v772, 0
    %v775 = vshrl.u32 %v774, 5
    %v776 = vand.u32 %v774, 31
    %v777 = vsub.s32 32, %v776
    %v778 = vshrl.u32 683565275, %v777
    %v779 = vshll.u32 683565275, %v776
    %v780 = vshrl.u32 2475754826, %v777
    %v781 = vor.u32 %v779, %v780
    %v782 = vshll.u32 2475754826, %v776
    %v783 = vshrl.u32 2131351028, %v777
    %v784 = vor.u32 %v782, %v783
    %v785 = vshll.u32 2131351028, %v776
    %v786 = vshrl.u32 2102212464, %v777
    %v787 = vor.u32 %v785, %v786
    %v788 = vshll.u32 2102212464, %v776
    %v789 = vshrl.u32 920167782, %v777
    %v790 = vor.u32 %v788, %v789
    %v791 = vshll.u32 920167782, %v776
    %v792 = vshrl.u32 1326507024, %v777
    %v793 = vor.u32 %v791, %v792
    %vm794 = vcmp.lt.s32.totalorder %v775, 1
    %vm795 = vcmp.lt.s32.totalorder %v775, 2
    %vm796 = vcmp.lt.s32.totalorder %v775, 3
    %vm797 = vcmp.lt.s32.totalorder %v775, 4
    %v798 = vsel %vm794, %v778, %v781
    %v799 = vsel %vm797, %v787, 2102212464
    %v800 = vsel %vm796, %v784, %v799
    %v801 = vsel %vm795, %v798, %v800
    %v802 = vsel %vm794, %v781, %v784
    %v803 = vsel %vm797, %v790, 920167782
    %v804 = vsel %vm796, %v787, %v803
    %v805 = vsel %vm795, %v802, %v804
    %v806 = vsel %vm794, %v784, %v787
    %v807 = vsel %vm797, %v793, 1326507024
    %v808 = vsel %vm796, %v790, %v807
    %v809 = vsel %vm795, %v806, %v808
    %v810 = vshll.u32 %v770, 8
    %v811 = vmul.u32.u64.compose %v810, %v809
    %v812 = vextract.low.u32 %v811
    %v813 = vextract.high.u32 %v811
    %v814 = vmul.u32.u64.compose %v810, %v805
    %v815 = vextract.low.u32 %v814
    %v816 = vextract.high.u32 %v814
    %v817 = vmul.u32 %v810, %v801
    %v818 = vadd.s32 %v813, %v815
    %vm819 = vc.u32 %v813, %v815
    %v820 = vadd.s32 %v816, 1
    %v821 = vsel %vm819, %v820, %v816
    %v822 = vadd.s32 %v817, %v821
    %v823 = vadd.s32 %v822, 536870912
    %v824 = vshrl.u32 %v823, 30
    %v825 = vshll.u32 %v824, 30
    %v826 = vsub.s32 %v822, %v825
    %vm827 = vcmp.lt.s32.totalorder %v826, 0
    %v828 = vsub.s32 0, %v826
    %v829 = vsel %vm827, %v828, %v826
    %v830 = vclz %v829
    %v831 = vsub.s32 %v830, 2
    %vm832 = vcmp.gt.s32.totalorder 0, %v831
    %v833 = vsel %vm832, 0, %v831
    %v834 = vsub.s32 32, %v833
    %v835 = vshll.u32 %v826, %v833
    %v836 = vshrl.u32 %v818, %v834
    %v837 = vor.u32 %v835, %v836
    %v838 = vsub.s32 4294967266, %v833
    %v839 = vadd.s32 %v838, 127
    %v840 = vshll.u32 %v839, 23
    %v841 = vor.u32 4788187, %v840
    %v842 = vand.u32 2147483647, %v841
    %v844 = vcvt.s32.f32 %v837
    %v845 = vmul.f32 %v844, %v842
    %v846 = vxor.u32 %v845, 2147483648
    %v847 = vsel %vm764, %v846, %v845
    %v848 = vsub.s32 4, %v824
    %v849 = vsel %vm764, %v848, %v824
    %v850 = vsel %vm763, %v446, %v847
    %v851 = vsel %vm763, 0, %v849
    %v852 = vcosq.f32.pop %v850
    %v853 = vsinq.f32.pop %v850
    %vm854 = vweird.f32 %v446
    %v855 = vadd.s32 %v851, 3
    %v856 = vand.u32 %v855, 3
    %vm857 = vcmp.lt.s32.totalorder %v856, 2
    %vm858 = vcmp.eq.s32.totalorder %v856, 0
    %v859 = vxor.u32 %v853, 2147483648
    %v860 = vsel %vm858, %v852, %v859
    %vm861 = vcmp.eq.s32.totalorder %v856, 2
    %v862 = vxor.u32 %v852, 2147483648
    %v863 = vsel %vm861, %v862, %v853
    %v864 = vsel %vm857, %v860, %v863
    %v865 = vsel %vm854, nan, %v864
    %v866 = vand.u32 2147483647, %v447
    %vm867 = vcmp.le.f32.partialorder %v866, 0.7853982
    %vm868 = vcmp.lt.s32.totalorder %v447, 0
    %v869 = vand.u32 %v447, 2139095040
    %v870 = vshrl.u32 %v869, 23
    %v871 = vsub.s32 %v870, 127
    %v872 = vand.u32 2147483647, %v447
    %v873 = vand.u32 %v872, 8388607
    %v874 = vor.u32 %v873, 8388608
    %v875 = vsub.s32 0, %v874
    %v876 = vadd.s32 %v871, 1
    %vm877 = vcmp.gt.s32.totalorder %v876, 0
    %v878 = vsel %vm877, %v876, 0
    %v879 = vshrl.u32 %v878, 5
    %v880 = vand.u32 %v878, 31
    %v881 = vsub.s32 32, %v880
    %v882 = vshrl.u32 683565275, %v881
    %v883 = vshll.u32 683565275, %v880
    %v884 = vshrl.u32 2475754826, %v881
    %v885 = vor.u32 %v883, %v884
    %v886 = vshll.u32 2475754826, %v880
    %v887 = vshrl.u32 2131351028, %v881
    %v888 = vor.u32 %v886, %v887
    %v889 = vshll.u32 2131351028, %v880
    %v890 = vshrl.u32 2102212464, %v881
    %v891 = vor.u32 %v889, %v890
    %v892 = vshll.u32 2102212464, %v880
    %v893 = vshrl.u32 920167782, %v881
    %v894 = vor.u32 %v892, %v893
    %v895 = vshll.u32 920167782, %v880
    %v896 = vshrl.u32 1326507024, %v881
    %v897 = vor.u32 %v895, %v896
    %vm898 = vcmp.lt.s32.totalorder %v879, 1
    %vm899 = vcmp.lt.s32.totalorder %v879, 2
    %vm900 = vcmp.lt.s32.totalorder %v879, 3
    %vm901 = vcmp.lt.s32.totalorder %v879, 4
    %v902 = vsel %vm898, %v882, %v885
    %v903 = vsel %vm901, %v891, 2102212464
    %v904 = vsel %vm900, %v888, %v903
    %v905 = vsel %vm899, %v902, %v904
    %v906 = vsel %vm898, %v885, %v888
    %v907 = vsel %vm901, %v894, 920167782
    %v908 = vsel %vm900, %v891, %v907
    %v909 = vsel %vm899, %v906, %v908
    %v910 = vsel %vm898, %v888, %v891
    %v911 = vsel %vm901, %v897, 1326507024
    %v912 = vsel %vm900, %v894, %v911
    %v913 = vsel %vm899, %v910, %v912
    %v914 = vshll.u32 %v874, 8
    %v915 = vmul.u32.u64.compose %v914, %v913
    %v916 = vextract.low.u32 %v915
    %v917 = vextract.high.u32 %v915
    %v918 = vmul.u32.u64.compose %v914, %v909
    %v919 = vextract.low.u32 %v918
    %v920 = vextract.high.u32 %v918
    %v921 = vmul.u32 %v914, %v905
    %v922 = vadd.s32 %v917, %v919
    %vm923 = vc.u32 %v917, %v919
    %v924 = vadd.s32 %v920, 1
    %v925 = vsel %vm923, %v924, %v920
    %v926 = vadd.s32 %v921, %v925
    %v927 = vadd.s32 %v926, 536870912
    %v928 = vshrl.u32 %v927, 30
    %v929 = vshll.u32 %v928, 30
    %v930 = vsub.s32 %v926, %v929
    %vm931 = vcmp.lt.s32.totalorder %v930, 0
    %v932 = vsub.s32 0, %v930
    %v933 = vsel %vm931, %v932, %v930
    %v934 = vclz %v933
    %v935 = vsub.s32 %v934, 2
    %vm936 = vcmp.gt.s32.totalorder 0, %v935
    %v937 = vsel %vm936, 0, %v935
    %v938 = vsub.s32 32, %v937
    %v939 = vshll.u32 %v930, %v937
    %v940 = vshrl.u32 %v922, %v938
    %v941 = vor.u32 %v939, %v940
    %v942 = vsub.s32 4294967266, %v937
    %v943 = vadd.s32 %v942, 127
    %v944 = vshll.u32 %v943, 23
    %v945 = vor.u32 4788187, %v944
    %v946 = vand.u32 2147483647, %v945
    %v948 = vcvt.s32.f32 %v941
    %v949 = vmul.f32 %v948, %v946
    %v950 = vxor.u32 %v949, 2147483648
    %v951 = vsel %vm868, %v950, %v949
    %v952 = vsub.s32 4, %v928
    %v953 = vsel %vm868, %v952, %v928
    %v954 = vsel %vm867, %v447, %v951
    %v955 = vsel %vm867, 0, %v953
    %v956 = vcosq.f32.pop %v954
    %v957 = vsinq.f32.pop %v954
    %vm958 = vweird.f32 %v447
    %v959 = vadd.s32 %v955, 3
    %v960 = vand.u32 %v959, 3
    %vm961 = vcmp.lt.s32.totalorder %v960, 2
    %vm962 = vcmp.eq.s32.totalorder %v960, 0
    %v963 = vxor.u32 %v957, 2147483648
    %v964 = vsel %vm962, %v956, %v963
    %vm965 = vcmp.eq.s32.totalorder %v960, 2
    %v966 = vxor.u32 %v956, 2147483648
    %v967 = vsel %vm965, %v966, %v957
    %v968 = vsel %vm961, %v964, %v967
    %v969 = vsel %vm958, nan, %v968
    %v970 = vand.u32 2147483647, %v448
    %vm971 = vcmp.le.f32.partialorder %v970, 0.7853982
    %vm972 = vcmp.lt.s32.totalorder %v448, 0
    %v973 = vand.u32 %v448, 2139095040
    %v974 = vshrl.u32 %v973, 23
    %v975 = vsub.s32 %v974, 127
    %v976 = vand.u32 2147483647, %v448
    %v977 = vand.u32 %v976, 8388607
    %v978 = vor.u32 %v977, 8388608
    %v979 = vsub.s32 0, %v978
    %v980 = vadd.s32 %v975, 1
    %vm981 = vcmp.gt.s32.totalorder %v980, 0
    %v982 = vsel %vm981, %v980, 0
    %v983 = vshrl.u32 %v982, 5
    %v984 = vand.u32 %v982, 31
    %v985 = vsub.s32 32, %v984
    %v986 = vshrl.u32 683565275, %v985
    %v987 = vshll.u32 683565275, %v984
    %v988 = vshrl.u32 2475754826, %v985
    %v989 = vor.u32 %v987, %v988
    %v990 = vshll.u32 2475754826, %v984
    %v991 = vshrl.u32 2131351028, %v985
    %v992 = vor.u32 %v990, %v991
    %v993 = vshll.u32 2131351028, %v984
    %v994 = vshrl.u32 2102212464, %v985
    %v995 = vor.u32 %v993, %v994
    %v996 = vshll.u32 2102212464, %v984
    %v997 = vshrl.u32 920167782, %v985
    %v998 = vor.u32 %v996, %v997
    %v999 = vshll.u32 920167782, %v984
    %v1000 = vshrl.u32 1326507024, %v985
    %v1001 = vor.u32 %v999, %v1000
    %vm1002 = vcmp.lt.s32.totalorder %v983, 1
    %vm1003 = vcmp.lt.s32.totalorder %v983, 2
    %vm1004 = vcmp.lt.s32.totalorder %v983, 3
    %vm1005 = vcmp.lt.s32.totalorder %v983, 4
    %v1006 = vsel %vm1002, %v986, %v989
    %v1007 = vsel %vm1005, %v995, 2102212464
    %v1008 = vsel %vm1004, %v992, %v1007
    %v1009 = vsel %vm1003, %v1006, %v1008
    %v1010 = vsel %vm1002, %v989, %v992
    %v1011 = vsel %vm1005, %v998, 920167782
    %v1012 = vsel %vm1004, %v995, %v1011
    %v1013 = vsel %vm1003, %v1010, %v1012
    %v1014 = vsel %vm1002, %v992, %v995
    %v1015 = vsel %vm1005, %v1001, 1326507024
    %v1016 = vsel %vm1004, %v998, %v1015
    %v1017 = vsel %vm1003, %v1014, %v1016
    %v1018 = vshll.u32 %v978, 8
    %v1019 = vmul.u32.u64.compose %v1018, %v1017
    %v1020 = vextract.low.u32 %v1019
    %v1021 = vextract.high.u32 %v1019
    %v1022 = vmul.u32.u64.compose %v1018, %v1013
    %v1023 = vextract.low.u32 %v1022
    %v1024 = vextract.high.u32 %v1022
    %v1025 = vmul.u32 %v1018, %v1009
    %v1026 = vadd.s32 %v1021, %v1023
    %vm1027 = vc.u32 %v1021, %v1023
    %v1028 = vadd.s32 %v1024, 1
    %v1029 = vsel %vm1027, %v1028, %v1024
    %v1030 = vadd.s32 %v1025, %v1029
    %v1031 = vadd.s32 %v1030, 536870912
    %v1032 = vshrl.u32 %v1031, 30
    %v1033 = vshll.u32 %v1032, 30
    %v1034 = vsub.s32 %v1030, %v1033
    %vm1035 = vcmp.lt.s32.totalorder %v1034, 0
    %v1036 = vsub.s32 0, %v1034
    %v1037 = vsel %vm1035, %v1036, %v1034
    %v1038 = vclz %v1037
    %v1039 = vsub.s32 %v1038, 2
    %vm1040 = vcmp.gt.s32.totalorder 0, %v1039
    %v1041 = vsel %vm1040, 0, %v1039
    %v1042 = vsub.s32 32, %v1041
    %v1043 = vshll.u32 %v1034, %v1041
    %v1044 = vshrl.u32 %v1026, %v1042
    %v1045 = vor.u32 %v1043, %v1044
    %v1046 = vsub.s32 4294967266, %v1041
    %v1047 = vadd.s32 %v1046, 127
    %v1048 = vshll.u32 %v1047, 23
    %v1049 = vor.u32 4788187, %v1048
    %v1050 = vand.u32 2147483647, %v1049
    %v1052 = vcvt.s32.f32 %v1045
    %v1053 = vmul.f32 %v1052, %v1050
    %v1054 = vxor.u32 %v1053, 2147483648
    %v1055 = vsel %vm972, %v1054, %v1053
    %v1056 = vsub.s32 4, %v1032
    %v1057 = vsel %vm972, %v1056, %v1032
    %v1058 = vsel %vm971, %v448, %v1055
    %v1059 = vsel %vm971, 0, %v1057
    %v1060 = vcosq.f32.pop %v1058
    %v1061 = vsinq.f32.pop %v1058
    %vm1062 = vweird.f32 %v448
    %v1063 = vadd.s32 %v1059, 3
    %v1064 = vand.u32 %v1063, 3
    %vm1065 = vcmp.lt.s32.totalorder %v1064, 2
    %vm1066 = vcmp.eq.s32.totalorder %v1064, 0
    %v1067 = vxor.u32 %v1061, 2147483648
    %v1068 = vsel %vm1066, %v1060, %v1067
    %vm1069 = vcmp.eq.s32.totalorder %v1064, 2
    %v1070 = vxor.u32 %v1060, 2147483648
    %v1071 = vsel %vm1069, %v1070, %v1061
    %v1072 = vsel %vm1065, %v1068, %v1071
    %v1073 = vsel %vm1062, nan, %v1072
    %v1074 = vand.u32 2147483647, %v449
    %vm1075 = vcmp.le.f32.partialorder %v1074, 0.7853982
    %vm1076 = vcmp.lt.s32.totalorder %v449, 0
    %v1077 = vand.u32 %v449, 2139095040
    %v1078 = vshrl.u32 %v1077, 23
    %v1079 = vsub.s32 %v1078, 127
    %v1080 = vand.u32 2147483647, %v449
    %v1081 = vand.u32 %v1080, 8388607
    %v1082 = vor.u32 %v1081, 8388608
    %v1083 = vsub.s32 0, %v1082
    %v1084 = vadd.s32 %v1079, 1
    %vm1085 = vcmp.gt.s32.totalorder %v1084, 0
    %v1086 = vsel %vm1085, %v1084, 0
    %v1087 = vshrl.u32 %v1086, 5
    %v1088 = vand.u32 %v1086, 31
    %v1089 = vsub.s32 32, %v1088
    %v1090 = vshrl.u32 683565275, %v1089
    %v1091 = vshll.u32 683565275, %v1088
    %v1092 = vshrl.u32 2475754826, %v1089
    %v1093 = vor.u32 %v1091, %v1092
    %v1094 = vshll.u32 2475754826, %v1088
    %v1095 = vshrl.u32 2131351028, %v1089
    %v1096 = vor.u32 %v1094, %v1095
    %v1097 = vshll.u32 2131351028, %v1088
    %v1098 = vshrl.u32 2102212464, %v1089
    %v1099 = vor.u32 %v1097, %v1098
    %v1100 = vshll.u32 2102212464, %v1088
    %v1101 = vshrl.u32 920167782, %v1089
    %v1102 = vor.u32 %v1100, %v1101
    %v1103 = vshll.u32 920167782, %v1088
    %v1104 = vshrl.u32 1326507024, %v1089
    %v1105 = vor.u32 %v1103, %v1104
    %vm1106 = vcmp.lt.s32.totalorder %v1087, 1
    %vm1107 = vcmp.lt.s32.totalorder %v1087, 2
    %vm1108 = vcmp.lt.s32.totalorder %v1087, 3
    %vm1109 = vcmp.lt.s32.totalorder %v1087, 4
    %v1110 = vsel %vm1106, %v1090, %v1093
    %v1111 = vsel %vm1109, %v1099, 2102212464
    %v1112 = vsel %vm1108, %v1096, %v1111
    %v1113 = vsel %vm1107, %v1110, %v1112
    %v1114 = vsel %vm1106, %v1093, %v1096
    %v1115 = vsel %vm1109, %v1102, 920167782
    %v1116 = vsel %vm1108, %v1099, %v1115
    %v1117 = vsel %vm1107, %v1114, %v1116
    %v1118 = vsel %vm1106, %v1096, %v1099
    %v1119 = vsel %vm1109, %v1105, 1326507024
    %v1120 = vsel %vm1108, %v1102, %v1119
    %v1121 = vsel %vm1107, %v1118, %v1120
    %v1122 = vshll.u32 %v1082, 8
    %v1123 = vmul.u32.u64.compose %v1122, %v1121
    %v1124 = vextract.low.u32 %v1123
    %v1125 = vextract.high.u32 %v1123
    %v1126 = vmul.u32.u64.compose %v1122, %v1117
    %v1127 = vextract.low.u32 %v1126
    %v1128 = vextract.high.u32 %v1126
    %v1129 = vmul.u32 %v1122, %v1113
    %v1130 = vadd.s32 %v1125, %v1127
    %vm1131 = vc.u32 %v1125, %v1127
    %v1132 = vadd.s32 %v1128, 1
    %v1133 = vsel %vm1131, %v1132, %v1128
    %v1134 = vadd.s32 %v1129, %v1133
    %v1135 = vadd.s32 %v1134, 536870912
    %v1136 = vshrl.u32 %v1135, 30
    %v1137 = vshll.u32 %v1136, 30
    %v1138 = vsub.s32 %v1134, %v1137
    %vm1139 = vcmp.lt.s32.totalorder %v1138, 0
    %v1140 = vsub.s32 0, %v1138
    %v1141 = vsel %vm1139, %v1140, %v1138
    %v1142 = vclz %v1141
    %v1143 = vsub.s32 %v1142, 2
    %vm1144 = vcmp.gt.s32.totalorder 0, %v1143
    %v1145 = vsel %vm1144, 0, %v1143
    %v1146 = vsub.s32 32, %v1145
    %v1147 = vshll.u32 %v1138, %v1145
    %v1148 = vshrl.u32 %v1130, %v1146
    %v1149 = vor.u32 %v1147, %v1148
    %v1150 = vsub.s32 4294967266, %v1145
    %v1151 = vadd.s32 %v1150, 127
    %v1152 = vshll.u32 %v1151, 23
    %v1153 = vor.u32 4788187, %v1152
    %v1154 = vand.u32 2147483647, %v1153
    %v1156 = vcvt.s32.f32 %v1149
    %v1157 = vmul.f32 %v1156, %v1154
    %v1158 = vxor.u32 %v1157, 2147483648
    %v1159 = vsel %vm1076, %v1158, %v1157
    %v1160 = vsub.s32 4, %v1136
    %v1161 = vsel %vm1076, %v1160, %v1136
    %v1162 = vsel %vm1075, %v449, %v1159
    %v1163 = vsel %vm1075, 0, %v1161
    %v1164 = vcosq.f32.pop %v1162
    %v1165 = vsinq.f32.pop %v1162
    %vm1166 = vweird.f32 %v449
    %v1167 = vadd.s32 %v1163, 3
    %v1168 = vand.u32 %v1167, 3
    %vm1169 = vcmp.lt.s32.totalorder %v1168, 2
    %vm1170 = vcmp.eq.s32.totalorder %v1168, 0
    %v1171 = vxor.u32 %v1165, 2147483648
    %v1172 = vsel %vm1170, %v1164, %v1171
    %vm1173 = vcmp.eq.s32.totalorder %v1168, 2
    %v1174 = vxor.u32 %v1164, 2147483648
    %v1175 = vsel %vm1173, %v1174, %v1165
    %v1176 = vsel %vm1169, %v1172, %v1175
    %v1177 = vsel %vm1166, nan, %v1176
    %v1178 = vmul.f32 %v553, 0.8164966
    %v1179 = vmul.f32 %v657, 0.8164966
    %v1180 = vmul.f32 %v761, 0.8164966
    %v1181 = vmul.f32 %v865, 0.8164966
    %v1182 = vmul.f32 %v969, 0.8164966
    %v1183 = vmul.f32 %v1073, 0.8164966
    %v1184 = vmul.f32 %v1177, 0.8164966
    %1185 = vset.pattern.permute.xlu0 0
    %1186 = vperm.xlu0 %1185, %v298
    %v1187 = vpop.permute.xlu0 %1186
    %1189 = vset.pattern.permute.xlu0 0
    %1190 = vperm.xlu0 %1189, %v300
    %v1191 = vpop.permute.xlu0 %1190
    %1193 = vset.pattern.permute.xlu0 0
    %1194 = vperm.xlu0 %1193, %v302
    %v1195 = vpop.permute.xlu0 %1194
    %1197 = vset.pattern.permute.xlu0 0
    %1198 = vperm.xlu0 %1197, %v304
    %v1199 = vpop.permute.xlu0 %1198
    %1201 = vset.pattern.permute.xlu0 0
    %1202 = vperm.xlu0 %1201, %v306
    %v1203 = vpop.permute.xlu0 %1202
    %1205 = vset.pattern.permute.xlu0 0
    %1206 = vperm.xlu0 %1205, %v308
    %v1207 = vpop.permute.xlu0 %1206
    %1209 = vset.pattern.permute.xlu0 0
    %1210 = vperm.xlu0 %1209, %v310
    %v1211 = vpop.permute.xlu0 %1210
    %v1213 = vmul.f32 %v1178, %v1187
    %v1214 = vmul.f32 %v1179, %v1191
    %v1215 = vmul.f32 %v1180, %v1195
    %v1216 = vmul.f32 %v1181, %v1199
    %v1217 = vmul.f32 %v1182, %v1203
    %v1218 = vmul.f32 %v1183, %v1207
    %v1219 = vmul.f32 %v1184, %v1211
    %v1220 = vmul.f32 %v1213, 0.33333334
    %v1221 = vmul.f32 %v1214, 0.33333334
    %v1222 = vmul.f32 %v1215, 0.33333334
    %v1223 = vmul.f32 %v1216, 0.33333334
    %v1224 = vmul.f32 %v1217, 0.33333334
    %v1225 = vmul.f32 %v1218, 0.33333334
    %v1226 = vmul.f32 %v1219, 0.33333334
    %v1227 = vmul.f32 %v1220, %v1220
    %v1228 = vmul.f32 %v1221, %v1221
    %v1229 = vmul.f32 %v1222, %v1222
    %v1230 = vmul.f32 %v1223, %v1223
    %v1231 = vmul.f32 %v1224, %v1224
    %v1232 = vmul.f32 %v1225, %v1225
    %v1233 = vmul.f32 %v1226, %v1226
    %v1234 = vmul.f32 %v1227, %v1227
    %v1235 = vmul.f32 %v1228, %v1228
    %v1236 = vmul.f32 %v1229, %v1229
    %v1237 = vmul.f32 %v1230, %v1230
    %v1238 = vmul.f32 %v1231, %v1231
    %v1239 = vmul.f32 %v1232, %v1232
    %v1240 = vmul.f32 %v1233, %v1233
    %v1241 = vmul.f32 %v1234, %v1227
    %v1242 = vmul.f32 %v1235, %v1228
    %v1243 = vmul.f32 %v1236, %v1229
    %v1244 = vmul.f32 %v1237, %v1230
    %v1245 = vmul.f32 %v1238, %v1231
    %v1246 = vmul.f32 %v1239, %v1232
    %v1247 = vmul.f32 %v1240, %v1233
    %v1248 = vmul.f32 %v1241, 28.0
    %v1249 = vmul.f32 %v1242, 28.0
    %v1250 = vmul.f32 %v1243, 28.0
    %v1251 = vmul.f32 %v1244, 28.0
    %v1252 = vmul.f32 %v1245, 28.0
    %v1253 = vmul.f32 %v1246, 28.0
    %v1254 = vmul.f32 %v1247, 28.0
    %v1255 = vsub.f32 1.0, %v1248
    %v1256 = vsub.f32 1.0, %v1249
    %v1257 = vsub.f32 1.0, %v1250
    %v1258 = vsub.f32 1.0, %v1251
    %v1259 = vsub.f32 1.0, %v1252
    %v1260 = vsub.f32 1.0, %v1253
    %v1261 = vsub.f32 1.0, %v1254
    %v1262 = vmul.f32 %v1241, 48.0
    %v1263 = vmul.f32 %v1242, 48.0
    %v1264 = vmul.f32 %v1243, 48.0
    %v1265 = vmul.f32 %v1244, 48.0
    %v1266 = vmul.f32 %v1245, 48.0
    %v1267 = vmul.f32 %v1246, 48.0
    %v1268 = vmul.f32 %v1247, 48.0
    %v1269 = vmul.f32 %v1262, %v1220
    %v1270 = vmul.f32 %v1263, %v1221
    %v1271 = vmul.f32 %v1264, %v1222
    %v1272 = vmul.f32 %v1265, %v1223
    %v1273 = vmul.f32 %v1266, %v1224
    %v1274 = vmul.f32 %v1267, %v1225
    %v1275 = vmul.f32 %v1268, %v1226
    %v1276 = vadd.f32 %v1255, %v1269
    %v1277 = vadd.f32 %v1256, %v1270
    %v1278 = vadd.f32 %v1257, %v1271
    %v1279 = vadd.f32 %v1258, %v1272
    %v1280 = vadd.f32 %v1259, %v1273
    %v1281 = vadd.f32 %v1260, %v1274
    %v1282 = vadd.f32 %v1261, %v1275
    %v1283 = vmul.f32 %v1241, 21.0
    %v1284 = vmul.f32 %v1242, 21.0
    %v1285 = vmul.f32 %v1243, 21.0
    %v1286 = vmul.f32 %v1244, 21.0
    %v1287 = vmul.f32 %v1245, 21.0
    %v1288 = vmul.f32 %v1246, 21.0
    %v1289 = vmul.f32 %v1247, 21.0
    %v1290 = vmul.f32 %v1283, %v1227
    %v1291 = vmul.f32 %v1284, %v1228
    %v1292 = vmul.f32 %v1285, %v1229
    %v1293 = vmul.f32 %v1286, %v1230
    %v1294 = vmul.f32 %v1287, %v1231
    %v1295 = vmul.f32 %v1288, %v1232
    %v1296 = vmul.f32 %v1289, %v1233
    %v1297 = vsub.f32 %v1276, %v1290
    %v1298 = vsub.f32 %v1277, %v1291
    %v1299 = vsub.f32 %v1278, %v1292
    %v1300 = vsub.f32 %v1279, %v1293
    %v1301 = vsub.f32 %v1280, %v1294
    %v1302 = vsub.f32 %v1281, %v1295
    %v1303 = vsub.f32 %v1282, %v1296
    %vm1304 = vcmp.lt.f32.partialorder %v1213, 3.0
    %vm1305 = vcmp.lt.f32.partialorder %v1214, 3.0
    %vm1306 = vcmp.lt.f32.partialorder %v1215, 3.0
    %vm1307 = vcmp.lt.f32.partialorder %v1216, 3.0
    %vm1308 = vcmp.lt.f32.partialorder %v1217, 3.0
    %vm1309 = vcmp.lt.f32.partialorder %v1218, 3.0
    %vm1310 = vcmp.lt.f32.partialorder %v1219, 3.0
    %v1311 = vsel %vm1304, 1, 0
    %v1312 = vsel %vm1305, 1, 0
    %v1313 = vsel %vm1306, 1, 0
    %v1314 = vsel %vm1307, 1, 0
    %v1315 = vsel %vm1308, 1, 0
    %v1316 = vsel %vm1309, 1, 0
    %v1317 = vsel %vm1310, 1, 0
    %v1318 = vcvt.s32.f32 %v1311
    %v1319 = vcvt.s32.f32 %v1312
    %v1320 = vcvt.s32.f32 %v1313
    %v1321 = vcvt.s32.f32 %v1314
    %v1322 = vcvt.s32.f32 %v1315
    %v1323 = vcvt.s32.f32 %v1316
    %v1324 = vcvt.s32.f32 %v1317
    %v1325 = vmul.f32 %v1297, %v1318
    %v1326 = vmul.f32 %v1298, %v1319
    %v1327 = vmul.f32 %v1299, %v1320
    %v1328 = vmul.f32 %v1300, %v1321
    %v1329 = vmul.f32 %v1301, %v1322
    %v1330 = vmul.f32 %v1302, %v1323
    %v1331 = vmul.f32 %v1303, %v1324
    %v1332 = vld [vmem:[#allocation2] sm:$0xff]
    %v1333 = vld [vmem:[%s8] sm:$0xff]
    %v1334 = vld [vmem:[%s8 + $0x8] sm:$0xff]
    %v1335 = vld [vmem:[%s8 + $0x10] sm:$0xff]
    %v1336 = vld [vmem:[%s8 + $0x18] sm:$0xff]
    %v1337 = vld [vmem:[%s8 + $0x20] sm:$0xff]
    %v1338 = vld [vmem:[%s8 + $0x28] sm:$0xff]
    %v1339 = vld [vmem:[%s8 + $0x30] sm:$0xff]
    %v1340 = vld [vmem:[%s8 + $0x38] sm:$0xff]
    %v1341 = vld [vmem:[%s9] sm:$0xff]
    %v1342 = vld [vmem:[%s9 + $0x8] sm:$0xff]
    %v1343 = vld [vmem:[%s9 + $0x10] sm:$0xff]
    %v1344 = vld [vmem:[%s9 + $0x18] sm:$0xff]
    %v1345 = vld [vmem:[%s9 + $0x20] sm:$0xff]
    %v1346 = vld [vmem:[%s9 + $0x28] sm:$0xff]
    %v1347 = vld [vmem:[%s9 + $0x30] sm:$0xff]
    %v1348 = vld [vmem:[%s9 + $0x38] sm:$0xff]
    %v1349 = vld [vmem:[%s10] sm:$0xff]
    %v1350 = vld [vmem:[%s10 + $0x8] sm:$0xff]
    %v1351 = vld [vmem:[%s10 + $0x10] sm:$0xff]
    %v1352 = vld [vmem:[%s10 + $0x18] sm:$0xff]
    %v1353 = vld [vmem:[%s10 + $0x20] sm:$0xff]
    %v1354 = vld [vmem:[%s10 + $0x28] sm:$0xff]
    %v1355 = vld [vmem:[%s10 + $0x30] sm:$0xff]
    %v1356 = vld [vmem:[%s10 + $0x38] sm:$0xff]
    %vm1357 = vcmask 64512
    %v1359 = vsel %vm1357, %v1325, 0
    %v1362 = vsel %vm1357, %v1326, 0
    %v1365 = vsel %vm1357, %v1327, 0
    %v1368 = vsel %vm1357, %v1328, 0
    %v1371 = vsel %vm1357, %v1329, 0
    %v1374 = vsel %vm1357, %v1330, 0
    %v1377 = vsel %vm1357, %v1331, 0
    %1379 = vmatprep.subr.mxu0 0.0
    %1380 = vmatpush1.msra.mxu0 %v1332
    %1381 = vmatprep.subr.mxu0 0.0
    %1382 = vmatpush1.msra.mxu0 0.0
    %1383 = vmatprep.subr.mxu0 0.0
    %1384 = vmatpush1.msra.mxu0 0.0
    %1385 = vmatprep.subr.mxu0 0.0
    %1386 = vmatpush1.msra.mxu0 0.0
    %1387 = vmatprep.subr.mxu0 0.0
    %1388 = vmatpush1.msra.mxu0 0.0
    %1389 = vmatprep.subr.mxu0 0.0
    %1390 = vmatpush1.msra.mxu0 0.0
    %1391 = vmatprep.subr.mxu0 0.0
    %1392 = vmatpush1.msra.mxu0 0.0
    %1393 = vmatprep.subr.mxu0 0.0
    %1394 = vmatpush1.msra.mxu0 0.0
    %1395 = vmatprep.subr.mxu0 0.0
    %1396 = vmatpush1.msra.mxu0 0.0
    %1397 = vmatprep.subr.mxu0 0.0
    %1398 = vmatpush1.msra.mxu0 0.0
    %1399 = vmatprep.subr.mxu0 0.0
    %1400 = vmatpush1.msra.mxu0 0.0
    %1401 = vmatprep.subr.mxu0 0.0
    %1402 = vmatpush1.msra.mxu0 0.0
    %1403 = vmatprep.subr.mxu0 0.0
    %1404 = vmatpush1.msra.mxu0 0.0
    %1405 = vmatprep.subr.mxu0 0.0
    %1406 = vmatpush1.msra.mxu0 0.0
    %1407 = vmatprep.subr.mxu0 0.0
    %1408 = vmatpush1.msra.mxu0 0.0
    %1409 = vmatprep.subr.mxu0 0.0
    %1410 = vmatpush1.msra.mxu0 0.0
    %1411 = vmatprep.subr.mxu0 0.0
    %1412 = vmatpush1.msra.mxu0 0.0
    %1413 = vmatprep.subr.mxu0 0.0
    %1414 = vmatpush1.msra.mxu0 0.0
    %1415 = vmatprep.subr.mxu0 0.0
    %1416 = vmatpush1.msra.mxu0 0.0
    %1417 = vmatprep.subr.mxu0 0.0
    %1418 = vmatpush1.msra.mxu0 0.0
    %1419 = vmatprep.subr.mxu0 0.0
    %1420 = vmatpush1.msra.mxu0 0.0
    %1421 = vmatprep.subr.mxu0 0.0
    %1422 = vmatpush1.msra.mxu0 0.0
    %1423 = vmatprep.subr.mxu0 0.0
    %1424 = vmatpush1.msra.mxu0 0.0
    %1425 = vmatprep.subr.mxu0 0.0
    %1426 = vmatpush1.msra.mxu0 0.0
    %1427 = vmatprep.subr.mxu0 0.0
    %1428 = vmatpush1.msra.mxu0 0.0
    %1429 = vmatprep.subr.mxu0 0.0
    %1430 = vmatpush1.msra.mxu0 0.0
    %1431 = vmatprep.subr.mxu0 0.0
    %1432 = vmatpush1.msra.mxu0 0.0
    %1433 = vmatprep.subr.mxu0 0.0
    %1434 = vmatpush1.msra.mxu0 0.0
    %1435 = vmatprep.subr.mxu0 0.0
    %1436 = vmatpush1.msra.mxu0 0.0
    %1437 = vmatprep.subr.mxu0 0.0
    %1438 = vmatpush1.msra.mxu0 0.0
    %1439 = vmatprep.subr.mxu0 0.0
    %1440 = vmatpush1.msra.mxu0 0.0
    %1441 = vmatprep.subr.mxu0 0.0
    %1442 = vmatpush1.msra.mxu0 0.0
    %1443 = vmatprep.mubr.f32.mxu0 0.0
    %1444 = vmatmul.mubr.f32.gmra.mrb[0].mxu0 %v1359
    %v1445 = vpop.f32.mrb[0].mxu0
    %v1446 = vadd.f32 0.0, %v1445
    %v1447 = vpop.f32.mrb[0].mxu0
    %1448 = vmatprep.mubr.f32.mxu0 0.0
    %1449 = vmatmul.mubr.f32.gmra.mrb[0].mxu0 %v1362
    %v1450 = vpop.f32.mrb[0].mxu0
    %v1451 = vadd.f32 0.0, %v1450
    %v1452 = vpop.f32.mrb[0].mxu0
    %1453 = vmatprep.mubr.f32.mxu0 0.0
    %1454 = vmatmul.mubr.f32.gmra.mrb[0].mxu0 %v1365
    %v1455 = vpop.f32.mrb[0].mxu0
    %v1456 = vadd.f32 0.0, %v1455
    %v1457 = vpop.f32.mrb[0].mxu0
    %1458 = vmatprep.mubr.f32.mxu0 0.0
    %1459 = vmatmul.mubr.f32.gmra.mrb[0].mxu0 %v1368
    %v1460 = vpop.f32.mrb[0].mxu0
    %v1461 = vadd.f32 0.0, %v1460
    %v1462 = vpop.f32.mrb[0].mxu0
    %1463 = vmatprep.mubr.f32.mxu0 0.0
    %1464 = vmatmul.mubr.f32.gmra.mrb[0].mxu0 %v1371
    %v1465 = vpop.f32.mrb[0].mxu0
    %v1466 = vadd.f32 0.0, %v1465
    %v1467 = vpop.f32.mrb[0].mxu0
    %1468 = vmatprep.mubr.f32.mxu0 0.0
    %1469 = vmatmul.mubr.f32.gmra.mrb[0].mxu0 %v1374
    %v1470 = vpop.f32.mrb[0].mxu0
    %v1471 = vadd.f32 0.0, %v1470
    %v1472 = vpop.f32.mrb[0].mxu0
    %1473 = vmatprep.mubr.f32.mxu0 0.0
    %1474 = vmatmul.mubr.f32.gmra.mrb[0].mxu0 %v1377
    %v1475 = vpop.f32.mrb[0].mxu0
    %v1476 = vadd.f32 0.0, %v1475
    %v1477 = vpop.f32.mrb[0].mxu0
    %1478 = vdwg.mxu0
    %v1479 = vxor.u32 %v1446, 2147483648
    %v1480 = vxor.u32 %v1451, 2147483648
    %v1481 = vxor.u32 %v1456, 2147483648
    %v1482 = vxor.u32 %v1461, 2147483648
    %v1483 = vxor.u32 %v1466, 2147483648
    %v1484 = vxor.u32 %v1471, 2147483648
    %v1485 = vxor.u32 %v1476, 2147483648
    %v1486 = vmul.f32 %v1479, 1.442695
    %v1487 = vpow.pop %v1486
    %v1488 = vmul.f32 %v1480, 1.442695
    %v1489 = vpow.pop %v1488
    %v1490 = vmul.f32 %v1481, 1.442695
    %v1491 = vpow.pop %v1490
    %v1492 = vmul.f32 %v1482, 1.442695
    %v1493 = vpow.pop %v1492
    %v1494 = vmul.f32 %v1483, 1.442695
    %v1495 = vpow.pop %v1494
    %v1496 = vmul.f32 %v1484, 1.442695
    %v1497 = vpow.pop %v1496
    %v1498 = vmul.f32 %v1485, 1.442695
    %v1499 = vpow.pop %v1498
    %v1500 = vadd.f32 %v1487, 1.0
    %v1501 = vadd.f32 %v1489, 1.0
    %v1502 = vadd.f32 %v1491, 1.0
    %v1503 = vadd.f32 %v1493, 1.0
    %v1504 = vadd.f32 %v1495, 1.0
    %v1505 = vadd.f32 %v1497, 1.0
    %v1506 = vadd.f32 %v1499, 1.0
    %v1507 = vrcp.pop %v1500
    %v1508 = vmul.f32 1.0, %v1507
    %v1509 = vrcp.pop %v1501
    %v1510 = vmul.f32 1.0, %v1509
    %v1511 = vrcp.pop %v1502
    %v1512 = vmul.f32 1.0, %v1511
    %v1513 = vrcp.pop %v1503
    %v1514 = vmul.f32 1.0, %v1513
    %v1515 = vrcp.pop %v1504
    %v1516 = vmul.f32 1.0, %v1515
    %v1517 = vrcp.pop %v1505
    %v1518 = vmul.f32 1.0, %v1517
    %v1519 = vrcp.pop %v1506
    %v1520 = vmul.f32 1.0, %v1519
    %v1521 = vmul.f32 %v1446, %v1508
    %v1522 = vmul.f32 %v1451, %v1510
    %v1523 = vmul.f32 %v1456, %v1512
    %v1524 = vmul.f32 %v1461, %v1514
    %v1525 = vmul.f32 %v1466, %v1516
    %v1526 = vmul.f32 %v1471, %v1518
    %v1527 = vmul.f32 %v1476, %v1520
    %vm1528 = vcmask 523264
    %v1530 = vsel %vm1528, %v1521, 0
    %v1533 = vsel %vm1528, %v1522, 0
    %v1536 = vsel %vm1528, %v1523, 0
    %v1539 = vsel %vm1528, %v1524, 0
    %v1542 = vsel %vm1528, %v1525, 0
    %v1545 = vsel %vm1528, %v1526, 0
    %v1548 = vsel %vm1528, %v1527, 0
    %1550 = vmatprep.subr.mxu0 0.0
    %1551 = vmatpush1.msra.mxu0 %v1333
    %1552 = vmatprep.subr.mxu0 0.0
    %1553 = vmatpush1.msra.mxu0 %v1334
    %1554 = vmatprep.subr.mxu0 0.0
    %1555 = vmatpush1.msra.mxu0 %v1335
    %1556 = vmatprep.subr.mxu0 0.0
    %1557 = vmatpush1.msra.mxu0 %v1336
    %1558 = vmatprep.subr.mxu0 0.0
    %1559 = vmatpush1.msra.mxu0 %v1337
    %1560 = vmatprep.subr.mxu0 0.0
    %1561 = vmatpush1.msra.mxu0 %v1338
    %1562 = vmatprep.subr.mxu0 0.0
    %1563 = vmatpush1.msra.mxu0 %v1339
    %1564 = vmatprep.subr.mxu0 0.0
    %1565 = vmatpush1.msra.mxu0 %v1340
    %1566 = vmatprep.subr.mxu0 0.0
    %1567 = vmatpush1.msra.mxu0 0.0
    %1568 = vmatprep.subr.mxu0 0.0
    %1569 = vmatpush1.msra.mxu0 0.0
    %1570 = vmatprep.subr.mxu0 0.0
    %1571 = vmatpush1.msra.mxu0 0.0
    %1572 = vmatprep.subr.mxu0 0.0
    %1573 = vmatpush1.msra.mxu0 0.0
    %1574 = vmatprep.subr.mxu0 0.0
    %1575 = vmatpush1.msra.mxu0 0.0
    %1576 = vmatprep.subr.mxu0 0.0
    %1577 = vmatpush1.msra.mxu0 0.0
    %1578 = vmatprep.subr.mxu0 0.0
    %1579 = vmatpush1.msra.mxu0 0.0
    %1580 = vmatprep.subr.mxu0 0.0
    %1581 = vmatpush1.msra.mxu0 0.0
    %1582 = vmatprep.subr.mxu0 0.0
    %1583 = vmatpush1.msra.mxu0 0.0
    %1584 = vmatprep.subr.mxu0 0.0
    %1585 = vmatpush1.msra.mxu0 0.0
    %1586 = vmatprep.subr.mxu0 0.0
    %1587 = vmatpush1.msra.mxu0 0.0
    %1588 = vmatprep.subr.mxu0 0.0
    %1589 = vmatpush1.msra.mxu0 0.0
    %1590 = vmatprep.subr.mxu0 0.0
    %1591 = vmatpush1.msra.mxu0 0.0
    %1592 = vmatprep.subr.mxu0 0.0
    %1593 = vmatpush1.msra.mxu0 0.0
    %1594 = vmatprep.subr.mxu0 0.0
    %1595 = vmatpush1.msra.mxu0 0.0
    %1596 = vmatprep.subr.mxu0 0.0
    %1597 = vmatpush1.msra.mxu0 0.0
    %1598 = vmatprep.subr.mxu0 0.0
    %1599 = vmatpush1.msra.mxu0 0.0
    %1600 = vmatprep.subr.mxu0 0.0
    %1601 = vmatpush1.msra.mxu0 0.0
    %1602 = vmatprep.subr.mxu0 0.0
    %1603 = vmatpush1.msra.mxu0 0.0
    %1604 = vmatprep.subr.mxu0 0.0
    %1605 = vmatpush1.msra.mxu0 0.0
    %1606 = vmatprep.subr.mxu0 0.0
    %1607 = vmatpush1.msra.mxu0 0.0
    %1608 = vmatprep.subr.mxu0 0.0
    %1609 = vmatpush1.msra.mxu0 0.0
    %1610 = vmatprep.subr.mxu0 0.0
    %1611 = vmatpush1.msra.mxu0 0.0
    %1612 = vmatprep.subr.mxu0 0.0
    %1613 = vmatpush1.msra.mxu0 0.0
    %1614 = vmatprep.mubr.f32.mxu0 0.0
    %1615 = vmatmul.mubr.f32.gmra.mrb[0].mxu0 %v1530
    %v1616 = vpop.f32.mrb[0].mxu0
    %v1617 = vadd.f32 0.0, %v1616
    %v1618 = vpop.f32.mrb[0].mxu0
    %1619 = vmatprep.mubr.f32.mxu0 0.0
    %1620 = vmatmul.mubr.f32.gmra.mrb[0].mxu0 %v1533
    %v1621 = vpop.f32.mrb[0].mxu0
    %v1622 = vadd.f32 0.0, %v1621
    %v1623 = vpop.f32.mrb[0].mxu0
    %1624 = vmatprep.mubr.f32.mxu0 0.0
    %1625 = vmatmul.mubr.f32.gmra.mrb[0].mxu0 %v1536
    %v1626 = vpop.f32.mrb[0].mxu0
    %v1627 = vadd.f32 0.0, %v1626
    %v1628 = vpop.f32.mrb[0].mxu0
    %1629 = vmatprep.mubr.f32.mxu0 0.0
    %1630 = vmatmul.mubr.f32.gmra.mrb[0].mxu0 %v1539
    %v1631 = vpop.f32.mrb[0].mxu0
    %v1632 = vadd.f32 0.0, %v1631
    %v1633 = vpop.f32.mrb[0].mxu0
    %1634 = vmatprep.mubr.f32.mxu0 0.0
    %1635 = vmatmul.mubr.f32.gmra.mrb[0].mxu0 %v1542
    %v1636 = vpop.f32.mrb[0].mxu0
    %v1637 = vadd.f32 0.0, %v1636
    %v1638 = vpop.f32.mrb[0].mxu0
    %1639 = vmatprep.mubr.f32.mxu0 0.0
    %1640 = vmatmul.mubr.f32.gmra.mrb[0].mxu0 %v1545
    %v1641 = vpop.f32.mrb[0].mxu0
    %v1642 = vadd.f32 0.0, %v1641
    %v1643 = vpop.f32.mrb[0].mxu0
    %1644 = vmatprep.mubr.f32.mxu0 0.0
    %1645 = vmatmul.mubr.f32.gmra.mrb[0].mxu0 %v1548
    %v1646 = vpop.f32.mrb[0].mxu0
    %v1647 = vadd.f32 0.0, %v1646
    %v1648 = vpop.f32.mrb[0].mxu0
    %1649 = vdwg.mxu0
    %v1650 = vxor.u32 %v1617, 2147483648
    %v1651 = vxor.u32 %v1622, 2147483648
    %v1652 = vxor.u32 %v1627, 2147483648
    %v1653 = vxor.u32 %v1632, 2147483648
    %v1654 = vxor.u32 %v1637, 2147483648
    %v1655 = vxor.u32 %v1642, 2147483648
    %v1656 = vxor.u32 %v1647, 2147483648
    %v1657 = vmul.f32 %v1650, 1.442695
    %v1658 = vpow.pop %v1657
    %v1659 = vmul.f32 %v1651, 1.442695
    %v1660 = vpow.pop %v1659
    %v1661 = vmul.f32 %v1652, 1.442695
    %v1662 = vpow.pop %v1661
    %v1663 = vmul.f32 %v1653, 1.442695
    %v1664 = vpow.pop %v1663
    %v1665 = vmul.f32 %v1654, 1.442695
    %v1666 = vpow.pop %v1665
    %v1667 = vmul.f32 %v1655, 1.442695
    %v1668 = vpow.pop %v1667
    %v1669 = vmul.f32 %v1656, 1.442695
    %v1670 = vpow.pop %v1669
    %v1671 = vadd.f32 %v1658, 1.0
    %v1672 = vadd.f32 %v1660, 1.0
    %v1673 = vadd.f32 %v1662, 1.0
    %v1674 = vadd.f32 %v1664, 1.0
    %v1675 = vadd.f32 %v1666, 1.0
    %v1676 = vadd.f32 %v1668, 1.0
    %v1677 = vadd.f32 %v1670, 1.0
    %v1678 = vrcp.pop %v1671
    %v1679 = vmul.f32 1.0, %v1678
    %v1680 = vrcp.pop %v1672
    %v1681 = vmul.f32 1.0, %v1680
    %v1682 = vrcp.pop %v1673
    %v1683 = vmul.f32 1.0, %v1682
    %v1684 = vrcp.pop %v1674
    %v1685 = vmul.f32 1.0, %v1684
    %v1686 = vrcp.pop %v1675
    %v1687 = vmul.f32 1.0, %v1686
    %v1688 = vrcp.pop %v1676
    %v1689 = vmul.f32 1.0, %v1688
    %v1690 = vrcp.pop %v1677
    %v1691 = vmul.f32 1.0, %v1690
    %v1692 = vmul.f32 %v1617, %v1679
    %v1693 = vmul.f32 %v1622, %v1681
    %v1694 = vmul.f32 %v1627, %v1683
    %v1695 = vmul.f32 %v1632, %v1685
    %v1696 = vmul.f32 %v1637, %v1687
    %v1697 = vmul.f32 %v1642, %v1689
    %v1698 = vmul.f32 %v1647, %v1691
    %v1700 = vsel %vm1528, %v1692, 0
    %v1703 = vsel %vm1528, %v1693, 0
    %v1706 = vsel %vm1528, %v1694, 0
    %v1709 = vsel %vm1528, %v1695, 0
    %v1712 = vsel %vm1528, %v1696, 0
    %v1715 = vsel %vm1528, %v1697, 0
    %v1718 = vsel %vm1528, %v1698, 0
    %1720 = vmatprep.subr.mxu0 0.0
    %1721 = vmatpush1.msra.mxu0 %v1341
    %1722 = vmatprep.subr.mxu0 0.0
    %1723 = vmatpush1.msra.mxu0 %v1342
    %1724 = vmatprep.subr.mxu0 0.0
    %1725 = vmatpush1.msra.mxu0 %v1343
    %1726 = vmatprep.subr.mxu0 0.0
    %1727 = vmatpush1.msra.mxu0 %v1344
    %1728 = vmatprep.subr.mxu0 0.0
    %1729 = vmatpush1.msra.mxu0 %v1345
    %1730 = vmatprep.subr.mxu0 0.0
    %1731 = vmatpush1.msra.mxu0 %v1346
    %1732 = vmatprep.subr.mxu0 0.0
    %1733 = vmatpush1.msra.mxu0 %v1347
    %1734 = vmatprep.subr.mxu0 0.0
    %1735 = vmatpush1.msra.mxu0 %v1348
    %1736 = vmatprep.subr.mxu0 0.0
    %1737 = vmatpush1.msra.mxu0 0.0
    %1738 = vmatprep.subr.mxu0 0.0
    %1739 = vmatpush1.msra.mxu0 0.0
    %1740 = vmatprep.subr.mxu0 0.0
    %1741 = vmatpush1.msra.mxu0 0.0
    %1742 = vmatprep.subr.mxu0 0.0
    %1743 = vmatpush1.msra.mxu0 0.0
    %1744 = vmatprep.subr.mxu0 0.0
    %1745 = vmatpush1.msra.mxu0 0.0
    %1746 = vmatprep.subr.mxu0 0.0
    %1747 = vmatpush1.msra.mxu0 0.0
    %1748 = vmatprep.subr.mxu0 0.0
    %1749 = vmatpush1.msra.mxu0 0.0
    %1750 = vmatprep.subr.mxu0 0.0
    %1751 = vmatpush1.msra.mxu0 0.0
    %1752 = vmatprep.subr.mxu0 0.0
    %1753 = vmatpush1.msra.mxu0 0.0
    %1754 = vmatprep.subr.mxu0 0.0
    %1755 = vmatpush1.msra.mxu0 0.0
    %1756 = vmatprep.subr.mxu0 0.0
    %1757 = vmatpush1.msra.mxu0 0.0
    %1758 = vmatprep.subr.mxu0 0.0
    %1759 = vmatpush1.msra.mxu0 0.0
    %1760 = vmatprep.subr.mxu0 0.0
    %1761 = vmatpush1.msra.mxu0 0.0
    %1762 = vmatprep.subr.mxu0 0.0
    %1763 = vmatpush1.msra.mxu0 0.0
    %1764 = vmatprep.subr.mxu0 0.0
    %1765 = vmatpush1.msra.mxu0 0.0
    %1766 = vmatprep.subr.mxu0 0.0
    %1767 = vmatpush1.msra.mxu0 0.0
    %1768 = vmatprep.subr.mxu0 0.0
    %1769 = vmatpush1.msra.mxu0 0.0
    %1770 = vmatprep.subr.mxu0 0.0
    %1771 = vmatpush1.msra.mxu0 0.0
    %1772 = vmatprep.subr.mxu0 0.0
    %1773 = vmatpush1.msra.mxu0 0.0
    %1774 = vmatprep.subr.mxu0 0.0
    %1775 = vmatpush1.msra.mxu0 0.0
    %1776 = vmatprep.subr.mxu0 0.0
    %1777 = vmatpush1.msra.mxu0 0.0
    %1778 = vmatprep.subr.mxu0 0.0
    %1779 = vmatpush1.msra.mxu0 0.0
    %1780 = vmatprep.subr.mxu0 0.0
    %1781 = vmatpush1.msra.mxu0 0.0
    %1782 = vmatprep.subr.mxu0 0.0
    %1783 = vmatpush1.msra.mxu0 0.0
    %1784 = vmatprep.mubr.f32.mxu0 0.0
    %1785 = vmatmul.mubr.f32.gmra.mrb[0].mxu0 %v1700
    %v1786 = vpop.f32.mrb[0].mxu0
    %v1787 = vadd.f32 0.0, %v1786
    %v1788 = vpop.f32.mrb[0].mxu0
    %1789 = vmatprep.mubr.f32.mxu0 0.0
    %1790 = vmatmul.mubr.f32.gmra.mrb[0].mxu0 %v1703
    %v1791 = vpop.f32.mrb[0].mxu0
    %v1792 = vadd.f32 0.0, %v1791
    %v1793 = vpop.f32.mrb[0].mxu0
    %1794 = vmatprep.mubr.f32.mxu0 0.0
    %1795 = vmatmul.mubr.f32.gmra.mrb[0].mxu0 %v1706
    %v1796 = vpop.f32.mrb[0].mxu0
    %v1797 = vadd.f32 0.0, %v1796
    %v1798 = vpop.f32.mrb[0].mxu0
    %1799 = vmatprep.mubr.f32.mxu0 0.0
    %1800 = vmatmul.mubr.f32.gmra.mrb[0].mxu0 %v1709
    %v1801 = vpop.f32.mrb[0].mxu0
    %v1802 = vadd.f32 0.0, %v1801
    %v1803 = vpop.f32.mrb[0].mxu0
    %1804 = vmatprep.mubr.f32.mxu0 0.0
    %1805 = vmatmul.mubr.f32.gmra.mrb[0].mxu0 %v1712
    %v1806 = vpop.f32.mrb[0].mxu0
    %v1807 = vadd.f32 0.0, %v1806
    %v1808 = vpop.f32.mrb[0].mxu0
    %1809 = vmatprep.mubr.f32.mxu0 0.0
    %1810 = vmatmul.mubr.f32.gmra.mrb[0].mxu0 %v1715
    %v1811 = vpop.f32.mrb[0].mxu0
    %v1812 = vadd.f32 0.0, %v1811
    %v1813 = vpop.f32.mrb[0].mxu0
    %1814 = vmatprep.mubr.f32.mxu0 0.0
    %1815 = vmatmul.mubr.f32.gmra.mrb[0].mxu0 %v1718
    %v1816 = vpop.f32.mrb[0].mxu0
    %v1817 = vadd.f32 0.0, %v1816
    %v1818 = vpop.f32.mrb[0].mxu0
    %1819 = vdwg.mxu0
    %v1820 = vxor.u32 %v1787, 2147483648
    %v1821 = vxor.u32 %v1792, 2147483648
    %v1822 = vxor.u32 %v1797, 2147483648
    %v1823 = vxor.u32 %v1802, 2147483648
    %v1824 = vxor.u32 %v1807, 2147483648
    %v1825 = vxor.u32 %v1812, 2147483648
    %v1826 = vxor.u32 %v1817, 2147483648
    %v1827 = vmul.f32 %v1820, 1.442695
    %v1828 = vpow.pop %v1827
    %v1829 = vmul.f32 %v1821, 1.442695
    %v1830 = vpow.pop %v1829
    %v1831 = vmul.f32 %v1822, 1.442695
    %v1832 = vpow.pop %v1831
    %v1833 = vmul.f32 %v1823, 1.442695
    %v1834 = vpow.pop %v1833
    %v1835 = vmul.f32 %v1824, 1.442695
    %v1836 = vpow.pop %v1835
    %v1837 = vmul.f32 %v1825, 1.442695
    %v1838 = vpow.pop %v1837
    %v1839 = vmul.f32 %v1826, 1.442695
    %v1840 = vpow.pop %v1839
    %v1841 = vadd.f32 %v1828, 1.0
    %v1842 = vadd.f32 %v1830, 1.0
    %v1843 = vadd.f32 %v1832, 1.0
    %v1844 = vadd.f32 %v1834, 1.0
    %v1845 = vadd.f32 %v1836, 1.0
    %v1846 = vadd.f32 %v1838, 1.0
    %v1847 = vadd.f32 %v1840, 1.0
    %v1848 = vrcp.pop %v1841
    %v1849 = vmul.f32 1.0, %v1848
    %v1850 = vrcp.pop %v1842
    %v1851 = vmul.f32 1.0, %v1850
    %v1852 = vrcp.pop %v1843
    %v1853 = vmul.f32 1.0, %v1852
    %v1854 = vrcp.pop %v1844
    %v1855 = vmul.f32 1.0, %v1854
    %v1856 = vrcp.pop %v1845
    %v1857 = vmul.f32 1.0, %v1856
    %v1858 = vrcp.pop %v1846
    %v1859 = vmul.f32 1.0, %v1858
    %v1860 = vrcp.pop %v1847
    %v1861 = vmul.f32 1.0, %v1860
    %v1862 = vmul.f32 %v1787, %v1849
    %v1863 = vmul.f32 %v1792, %v1851
    %v1864 = vmul.f32 %v1797, %v1853
    %v1865 = vmul.f32 %v1802, %v1855
    %v1866 = vmul.f32 %v1807, %v1857
    %v1867 = vmul.f32 %v1812, %v1859
    %v1868 = vmul.f32 %v1817, %v1861
    %v1870 = vsel %vm1528, %v1862, 0
    %v1873 = vsel %vm1528, %v1863, 0
    %v1876 = vsel %vm1528, %v1864, 0
    %v1879 = vsel %vm1528, %v1865, 0
    %v1882 = vsel %vm1528, %v1866, 0
    %v1885 = vsel %vm1528, %v1867, 0
    %v1888 = vsel %vm1528, %v1868, 0
    %1890 = vmatprep.subr.mxu0 0.0
    %1891 = vmatpush1.msra.mxu0 %v1349
    %1892 = vmatprep.subr.mxu0 0.0
    %1893 = vmatpush1.msra.mxu0 %v1350
    %1894 = vmatprep.subr.mxu0 0.0
    %1895 = vmatpush1.msra.mxu0 %v1351
    %1896 = vmatprep.subr.mxu0 0.0
    %1897 = vmatpush1.msra.mxu0 %v1352
    %1898 = vmatprep.subr.mxu0 0.0
    %1899 = vmatpush1.msra.mxu0 %v1353
    %1900 = vmatprep.subr.mxu0 0.0
    %1901 = vmatpush1.msra.mxu0 %v1354
    %1902 = vmatprep.subr.mxu0 0.0
    %1903 = vmatpush1.msra.mxu0 %v1355
    %1904 = vmatprep.subr.mxu0 0.0
    %1905 = vmatpush1.msra.mxu0 %v1356
    %1906 = vmatprep.subr.mxu0 0.0
    %1907 = vmatpush1.msra.mxu0 0.0
    %1908 = vmatprep.subr.mxu0 0.0
    %1909 = vmatpush1.msra.mxu0 0.0
    %1910 = vmatprep.subr.mxu0 0.0
    %1911 = vmatpush1.msra.mxu0 0.0
    %1912 = vmatprep.subr.mxu0 0.0
    %1913 = vmatpush1.msra.mxu0 0.0
    %1914 = vmatprep.subr.mxu0 0.0
    %1915 = vmatpush1.msra.mxu0 0.0
    %1916 = vmatprep.subr.mxu0 0.0
    %1917 = vmatpush1.msra.mxu0 0.0
    %1918 = vmatprep.subr.mxu0 0.0
    %1919 = vmatpush1.msra.mxu0 0.0
    %1920 = vmatprep.subr.mxu0 0.0
    %1921 = vmatpush1.msra.mxu0 0.0
    %1922 = vmatprep.subr.mxu0 0.0
    %1923 = vmatpush1.msra.mxu0 0.0
    %1924 = vmatprep.subr.mxu0 0.0
    %1925 = vmatpush1.msra.mxu0 0.0
    %1926 = vmatprep.subr.mxu0 0.0
    %1927 = vmatpush1.msra.mxu0 0.0
    %1928 = vmatprep.subr.mxu0 0.0
    %1929 = vmatpush1.msra.mxu0 0.0
    %1930 = vmatprep.subr.mxu0 0.0
    %1931 = vmatpush1.msra.mxu0 0.0
    %1932 = vmatprep.subr.mxu0 0.0
    %1933 = vmatpush1.msra.mxu0 0.0
    %1934 = vmatprep.subr.mxu0 0.0
    %1935 = vmatpush1.msra.mxu0 0.0
    %1936 = vmatprep.subr.mxu0 0.0
    %1937 = vmatpush1.msra.mxu0 0.0
    %1938 = vmatprep.subr.mxu0 0.0
    %1939 = vmatpush1.msra.mxu0 0.0
    %1940 = vmatprep.subr.mxu0 0.0
    %1941 = vmatpush1.msra.mxu0 0.0
    %1942 = vmatprep.subr.mxu0 0.0
    %1943 = vmatpush1.msra.mxu0 0.0
    %1944 = vmatprep.subr.mxu0 0.0
    %1945 = vmatpush1.msra.mxu0 0.0
    %1946 = vmatprep.subr.mxu0 0.0
    %1947 = vmatpush1.msra.mxu0 0.0
    %1948 = vmatprep.subr.mxu0 0.0
    %1949 = vmatpush1.msra.mxu0 0.0
    %1950 = vmatprep.subr.mxu0 0.0
    %1951 = vmatpush1.msra.mxu0 0.0
    %1952 = vmatprep.subr.mxu0 0.0
    %1953 = vmatpush1.msra.mxu0 0.0
    %1954 = vmatprep.mubr.f32.mxu0 0.0
    %1955 = vmatmul.mubr.f32.gmra.mrb[0].mxu0 %v1870
    %v1956 = vpop.f32.mrb[0].mxu0
    %v1957 = vadd.f32 0.0, %v1956
    %v1958 = vpop.f32.mrb[0].mxu0
    %1959 = vmatprep.mubr.f32.mxu0 0.0
    %1960 = vmatmul.mubr.f32.gmra.mrb[0].mxu0 %v1873
    %v1961 = vpop.f32.mrb[0].mxu0
    %v1962 = vadd.f32 0.0, %v1961
    %v1963 = vpop.f32.mrb[0].mxu0
    %1964 = vmatprep.mubr.f32.mxu0 0.0
    %1965 = vmatmul.mubr.f32.gmra.mrb[0].mxu0 %v1876
    %v1966 = vpop.f32.mrb[0].mxu0
    %v1967 = vadd.f32 0.0, %v1966
    %v1968 = vpop.f32.mrb[0].mxu0
    %1969 = vmatprep.mubr.f32.mxu0 0.0
    %1970 = vmatmul.mubr.f32.gmra.mrb[0].mxu0 %v1879
    %v1971 = vpop.f32.mrb[0].mxu0
    %v1972 = vadd.f32 0.0, %v1971
    %v1973 = vpop.f32.mrb[0].mxu0
    %1974 = vmatprep.mubr.f32.mxu0 0.0
    %1975 = vmatmul.mubr.f32.gmra.mrb[0].mxu0 %v1882
    %v1976 = vpop.f32.mrb[0].mxu0
    %v1977 = vadd.f32 0.0, %v1976
    %v1978 = vpop.f32.mrb[0].mxu0
    %1979 = vmatprep.mubr.f32.mxu0 0.0
    %1980 = vmatmul.mubr.f32.gmra.mrb[0].mxu0 %v1885
    %v1981 = vpop.f32.mrb[0].mxu0
    %v1982 = vadd.f32 0.0, %v1981
    %v1983 = vpop.f32.mrb[0].mxu0
    %1984 = vmatprep.mubr.f32.mxu0 0.0
    %1985 = vmatmul.mubr.f32.gmra.mrb[0].mxu0 %v1888
    %v1986 = vpop.f32.mrb[0].mxu0
    %v1987 = vadd.f32 0.0, %v1986
    %v1988 = vpop.f32.mrb[0].mxu0
    %1989 = vdwg.mxu0
    %v1990 = vld [vmem:[%s3] sm:$0xff]
    %v1991 = vld [vmem:[%s3 + $0x8] sm:$0xff]
    %v1992 = vld [vmem:[%s3 + $0x10] sm:$0xff]
    %v1993 = vld [vmem:[%s3 + $0x18] sm:$0xff]
    %v1994 = vld [vmem:[%s3 + $0x20] sm:$0xff]
    %v1995 = vld [vmem:[%s3 + $0x28] sm:$0xff]
    %v1996 = vld [vmem:[%s3 + $0x30] sm:$0xff]
    %v1998 = vsel %vm1357, %v1990, 0
    %v2001 = vsel %vm1357, %v1991, 0
    %v2004 = vsel %vm1357, %v1992, 0
    %v2007 = vsel %vm1357, %v1993, 0
    %v2010 = vsel %vm1357, %v1994, 0
    %v2013 = vsel %vm1357, %v1995, 0
    %v2016 = vsel %vm1357, %v1996, 0
    %2018 = vmatprep.subr.mxu0 0.0
    %2019 = vmatpush1.msra.mxu0 %v286
    %2020 = vmatprep.subr.mxu0 0.0
    %2021 = vmatpush1.msra.mxu0 0.0
    %2022 = vmatprep.subr.mxu0 0.0
    %2023 = vmatpush1.msra.mxu0 0.0
    %2024 = vmatprep.subr.mxu0 0.0
    %2025 = vmatpush1.msra.mxu0 0.0
    %2026 = vmatprep.subr.mxu0 0.0
    %2027 = vmatpush1.msra.mxu0 0.0
    %2028 = vmatprep.subr.mxu0 0.0
    %2029 = vmatpush1.msra.mxu0 0.0
    %2030 = vmatprep.subr.mxu0 0.0
    %2031 = vmatpush1.msra.mxu0 0.0
    %2032 = vmatprep.subr.mxu0 0.0
    %2033 = vmatpush1.msra.mxu0 0.0
    %2034 = vmatprep.subr.mxu0 0.0
    %2035 = vmatpush1.msra.mxu0 0.0
    %2036 = vmatprep.subr.mxu0 0.0
    %2037 = vmatpush1.msra.mxu0 0.0
    %2038 = vmatprep.subr.mxu0 0.0
    %2039 = vmatpush1.msra.mxu0 0.0
    %2040 = vmatprep.subr.mxu0 0.0
    %2041 = vmatpush1.msra.mxu0 0.0
    %2042 = vmatprep.subr.mxu0 0.0
    %2043 = vmatpush1.msra.mxu0 0.0
    %2044 = vmatprep.subr.mxu0 0.0
    %2045 = vmatpush1.msra.mxu0 0.0
    %2046 = vmatprep.subr.mxu0 0.0
    %2047 = vmatpush1.msra.mxu0 0.0
    %2048 = vmatprep.subr.mxu0 0.0
    %2049 = vmatpush1.msra.mxu0 0.0
    %2050 = vmatprep.subr.mxu0 0.0
    %2051 = vmatpush1.msra.mxu0 0.0
    %2052 = vmatprep.subr.mxu0 0.0
    %2053 = vmatpush1.msra.mxu0 0.0
    %2054 = vmatprep.subr.mxu0 0.0
    %2055 = vmatpush1.msra.mxu0 0.0
    %2056 = vmatprep.subr.mxu0 0.0
    %2057 = vmatpush1.msra.mxu0 0.0
    %2058 = vmatprep.subr.mxu0 0.0
    %2059 = vmatpush1.msra.mxu0 0.0
    %2060 = vmatprep.subr.mxu0 0.0
    %2061 = vmatpush1.msra.mxu0 0.0
    %2062 = vmatprep.subr.mxu0 0.0
    %2063 = vmatpush1.msra.mxu0 0.0
    %2064 = vmatprep.subr.mxu0 0.0
    %2065 = vmatpush1.msra.mxu0 0.0
    %2066 = vmatprep.subr.mxu0 0.0
    %2067 = vmatpush1.msra.mxu0 0.0
    %2068 = vmatprep.subr.mxu0 0.0
    %2069 = vmatpush1.msra.mxu0 0.0
    %2070 = vmatprep.subr.mxu0 0.0
    %2071 = vmatpush1.msra.mxu0 0.0
    %2072 = vmatprep.subr.mxu0 0.0
    %2073 = vmatpush1.msra.mxu0 0.0
    %2074 = vmatprep.subr.mxu0 0.0
    %2075 = vmatpush1.msra.mxu0 0.0
    %2076 = vmatprep.subr.mxu0 0.0
    %2077 = vmatpush1.msra.mxu0 0.0
    %2078 = vmatprep.subr.mxu0 0.0
    %2079 = vmatpush1.msra.mxu0 0.0
    %2080 = vmatprep.subr.mxu0 0.0
    %2081 = vmatpush1.msra.mxu0 0.0
    %2082 = vmatprep.mubr.f32.mxu0 0.0
    %2083 = vmatmul.mubr.f32.gmra.mrb[0].mxu0 %v1998
    %v2084 = vpop.f32.mrb[0].mxu0
    %v2085 = vadd.f32 0.0, %v2084
    %v2086 = vpop.f32.mrb[0].mxu0
    %2087 = vmatprep.mubr.f32.mxu0 0.0
    %2088 = vmatmul.mubr.f32.gmra.mrb[0].mxu0 %v2001
    %v2089 = vpop.f32.mrb[0].mxu0
    %v2090 = vadd.f32 0.0, %v2089
    %v2091 = vpop.f32.mrb[0].mxu0
    %2092 = vmatprep.mubr.f32.mxu0 0.0
    %2093 = vmatmul.mubr.f32.gmra.mrb[0].mxu0 %v2004
    %v2094 = vpop.f32.mrb[0].mxu0
    %v2095 = vadd.f32 0.0, %v2094
    %v2096 = vpop.f32.mrb[0].mxu0
    %2097 = vmatprep.mubr.f32.mxu0 0.0
    %2098 = vmatmul.mubr.f32.gmra.mrb[0].mxu0 %v2007
    %v2099 = vpop.f32.mrb[0].mxu0
    %v2100 = vadd.f32 0.0, %v2099
    %v2101 = vpop.f32.mrb[0].mxu0
    %2102 = vmatprep.mubr.f32.mxu0 0.0
    %2103 = vmatmul.mubr.f32.gmra.mrb[0].mxu0 %v2010
    %v2104 = vpop.f32.mrb[0].mxu0
    %v2105 = vadd.f32 0.0, %v2104
    %v2106 = vpop.f32.mrb[0].mxu0
    %2107 = vmatprep.mubr.f32.mxu0 0.0
    %2108 = vmatmul.mubr.f32.gmra.mrb[0].mxu0 %v2013
    %v2109 = vpop.f32.mrb[0].mxu0
    %v2110 = vadd.f32 0.0, %v2109
    %v2111 = vpop.f32.mrb[0].mxu0
    %2112 = vmatprep.mubr.f32.mxu0 0.0
    %2113 = vmatmul.mubr.f32.gmra.mrb[0].mxu0 %v2016
    %v2114 = vpop.f32.mrb[0].mxu0
    %v2115 = vadd.f32 0.0, %v2114
    %v2116 = vpop.f32.mrb[0].mxu0
    %2117 = vdwg.mxu0
    %v2118 = vmul.f32 %v1957, %v2085
    %v2119 = vmul.f32 %v1962, %v2090
    %v2120 = vmul.f32 %v1967, %v2095
    %v2121 = vmul.f32 %v1972, %v2100
    %v2122 = vmul.f32 %v1977, %v2105
    %v2123 = vmul.f32 %v1982, %v2110
    %v2124 = vmul.f32 %v1987, %v2115
    %v2125 = vmul.f32 %v2118, 0.2820948
    %v2126 = vmul.f32 %v2119, 0.2820948
    %v2127 = vmul.f32 %v2120, 0.2820948
    %v2128 = vmul.f32 %v2121, 0.2820948
    %v2129 = vmul.f32 %v2122, 0.2820948
    %v2130 = vmul.f32 %v2123, 0.2820948
    %v2131 = vmul.f32 %v2124, 0.2820948
    %2139 = vrot.lane.b32.xlu0 %v2085, 32
    %v2140 = vpop.permute.xlu0 %2139
    %2141 = vrot.lane.b32.xlu0 %v2090, 32
    %v2142 = vpop.permute.xlu0 %2141
    %2143 = vrot.lane.b32.xlu0 %v2095, 32
    %v2144 = vpop.permute.xlu0 %2143
    %2145 = vrot.lane.b32.xlu0 %v2100, 32
    %v2146 = vpop.permute.xlu0 %2145
    %2147 = vrot.lane.b32.xlu0 %v2105, 32
    %v2148 = vpop.permute.xlu0 %2147
    %2149 = vrot.lane.b32.xlu0 %v2110, 32
    %v2150 = vpop.permute.xlu0 %2149
    %2151 = vrot.lane.b32.xlu0 %v2115, 32
    %v2152 = vpop.permute.xlu0 %2151
    %v2160 = vmul.f32 %v1957, %v2140
    %v2161 = vmul.f32 %v1962, %v2142
    %v2162 = vmul.f32 %v1967, %v2144
    %v2163 = vmul.f32 %v1972, %v2146
    %v2164 = vmul.f32 %v1977, %v2148
    %v2165 = vmul.f32 %v1982, %v2150
    %v2166 = vmul.f32 %v1987, %v2152
    %v2167 = vld [vmem:[%s4] sm:$0xff]
    %v2168 = vld [vmem:[#allocation4] sm:$0xff]
    %v2169 = vld [vmem:[#allocation4 + $0x8] sm:$0xff]
    %v2170 = vld [vmem:[#allocation4 + $0x10] sm:$0xff]
    %v2171 = vld [vmem:[#allocation4 + $0x18] sm:$0xff]
    %v2172 = vld [vmem:[#allocation6] sm:$0xff]
    %v2173 = vld [vmem:[#allocation6 + $0x8] sm:$0xff]
    %v2174 = vld [vmem:[#allocation6 + $0x10] sm:$0xff]
    %v2175 = vld [vmem:[#allocation6 + $0x18] sm:$0xff]
    %vm2176 = vcmask 457728
    %v2178 = vsel %vm2176, %v2167, 0
    %2180 = vmatprep.subr.mxu0 0.0
    %2181 = vmatpush1.msra.mxu0 %v2125
    %2182 = vmatprep.subr.mxu0 0.0
    %2183 = vmatpush1.msra.mxu0 %v2126
    %2184 = vmatprep.subr.mxu0 0.0
    %2185 = vmatpush1.msra.mxu0 %v2127
    %2186 = vmatprep.subr.mxu0 0.0
    %2187 = vmatpush1.msra.mxu0 %v2128
    %2188 = vmatprep.subr.mxu0 0.0
    %2189 = vmatpush1.msra.mxu0 %v2129
    %2190 = vmatprep.subr.mxu0 0.0
    %2191 = vmatpush1.msra.mxu0 %v2130
    %2192 = vmatprep.subr.mxu0 0.0
    %2193 = vmatpush1.msra.mxu0 %v2131
    %2194 = vmatprep.subr.mxu0 0.0
    %2195 = vmatpush1.msra.mxu0 0.0
    %2196 = vmatprep.subr.mxu0 0.0
    %2197 = vmatpush1.msra.mxu0 0.0
    %2198 = vmatprep.subr.mxu0 0.0
    %2199 = vmatpush1.msra.mxu0 0.0
    %2200 = vmatprep.subr.mxu0 0.0
    %2201 = vmatpush1.msra.mxu0 0.0
    %2202 = vmatprep.subr.mxu0 0.0
    %2203 = vmatpush1.msra.mxu0 0.0
    %2204 = vmatprep.subr.mxu0 0.0
    %2205 = vmatpush1.msra.mxu0 0.0
    %2206 = vmatprep.subr.mxu0 0.0
    %2207 = vmatpush1.msra.mxu0 0.0
    %2208 = vmatprep.subr.mxu0 0.0
    %2209 = vmatpush1.msra.mxu0 0.0
    %2210 = vmatprep.subr.mxu0 0.0
    %2211 = vmatpush1.msra.mxu0 0.0
    %2212 = vmatprep.subr.mxu0 0.0
    %2213 = vmatpush1.msra.mxu0 0.0
    %2214 = vmatprep.subr.mxu0 0.0
    %2215 = vmatpush1.msra.mxu0 0.0
    %2216 = vmatprep.subr.mxu0 0.0
    %2217 = vmatpush1.msra.mxu0 0.0
    %2218 = vmatprep.subr.mxu0 0.0
    %2219 = vmatpush1.msra.mxu0 0.0
    %2220 = vmatprep.subr.mxu0 0.0
    %2221 = vmatpush1.msra.mxu0 0.0
    %2222 = vmatprep.subr.mxu0 0.0
    %2223 = vmatpush1.msra.mxu0 0.0
    %2224 = vmatprep.subr.mxu0 0.0
    %2225 = vmatpush1.msra.mxu0 0.0
    %2226 = vmatprep.subr.mxu0 0.0
    %2227 = vmatpush1.msra.mxu0 0.0
    %2228 = vmatprep.subr.mxu0 0.0
    %2229 = vmatpush1.msra.mxu0 0.0
    %2230 = vmatprep.subr.mxu0 0.0
    %2231 = vmatpush1.msra.mxu0 0.0
    %2232 = vmatprep.subr.mxu0 0.0
    %2233 = vmatpush1.msra.mxu0 0.0
    %2234 = vmatprep.subr.mxu0 0.0
    %2235 = vmatpush1.msra.mxu0 0.0
    %2236 = vmatprep.subr.mxu0 0.0
    %2237 = vmatpush1.msra.mxu0 0.0
    %2238 = vmatprep.subr.mxu0 0.0
    %2239 = vmatpush1.msra.mxu0 0.0
    %2240 = vmatprep.subr.mxu0 0.0
    %2241 = vmatpush1.msra.mxu0 0.0
    %2242 = vmatprep.subr.mxu0 0.0
    %2243 = vmatpush1.msra.mxu0 0.0
    %2244 = vmatprep.mubr.f32.mxu0 0.0
    %2245 = vmatmul.mubr.f32.gmra.mrb[0].mxu0 %v2178
    %v2246 = vpop.f32.mrb[0].mxu0
    %v2247 = vadd.f32 0.0, %v2246
    %v2248 = vpop.f32.mrb[0].mxu0
    %2249 = vdwg.mxu0
    %v2251 = vsel %vm215, %v2247, 0
    %2253 = vmatprep.subr.mxu0 0.0
    %2254 = vmatpush1.msra.mxu0 %v2168
    %2255 = vmatprep.subr.mxu0 0.0
    %2256 = vmatpush1.msra.mxu0 %v2169
    %2257 = vmatprep.subr.mxu0 0.0
    %2258 = vmatpush1.msra.mxu0 %v2170
    %2259 = vmatprep.subr.mxu0 0.0
    %2260 = vmatpush1.msra.mxu0 %v2171
    %2261 = vmatprep.subr.mxu0 0.0
    %2262 = vmatpush1.msra.mxu0 0.0
    %2263 = vmatprep.subr.mxu0 0.0
    %2264 = vmatpush1.msra.mxu0 0.0
    %2265 = vmatprep.subr.mxu0 0.0
    %2266 = vmatpush1.msra.mxu0 0.0
    %2267 = vmatprep.subr.mxu0 0.0
    %2268 = vmatpush1.msra.mxu0 0.0
    %2269 = vmatprep.subr.mxu0 0.0
    %2270 = vmatpush1.msra.mxu0 0.0
    %2271 = vmatprep.subr.mxu0 0.0
    %2272 = vmatpush1.msra.mxu0 0.0
    %2273 = vmatprep.subr.mxu0 0.0
    %2274 = vmatpush1.msra.mxu0 0.0
    %2275 = vmatprep.subr.mxu0 0.0
    %2276 = vmatpush1.msra.mxu0 0.0
    %2277 = vmatprep.subr.mxu0 0.0
    %2278 = vmatpush1.msra.mxu0 0.0
    %2279 = vmatprep.subr.mxu0 0.0
    %2280 = vmatpush1.msra.mxu0 0.0
    %2281 = vmatprep.subr.mxu0 0.0
    %2282 = vmatpush1.msra.mxu0 0.0
    %2283 = vmatprep.subr.mxu0 0.0
    %2284 = vmatpush1.msra.mxu0 0.0
    %2285 = vmatprep.subr.mxu0 0.0
    %2286 = vmatpush1.msra.mxu0 0.0
    %2287 = vmatprep.subr.mxu0 0.0
    %2288 = vmatpush1.msra.mxu0 0.0
    %2289 = vmatprep.subr.mxu0 0.0
    %2290 = vmatpush1.msra.mxu0 0.0
    %2291 = vmatprep.subr.mxu0 0.0
    %2292 = vmatpush1.msra.mxu0 0.0
    %2293 = vmatprep.subr.mxu0 0.0
    %2294 = vmatpush1.msra.mxu0 0.0
    %2295 = vmatprep.subr.mxu0 0.0
    %2296 = vmatpush1.msra.mxu0 0.0
    %2297 = vmatprep.subr.mxu0 0.0
    %2298 = vmatpush1.msra.mxu0 0.0
    %2299 = vmatprep.subr.mxu0 0.0
    %2300 = vmatpush1.msra.mxu0 0.0
    %2301 = vmatprep.subr.mxu0 0.0
    %2302 = vmatpush1.msra.mxu0 0.0
    %2303 = vmatprep.subr.mxu0 0.0
    %2304 = vmatpush1.msra.mxu0 0.0
    %2305 = vmatprep.subr.mxu0 0.0
    %2306 = vmatpush1.msra.mxu0 0.0
    %2307 = vmatprep.subr.mxu0 0.0
    %2308 = vmatpush1.msra.mxu0 0.0
    %2309 = vmatprep.subr.mxu0 0.0
    %2310 = vmatpush1.msra.mxu0 0.0
    %2311 = vmatprep.subr.mxu0 0.0
    %2312 = vmatpush1.msra.mxu0 0.0
    %2313 = vmatprep.subr.mxu0 0.0
    %2314 = vmatpush1.msra.mxu0 0.0
    %2315 = vmatprep.subr.mxu0 0.0
    %2316 = vmatpush1.msra.mxu0 0.0
    %2317 = vmatprep.mubr.f32.mxu0 0.0
    %2318 = vmatmul.mubr.f32.gmra.mrb[0].mxu0 %v2251
    %v2319 = vpop.f32.mrb[0].mxu0
    %v2320 = vadd.f32 0.0, %v2319
    %v2321 = vpop.f32.mrb[0].mxu0
    %2322 = vdwg.mxu0
    %v2323 = vmul.f32 %v339, 0.48860252
    %v2324 = vmul.f32 %v340, 0.48860252
    %v2325 = vmul.f32 %v341, 0.48860252
    %v2326 = vmul.f32 %v342, 0.48860252
    %v2327 = vmul.f32 %v343, 0.48860252
    %v2328 = vmul.f32 %v344, 0.48860252
    %v2329 = vmul.f32 %v345, 0.48860252
    %2331 = vset.pattern.permute.xlu0 1
    %2332 = vperm.xlu0 %2331, %v2323
    %v2333 = vpop.permute.xlu0 %2332
    %2336 = vset.pattern.permute.xlu0 1
    %2337 = vperm.xlu0 %2336, %v2324
    %v2338 = vpop.permute.xlu0 %2337
    %2341 = vset.pattern.permute.xlu0 1
    %2342 = vperm.xlu0 %2341, %v2325
    %v2343 = vpop.permute.xlu0 %2342
    %2346 = vset.pattern.permute.xlu0 1
    %2347 = vperm.xlu0 %2346, %v2326
    %v2348 = vpop.permute.xlu0 %2347
    %2351 = vset.pattern.permute.xlu0 1
    %2352 = vperm.xlu0 %2351, %v2327
    %v2353 = vpop.permute.xlu0 %2352
    %2356 = vset.pattern.permute.xlu0 1
    %2357 = vperm.xlu0 %2356, %v2328
    %v2358 = vpop.permute.xlu0 %2357
    %2361 = vset.pattern.permute.xlu0 1
    %2362 = vperm.xlu0 %2361, %v2329
    %v2363 = vpop.permute.xlu0 %2362
    %v2365 = vmul.f32 %v2160, %v2333
    %v2366 = vmul.f32 %v2161, %v2338
    %v2367 = vmul.f32 %v2162, %v2343
    %v2368 = vmul.f32 %v2163, %v2348
    %v2369 = vmul.f32 %v2164, %v2353
    %v2370 = vmul.f32 %v2165, %v2358
    %v2371 = vmul.f32 %v2166, %v2363
    %2379 = vrot.lane.b32.xlu0 %v2365, 96
    %v2380 = vpop.permute.xlu0 %2379
    %2381 = vrot.lane.b32.xlu0 %v2366, 96
    %v2382 = vpop.permute.xlu0 %2381
    %2383 = vrot.lane.b32.xlu0 %v2367, 96
    %v2384 = vpop.permute.xlu0 %2383
    %2385 = vrot.lane.b32.xlu0 %v2368, 96
    %v2386 = vpop.permute.xlu0 %2385
    %2387 = vrot.lane.b32.xlu0 %v2369, 96
    %v2388 = vpop.permute.xlu0 %2387
    %2389 = vrot.lane.b32.xlu0 %v2370, 96
    %v2390 = vpop.permute.xlu0 %2389
    %2391 = vrot.lane.b32.xlu0 %v2371, 96
    %v2392 = vpop.permute.xlu0 %2391
    %2400 = vmatprep.subr.mxu0 0.0
    %2401 = vmatpush1.msra.mxu0 %v2380
    %2402 = vmatprep.subr.mxu0 0.0
    %2403 = vmatpush1.msra.mxu0 %v2382
    %2404 = vmatprep.subr.mxu0 0.0
    %2405 = vmatpush1.msra.mxu0 %v2384
    %2406 = vmatprep.subr.mxu0 0.0
    %2407 = vmatpush1.msra.mxu0 %v2386
    %2408 = vmatprep.subr.mxu0 0.0
    %2409 = vmatpush1.msra.mxu0 %v2388
    %2410 = vmatprep.subr.mxu0 0.0
    %2411 = vmatpush1.msra.mxu0 %v2390
    %2412 = vmatprep.subr.mxu0 0.0
    %2413 = vmatpush1.msra.mxu0 %v2392
    %2414 = vmatprep.subr.mxu0 0.0
    %2415 = vmatpush1.msra.mxu0 0.0
    %2416 = vmatprep.subr.mxu0 0.0
    %2417 = vmatpush1.msra.mxu0 0.0
    %2418 = vmatprep.subr.mxu0 0.0
    %2419 = vmatpush1.msra.mxu0 0.0
    %2420 = vmatprep.subr.mxu0 0.0
    %2421 = vmatpush1.msra.mxu0 0.0
    %2422 = vmatprep.subr.mxu0 0.0
    %2423 = vmatpush1.msra.mxu0 0.0
    %2424 = vmatprep.subr.mxu0 0.0
    %2425 = vmatpush1.msra.mxu0 0.0
    %2426 = vmatprep.subr.mxu0 0.0
    %2427 = vmatpush1.msra.mxu0 0.0
    %2428 = vmatprep.subr.mxu0 0.0
    %2429 = vmatpush1.msra.mxu0 0.0
    %2430 = vmatprep.subr.mxu0 0.0
    %2431 = vmatpush1.msra.mxu0 0.0
    %2432 = vmatprep.subr.mxu0 0.0
    %2433 = vmatpush1.msra.mxu0 0.0
    %2434 = vmatprep.subr.mxu0 0.0
    %2435 = vmatpush1.msra.mxu0 0.0
    %2436 = vmatprep.subr.mxu0 0.0
    %2437 = vmatpush1.msra.mxu0 0.0
    %2438 = vmatprep.subr.mxu0 0.0
    %2439 = vmatpush1.msra.mxu0 0.0
    %2440 = vmatprep.subr.mxu0 0.0
    %2441 = vmatpush1.msra.mxu0 0.0
    %2442 = vmatprep.subr.mxu0 0.0
    %2443 = vmatpush1.msra.mxu0 0.0
    %2444 = vmatprep.subr.mxu0 0.0
    %2445 = vmatpush1.msra.mxu0 0.0
    %2446 = vmatprep.subr.mxu0 0.0
    %2447 = vmatpush1.msra.mxu0 0.0
    %2448 = vmatprep.subr.mxu0 0.0
    %2449 = vmatpush1.msra.mxu0 0.0
    %2450 = vmatprep.subr.mxu0 0.0
    %2451 = vmatpush1.msra.mxu0 0.0
    %2452 = vmatprep.subr.mxu0 0.0
    %2453 = vmatpush1.msra.mxu0 0.0
    %2454 = vmatprep.subr.mxu0 0.0
    %2455 = vmatpush1.msra.mxu0 0.0
    %2456 = vmatprep.subr.mxu0 0.0
    %2457 = vmatpush1.msra.mxu0 0.0
    %2458 = vmatprep.subr.mxu0 0.0
    %2459 = vmatpush1.msra.mxu0 0.0
    %2460 = vmatprep.subr.mxu0 0.0
    %2461 = vmatpush1.msra.mxu0 0.0
    %2462 = vmatprep.subr.mxu0 0.0
    %2463 = vmatpush1.msra.mxu0 0.0
    %2464 = vmatprep.mubr.f32.mxu0 0.0
    %2465 = vmatmul.mubr.f32.gmra.mrb[0].mxu0 %v2178
    %v2466 = vpop.f32.mrb[0].mxu0
    %v2467 = vadd.f32 0.0, %v2466
    %v2468 = vpop.f32.mrb[0].mxu0
    %2469 = vdwg.mxu0
    %v2471 = vsel %vm215, %v2467, 0
    %2473 = vmatprep.subr.mxu0 0.0
    %2474 = vmatpush1.msra.mxu0 %v2172
    %2475 = vmatprep.subr.mxu0 0.0
    %2476 = vmatpush1.msra.mxu0 %v2173
    %2477 = vmatprep.subr.mxu0 0.0
    %2478 = vmatpush1.msra.mxu0 %v2174
    %2479 = vmatprep.subr.mxu0 0.0
    %2480 = vmatpush1.msra.mxu0 %v2175
    %2481 = vmatprep.subr.mxu0 0.0
    %2482 = vmatpush1.msra.mxu0 0.0
    %2483 = vmatprep.subr.mxu0 0.0
    %2484 = vmatpush1.msra.mxu0 0.0
    %2485 = vmatprep.subr.mxu0 0.0
    %2486 = vmatpush1.msra.mxu0 0.0
    %2487 = vmatprep.subr.mxu0 0.0
    %2488 = vmatpush1.msra.mxu0 0.0
    %2489 = vmatprep.subr.mxu0 0.0
    %2490 = vmatpush1.msra.mxu0 0.0
    %2491 = vmatprep.subr.mxu0 0.0
    %2492 = vmatpush1.msra.mxu0 0.0
    %2493 = vmatprep.subr.mxu0 0.0
    %2494 = vmatpush1.msra.mxu0 0.0
    %2495 = vmatprep.subr.mxu0 0.0
    %2496 = vmatpush1.msra.mxu0 0.0
    %2497 = vmatprep.subr.mxu0 0.0
    %2498 = vmatpush1.msra.mxu0 0.0
    %2499 = vmatprep.subr.mxu0 0.0
    %2500 = vmatpush1.msra.mxu0 0.0
    %2501 = vmatprep.subr.mxu0 0.0
    %2502 = vmatpush1.msra.mxu0 0.0
    %2503 = vmatprep.subr.mxu0 0.0
    %2504 = vmatpush1.msra.mxu0 0.0
    %2505 = vmatprep.subr.mxu0 0.0
    %2506 = vmatpush1.msra.mxu0 0.0
    %2507 = vmatprep.subr.mxu0 0.0
    %2508 = vmatpush1.msra.mxu0 0.0
    %2509 = vmatprep.subr.mxu0 0.0
    %2510 = vmatpush1.msra.mxu0 0.0
    %2511 = vmatprep.subr.mxu0 0.0
    %2512 = vmatpush1.msra.mxu0 0.0
    %2513 = vmatprep.subr.mxu0 0.0
    %2514 = vmatpush1.msra.mxu0 0.0
    %2515 = vmatprep.subr.mxu0 0.0
    %2516 = vmatpush1.msra.mxu0 0.0
    %2517 = vmatprep.subr.mxu0 0.0
    %2518 = vmatpush1.msra.mxu0 0.0
    %2519 = vmatprep.subr.mxu0 0.0
    %2520 = vmatpush1.msra.mxu0 0.0
    %2521 = vmatprep.subr.mxu0 0.0
    %2522 = vmatpush1.msra.mxu0 0.0
    %2523 = vmatprep.subr.mxu0 0.0
    %2524 = vmatpush1.msra.mxu0 0.0
    %2525 = vmatprep.subr.mxu0 0.0
    %2526 = vmatpush1.msra.mxu0 0.0
    %2527 = vmatprep.subr.mxu0 0.0
    %2528 = vmatpush1.msra.mxu0 0.0
    %2529 = vmatprep.subr.mxu0 0.0
    %2530 = vmatpush1.msra.mxu0 0.0
    %2531 = vmatprep.subr.mxu0 0.0
    %2532 = vmatpush1.msra.mxu0 0.0
    %2533 = vmatprep.subr.mxu0 0.0
    %2534 = vmatpush1.msra.mxu0 0.0
    %2535 = vmatprep.subr.mxu0 0.0
    %2536 = vmatpush1.msra.mxu0 0.0
    %2537 = vmatprep.mubr.f32.mxu0 0.0
    %2538 = vmatmul.mubr.f32.gmra.mrb[0].mxu0 %v2471
    %v2539 = vpop.f32.mrb[0].mxu0
    %v2540 = vadd.f32 0.0, %v2539
    %v2541 = vpop.f32.mrb[0].mxu0
    %2542 = vdwg.mxu0
    %v2543 = vmul.f32 %v367, 0.48860252
    %v2544 = vmul.f32 %v368, 0.48860252
    %v2545 = vmul.f32 %v369, 0.48860252
    %v2546 = vmul.f32 %v370, 0.48860252
    %v2547 = vmul.f32 %v371, 0.48860252
    %v2548 = vmul.f32 %v372, 0.48860252
    %v2549 = vmul.f32 %v373, 0.48860252
    %2551 = vset.pattern.permute.xlu0 2
    %2552 = vperm.xlu0 %2551, %v2543
    %v2553 = vpop.permute.xlu0 %2552
    %2556 = vset.pattern.permute.xlu0 2
    %2557 = vperm.xlu0 %2556, %v2544
    %v2558 = vpop.permute.xlu0 %2557
    %2561 = vset.pattern.permute.xlu0 2
    %2562 = vperm.xlu0 %2561, %v2545
    %v2563 = vpop.permute.xlu0 %2562
    %2566 = vset.pattern.permute.xlu0 2
    %2567 = vperm.xlu0 %2566, %v2546
    %v2568 = vpop.permute.xlu0 %2567
    %2571 = vset.pattern.permute.xlu0 2
    %2572 = vperm.xlu0 %2571, %v2547
    %v2573 = vpop.permute.xlu0 %2572
    %2576 = vset.pattern.permute.xlu0 2
    %2577 = vperm.xlu0 %2576, %v2548
    %v2578 = vpop.permute.xlu0 %2577
    %2581 = vset.pattern.permute.xlu0 2
    %2582 = vperm.xlu0 %2581, %v2549
    %v2583 = vpop.permute.xlu0 %2582
    %v2585 = vmul.f32 %v2160, %v2553
    %v2586 = vmul.f32 %v2161, %v2558
    %v2587 = vmul.f32 %v2162, %v2563
    %v2588 = vmul.f32 %v2163, %v2568
    %v2589 = vmul.f32 %v2164, %v2573
    %v2590 = vmul.f32 %v2165, %v2578
    %v2591 = vmul.f32 %v2166, %v2583
    %2599 = vrot.lane.b32.xlu0 %v2585, 96
    %v2600 = vpop.permute.xlu0 %2599
    %2601 = vrot.lane.b32.xlu0 %v2586, 96
    %v2602 = vpop.permute.xlu0 %2601
    %2603 = vrot.lane.b32.xlu0 %v2587, 96
    %v2604 = vpop.permute.xlu0 %2603
    %2605 = vrot.lane.b32.xlu0 %v2588, 96
    %v2606 = vpop.permute.xlu0 %2605
    %2607 = vrot.lane.b32.xlu0 %v2589, 96
    %v2608 = vpop.permute.xlu0 %2607
    %2609 = vrot.lane.b32.xlu0 %v2590, 96
    %v2610 = vpop.permute.xlu0 %2609
    %2611 = vrot.lane.b32.xlu0 %v2591, 96
    %v2612 = vpop.permute.xlu0 %2611
    %2620 = vmatprep.subr.mxu0 0.0
    %2621 = vmatpush1.msra.mxu0 %v2600
    %2622 = vmatprep.subr.mxu0 0.0
    %2623 = vmatpush1.msra.mxu0 %v2602
    %2624 = vmatprep.subr.mxu0 0.0
    %2625 = vmatpush1.msra.mxu0 %v2604
    %2626 = vmatprep.subr.mxu0 0.0
    %2627 = vmatpush1.msra.mxu0 %v2606
    %2628 = vmatprep.subr.mxu0 0.0
    %2629 = vmatpush1.msra.mxu0 %v2608
    %2630 = vmatprep.subr.mxu0 0.0
    %2631 = vmatpush1.msra.mxu0 %v2610
    %2632 = vmatprep.subr.mxu0 0.0
    %2633 = vmatpush1.msra.mxu0 %v2612
    %2634 = vmatprep.subr.mxu0 0.0
    %2635 = vmatpush1.msra.mxu0 0.0
    %2636 = vmatprep.subr.mxu0 0.0
    %2637 = vmatpush1.msra.mxu0 0.0
    %2638 = vmatprep.subr.mxu0 0.0
    %2639 = vmatpush1.msra.mxu0 0.0
    %2640 = vmatprep.subr.mxu0 0.0
    %2641 = vmatpush1.msra.mxu0 0.0
    %2642 = vmatprep.subr.mxu0 0.0
    %2643 = vmatpush1.msra.mxu0 0.0
    %2644 = vmatprep.subr.mxu0 0.0
    %2645 = vmatpush1.msra.mxu0 0.0
    %2646 = vmatprep.subr.mxu0 0.0
    %2647 = vmatpush1.msra.mxu0 0.0
    %2648 = vmatprep.subr.mxu0 0.0
    %2649 = vmatpush1.msra.mxu0 0.0
    %2650 = vmatprep.subr.mxu0 0.0
    %2651 = vmatpush1.msra.mxu0 0.0
    %2652 = vmatprep.subr.mxu0 0.0
    %2653 = vmatpush1.msra.mxu0 0.0
    %2654 = vmatprep.subr.mxu0 0.0
    %2655 = vmatpush1.msra.mxu0 0.0
    %2656 = vmatprep.subr.mxu0 0.0
    %2657 = vmatpush1.msra.mxu0 0.0
    %2658 = vmatprep.subr.mxu0 0.0
    %2659 = vmatpush1.msra.mxu0 0.0
    %2660 = vmatprep.subr.mxu0 0.0
    %2661 = vmatpush1.msra.mxu0 0.0
    %2662 = vmatprep.subr.mxu0 0.0
    %2663 = vmatpush1.msra.mxu0 0.0
    %2664 = vmatprep.subr.mxu0 0.0
    %2665 = vmatpush1.msra.mxu0 0.0
    %2666 = vmatprep.subr.mxu0 0.0
    %2667 = vmatpush1.msra.mxu0 0.0
    %2668 = vmatprep.subr.mxu0 0.0
    %2669 = vmatpush1.msra.mxu0 0.0
    %2670 = vmatprep.subr.mxu0 0.0
    %2671 = vmatpush1.msra.mxu0 0.0
    %2672 = vmatprep.subr.mxu0 0.0
    %2673 = vmatpush1.msra.mxu0 0.0
    %2674 = vmatprep.subr.mxu0 0.0
    %2675 = vmatpush1.msra.mxu0 0.0
    %2676 = vmatprep.subr.mxu0 0.0
    %2677 = vmatpush1.msra.mxu0 0.0
    %2678 = vmatprep.subr.mxu0 0.0
    %2679 = vmatpush1.msra.mxu0 0.0
    %2680 = vmatprep.subr.mxu0 0.0
    %2681 = vmatpush1.msra.mxu0 0.0
    %2682 = vmatprep.subr.mxu0 0.0
    %2683 = vmatpush1.msra.mxu0 0.0
    %2684 = vmatprep.mubr.f32.mxu0 0.0
    %2685 = vmatmul.mubr.f32.gmra.mrb[0].mxu0 %v2178
    %v2686 = vpop.f32.mrb[0].mxu0
    %v2687 = vadd.f32 0.0, %v2686
    %v2688 = vpop.f32.mrb[0].mxu0
    %2689 = vdwg.mxu0
    %v2691 = vsel %vm215, %v2687, 0
    %2693 = vmatprep.subr.mxu0 0.0
    %2694 = vmatpush1.msra.mxu0 %v2172
    %2695 = vmatprep.subr.mxu0 0.0
    %2696 = vmatpush1.msra.mxu0 %v2173
    %2697 = vmatprep.subr.mxu0 0.0
    %2698 = vmatpush1.msra.mxu0 %v2174
    %2699 = vmatprep.subr.mxu0 0.0
    %2700 = vmatpush1.msra.mxu0 %v2175
    %2701 = vmatprep.subr.mxu0 0.0
    %2702 = vmatpush1.msra.mxu0 0.0
    %2703 = vmatprep.subr.mxu0 0.0
    %2704 = vmatpush1.msra.mxu0 0.0
    %2705 = vmatprep.subr.mxu0 0.0
    %2706 = vmatpush1.msra.mxu0 0.0
    %2707 = vmatprep.subr.mxu0 0.0
    %2708 = vmatpush1.msra.mxu0 0.0
    %2709 = vmatprep.subr.mxu0 0.0
    %2710 = vmatpush1.msra.mxu0 0.0
    %2711 = vmatprep.subr.mxu0 0.0
    %2712 = vmatpush1.msra.mxu0 0.0
    %2713 = vmatprep.subr.mxu0 0.0
    %2714 = vmatpush1.msra.mxu0 0.0
    %2715 = vmatprep.subr.mxu0 0.0
    %2716 = vmatpush1.msra.mxu0 0.0
    %2717 = vmatprep.subr.mxu0 0.0
    %2718 = vmatpush1.msra.mxu0 0.0
    %2719 = vmatprep.subr.mxu0 0.0
    %2720 = vmatpush1.msra.mxu0 0.0
    %2721 = vmatprep.subr.mxu0 0.0
    %2722 = vmatpush1.msra.mxu0 0.0
    %2723 = vmatprep.subr.mxu0 0.0
    %2724 = vmatpush1.msra.mxu0 0.0
    %2725 = vmatprep.subr.mxu0 0.0
    %2726 = vmatpush1.msra.mxu0 0.0
    %2727 = vmatprep.subr.mxu0 0.0
    %2728 = vmatpush1.msra.mxu0 0.0
    %2729 = vmatprep.subr.mxu0 0.0
    %2730 = vmatpush1.msra.mxu0 0.0
    %2731 = vmatprep.subr.mxu0 0.0
    %2732 = vmatpush1.msra.mxu0 0.0
    %2733 = vmatprep.subr.mxu0 0.0
    %2734 = vmatpush1.msra.mxu0 0.0
    %2735 = vmatprep.subr.mxu0 0.0
    %2736 = vmatpush1.msra.mxu0 0.0
    %2737 = vmatprep.subr.mxu0 0.0
    %2738 = vmatpush1.msra.mxu0 0.0
    %2739 = vmatprep.subr.mxu0 0.0
    %2740 = vmatpush1.msra.mxu0 0.0
    %2741 = vmatprep.subr.mxu0 0.0
    %2742 = vmatpush1.msra.mxu0 0.0
    %2743 = vmatprep.subr.mxu0 0.0
    %2744 = vmatpush1.msra.mxu0 0.0
    %2745 = vmatprep.subr.mxu0 0.0
    %2746 = vmatpush1.msra.mxu0 0.0
    %2747 = vmatprep.subr.mxu0 0.0
    %2748 = vmatpush1.msra.mxu0 0.0
    %2749 = vmatprep.subr.mxu0 0.0
    %2750 = vmatpush1.msra.mxu0 0.0
    %2751 = vmatprep.subr.mxu0 0.0
    %2752 = vmatpush1.msra.mxu0 0.0
    %2753 = vmatprep.subr.mxu0 0.0
    %2754 = vmatpush1.msra.mxu0 0.0
    %2755 = vmatprep.subr.mxu0 0.0
    %2756 = vmatpush1.msra.mxu0 0.0
    %2757 = vmatprep.mubr.f32.mxu0 0.0
    %2758 = vmatmul.mubr.f32.gmra.mrb[0].mxu0 %v2691
    %v2759 = vpop.f32.mrb[0].mxu0
    %v2760 = vadd.f32 0.0, %v2759
    %v2761 = vpop.f32.mrb[0].mxu0
    %2762 = vdwg.mxu0
    %v2763 = vmul.f32 %v395, 0.48860252
    %v2764 = vmul.f32 %v396, 0.48860252
    %v2765 = vmul.f32 %v397, 0.48860252
    %v2766 = vmul.f32 %v398, 0.48860252
    %v2767 = vmul.f32 %v399, 0.48860252
    %v2768 = vmul.f32 %v400, 0.48860252
    %v2769 = vmul.f32 %v401, 0.48860252
    %2771 = vset.pattern.permute.xlu0 3
    %2772 = vperm.xlu0 %2771, %v2763
    %v2773 = vpop.permute.xlu0 %2772
    %2776 = vset.pattern.permute.xlu0 3
    %2777 = vperm.xlu0 %2776, %v2764
    %v2778 = vpop.permute.xlu0 %2777
    %2781 = vset.pattern.permute.xlu0 3
    %2782 = vperm.xlu0 %2781, %v2765
    %v2783 = vpop.permute.xlu0 %2782
    %2786 = vset.pattern.permute.xlu0 3
    %2787 = vperm.xlu0 %2786, %v2766
    %v2788 = vpop.permute.xlu0 %2787
    %2791 = vset.pattern.permute.xlu0 3
    %2792 = vperm.xlu0 %2791, %v2767
    %v2793 = vpop.permute.xlu0 %2792
    %2796 = vset.pattern.permute.xlu0 3
    %2797 = vperm.xlu0 %2796, %v2768
    %v2798 = vpop.permute.xlu0 %2797
    %2801 = vset.pattern.permute.xlu0 3
    %2802 = vperm.xlu0 %2801, %v2769
    %v2803 = vpop.permute.xlu0 %2802
    %v2805 = vmul.f32 %v2160, %v2773
    %v2806 = vmul.f32 %v2161, %v2778
    %v2807 = vmul.f32 %v2162, %v2783
    %v2808 = vmul.f32 %v2163, %v2788
    %v2809 = vmul.f32 %v2164, %v2793
    %v2810 = vmul.f32 %v2165, %v2798
    %v2811 = vmul.f32 %v2166, %v2803
    %2819 = vrot.lane.b32.xlu0 %v2805, 96
    %v2820 = vpop.permute.xlu0 %2819
    %2821 = vrot.lane.b32.xlu0 %v2806, 96
    %v2822 = vpop.permute.xlu0 %2821
    %2823 = vrot.lane.b32.xlu0 %v2807, 96
    %v2824 = vpop.permute.xlu0 %2823
    %2825 = vrot.lane.b32.xlu0 %v2808, 96
    %v2826 = vpop.permute.xlu0 %2825
    %2827 = vrot.lane.b32.xlu0 %v2809, 96
    %v2828 = vpop.permute.xlu0 %2827
    %2829 = vrot.lane.b32.xlu0 %v2810, 96
    %v2830 = vpop.permute.xlu0 %2829
    %2831 = vrot.lane.b32.xlu0 %v2811, 96
    %v2832 = vpop.permute.xlu0 %2831
    %2840 = vmatprep.subr.mxu0 0.0
    %2841 = vmatpush1.msra.mxu0 %v2820
    %2842 = vmatprep.subr.mxu0 0.0
    %2843 = vmatpush1.msra.mxu0 %v2822
    %2844 = vmatprep.subr.mxu0 0.0
    %2845 = vmatpush1.msra.mxu0 %v2824
    %2846 = vmatprep.subr.mxu0 0.0
    %2847 = vmatpush1.msra.mxu0 %v2826
    %2848 = vmatprep.subr.mxu0 0.0
    %2849 = vmatpush1.msra.mxu0 %v2828
    %2850 = vmatprep.subr.mxu0 0.0
    %2851 = vmatpush1.msra.mxu0 %v2830
    %2852 = vmatprep.subr.mxu0 0.0
    %2853 = vmatpush1.msra.mxu0 %v2832
    %2854 = vmatprep.subr.mxu0 0.0
    %2855 = vmatpush1.msra.mxu0 0.0
    %2856 = vmatprep.subr.mxu0 0.0
    %2857 = vmatpush1.msra.mxu0 0.0
    %2858 = vmatprep.subr.mxu0 0.0
    %2859 = vmatpush1.msra.mxu0 0.0
    %2860 = vmatprep.subr.mxu0 0.0
    %2861 = vmatpush1.msra.mxu0 0.0
    %2862 = vmatprep.subr.mxu0 0.0
    %2863 = vmatpush1.msra.mxu0 0.0
    %2864 = vmatprep.subr.mxu0 0.0
    %2865 = vmatpush1.msra.mxu0 0.0
    %2866 = vmatprep.subr.mxu0 0.0
    %2867 = vmatpush1.msra.mxu0 0.0
    %2868 = vmatprep.subr.mxu0 0.0
    %2869 = vmatpush1.msra.mxu0 0.0
    %2870 = vmatprep.subr.mxu0 0.0
    %2871 = vmatpush1.msra.mxu0 0.0
    %2872 = vmatprep.subr.mxu0 0.0
    %2873 = vmatpush1.msra.mxu0 0.0
    %2874 = vmatprep.subr.mxu0 0.0
    %2875 = vmatpush1.msra.mxu0 0.0
    %2876 = vmatprep.subr.mxu0 0.0
    %2877 = vmatpush1.msra.mxu0 0.0
    %2878 = vmatprep.subr.mxu0 0.0
    %2879 = vmatpush1.msra.mxu0 0.0
    %2880 = vmatprep.subr.mxu0 0.0
    %2881 = vmatpush1.msra.mxu0 0.0
    %2882 = vmatprep.subr.mxu0 0.0
    %2883 = vmatpush1.msra.mxu0 0.0
    %2884 = vmatprep.subr.mxu0 0.0
    %2885 = vmatpush1.msra.mxu0 0.0
    %2886 = vmatprep.subr.mxu0 0.0
    %2887 = vmatpush1.msra.mxu0 0.0
    %2888 = vmatprep.subr.mxu0 0.0
    %2889 = vmatpush1.msra.mxu0 0.0
    %2890 = vmatprep.subr.mxu0 0.0
    %2891 = vmatpush1.msra.mxu0 0.0
    %2892 = vmatprep.subr.mxu0 0.0
    %2893 = vmatpush1.msra.mxu0 0.0
    %2894 = vmatprep.subr.mxu0 0.0
    %2895 = vmatpush1.msra.mxu0 0.0
    %2896 = vmatprep.subr.mxu0 0.0
    %2897 = vmatpush1.msra.mxu0 0.0
    %2898 = vmatprep.subr.mxu0 0.0
    %2899 = vmatpush1.msra.mxu0 0.0
    %2900 = vmatprep.subr.mxu0 0.0
    %2901 = vmatpush1.msra.mxu0 0.0
    %2902 = vmatprep.subr.mxu0 0.0
    %2903 = vmatpush1.msra.mxu0 0.0
    %2904 = vmatprep.mubr.f32.mxu0 0.0
    %2905 = vmatmul.mubr.f32.gmra.mrb[0].mxu0 %v2178
    %v2906 = vpop.f32.mrb[0].mxu0
    %v2907 = vadd.f32 0.0, %v2906
    %v2908 = vpop.f32.mrb[0].mxu0
    %2909 = vdwg.mxu0
    %v2911 = vsel %vm215, %v2907, 0
    %2913 = vmatprep.subr.mxu0 0.0
    %2914 = vmatpush1.msra.mxu0 %v2172
    %2915 = vmatprep.subr.mxu0 0.0
    %2916 = vmatpush1.msra.mxu0 %v2173
    %2917 = vmatprep.subr.mxu0 0.0
    %2918 = vmatpush1.msra.mxu0 %v2174
    %2919 = vmatprep.subr.mxu0 0.0
    %2920 = vmatpush1.msra.mxu0 %v2175
    %2921 = vmatprep.subr.mxu0 0.0
    %2922 = vmatpush1.msra.mxu0 0.0
    %2923 = vmatprep.subr.mxu0 0.0
    %2924 = vmatpush1.msra.mxu0 0.0
    %2925 = vmatprep.subr.mxu0 0.0
    %2926 = vmatpush1.msra.mxu0 0.0
    %2927 = vmatprep.subr.mxu0 0.0
    %2928 = vmatpush1.msra.mxu0 0.0
    %2929 = vmatprep.subr.mxu0 0.0
    %2930 = vmatpush1.msra.mxu0 0.0
    %2931 = vmatprep.subr.mxu0 0.0
    %2932 = vmatpush1.msra.mxu0 0.0
    %2933 = vmatprep.subr.mxu0 0.0
    %2934 = vmatpush1.msra.mxu0 0.0
    %2935 = vmatprep.subr.mxu0 0.0
    %2936 = vmatpush1.msra.mxu0 0.0
    %2937 = vmatprep.subr.mxu0 0.0
    %2938 = vmatpush1.msra.mxu0 0.0
    %2939 = vmatprep.subr.mxu0 0.0
    %2940 = vmatpush1.msra.mxu0 0.0
    %2941 = vmatprep.subr.mxu0 0.0
    %2942 = vmatpush1.msra.mxu0 0.0
    %2943 = vmatprep.subr.mxu0 0.0
    %2944 = vmatpush1.msra.mxu0 0.0
    %2945 = vmatprep.subr.mxu0 0.0
    %2946 = vmatpush1.msra.mxu0 0.0
    %2947 = vmatprep.subr.mxu0 0.0
    %2948 = vmatpush1.msra.mxu0 0.0
    %2949 = vmatprep.subr.mxu0 0.0
    %2950 = vmatpush1.msra.mxu0 0.0
    %2951 = vmatprep.subr.mxu0 0.0
    %2952 = vmatpush1.msra.mxu0 0.0
    %2953 = vmatprep.subr.mxu0 0.0
    %2954 = vmatpush1.msra.mxu0 0.0
    %2955 = vmatprep.subr.mxu0 0.0
    %2956 = vmatpush1.msra.mxu0 0.0
    %2957 = vmatprep.subr.mxu0 0.0
    %2958 = vmatpush1.msra.mxu0 0.0
    %2959 = vmatprep.subr.mxu0 0.0
    %2960 = vmatpush1.msra.mxu0 0.0
    %2961 = vmatprep.subr.mxu0 0.0
    %2962 = vmatpush1.msra.mxu0 0.0
    %2963 = vmatprep.subr.mxu0 0.0
    %2964 = vmatpush1.msra.mxu0 0.0
    %2965 = vmatprep.subr.mxu0 0.0
    %2966 = vmatpush1.msra.mxu0 0.0
    %2967 = vmatprep.subr.mxu0 0.0
    %2968 = vmatpush1.msra.mxu0 0.0
    %2969 = vmatprep.subr.mxu0 0.0
    %2970 = vmatpush1.msra.mxu0 0.0
    %2971 = vmatprep.subr.mxu0 0.0
    %2972 = vmatpush1.msra.mxu0 0.0
    %2973 = vmatprep.subr.mxu0 0.0
    %2974 = vmatpush1.msra.mxu0 0.0
    %2975 = vmatprep.subr.mxu0 0.0
    %2976 = vmatpush1.msra.mxu0 0.0
    %2977 = vmatprep.mubr.f32.mxu0 0.0
    %2978 = vmatmul.mubr.f32.gmra.mrb[0].mxu0 %v2911
    %v2979 = vpop.f32.mrb[0].mxu0
    %v2980 = vadd.f32 0.0, %v2979
    %v2981 = vpop.f32.mrb[0].mxu0
    %2982 = vdwg.mxu0
    %v2983 = vld [vmem:[#allocation7] sm:$0xff]
    %v2984 = vld [vmem:[#allocation7 + $0x8] sm:$0xf]
    %v2985 = vld [vmem:[#allocation9] sm:$0xff]
    %v2986 = vld [vmem:[#allocation9 + $0x8] sm:$0xff]
    %v2987 = vld [vmem:[#allocation9 + $0x10] sm:$0xff]
    %v2988 = vld [vmem:[#allocation9 + $0x18] sm:$0xff]
    %v2989 = vld [vmem:[#allocation10] sm:$0xff]
    %v2990 = vld [vmem:[#allocation10 + $0x8] sm:$0xff]
    %v2991 = vld [vmem:[#allocation10 + $0x10] sm:$0xff]
    %v2992 = vld [vmem:[#allocation10 + $0x18] sm:$0xff]
    %v2995 = vcombine.high %v2983, %v2983
    %v2996 = vsel %vm137, %v2983, 0
    %v2998 = vsel %vm137, %v2995, 0
    %v3000 = vsel %vm137, %v2984, 0
    %3002 = vmatprep.subr.mxu0 %v2998
    %3003 = vmatpush1.msra.mxu0 %v2996
    %3004 = vmatprep.subr.mxu0 0.0
    %3005 = vmatpush1.msra.mxu0 0.0
    %3006 = vmatprep.subr.mxu0 0.0
    %3007 = vmatpush1.msra.mxu0 0.0
    %3008 = vmatprep.subr.mxu0 0.0
    %3009 = vmatpush1.msra.mxu0 0.0
    %3010 = vmatprep.subr.mxu0 0.0
    %3011 = vmatpush1.msra.mxu0 0.0
    %3012 = vmatprep.subr.mxu0 0.0
    %3013 = vmatpush1.msra.mxu0 0.0
    %3014 = vmatprep.subr.mxu0 0.0
    %3015 = vmatpush1.msra.mxu0 0.0
    %3016 = vmatprep.subr.mxu0 0.0
    %3017 = vmatpush1.msra.mxu0 0.0
    %3018 = vmatprep.subr.mxu0 0.0
    %3019 = vmatpush1.msra.mxu0 0.0
    %3020 = vmatprep.subr.mxu0 0.0
    %3021 = vmatpush1.msra.mxu0 0.0
    %3022 = vmatprep.subr.mxu0 0.0
    %3023 = vmatpush1.msra.mxu0 0.0
    %3024 = vmatprep.subr.mxu0 0.0
    %3025 = vmatpush1.msra.mxu0 0.0
    %3026 = vmatprep.subr.mxu0 0.0
    %3027 = vmatpush1.msra.mxu0 0.0
    %3028 = vmatprep.subr.mxu0 0.0
    %3029 = vmatpush1.msra.mxu0 0.0
    %3030 = vmatprep.subr.mxu0 0.0
    %3031 = vmatpush1.msra.mxu0 0.0
    %3032 = vmatprep.subr.mxu0 0.0
    %3033 = vmatpush1.msra.mxu0 0.0
    %3034 = vmatprep.subr.mxu0 0.0
    %3035 = vmatpush1.msra.mxu0 0.0
    %3036 = vmatprep.subr.mxu0 0.0
    %3037 = vmatpush1.msra.mxu0 0.0
    %3038 = vmatprep.subr.mxu0 0.0
    %3039 = vmatpush1.msra.mxu0 0.0
    %3040 = vmatprep.subr.mxu0 0.0
    %3041 = vmatpush1.msra.mxu0 0.0
    %3042 = vmatprep.subr.mxu0 0.0
    %3043 = vmatpush1.msra.mxu0 0.0
    %3044 = vmatprep.subr.mxu0 0.0
    %3045 = vmatpush1.msra.mxu0 0.0
    %3046 = vmatprep.subr.mxu0 0.0
    %3047 = vmatpush1.msra.mxu0 0.0
    %3048 = vmatprep.subr.mxu0 0.0
    %3049 = vmatpush1.msra.mxu0 0.0
    %3050 = vmatprep.subr.mxu0 0.0
    %3051 = vmatpush1.msra.mxu0 0.0
    %3052 = vmatprep.subr.mxu0 0.0
    %3053 = vmatpush1.msra.mxu0 0.0
    %3054 = vmatprep.subr.mxu0 0.0
    %3055 = vmatpush1.msra.mxu0 0.0
    %3056 = vmatprep.subr.mxu0 0.0
    %3057 = vmatpush1.msra.mxu0 0.0
    %3058 = vmatprep.subr.mxu0 0.0
    %3059 = vmatpush1.msra.mxu0 0.0
    %3060 = vmatprep.subr.mxu0 0.0
    %3061 = vmatpush1.msra.mxu0 0.0
    %3062 = vmatprep.subr.mxu0 0.0
    %3063 = vmatpush1.msra.mxu0 0.0
    %3064 = vmatprep.subr.mxu0 0.0
    %3065 = vmatpush1.msra.mxu0 0.0
    %3066 = vmatprep.mubr.f32.mxu0 0.0
    %3067 = vmatmul.mubr.f32.gmra.mrb[0].mxu0 %v135
    %v3068 = vpop.f32.mrb[0].mxu0
    %v3069 = vadd.f32 0.0, %v3068
    %v3070 = vpop.f32.mrb[0].mxu0
    %v3071 = vadd.f32 0.0, %v3070
    %3072 = vdwg.mxu0
    %3073 = vmatprep.subr.mxu0 0.0
    %3074 = vmatpush1.msra.mxu0 %v3000
    %3075 = vmatprep.subr.mxu0 0.0
    %3076 = vmatpush1.msra.mxu0 0.0
    %3077 = vmatprep.subr.mxu0 0.0
    %3078 = vmatpush1.msra.mxu0 0.0
    %3079 = vmatprep.subr.mxu0 0.0
    %3080 = vmatpush1.msra.mxu0 0.0
    %3081 = vmatprep.subr.mxu0 0.0
    %3082 = vmatpush1.msra.mxu0 0.0
    %3083 = vmatprep.subr.mxu0 0.0
    %3084 = vmatpush1.msra.mxu0 0.0
    %3085 = vmatprep.subr.mxu0 0.0
    %3086 = vmatpush1.msra.mxu0 0.0
    %3087 = vmatprep.subr.mxu0 0.0
    %3088 = vmatpush1.msra.mxu0 0.0
    %3089 = vmatprep.subr.mxu0 0.0
    %3090 = vmatpush1.msra.mxu0 0.0
    %3091 = vmatprep.subr.mxu0 0.0
    %3092 = vmatpush1.msra.mxu0 0.0
    %3093 = vmatprep.subr.mxu0 0.0
    %3094 = vmatpush1.msra.mxu0 0.0
    %3095 = vmatprep.subr.mxu0 0.0
    %3096 = vmatpush1.msra.mxu0 0.0
    %3097 = vmatprep.subr.mxu0 0.0
    %3098 = vmatpush1.msra.mxu0 0.0
    %3099 = vmatprep.subr.mxu0 0.0
    %3100 = vmatpush1.msra.mxu0 0.0
    %3101 = vmatprep.subr.mxu0 0.0
    %3102 = vmatpush1.msra.mxu0 0.0
    %3103 = vmatprep.subr.mxu0 0.0
    %3104 = vmatpush1.msra.mxu0 0.0
    %3105 = vmatprep.subr.mxu0 0.0
    %3106 = vmatpush1.msra.mxu0 0.0
    %3107 = vmatprep.subr.mxu0 0.0
    %3108 = vmatpush1.msra.mxu0 0.0
    %3109 = vmatprep.subr.mxu0 0.0
    %3110 = vmatpush1.msra.mxu0 0.0
    %3111 = vmatprep.subr.mxu0 0.0
    %3112 = vmatpush1.msra.mxu0 0.0
    %3113 = vmatprep.subr.mxu0 0.0
    %3114 = vmatpush1.msra.mxu0 0.0
    %3115 = vmatprep.subr.mxu0 0.0
    %3116 = vmatpush1.msra.mxu0 0.0
    %3117 = vmatprep.subr.mxu0 0.0
    %3118 = vmatpush1.msra.mxu0 0.0
    %3119 = vmatprep.subr.mxu0 0.0
    %3120 = vmatpush1.msra.mxu0 0.0
    %3121 = vmatprep.subr.mxu0 0.0
    %3122 = vmatpush1.msra.mxu0 0.0
    %3123 = vmatprep.subr.mxu0 0.0
    %3124 = vmatpush1.msra.mxu0 0.0
    %3125 = vmatprep.subr.mxu0 0.0
    %3126 = vmatpush1.msra.mxu0 0.0
    %3127 = vmatprep.subr.mxu0 0.0
    %3128 = vmatpush1.msra.mxu0 0.0
    %3129 = vmatprep.subr.mxu0 0.0
    %3130 = vmatpush1.msra.mxu0 0.0
    %3131 = vmatprep.subr.mxu0 0.0
    %3132 = vmatpush1.msra.mxu0 0.0
    %3133 = vmatprep.subr.mxu0 0.0
    %3134 = vmatpush1.msra.mxu0 0.0
    %3135 = vmatprep.subr.mxu0 0.0
    %3136 = vmatpush1.msra.mxu0 0.0
    %3137 = vmatprep.mubr.f32.mxu0 0.0
    %3138 = vmatmul.mubr.f32.gmra.mrb[0].mxu0 %v135
    %v3139 = vpop.f32.mrb[0].mxu0
    %v3140 = vadd.f32 0.0, %v3139
    %v3141 = vpop.f32.mrb[0].mxu0
    %3142 = vdwg.mxu0
    %v3143 = vmul.f32 %v2540, %v2540
    %v3144 = vmul.f32 %v2760, %v2760
    %v3145 = vadd.f32 %v3143, %v3144
    %v3146 = vmul.f32 %v2980, %v2980
    %v3147 = vadd.f32 %v3145, %v3146
    %v3148 = vmul.f32 %v2320, %v2320
    %v3149 = vmul.f32 %v3069, %v2320
    %3151 = vrot.lane.b32.xlu0 %v3148, 32
    %v3152 = vpop.permute.xlu0 %3151
    %v3154 = vmul.f32 %v3069, %v3152
    %3156 = vrot.lane.b32.xlu0 %v3154, 96
    %v3157 = vpop.permute.xlu0 %3156
    %v3159 = vadd.f32 %v3149, %v3157
    %3161 = vrot.lane.b32.xlu0 %v3147, 64
    %v3162 = vpop.permute.xlu0 %3161
    %v3164 = vmul.f32 %v3069, %v3162
    %3166 = vrot.lane.b32.xlu0 %v3164, 64
    %v3167 = vpop.permute.xlu0 %3166
    %v3169 = vadd.f32 %v3159, %v3167
    %3170 = vrot.lane.b32.xlu0 %v3148, 96
    %v3171 = vpop.permute.xlu0 %3170
    %v3173 = vmul.f32 %v3069, %v3171
    %3175 = vrot.lane.b32.xlu0 %v2320, 96
    %v3176 = vpop.permute.xlu0 %3175
    %v3178 = vmul.f32 %v3173, %v3176
    %3180 = vrot.lane.b32.xlu0 %v3178, 32
    %v3181 = vpop.permute.xlu0 %3180
    %v3183 = vadd.f32 %v3169, %v3181
    %v3184 = vmul.f32 %v3071, %v2320
    %v3185 = vmul.f32 %v3184, %v3147
    %v3186 = vadd.f32 %v3183, %v3185
    %3187 = vrot.lane.b32.xlu0 %v2320, 64
    %v3188 = vpop.permute.xlu0 %3187
    %v3190 = vmul.f32 %v3071, %v3188
    %3192 = vrot.lane.b32.xlu0 %v3190, 96
    %v3193 = vpop.permute.xlu0 %3192
    %v3195 = vadd.f32 %v3071, %v3193
    %v3196 = vmul.f32 %v3071, %v3171
    %3198 = vrot.lane.b32.xlu0 %v3196, 64
    %v3199 = vpop.permute.xlu0 %3198
    %v3201 = vadd.f32 %v3195, %v3199
    %v3202 = vmul.f32 %v3140, %v3147
    %3204 = vrot.lane.b32.xlu0 %v3202, 32
    %v3205 = vpop.permute.xlu0 %3204
    %v3207 = vadd.f32 %v3201, %v3205
    %3209 = vrot.lane.b32.xlu0 %v2540, 32
    %v3210 = vpop.permute.xlu0 %3209
    %v3212 = vmul.f32 %v3207, %v3210
    %3214 = vrot.lane.b32.xlu0 %v2760, 32
    %v3215 = vpop.permute.xlu0 %3214
    %v3217 = vmul.f32 %v3207, %v3215
    %3219 = vrot.lane.b32.xlu0 %v2980, 32
    %v3220 = vpop.permute.xlu0 %3219
    %v3222 = vmul.f32 %v3207, %v3220
    %v3224 = vsel %vm215, %v3186, 0
    %3226 = vmatprep.subr.mxu0 0.0
    %3227 = vmatpush1.msra.mxu0 %v2985
    %3228 = vmatprep.subr.mxu0 0.0
    %3229 = vmatpush1.msra.mxu0 %v2986
    %3230 = vmatprep.subr.mxu0 0.0
    %3231 = vmatpush1.msra.mxu0 %v2987
    %3232 = vmatprep.subr.mxu0 0.0
    %3233 = vmatpush1.msra.mxu0 %v2988
    %3234 = vmatprep.subr.mxu0 0.0
    %3235 = vmatpush1.msra.mxu0 0.0
    %3236 = vmatprep.subr.mxu0 0.0
    %3237 = vmatpush1.msra.mxu0 0.0
    %3238 = vmatprep.subr.mxu0 0.0
    %3239 = vmatpush1.msra.mxu0 0.0
    %3240 = vmatprep.subr.mxu0 0.0
    %3241 = vmatpush1.msra.mxu0 0.0
    %3242 = vmatprep.subr.mxu0 0.0
    %3243 = vmatpush1.msra.mxu0 0.0
    %3244 = vmatprep.subr.mxu0 0.0
    %3245 = vmatpush1.msra.mxu0 0.0
    %3246 = vmatprep.subr.mxu0 0.0
    %3247 = vmatpush1.msra.mxu0 0.0
    %3248 = vmatprep.subr.mxu0 0.0
    %3249 = vmatpush1.msra.mxu0 0.0
    %3250 = vmatprep.subr.mxu0 0.0
    %3251 = vmatpush1.msra.mxu0 0.0
    %3252 = vmatprep.subr.mxu0 0.0
    %3253 = vmatpush1.msra.mxu0 0.0
    %3254 = vmatprep.subr.mxu0 0.0
    %3255 = vmatpush1.msra.mxu0 0.0
    %3256 = vmatprep.subr.mxu0 0.0
    %3257 = vmatpush1.msra.mxu0 0.0
    %3258 = vmatprep.subr.mxu0 0.0
    %3259 = vmatpush1.msra.mxu0 0.0
    %3260 = vmatprep.subr.mxu0 0.0
    %3261 = vmatpush1.msra.mxu0 0.0
    %3262 = vmatprep.subr.mxu0 0.0
    %3263 = vmatpush1.msra.mxu0 0.0
    %3264 = vmatprep.subr.mxu0 0.0
    %3265 = vmatpush1.msra.mxu0 0.0
    %3266 = vmatprep.subr.mxu0 0.0
    %3267 = vmatpush1.msra.mxu0 0.0
    %3268 = vmatprep.subr.mxu0 0.0
    %3269 = vmatpush1.msra.mxu0 0.0
    %3270 = vmatprep.subr.mxu0 0.0
    %3271 = vmatpush1.msra.mxu0 0.0
    %3272 = vmatprep.subr.mxu0 0.0
    %3273 = vmatpush1.msra.mxu0 0.0
    %3274 = vmatprep.subr.mxu0 0.0
    %3275 = vmatpush1.msra.mxu0 0.0
    %3276 = vmatprep.subr.mxu0 0.0
    %3277 = vmatpush1.msra.mxu0 0.0
    %3278 = vmatprep.subr.mxu0 0.0
    %3279 = vmatpush1.msra.mxu0 0.0
    %3280 = vmatprep.subr.mxu0 0.0
    %3281 = vmatpush1.msra.mxu0 0.0
    %3282 = vmatprep.subr.mxu0 0.0
    %3283 = vmatpush1.msra.mxu0 0.0
    %3284 = vmatprep.subr.mxu0 0.0
    %3285 = vmatpush1.msra.mxu0 0.0
    %3286 = vmatprep.subr.mxu0 0.0
    %3287 = vmatpush1.msra.mxu0 0.0
    %3288 = vmatprep.subr.mxu0 0.0
    %3289 = vmatpush1.msra.mxu0 0.0
    %3290 = vmatprep.mubr.f32.mxu0 0.0
    %3291 = vmatmul.mubr.f32.gmra.mrb[0].mxu0 %v3224
    %v3292 = vpop.f32.mrb[0].mxu0
    %v3293 = vadd.f32 0.0, %v3292
    %v3294 = vpop.f32.mrb[0].mxu0
    %3295 = vdwg.mxu0
    %3296 = vst.msk [vmem:[%s16] sm:$0xff] %vm215, %v3293
    %3298 = vrot.lane.b32.xlu0 %v3212, 96
    %v3299 = vpop.permute.xlu0 %3298
    %v3300 = vsel %vm215, %v3299, 0
    %3302 = vmatprep.subr.mxu0 0.0
    %3303 = vmatpush1.msra.mxu0 %v2989
    %3304 = vmatprep.subr.mxu0 0.0
    %3305 = vmatpush1.msra.mxu0 %v2990
    %3306 = vmatprep.subr.mxu0 0.0
    %3307 = vmatpush1.msra.mxu0 %v2991
    %3308 = vmatprep.subr.mxu0 0.0
    %3309 = vmatpush1.msra.mxu0 %v2992
    %3310 = vmatprep.subr.mxu0 0.0
    %3311 = vmatpush1.msra.mxu0 0.0
    %3312 = vmatprep.subr.mxu0 0.0
    %3313 = vmatpush1.msra.mxu0 0.0
    %3314 = vmatprep.subr.mxu0 0.0
    %3315 = vmatpush1.msra.mxu0 0.0
    %3316 = vmatprep.subr.mxu0 0.0
    %3317 = vmatpush1.msra.mxu0 0.0
    %3318 = vmatprep.subr.mxu0 0.0
    %3319 = vmatpush1.msra.mxu0 0.0
    %3320 = vmatprep.subr.mxu0 0.0
    %3321 = vmatpush1.msra.mxu0 0.0
    %3322 = vmatprep.subr.mxu0 0.0
    %3323 = vmatpush1.msra.mxu0 0.0
    %3324 = vmatprep.subr.mxu0 0.0
    %3325 = vmatpush1.msra.mxu0 0.0
    %3326 = vmatprep.subr.mxu0 0.0
    %3327 = vmatpush1.msra.mxu0 0.0
    %3328 = vmatprep.subr.mxu0 0.0
    %3329 = vmatpush1.msra.mxu0 0.0
    %3330 = vmatprep.subr.mxu0 0.0
    %3331 = vmatpush1.msra.mxu0 0.0
    %3332 = vmatprep.subr.mxu0 0.0
    %3333 = vmatpush1.msra.mxu0 0.0
    %3334 = vmatprep.subr.mxu0 0.0
    %3335 = vmatpush1.msra.mxu0 0.0
    %3336 = vmatprep.subr.mxu0 0.0
    %3337 = vmatpush1.msra.mxu0 0.0
    %3338 = vmatprep.subr.mxu0 0.0
    %3339 = vmatpush1.msra.mxu0 0.0
    %3340 = vmatprep.subr.mxu0 0.0
    %3341 = vmatpush1.msra.mxu0 0.0
    %3342 = vmatprep.subr.mxu0 0.0
    %3343 = vmatpush1.msra.mxu0 0.0
    %3344 = vmatprep.subr.mxu0 0.0
    %3345 = vmatpush1.msra.mxu0 0.0
    %3346 = vmatprep.subr.mxu0 0.0
    %3347 = vmatpush1.msra.mxu0 0.0
    %3348 = vmatprep.subr.mxu0 0.0
    %3349 = vmatpush1.msra.mxu0 0.0
    %3350 = vmatprep.subr.mxu0 0.0
    %3351 = vmatpush1.msra.mxu0 0.0
    %3352 = vmatprep.subr.mxu0 0.0
    %3353 = vmatpush1.msra.mxu0 0.0
    %3354 = vmatprep.subr.mxu0 0.0
    %3355 = vmatpush1.msra.mxu0 0.0
    %3356 = vmatprep.subr.mxu0 0.0
    %3357 = vmatpush1.msra.mxu0 0.0
    %3358 = vmatprep.subr.mxu0 0.0
    %3359 = vmatpush1.msra.mxu0 0.0
    %3360 = vmatprep.subr.mxu0 0.0
    %3361 = vmatpush1.msra.mxu0 0.0
    %3362 = vmatprep.subr.mxu0 0.0
    %3363 = vmatpush1.msra.mxu0 0.0
    %3364 = vmatprep.subr.mxu0 0.0
    %3365 = vmatpush1.msra.mxu0 0.0
    %3366 = vmatprep.mubr.f32.mxu0 0.0
    %3367 = vmatmul.mubr.f32.gmra.mrb[0].mxu0 %v3300
    %v3368 = vpop.f32.mrb[0].mxu0
    %v3369 = vadd.f32 0.0, %v3368
    %v3370 = vpop.f32.mrb[0].mxu0
    %3371 = vdwg.mxu0
    %3373 = vrot.lane.b32.xlu0 %v3369, 32
    %v3374 = vpop.permute.xlu0 %3373
    %vm3376 = vcmask 523520
    %3377 = vst.msk [vmem:[%s16] sm:$0xff] %vm3376, %v3374
    %3379 = vrot.lane.b32.xlu0 %v3217, 96
    %v3380 = vpop.permute.xlu0 %3379
    %v3381 = vsel %vm215, %v3380, 0
    %3383 = vmatprep.subr.mxu0 0.0
    %3384 = vmatpush1.msra.mxu0 %v2989
    %3385 = vmatprep.subr.mxu0 0.0
    %3386 = vmatpush1.msra.mxu0 %v2990
    %3387 = vmatprep.subr.mxu0 0.0
    %3388 = vmatpush1.msra.mxu0 %v2991
    %3389 = vmatprep.subr.mxu0 0.0
    %3390 = vmatpush1.msra.mxu0 %v2992
    %3391 = vmatprep.subr.mxu0 0.0
    %3392 = vmatpush1.msra.mxu0 0.0
    %3393 = vmatprep.subr.mxu0 0.0
    %3394 = vmatpush1.msra.mxu0 0.0
    %3395 = vmatprep.subr.mxu0 0.0
    %3396 = vmatpush1.msra.mxu0 0.0
    %3397 = vmatprep.subr.mxu0 0.0
    %3398 = vmatpush1.msra.mxu0 0.0
    %3399 = vmatprep.subr.mxu0 0.0
    %3400 = vmatpush1.msra.mxu0 0.0
    %3401 = vmatprep.subr.mxu0 0.0
    %3402 = vmatpush1.msra.mxu0 0.0
    %3403 = vmatprep.subr.mxu0 0.0
    %3404 = vmatpush1.msra.mxu0 0.0
    %3405 = vmatprep.subr.mxu0 0.0
    %3406 = vmatpush1.msra.mxu0 0.0
    %3407 = vmatprep.subr.mxu0 0.0
    %3408 = vmatpush1.msra.mxu0 0.0
    %3409 = vmatprep.subr.mxu0 0.0
    %3410 = vmatpush1.msra.mxu0 0.0
    %3411 = vmatprep.subr.mxu0 0.0
    %3412 = vmatpush1.msra.mxu0 0.0
    %3413 = vmatprep.subr.mxu0 0.0
    %3414 = vmatpush1.msra.mxu0 0.0
    %3415 = vmatprep.subr.mxu0 0.0
    %3416 = vmatpush1.msra.mxu0 0.0
    %3417 = vmatprep.subr.mxu0 0.0
    %3418 = vmatpush1.msra.mxu0 0.0
    %3419 = vmatprep.subr.mxu0 0.0
    %3420 = vmatpush1.msra.mxu0 0.0
    %3421 = vmatprep.subr.mxu0 0.0
    %3422 = vmatpush1.msra.mxu0 0.0
    %3423 = vmatprep.subr.mxu0 0.0
    %3424 = vmatpush1.msra.mxu0 0.0
    %3425 = vmatprep.subr.mxu0 0.0
    %3426 = vmatpush1.msra.mxu0 0.0
    %3427 = vmatprep.subr.mxu0 0.0
    %3428 = vmatpush1.msra.mxu0 0.0
    %3429 = vmatprep.subr.mxu0 0.0
    %3430 = vmatpush1.msra.mxu0 0.0
    %3431 = vmatprep.subr.mxu0 0.0
    %3432 = vmatpush1.msra.mxu0 0.0
    %3433 = vmatprep.subr.mxu0 0.0
    %3434 = vmatpush1.msra.mxu0 0.0
    %3435 = vmatprep.subr.mxu0 0.0
    %3436 = vmatpush1.msra.mxu0 0.0
    %3437 = vmatprep.subr.mxu0 0.0
    %3438 = vmatpush1.msra.mxu0 0.0
    %3439 = vmatprep.subr.mxu0 0.0
    %3440 = vmatpush1.msra.mxu0 0.0
    %3441 = vmatprep.subr.mxu0 0.0
    %3442 = vmatpush1.msra.mxu0 0.0
    %3443 = vmatprep.subr.mxu0 0.0
    %3444 = vmatpush1.msra.mxu0 0.0
    %3445 = vmatprep.subr.mxu0 0.0
    %3446 = vmatpush1.msra.mxu0 0.0
    %3447 = vmatprep.mubr.f32.mxu0 0.0
    %3448 = vmatmul.mubr.f32.gmra.mrb[0].mxu0 %v3381
    %v3449 = vpop.f32.mrb[0].mxu0
    %v3450 = vadd.f32 0.0, %v3449
    %v3451 = vpop.f32.mrb[0].mxu0
    %3452 = vdwg.mxu0
    %3454 = vrot.lane.b32.xlu0 %v3450, 64
    %v3455 = vpop.permute.xlu0 %3454
    %vm3457 = vcmask 785920
    %3458 = vst.msk [vmem:[%s16] sm:$0xff] %vm3457, %v3455
    %3460 = vrot.lane.b32.xlu0 %v3222, 96
    %v3461 = vpop.permute.xlu0 %3460
    %v3462 = vsel %vm215, %v3461, 0
    %3464 = vmatprep.subr.mxu0 0.0
    %3465 = vmatpush1.msra.mxu0 %v2989
    %3466 = vmatprep.subr.mxu0 0.0
    %3467 = vmatpush1.msra.mxu0 %v2990
    %3468 = vmatprep.subr.mxu0 0.0
    %3469 = vmatpush1.msra.mxu0 %v2991
    %3470 = vmatprep.subr.mxu0 0.0
    %3471 = vmatpush1.msra.mxu0 %v2992
    %3472 = vmatprep.subr.mxu0 0.0
    %3473 = vmatpush1.msra.mxu0 0.0
    %3474 = vmatprep.subr.mxu0 0.0
    %3475 = vmatpush1.msra.mxu0 0.0
    %3476 = vmatprep.subr.mxu0 0.0
    %3477 = vmatpush1.msra.mxu0 0.0
    %3478 = vmatprep.subr.mxu0 0.0
    %3479 = vmatpush1.msra.mxu0 0.0
    %3480 = vmatprep.subr.mxu0 0.0
    %3481 = vmatpush1.msra.mxu0 0.0
    %3482 = vmatprep.subr.mxu0 0.0
    %3483 = vmatpush1.msra.mxu0 0.0
    %3484 = vmatprep.subr.mxu0 0.0
    %3485 = vmatpush1.msra.mxu0 0.0
    %3486 = vmatprep.subr.mxu0 0.0
    %3487 = vmatpush1.msra.mxu0 0.0
    %3488 = vmatprep.subr.mxu0 0.0
    %3489 = vmatpush1.msra.mxu0 0.0
    %3490 = vmatprep.subr.mxu0 0.0
    %3491 = vmatpush1.msra.mxu0 0.0
    %3492 = vmatprep.subr.mxu0 0.0
    %3493 = vmatpush1.msra.mxu0 0.0
    %3494 = vmatprep.subr.mxu0 0.0
    %3495 = vmatpush1.msra.mxu0 0.0
    %3496 = vmatprep.subr.mxu0 0.0
    %3497 = vmatpush1.msra.mxu0 0.0
    %3498 = vmatprep.subr.mxu0 0.0
    %3499 = vmatpush1.msra.mxu0 0.0
    %3500 = vmatprep.subr.mxu0 0.0
    %3501 = vmatpush1.msra.mxu0 0.0
    %3502 = vmatprep.subr.mxu0 0.0
    %3503 = vmatpush1.msra.mxu0 0.0
    %3504 = vmatprep.subr.mxu0 0.0
    %3505 = vmatpush1.msra.mxu0 0.0
    %3506 = vmatprep.subr.mxu0 0.0
    %3507 = vmatpush1.msra.mxu0 0.0
    %3508 = vmatprep.subr.mxu0 0.0
    %3509 = vmatpush1.msra.mxu0 0.0
    %3510 = vmatprep.subr.mxu0 0.0
    %3511 = vmatpush1.msra.mxu0 0.0
    %3512 = vmatprep.subr.mxu0 0.0
    %3513 = vmatpush1.msra.mxu0 0.0
    %3514 = vmatprep.subr.mxu0 0.0
    %3515 = vmatpush1.msra.mxu0 0.0
    %3516 = vmatprep.subr.mxu0 0.0
    %3517 = vmatpush1.msra.mxu0 0.0
    %3518 = vmatprep.subr.mxu0 0.0
    %3519 = vmatpush1.msra.mxu0 0.0
    %3520 = vmatprep.subr.mxu0 0.0
    %3521 = vmatpush1.msra.mxu0 0.0
    %3522 = vmatprep.subr.mxu0 0.0
    %3523 = vmatpush1.msra.mxu0 0.0
    %3524 = vmatprep.subr.mxu0 0.0
    %3525 = vmatpush1.msra.mxu0 0.0
    %3526 = vmatprep.subr.mxu0 0.0
    %3527 = vmatpush1.msra.mxu0 0.0
    %3528 = vmatprep.mubr.f32.mxu0 0.0
    %3529 = vmatmul.mubr.f32.gmra.mrb[0].mxu0 %v3462
    %v3530 = vpop.f32.mrb[0].mxu0
    %v3531 = vadd.f32 0.0, %v3530
    %v3532 = vpop.f32.mrb[0].mxu0
    %3533 = vdwg.mxu0
    %3535 = vrot.lane.b32.xlu0 %v3531, 96
    %v3536 = vpop.permute.xlu0 %3535
    %vm3538 = vcmask 1048320
    %3539 = vst.msk [vmem:[%s16] sm:$0xff] %vm3538, %v3536
    // Predicated region
    $region90: #{mymace_forward.3} parent=1 // pred_check
      _
    $region91: #{mymace_forward.3} parent=1 // pred_check_branch
      %3541 = sbr.rel (0) target = $region93
    $region92: #{mymace_forward.3} parent=1 // pred_region
      _
    $region93: #{mymace_forward.3} parent=1 // pred_fallthru
      _
    // Predicated region
    $region94: #{mymace_forward.3} parent=1 // pred_check
      _
    $region95: #{mymace_forward.3} parent=1 // pred_check_branch
      %3543 = sbr.rel (0) target = $region97
    $region96: #{mymace_forward.3} parent=1 // pred_region
      _
    $region97: #{mymace_forward.3} parent=1 // pred_fallthru
      _
    %3544 = vsyncpa [#allocation3], 1
    %3545 = vsyncpa [#allocation5], 1
    %3546 = vsyncpa [#allocation8], 1
    %3547 = vsyncpa [#allocation11], 1

// kernel: mymace_forward.4
$region0: #{mymace_forward.4}
  #allocation0 [shape = 'u32[]', space=smem, size = 0x4, offset = 0x4, fixed_abs, tag = 'smem constant byte address 0x4 - core index']
  #allocation1 [shape = 'u32[144,128]{1,0:T(1,128)}', space=vmem, size = 0x12000, scoped, tag = 'internal scratch']
  %s0 = inlined_call_operand.vmem [shape: f32[8,128], index: 0, kind: input, shape index: {}]
  %s1 = inlined_call_operand.vmem [shape: f32[8,4], index: 1, kind: input, shape index: {}]
  %s2 = inlined_call_operand.vmem [shape: f32[56,4], index: 2, kind: input, shape index: {}]
  %s3 = inlined_call_operand.vmem [shape: f32[1,8], index: 3, kind: input, shape index: {}]
  %s4 = inlined_call_operand.vmem [shape: f32[56,8], index: 4, kind: input, shape index: {}]
  %s5 = inlined_call_operand.vmem [shape: f32[8,56], index: 5, kind: input, shape index: {}]
  %s6 = inlined_call_operand.vmem [shape: f32[32,32], index: 6, kind: input, shape index: {}]
  %s7 = inlined_call_operand.vmem [shape: f32[32,32], index: 7, kind: input, shape index: {}]
  %s8 = inlined_call_operand.vmem [shape: f32[8,64], index: 8, kind: input, shape index: {}]
  %s9 = inlined_call_operand.vmem [shape: f32[64,64], index: 9, kind: input, shape index: {}]
  %s10 = inlined_call_operand.vmem [shape: f32[64,64], index: 10, kind: input, shape index: {}]
  %s11 = inlined_call_operand.vmem [shape: f32[64,160], index: 11, kind: input, shape index: {}]
  %s12 = inlined_call_operand.vmem [shape: f32[64,32], index: 12, kind: input, shape index: {}]
  %s13 = inlined_call_operand.vmem [shape: f32[96,32], index: 13, kind: input, shape index: {}]
  %s14 = inlined_call_operand.vmem [shape: f32[4,288], index: 14, kind: input, shape index: {}]
  %s15 = inlined_call_operand.vmem [shape: f32[32,32], index: 15, kind: input, shape index: {}]
  %s16 = inlined_call_operand.vmem [shape: f32[32,32], index: 16, kind: input, shape index: {}]
  %s17 = inlined_call_operand.vmem [shape: f32[8,128], index: 17, kind: output, shape index: {}]
  %s18 = sld [smem:[#allocation0]]
  $region78: #{mymace_forward.4} parent=0
    _
  %s20 = ssub.s32 1, %s18
  %s21 = scalar_select 0, %s20, %s18
  // Predicated region
  $region2: #{mymace_forward.4} parent=0 // pred_check
    _
  $region3: #{mymace_forward.4} parent=0 // pred_check_branch
    %23 = sbr.rel (0) target = $region5
  $region4: #{mymace_forward.4} parent=0 // pred_region
    _
  $region5: #{mymace_forward.4} parent=0 // pred_fallthru
    _
  // Predicated region
  $region6: #{mymace_forward.4} parent=0 // pred_check
    _
  $region7: #{mymace_forward.4} parent=0 // pred_check_branch
    %25 = sbr.rel (0) target = $region9
  $region8: #{mymace_forward.4} parent=0 // pred_region
    _
  $region9: #{mymace_forward.4} parent=0 // pred_fallthru
    _
  // Predicated region
  $region10: #{mymace_forward.4} parent=0 // pred_check
    _
  $region11: #{mymace_forward.4} parent=0 // pred_check_branch
    %27 = sbr.rel (0) target = $region13
  $region12: #{mymace_forward.4} parent=0 // pred_region
    _
  $region13: #{mymace_forward.4} parent=0 // pred_fallthru
    _
  // Predicated region
  $region14: #{mymace_forward.4} parent=0 // pred_check
    _
  $region15: #{mymace_forward.4} parent=0 // pred_check_branch
    %29 = sbr.rel (0) target = $region17
  $region16: #{mymace_forward.4} parent=0 // pred_region
    _
  $region17: #{mymace_forward.4} parent=0 // pred_fallthru
    _
  // Predicated region
  $region18: #{mymace_forward.4} parent=0 // pred_check
    _
  $region19: #{mymace_forward.4} parent=0 // pred_check_branch
    %31 = sbr.rel (0) target = $region21
  $region20: #{mymace_forward.4} parent=0 // pred_region
    _
  $region21: #{mymace_forward.4} parent=0 // pred_fallthru
    _
  // Predicated region
  $region22: #{mymace_forward.4} parent=0 // pred_check
    _
  $region23: #{mymace_forward.4} parent=0 // pred_check_branch
    %33 = sbr.rel (0) target = $region25
  $region24: #{mymace_forward.4} parent=0 // pred_region
    _
  $region25: #{mymace_forward.4} parent=0 // pred_fallthru
    _
  // Predicated region
  $region26: #{mymace_forward.4} parent=0 // pred_check
    _
  $region27: #{mymace_forward.4} parent=0 // pred_check_branch
    %35 = sbr.rel (0) target = $region29
  $region28: #{mymace_forward.4} parent=0 // pred_region
    _
  $region29: #{mymace_forward.4} parent=0 // pred_fallthru
    _
  // Predicated region
  $region30: #{mymace_forward.4} parent=0 // pred_check
    _
  $region31: #{mymace_forward.4} parent=0 // pred_check_branch
    %37 = sbr.rel (0) target = $region33
  $region32: #{mymace_forward.4} parent=0 // pred_region
    _
  $region33: #{mymace_forward.4} parent=0 // pred_fallthru
    _
  // Predicated region
  $region34: #{mymace_forward.4} parent=0 // pred_check
    _
  $region35: #{mymace_forward.4} parent=0 // pred_check_branch
    %39 = sbr.rel (0) target = $region37
  $region36: #{mymace_forward.4} parent=0 // pred_region
    _
  $region37: #{mymace_forward.4} parent=0 // pred_fallthru
    _
  // Predicated region
  $region38: #{mymace_forward.4} parent=0 // pred_check
    _
  $region39: #{mymace_forward.4} parent=0 // pred_check_branch
    %41 = sbr.rel (0) target = $region41
  $region40: #{mymace_forward.4} parent=0 // pred_region
    _
  $region41: #{mymace_forward.4} parent=0 // pred_fallthru
    _
  // Predicated region
  $region42: #{mymace_forward.4} parent=0 // pred_check
    _
  $region43: #{mymace_forward.4} parent=0 // pred_check_branch
    %43 = sbr.rel (0) target = $region45
  $region44: #{mymace_forward.4} parent=0 // pred_region
    _
  $region45: #{mymace_forward.4} parent=0 // pred_fallthru
    _
  // Predicated region
  $region46: #{mymace_forward.4} parent=0 // pred_check
    _
  $region47: #{mymace_forward.4} parent=0 // pred_check_branch
    %45 = sbr.rel (0) target = $region49
  $region48: #{mymace_forward.4} parent=0 // pred_region
    _
  $region49: #{mymace_forward.4} parent=0 // pred_fallthru
    _
  // Predicated region
  $region50: #{mymace_forward.4} parent=0 // pred_check
    _
  $region51: #{mymace_forward.4} parent=0 // pred_check_branch
    %47 = sbr.rel (0) target = $region53
  $region52: #{mymace_forward.4} parent=0 // pred_region
    _
  $region53: #{mymace_forward.4} parent=0 // pred_fallthru
    _
  // Predicated region
  $region54: #{mymace_forward.4} parent=0 // pred_check
    _
  $region55: #{mymace_forward.4} parent=0 // pred_check_branch
    %49 = sbr.rel (0) target = $region57
  $region56: #{mymace_forward.4} parent=0 // pred_region
    _
  $region57: #{mymace_forward.4} parent=0 // pred_fallthru
    _
  // Predicated region
  $region58: #{mymace_forward.4} parent=0 // pred_check
    _
  $region59: #{mymace_forward.4} parent=0 // pred_check_branch
    %51 = sbr.rel (0) target = $region61
  $region60: #{mymace_forward.4} parent=0 // pred_region
    _
  $region61: #{mymace_forward.4} parent=0 // pred_fallthru
    _
  // Predicated region
  $region62: #{mymace_forward.4} parent=0 // pred_check
    _
  $region63: #{mymace_forward.4} parent=0 // pred_check_branch
    %53 = sbr.rel (0) target = $region65
  $region64: #{mymace_forward.4} parent=0 // pred_region
    _
  $region65: #{mymace_forward.4} parent=0 // pred_fallthru
    _
  // Predicated region
  $region66: #{mymace_forward.4} parent=0 // pred_check
    _
  $region67: #{mymace_forward.4} parent=0 // pred_check_branch
    %55 = sbr.rel (0) target = $region69
  $region68: #{mymace_forward.4} parent=0 // pred_region
    _
  $region69: #{mymace_forward.4} parent=0 // pred_fallthru
    _
  %v56 = vld [vmem:[%s0] sm:$0xff]
  %v57 = vld [vmem:[%s6] sm:$0xff]
  %v58 = vld [vmem:[%s6 + $0x8] sm:$0xff]
  %v59 = vld [vmem:[%s6 + $0x10] sm:$0xff]
  %v60 = vld [vmem:[%s6 + $0x18] sm:$0xff]
  %vm61 = vcmask 261120
  %v63 = vsel %vm61, %v56, 0
  %65 = vmatprep.subr.mxu0 0.0
  %66 = vmatpush1.msra.mxu0 %v57
  %67 = vmatprep.subr.mxu0 0.0
  %68 = vmatpush1.msra.mxu0 %v58
  %69 = vmatprep.subr.mxu0 0.0
  %70 = vmatpush1.msra.mxu0 %v59
  %71 = vmatprep.subr.mxu0 0.0
  %72 = vmatpush1.msra.mxu0 %v60
  %73 = vmatprep.subr.mxu0 0.0
  %74 = vmatpush1.msra.mxu0 0.0
  %75 = vmatprep.subr.mxu0 0.0
  %76 = vmatpush1.msra.mxu0 0.0
  %77 = vmatprep.subr.mxu0 0.0
  %78 = vmatpush1.msra.mxu0 0.0
  %79 = vmatprep.subr.mxu0 0.0
  %80 = vmatpush1.msra.mxu0 0.0
  %81 = vmatprep.subr.mxu0 0.0
  %82 = vmatpush1.msra.mxu0 0.0
  %83 = vmatprep.subr.mxu0 0.0
  %84 = vmatpush1.msra.mxu0 0.0
  %85 = vmatprep.subr.mxu0 0.0
  %86 = vmatpush1.msra.mxu0 0.0
  %87 = vmatprep.subr.mxu0 0.0
  %88 = vmatpush1.msra.mxu0 0.0
  %89 = vmatprep.subr.mxu0 0.0
  %90 = vmatpush1.msra.mxu0 0.0
  %91 = vmatprep.subr.mxu0 0.0
  %92 = vmatpush1.msra.mxu0 0.0
  %93 = vmatprep.subr.mxu0 0.0
  %94 = vmatpush1.msra.mxu0 0.0
  %95 = vmatprep.subr.mxu0 0.0
  %96 = vmatpush1.msra.mxu0 0.0
  %97 = vmatprep.subr.mxu0 0.0
  %98 = vmatpush1.msra.mxu0 0.0
  %99 = vmatprep.subr.mxu0 0.0
  %100 = vmatpush1.msra.mxu0 0.0
  %101 = vmatprep.subr.mxu0 0.0
  %102 = vmatpush1.msra.mxu0 0.0
  %103 = vmatprep.subr.mxu0 0.0
  %104 = vmatpush1.msra.mxu0 0.0
  %105 = vmatprep.subr.mxu0 0.0
  %106 = vmatpush1.msra.mxu0 0.0
  %107 = vmatprep.subr.mxu0 0.0
  %108 = vmatpush1.msra.mxu0 0.0
  %109 = vmatprep.subr.mxu0 0.0
  %110 = vmatpush1.msra.mxu0 0.0
  %111 = vmatprep.subr.mxu0 0.0
  %112 = vmatpush1.msra.mxu0 0.0
  %113 = vmatprep.subr.mxu0 0.0
  %114 = vmatpush1.msra.mxu0 0.0
  %115 = vmatprep.subr.mxu0 0.0
  %116 = vmatpush1.msra.mxu0 0.0
  %117 = vmatprep.subr.mxu0 0.0
  %118 = vmatpush1.msra.mxu0 0.0
  %119 = vmatprep.subr.mxu0 0.0
  %120 = vmatpush1.msra.mxu0 0.0
  %121 = vmatprep.subr.mxu0 0.0
  %122 = vmatpush1.msra.mxu0 0.0
  %123 = vmatprep.subr.mxu0 0.0
  %124 = vmatpush1.msra.mxu0 0.0
  %125 = vmatprep.subr.mxu0 0.0
  %126 = vmatpush1.msra.mxu0 0.0
  %127 = vmatprep.subr.mxu0 0.0
  %128 = vmatpush1.msra.mxu0 0.0
  %129 = vmatprep.mubr.f32.mxu0 0.0
  %130 = vmatmul.mubr.f32.gmra.mrb[0].mxu0 %v63
  %v131 = vpop.f32.mrb[0].mxu0
  %v132 = vadd.f32 0.0, %v131
  %v133 = vpop.f32.mrb[0].mxu0
  %134 = vdwg.mxu0
  %v135 = vld [vmem:[%s7] sm:$0xff]
  %v136 = vld [vmem:[%s7 + $0x8] sm:$0xff]
  %v137 = vld [vmem:[%s7 + $0x10] sm:$0xff]
  %v138 = vld [vmem:[%s7 + $0x18] sm:$0xff]
  %139 = vrot.lane.b32.xlu0 %v56, 96
  %v140 = vpop.permute.xlu0 %139
  %v141 = vsel %vm61, %v140, 0
  %143 = vmatprep.subr.mxu0 0.0
  %144 = vmatpush1.msra.mxu0 %v135
  %145 = vmatprep.subr.mxu0 0.0
  %146 = vmatpush1.msra.mxu0 %v136
  %147 = vmatprep.subr.mxu0 0.0
  %148 = vmatpush1.msra.mxu0 %v137
  %149 = vmatprep.subr.mxu0 0.0
  %150 = vmatpush1.msra.mxu0 %v138
  %151 = vmatprep.subr.mxu0 0.0
  %152 = vmatpush1.msra.mxu0 0.0
  %153 = vmatprep.subr.mxu0 0.0
  %154 = vmatpush1.msra.mxu0 0.0
  %155 = vmatprep.subr.mxu0 0.0
  %156 = vmatpush1.msra.mxu0 0.0
  %157 = vmatprep.subr.mxu0 0.0
  %158 = vmatpush1.msra.mxu0 0.0
  %159 = vmatprep.subr.mxu0 0.0
  %160 = vmatpush1.msra.mxu0 0.0
  %161 = vmatprep.subr.mxu0 0.0
  %162 = vmatpush1.msra.mxu0 0.0
  %163 = vmatprep.subr.mxu0 0.0
  %164 = vmatpush1.msra.mxu0 0.0
  %165 = vmatprep.subr.mxu0 0.0
  %166 = vmatpush1.msra.mxu0 0.0
  %167 = vmatprep.subr.mxu0 0.0
  %168 = vmatpush1.msra.mxu0 0.0
  %169 = vmatprep.subr.mxu0 0.0
  %170 = vmatpush1.msra.mxu0 0.0
  %171 = vmatprep.subr.mxu0 0.0
  %172 = vmatpush1.msra.mxu0 0.0
  %173 = vmatprep.subr.mxu0 0.0
  %174 = vmatpush1.msra.mxu0 0.0
  %175 = vmatprep.subr.mxu0 0.0
  %176 = vmatpush1.msra.mxu0 0.0
  %177 = vmatprep.subr.mxu0 0.0
  %178 = vmatpush1.msra.mxu0 0.0
  %179 = vmatprep.subr.mxu0 0.0
  %180 = vmatpush1.msra.mxu0 0.0
  %181 = vmatprep.subr.mxu0 0.0
  %182 = vmatpush1.msra.mxu0 0.0
  %183 = vmatprep.subr.mxu0 0.0
  %184 = vmatpush1.msra.mxu0 0.0
  %185 = vmatprep.subr.mxu0 0.0
  %186 = vmatpush1.msra.mxu0 0.0
  %187 = vmatprep.subr.mxu0 0.0
  %188 = vmatpush1.msra.mxu0 0.0
  %189 = vmatprep.subr.mxu0 0.0
  %190 = vmatpush1.msra.mxu0 0.0
  %191 = vmatprep.subr.mxu0 0.0
  %192 = vmatpush1.msra.mxu0 0.0
  %193 = vmatprep.subr.mxu0 0.0
  %194 = vmatpush1.msra.mxu0 0.0
  %195 = vmatprep.subr.mxu0 0.0
  %196 = vmatpush1.msra.mxu0 0.0
  %197 = vmatprep.subr.mxu0 0.0
  %198 = vmatpush1.msra.mxu0 0.0
  %199 = vmatprep.subr.mxu0 0.0
  %200 = vmatpush1.msra.mxu0 0.0
  %201 = vmatprep.subr.mxu0 0.0
  %202 = vmatpush1.msra.mxu0 0.0
  %203 = vmatprep.subr.mxu0 0.0
  %204 = vmatpush1.msra.mxu0 0.0
  %205 = vmatprep.subr.mxu0 0.0
  %206 = vmatpush1.msra.mxu0 0.0
  %207 = vmatprep.mubr.f32.mxu0 0.0
  %208 = vmatmul.mubr.f32.gmra.mrb[0].mxu0 %v141
  %v209 = vpop.f32.mrb[0].mxu0
  %v210 = vadd.f32 0.0, %v209
  %v211 = vpop.f32.mrb[0].mxu0
  %212 = vdwg.mxu0
  %213 = vrot.lane.b32.xlu0 %v56, 64
  %v214 = vpop.permute.xlu0 %213
  %v215 = vsel %vm61, %v214, 0
  %217 = vmatprep.subr.mxu0 0.0
  %218 = vmatpush1.msra.mxu0 %v135
  %219 = vmatprep.subr.mxu0 0.0
  %220 = vmatpush1.msra.mxu0 %v136
  %221 = vmatprep.subr.mxu0 0.0
  %222 = vmatpush1.msra.mxu0 %v137
  %223 = vmatprep.subr.mxu0 0.0
  %224 = vmatpush1.msra.mxu0 %v138
  %225 = vmatprep.subr.mxu0 0.0
  %226 = vmatpush1.msra.mxu0 0.0
  %227 = vmatprep.subr.mxu0 0.0
  %228 = vmatpush1.msra.mxu0 0.0
  %229 = vmatprep.subr.mxu0 0.0
  %230 = vmatpush1.msra.mxu0 0.0
  %231 = vmatprep.subr.mxu0 0.0
  %232 = vmatpush1.msra.mxu0 0.0
  %233 = vmatprep.subr.mxu0 0.0
  %234 = vmatpush1.msra.mxu0 0.0
  %235 = vmatprep.subr.mxu0 0.0
  %236 = vmatpush1.msra.mxu0 0.0
  %237 = vmatprep.subr.mxu0 0.0
  %238 = vmatpush1.msra.mxu0 0.0
  %239 = vmatprep.subr.mxu0 0.0
  %240 = vmatpush1.msra.mxu0 0.0
  %241 = vmatprep.subr.mxu0 0.0
  %242 = vmatpush1.msra.mxu0 0.0
  %243 = vmatprep.subr.mxu0 0.0
  %244 = vmatpush1.msra.mxu0 0.0
  %245 = vmatprep.subr.mxu0 0.0
  %246 = vmatpush1.msra.mxu0 0.0
  %247 = vmatprep.subr.mxu0 0.0
  %248 = vmatpush1.msra.mxu0 0.0
  %249 = vmatprep.subr.mxu0 0.0
  %250 = vmatpush1.msra.mxu0 0.0
  %251 = vmatprep.subr.mxu0 0.0
  %252 = vmatpush1.msra.mxu0 0.0
  %253 = vmatprep.subr.mxu0 0.0
  %254 = vmatpush1.msra.mxu0 0.0
  %255 = vmatprep.subr.mxu0 0.0
  %256 = vmatpush1.msra.mxu0 0.0
  %257 = vmatprep.subr.mxu0 0.0
  %258 = vmatpush1.msra.mxu0 0.0
  %259 = vmatprep.subr.mxu0 0.0
  %260 = vmatpush1.msra.mxu0 0.0
  %261 = vmatprep.subr.mxu0 0.0
  %262 = vmatpush1.msra.mxu0 0.0
  %263 = vmatprep.subr.mxu0 0.0
  %264 = vmatpush1.msra.mxu0 0.0
  %265 = vmatprep.subr.mxu0 0.0
  %266 = vmatpush1.msra.mxu0 0.0
  %267 = vmatprep.subr.mxu0 0.0
  %268 = vmatpush1.msra.mxu0 0.0
  %269 = vmatprep.subr.mxu0 0.0
  %270 = vmatpush1.msra.mxu0 0.0
  %271 = vmatprep.subr.mxu0 0.0
  %272 = vmatpush1.msra.mxu0 0.0
  %273 = vmatprep.subr.mxu0 0.0
  %274 = vmatpush1.msra.mxu0 0.0
  %275 = vmatprep.subr.mxu0 0.0
  %276 = vmatpush1.msra.mxu0 0.0
  %277 = vmatprep.subr.mxu0 0.0
  %278 = vmatpush1.msra.mxu0 0.0
  %279 = vmatprep.subr.mxu0 0.0
  %280 = vmatpush1.msra.mxu0 0.0
  %281 = vmatprep.mubr.f32.mxu0 0.0
  %282 = vmatmul.mubr.f32.gmra.mrb[0].mxu0 %v215
  %v283 = vpop.f32.mrb[0].mxu0
  %v284 = vadd.f32 0.0, %v283
  %v285 = vpop.f32.mrb[0].mxu0
  %286 = vdwg.mxu0
  %287 = vrot.lane.b32.xlu0 %v56, 32
  %v288 = vpop.permute.xlu0 %287
  %v289 = vsel %vm61, %v288, 0
  %291 = vmatprep.subr.mxu0 0.0
  %292 = vmatpush1.msra.mxu0 %v135
  %293 = vmatprep.subr.mxu0 0.0
  %294 = vmatpush1.msra.mxu0 %v136
  %295 = vmatprep.subr.mxu0 0.0
  %296 = vmatpush1.msra.mxu0 %v137
  %297 = vmatprep.subr.mxu0 0.0
  %298 = vmatpush1.msra.mxu0 %v138
  %299 = vmatprep.subr.mxu0 0.0
  %300 = vmatpush1.msra.mxu0 0.0
  %301 = vmatprep.subr.mxu0 0.0
  %302 = vmatpush1.msra.mxu0 0.0
  %303 = vmatprep.subr.mxu0 0.0
  %304 = vmatpush1.msra.mxu0 0.0
  %305 = vmatprep.subr.mxu0 0.0
  %306 = vmatpush1.msra.mxu0 0.0
  %307 = vmatprep.subr.mxu0 0.0
  %308 = vmatpush1.msra.mxu0 0.0
  %309 = vmatprep.subr.mxu0 0.0
  %310 = vmatpush1.msra.mxu0 0.0
  %311 = vmatprep.subr.mxu0 0.0
  %312 = vmatpush1.msra.mxu0 0.0
  %313 = vmatprep.subr.mxu0 0.0
  %314 = vmatpush1.msra.mxu0 0.0
  %315 = vmatprep.subr.mxu0 0.0
  %316 = vmatpush1.msra.mxu0 0.0
  %317 = vmatprep.subr.mxu0 0.0
  %318 = vmatpush1.msra.mxu0 0.0
  %319 = vmatprep.subr.mxu0 0.0
  %320 = vmatpush1.msra.mxu0 0.0
  %321 = vmatprep.subr.mxu0 0.0
  %322 = vmatpush1.msra.mxu0 0.0
  %323 = vmatprep.subr.mxu0 0.0
  %324 = vmatpush1.msra.mxu0 0.0
  %325 = vmatprep.subr.mxu0 0.0
  %326 = vmatpush1.msra.mxu0 0.0
  %327 = vmatprep.subr.mxu0 0.0
  %328 = vmatpush1.msra.mxu0 0.0
  %329 = vmatprep.subr.mxu0 0.0
  %330 = vmatpush1.msra.mxu0 0.0
  %331 = vmatprep.subr.mxu0 0.0
  %332 = vmatpush1.msra.mxu0 0.0
  %333 = vmatprep.subr.mxu0 0.0
  %334 = vmatpush1.msra.mxu0 0.0
  %335 = vmatprep.subr.mxu0 0.0
  %336 = vmatpush1.msra.mxu0 0.0
  %337 = vmatprep.subr.mxu0 0.0
  %338 = vmatpush1.msra.mxu0 0.0
  %339 = vmatprep.subr.mxu0 0.0
  %340 = vmatpush1.msra.mxu0 0.0
  %341 = vmatprep.subr.mxu0 0.0
  %342 = vmatpush1.msra.mxu0 0.0
  %343 = vmatprep.subr.mxu0 0.0
  %344 = vmatpush1.msra.mxu0 0.0
  %345 = vmatprep.subr.mxu0 0.0
  %346 = vmatpush1.msra.mxu0 0.0
  %347 = vmatprep.subr.mxu0 0.0
  %348 = vmatpush1.msra.mxu0 0.0
  %349 = vmatprep.subr.mxu0 0.0
  %350 = vmatpush1.msra.mxu0 0.0
  %351 = vmatprep.subr.mxu0 0.0
  %352 = vmatpush1.msra.mxu0 0.0
  %353 = vmatprep.subr.mxu0 0.0
  %354 = vmatpush1.msra.mxu0 0.0
  %355 = vmatprep.mubr.f32.mxu0 0.0
  %356 = vmatmul.mubr.f32.gmra.mrb[0].mxu0 %v289
  %v357 = vpop.f32.mrb[0].mxu0
  %v358 = vadd.f32 0.0, %v357
  %v359 = vpop.f32.mrb[0].mxu0
  %360 = vdwg.mxu0
  %v361 = vld [vmem:[%s2] sm:$0xff]
  %v362 = vld [vmem:[%s2 + $0x8] sm:$0xff]
  %v363 = vld [vmem:[%s2 + $0x10] sm:$0xff]
  %v364 = vld [vmem:[%s2 + $0x18] sm:$0xff]
  %v365 = vld [vmem:[%s2 + $0x20] sm:$0xff]
  %v366 = vld [vmem:[%s2 + $0x28] sm:$0xff]
  %v367 = vld [vmem:[%s2 + $0x30] sm:$0xff]
  %v368 = vld [vmem:[%s3] sm:$0x1]
  %v369 = vrcp.pop %v361
  %v370 = vmul.f32 1.0, %v369
  %v371 = vrcp.pop %v362
  %v372 = vmul.f32 1.0, %v371
  %v373 = vrcp.pop %v363
  %v374 = vmul.f32 1.0, %v373
  %v375 = vrcp.pop %v364
  %v376 = vmul.f32 1.0, %v375
  %v377 = vrcp.pop %v365
  %v378 = vmul.f32 1.0, %v377
  %v379 = vrcp.pop %v366
  %v380 = vmul.f32 1.0, %v379
  %v381 = vrcp.pop %v367
  %v382 = vmul.f32 1.0, %v381
  %390 = vrot.lane.b32.xlu0 %v370, 1
  %v391 = vpop.permute.xlu0 %390
  %392 = vrot.lane.b32.xlu0 %v372, 1
  %v393 = vpop.permute.xlu0 %392
  %394 = vrot.lane.b32.xlu0 %v374, 1
  %v395 = vpop.permute.xlu0 %394
  %396 = vrot.lane.b32.xlu0 %v376, 1
  %v397 = vpop.permute.xlu0 %396
  %398 = vrot.lane.b32.xlu0 %v378, 1
  %v399 = vpop.permute.xlu0 %398
  %400 = vrot.lane.b32.xlu0 %v380, 1
  %v401 = vpop.permute.xlu0 %400
  %402 = vrot.lane.b32.xlu0 %v382, 1
  %v403 = vpop.permute.xlu0 %402
  %v411 = vmul.f32 %v361, %v391
  %v412 = vmul.f32 %v362, %v393
  %v413 = vmul.f32 %v363, %v395
  %v414 = vmul.f32 %v364, %v397
  %v415 = vmul.f32 %v365, %v399
  %v416 = vmul.f32 %v366, %v401
  %v417 = vmul.f32 %v367, %v403
  %418 = vrot.lane.b32.xlu0 %v370, 2
  %v419 = vpop.permute.xlu0 %418
  %420 = vrot.lane.b32.xlu0 %v372, 2
  %v421 = vpop.permute.xlu0 %420
  %422 = vrot.lane.b32.xlu0 %v374, 2
  %v423 = vpop.permute.xlu0 %422
  %424 = vrot.lane.b32.xlu0 %v376, 2
  %v425 = vpop.permute.xlu0 %424
  %426 = vrot.lane.b32.xlu0 %v378, 2
  %v427 = vpop.permute.xlu0 %426
  %428 = vrot.lane.b32.xlu0 %v380, 2
  %v429 = vpop.permute.xlu0 %428
  %430 = vrot.lane.b32.xlu0 %v382, 2
  %v431 = vpop.permute.xlu0 %430
  %v439 = vmul.f32 %v361, %v419
  %v440 = vmul.f32 %v362, %v421
  %v441 = vmul.f32 %v363, %v423
  %v442 = vmul.f32 %v364, %v425
  %v443 = vmul.f32 %v365, %v427
  %v444 = vmul.f32 %v366, %v429
  %v445 = vmul.f32 %v367, %v431
  %446 = vrot.lane.b32.xlu0 %v370, 3
  %v447 = vpop.permute.xlu0 %446
  %448 = vrot.lane.b32.xlu0 %v372, 3
  %v449 = vpop.permute.xlu0 %448
  %450 = vrot.lane.b32.xlu0 %v374, 3
  %v451 = vpop.permute.xlu0 %450
  %452 = vrot.lane.b32.xlu0 %v376, 3
  %v453 = vpop.permute.xlu0 %452
  %454 = vrot.lane.b32.xlu0 %v378, 3
  %v455 = vpop.permute.xlu0 %454
  %456 = vrot.lane.b32.xlu0 %v380, 3
  %v457 = vpop.permute.xlu0 %456
  %458 = vrot.lane.b32.xlu0 %v382, 3
  %v459 = vpop.permute.xlu0 %458
  %v467 = vmul.f32 %v361, %v447
  %v468 = vmul.f32 %v362, %v449
  %v469 = vmul.f32 %v363, %v451
  %v470 = vmul.f32 %v364, %v453
  %v471 = vmul.f32 %v365, %v455
  %v472 = vmul.f32 %v366, %v457
  %v473 = vmul.f32 %v367, %v459
  %475 = vset.pattern.permute.xlu0 0
  %476 = vperm.xlu0 %475, %v361
  %v477 = vpop.permute.xlu0 %476
  %480 = vset.pattern.permute.xlu0 0
  %481 = vperm.xlu0 %480, %v362
  %v482 = vpop.permute.xlu0 %481
  %485 = vset.pattern.permute.xlu0 0
  %486 = vperm.xlu0 %485, %v363
  %v487 = vpop.permute.xlu0 %486
  %490 = vset.pattern.permute.xlu0 0
  %491 = vperm.xlu0 %490, %v364
  %v492 = vpop.permute.xlu0 %491
  %495 = vset.pattern.permute.xlu0 0
  %496 = vperm.xlu0 %495, %v365
  %v497 = vpop.permute.xlu0 %496
  %500 = vset.pattern.permute.xlu0 0
  %501 = vperm.xlu0 %500, %v366
  %v502 = vpop.permute.xlu0 %501
  %505 = vset.pattern.permute.xlu0 0
  %506 = vperm.xlu0 %505, %v367
  %v507 = vpop.permute.xlu0 %506
  %v510 = vlaneseq
  %v511 = vshrl.u32 %v510, 7
  %v512 = vsub.s32 0, %v511
  %v513 = vrot.slane %v368, %v512
  %v515 = vmul.f32 %v477, %v513
  %v516 = vmul.f32 %v482, %v513
  %v517 = vmul.f32 %v487, %v513
  %v518 = vmul.f32 %v492, %v513
  %v519 = vmul.f32 %v497, %v513
  %v520 = vmul.f32 %v502, %v513
  %v521 = vmul.f32 %v507, %v513
  %v522 = vand.u32 2147483647, %v515
  %vm523 = vcmp.le.f32.partialorder %v522, 0.7853982
  %vm524 = vcmp.lt.s32.totalorder %v515, 0
  %v525 = vand.u32 %v515, 2139095040
  %v526 = vshrl.u32 %v525, 23
  %v527 = vsub.s32 %v526, 127
  %v528 = vand.u32 2147483647, %v515
  %v529 = vand.u32 %v528, 8388607
  %v530 = vor.u32 %v529, 8388608
  %v531 = vsub.s32 0, %v530
  %v532 = vadd.s32 %v527, 1
  %vm533 = vcmp.gt.s32.totalorder %v532, 0
  %v534 = vsel %vm533, %v532, 0
  %v535 = vshrl.u32 %v534, 5
  %v536 = vand.u32 %v534, 31
  %v537 = vsub.s32 32, %v536
  %v538 = vshrl.u32 683565275, %v537
  %v539 = vshll.u32 683565275, %v536
  %v540 = vshrl.u32 2475754826, %v537
  %v541 = vor.u32 %v539, %v540
  %v542 = vshll.u32 2475754826, %v536
  %v543 = vshrl.u32 2131351028, %v537
  %v544 = vor.u32 %v542, %v543
  %v545 = vshll.u32 2131351028, %v536
  %v546 = vshrl.u32 2102212464, %v537
  %v547 = vor.u32 %v545, %v546
  %v548 = vshll.u32 2102212464, %v536
  %v549 = vshrl.u32 920167782, %v537
  %v550 = vor.u32 %v548, %v549
  %v551 = vshll.u32 920167782, %v536
  %v552 = vshrl.u32 1326507024, %v537
  %v553 = vor.u32 %v551, %v552
  %vm554 = vcmp.lt.s32.totalorder %v535, 1
  %vm555 = vcmp.lt.s32.totalorder %v535, 2
  %vm556 = vcmp.lt.s32.totalorder %v535, 3
  %vm557 = vcmp.lt.s32.totalorder %v535, 4
  %v558 = vsel %vm554, %v538, %v541
  %v559 = vsel %vm557, %v547, 2102212464
  %v560 = vsel %vm556, %v544, %v559
  %v561 = vsel %vm555, %v558, %v560
  %v562 = vsel %vm554, %v541, %v544
  %v563 = vsel %vm557, %v550, 920167782
  %v564 = vsel %vm556, %v547, %v563
  %v565 = vsel %vm555, %v562, %v564
  %v566 = vsel %vm554, %v544, %v547
  %v567 = vsel %vm557, %v553, 1326507024
  %v568 = vsel %vm556, %v550, %v567
  %v569 = vsel %vm555, %v566, %v568
  %v570 = vshll.u32 %v530, 8
  %v571 = vmul.u32.u64.compose %v570, %v569
  %v572 = vextract.low.u32 %v571
  %v573 = vextract.high.u32 %v571
  %v574 = vmul.u32.u64.compose %v570, %v565
  %v575 = vextract.low.u32 %v574
  %v576 = vextract.high.u32 %v574
  %v577 = vmul.u32 %v570, %v561
  %v578 = vadd.s32 %v573, %v575
  %vm579 = vc.u32 %v573, %v575
  %v580 = vadd.s32 %v576, 1
  %v581 = vsel %vm579, %v580, %v576
  %v582 = vadd.s32 %v577, %v581
  %v583 = vadd.s32 %v582, 536870912
  %v584 = vshrl.u32 %v583, 30
  %v585 = vshll.u32 %v584, 30
  %v586 = vsub.s32 %v582, %v585
  %vm587 = vcmp.lt.s32.totalorder %v586, 0
  %v588 = vsub.s32 0, %v586
  %v589 = vsel %vm587, %v588, %v586
  %v590 = vclz %v589
  %v591 = vsub.s32 %v590, 2
  %vm592 = vcmp.gt.s32.totalorder 0, %v591
  %v593 = vsel %vm592, 0, %v591
  %v594 = vsub.s32 32, %v593
  %v595 = vshll.u32 %v586, %v593
  %v596 = vshrl.u32 %v578, %v594
  %v597 = vor.u32 %v595, %v596
  %v598 = vsub.s32 4294967266, %v593
  %v599 = vadd.s32 %v598, 127
  %v600 = vshll.u32 %v599, 23
  %v601 = vor.u32 4788187, %v600
  %v602 = vand.u32 2147483647, %v601
  %v604 = vcvt.s32.f32 %v597
  %v605 = vmul.f32 %v604, %v602
  %v606 = vxor.u32 %v605, 2147483648
  %v607 = vsel %vm524, %v606, %v605
  %v608 = vsub.s32 4, %v584
  %v609 = vsel %vm524, %v608, %v584
  %v610 = vsel %vm523, %v515, %v607
  %v611 = vsel %vm523, 0, %v609
  %v612 = vcosq.f32.pop %v610
  %v613 = vsinq.f32.pop %v610
  %vm614 = vweird.f32 %v515
  %v615 = vadd.s32 %v611, 3
  %v616 = vand.u32 %v615, 3
  %vm617 = vcmp.lt.s32.totalorder %v616, 2
  %vm618 = vcmp.eq.s32.totalorder %v616, 0
  %v619 = vxor.u32 %v613, 2147483648
  %v620 = vsel %vm618, %v612, %v619
  %vm621 = vcmp.eq.s32.totalorder %v616, 2
  %v622 = vxor.u32 %v612, 2147483648
  %v623 = vsel %vm621, %v622, %v613
  %v624 = vsel %vm617, %v620, %v623
  %v625 = vsel %vm614, nan, %v624
  %v626 = vand.u32 2147483647, %v516
  %vm627 = vcmp.le.f32.partialorder %v626, 0.7853982
  %vm628 = vcmp.lt.s32.totalorder %v516, 0
  %v629 = vand.u32 %v516, 2139095040
  %v630 = vshrl.u32 %v629, 23
  %v631 = vsub.s32 %v630, 127
  %v632 = vand.u32 2147483647, %v516
  %v633 = vand.u32 %v632, 8388607
  %v634 = vor.u32 %v633, 8388608
  %v635 = vsub.s32 0, %v634
  %v636 = vadd.s32 %v631, 1
  %vm637 = vcmp.gt.s32.totalorder %v636, 0
  %v638 = vsel %vm637, %v636, 0
  %v639 = vshrl.u32 %v638, 5
  %v640 = vand.u32 %v638, 31
  %v641 = vsub.s32 32, %v640
  %v642 = vshrl.u32 683565275, %v641
  %v643 = vshll.u32 683565275, %v640
  %v644 = vshrl.u32 2475754826, %v641
  %v645 = vor.u32 %v643, %v644
  %v646 = vshll.u32 2475754826, %v640
  %v647 = vshrl.u32 2131351028, %v641
  %v648 = vor.u32 %v646, %v647
  %v649 = vshll.u32 2131351028, %v640
  %v650 = vshrl.u32 2102212464, %v641
  %v651 = vor.u32 %v649, %v650
  %v652 = vshll.u32 2102212464, %v640
  %v653 = vshrl.u32 920167782, %v641
  %v654 = vor.u32 %v652, %v653
  %v655 = vshll.u32 920167782, %v640
  %v656 = vshrl.u32 1326507024, %v641
  %v657 = vor.u32 %v655, %v656
  %vm658 = vcmp.lt.s32.totalorder %v639, 1
  %vm659 = vcmp.lt.s32.totalorder %v639, 2
  %vm660 = vcmp.lt.s32.totalorder %v639, 3
  %vm661 = vcmp.lt.s32.totalorder %v639, 4
  %v662 = vsel %vm658, %v642, %v645
  %v663 = vsel %vm661, %v651, 2102212464
  %v664 = vsel %vm660, %v648, %v663
  %v665 = vsel %vm659, %v662, %v664
  %v666 = vsel %vm658, %v645, %v648
  %v667 = vsel %vm661, %v654, 920167782
  %v668 = vsel %vm660, %v651, %v667
  %v669 = vsel %vm659, %v666, %v668
  %v670 = vsel %vm658, %v648, %v651
  %v671 = vsel %vm661, %v657, 1326507024
  %v672 = vsel %vm660, %v654, %v671
  %v673 = vsel %vm659, %v670, %v672
  %v674 = vshll.u32 %v634, 8
  %v675 = vmul.u32.u64.compose %v674, %v673
  %v676 = vextract.low.u32 %v675
  %v677 = vextract.high.u32 %v675
  %v678 = vmul.u32.u64.compose %v674, %v669
  %v679 = vextract.low.u32 %v678
  %v680 = vextract.high.u32 %v678
  %v681 = vmul.u32 %v674, %v665
  %v682 = vadd.s32 %v677, %v679
  %vm683 = vc.u32 %v677, %v679
  %v684 = vadd.s32 %v680, 1
  %v685 = vsel %vm683, %v684, %v680
  %v686 = vadd.s32 %v681, %v685
  %v687 = vadd.s32 %v686, 536870912
  %v688 = vshrl.u32 %v687, 30
  %v689 = vshll.u32 %v688, 30
  %v690 = vsub.s32 %v686, %v689
  %vm691 = vcmp.lt.s32.totalorder %v690, 0
  %v692 = vsub.s32 0, %v690
  %v693 = vsel %vm691, %v692, %v690
  %v694 = vclz %v693
  %v695 = vsub.s32 %v694, 2
  %vm696 = vcmp.gt.s32.totalorder 0, %v695
  %v697 = vsel %vm696, 0, %v695
  %v698 = vsub.s32 32, %v697
  %v699 = vshll.u32 %v690, %v697
  %v700 = vshrl.u32 %v682, %v698
  %v701 = vor.u32 %v699, %v700
  %v702 = vsub.s32 4294967266, %v697
  %v703 = vadd.s32 %v702, 127
  %v704 = vshll.u32 %v703, 23
  %v705 = vor.u32 4788187, %v704
  %v706 = vand.u32 2147483647, %v705
  %v708 = vcvt.s32.f32 %v701
  %v709 = vmul.f32 %v708, %v706
  %v710 = vxor.u32 %v709, 2147483648
  %v711 = vsel %vm628, %v710, %v709
  %v712 = vsub.s32 4, %v688
  %v713 = vsel %vm628, %v712, %v688
  %v714 = vsel %vm627, %v516, %v711
  %v715 = vsel %vm627, 0, %v713
  %v716 = vcosq.f32.pop %v714
  %v717 = vsinq.f32.pop %v714
  %vm718 = vweird.f32 %v516
  %v719 = vadd.s32 %v715, 3
  %v720 = vand.u32 %v719, 3
  %vm721 = vcmp.lt.s32.totalorder %v720, 2
  %vm722 = vcmp.eq.s32.totalorder %v720, 0
  %v723 = vxor.u32 %v717, 2147483648
  %v724 = vsel %vm722, %v716, %v723
  %vm725 = vcmp.eq.s32.totalorder %v720, 2
  %v726 = vxor.u32 %v716, 2147483648
  %v727 = vsel %vm725, %v726, %v717
  %v728 = vsel %vm721, %v724, %v727
  %v729 = vsel %vm718, nan, %v728
  %v730 = vand.u32 2147483647, %v517
  %vm731 = vcmp.le.f32.partialorder %v730, 0.7853982
  %vm732 = vcmp.lt.s32.totalorder %v517, 0
  %v733 = vand.u32 %v517, 2139095040
  %v734 = vshrl.u32 %v733, 23
  %v735 = vsub.s32 %v734, 127
  %v736 = vand.u32 2147483647, %v517
  %v737 = vand.u32 %v736, 8388607
  %v738 = vor.u32 %v737, 8388608
  %v739 = vsub.s32 0, %v738
  %v740 = vadd.s32 %v735, 1
  %vm741 = vcmp.gt.s32.totalorder %v740, 0
  %v742 = vsel %vm741, %v740, 0
  %v743 = vshrl.u32 %v742, 5
  %v744 = vand.u32 %v742, 31
  %v745 = vsub.s32 32, %v744
  %v746 = vshrl.u32 683565275, %v745
  %v747 = vshll.u32 683565275, %v744
  %v748 = vshrl.u32 2475754826, %v745
  %v749 = vor.u32 %v747, %v748
  %v750 = vshll.u32 2475754826, %v744
  %v751 = vshrl.u32 2131351028, %v745
  %v752 = vor.u32 %v750, %v751
  %v753 = vshll.u32 2131351028, %v744
  %v754 = vshrl.u32 2102212464, %v745
  %v755 = vor.u32 %v753, %v754
  %v756 = vshll.u32 2102212464, %v744
  %v757 = vshrl.u32 920167782, %v745
  %v758 = vor.u32 %v756, %v757
  %v759 = vshll.u32 920167782, %v744
  %v760 = vshrl.u32 1326507024, %v745
  %v761 = vor.u32 %v759, %v760
  %vm762 = vcmp.lt.s32.totalorder %v743, 1
  %vm763 = vcmp.lt.s32.totalorder %v743, 2
  %vm764 = vcmp.lt.s32.totalorder %v743, 3
  %vm765 = vcmp.lt.s32.totalorder %v743, 4
  %v766 = vsel %vm762, %v746, %v749
  %v767 = vsel %vm765, %v755, 2102212464
  %v768 = vsel %vm764, %v752, %v767
  %v769 = vsel %vm763, %v766, %v768
  %v770 = vsel %vm762, %v749, %v752
  %v771 = vsel %vm765, %v758, 920167782
  %v772 = vsel %vm764, %v755, %v771
  %v773 = vsel %vm763, %v770, %v772
  %v774 = vsel %vm762, %v752, %v755
  %v775 = vsel %vm765, %v761, 1326507024
  %v776 = vsel %vm764, %v758, %v775
  %v777 = vsel %vm763, %v774, %v776
  %v778 = vshll.u32 %v738, 8
  %v779 = vmul.u32.u64.compose %v778, %v777
  %v780 = vextract.low.u32 %v779
  %v781 = vextract.high.u32 %v779
  %v782 = vmul.u32.u64.compose %v778, %v773
  %v783 = vextract.low.u32 %v782
  %v784 = vextract.high.u32 %v782
  %v785 = vmul.u32 %v778, %v769
  %v786 = vadd.s32 %v781, %v783
  %vm787 = vc.u32 %v781, %v783
  %v788 = vadd.s32 %v784, 1
  %v789 = vsel %vm787, %v788, %v784
  %v790 = vadd.s32 %v785, %v789
  %v791 = vadd.s32 %v790, 536870912
  %v792 = vshrl.u32 %v791, 30
  %v793 = vshll.u32 %v792, 30
  %v794 = vsub.s32 %v790, %v793
  %vm795 = vcmp.lt.s32.totalorder %v794, 0
  %v796 = vsub.s32 0, %v794
  %v797 = vsel %vm795, %v796, %v794
  %v798 = vclz %v797
  %v799 = vsub.s32 %v798, 2
  %vm800 = vcmp.gt.s32.totalorder 0, %v799
  %v801 = vsel %vm800, 0, %v799
  %v802 = vsub.s32 32, %v801
  %v803 = vshll.u32 %v794, %v801
  %v804 = vshrl.u32 %v786, %v802
  %v805 = vor.u32 %v803, %v804
  %v806 = vsub.s32 4294967266, %v801
  %v807 = vadd.s32 %v806, 127
  %v808 = vshll.u32 %v807, 23
  %v809 = vor.u32 4788187, %v808
  %v810 = vand.u32 2147483647, %v809
  %v812 = vcvt.s32.f32 %v805
  %v813 = vmul.f32 %v812, %v810
  %v814 = vxor.u32 %v813, 2147483648
  %v815 = vsel %vm732, %v814, %v813
  %v816 = vsub.s32 4, %v792
  %v817 = vsel %vm732, %v816, %v792
  %v818 = vsel %vm731, %v517, %v815
  %v819 = vsel %vm731, 0, %v817
  %v820 = vcosq.f32.pop %v818
  %v821 = vsinq.f32.pop %v818
  %vm822 = vweird.f32 %v517
  %v823 = vadd.s32 %v819, 3
  %v824 = vand.u32 %v823, 3
  %vm825 = vcmp.lt.s32.totalorder %v824, 2
  %vm826 = vcmp.eq.s32.totalorder %v824, 0
  %v827 = vxor.u32 %v821, 2147483648
  %v828 = vsel %vm826, %v820, %v827
  %vm829 = vcmp.eq.s32.totalorder %v824, 2
  %v830 = vxor.u32 %v820, 2147483648
  %v831 = vsel %vm829, %v830, %v821
  %v832 = vsel %vm825, %v828, %v831
  %v833 = vsel %vm822, nan, %v832
  %v834 = vand.u32 2147483647, %v518
  %vm835 = vcmp.le.f32.partialorder %v834, 0.7853982
  %vm836 = vcmp.lt.s32.totalorder %v518, 0
  %v837 = vand.u32 %v518, 2139095040
  %v838 = vshrl.u32 %v837, 23
  %v839 = vsub.s32 %v838, 127
  %v840 = vand.u32 2147483647, %v518
  %v841 = vand.u32 %v840, 8388607
  %v842 = vor.u32 %v841, 8388608
  %v843 = vsub.s32 0, %v842
  %v844 = vadd.s32 %v839, 1
  %vm845 = vcmp.gt.s32.totalorder %v844, 0
  %v846 = vsel %vm845, %v844, 0
  %v847 = vshrl.u32 %v846, 5
  %v848 = vand.u32 %v846, 31
  %v849 = vsub.s32 32, %v848
  %v850 = vshrl.u32 683565275, %v849
  %v851 = vshll.u32 683565275, %v848
  %v852 = vshrl.u32 2475754826, %v849
  %v853 = vor.u32 %v851, %v852
  %v854 = vshll.u32 2475754826, %v848
  %v855 = vshrl.u32 2131351028, %v849
  %v856 = vor.u32 %v854, %v855
  %v857 = vshll.u32 2131351028, %v848
  %v858 = vshrl.u32 2102212464, %v849
  %v859 = vor.u32 %v857, %v858
  %v860 = vshll.u32 2102212464, %v848
  %v861 = vshrl.u32 920167782, %v849
  %v862 = vor.u32 %v860, %v861
  %v863 = vshll.u32 920167782, %v848
  %v864 = vshrl.u32 1326507024, %v849
  %v865 = vor.u32 %v863, %v864
  %vm866 = vcmp.lt.s32.totalorder %v847, 1
  %vm867 = vcmp.lt.s32.totalorder %v847, 2
  %vm868 = vcmp.lt.s32.totalorder %v847, 3
  %vm869 = vcmp.lt.s32.totalorder %v847, 4
  %v870 = vsel %vm866, %v850, %v853
  %v871 = vsel %vm869, %v859, 2102212464
  %v872 = vsel %vm868, %v856, %v871
  %v873 = vsel %vm867, %v870, %v872
  %v874 = vsel %vm866, %v853, %v856
  %v875 = vsel %vm869, %v862, 920167782
  %v876 = vsel %vm868, %v859, %v875
  %v877 = vsel %vm867, %v874, %v876
  %v878 = vsel %vm866, %v856, %v859
  %v879 = vsel %vm869, %v865, 1326507024
  %v880 = vsel %vm868, %v862, %v879
  %v881 = vsel %vm867, %v878, %v880
  %v882 = vshll.u32 %v842, 8
  %v883 = vmul.u32.u64.compose %v882, %v881
  %v884 = vextract.low.u32 %v883
  %v885 = vextract.high.u32 %v883
  %v886 = vmul.u32.u64.compose %v882, %v877
  %v887 = vextract.low.u32 %v886
  %v888 = vextract.high.u32 %v886
  %v889 = vmul.u32 %v882, %v873
  %v890 = vadd.s32 %v885, %v887
  %vm891 = vc.u32 %v885, %v887
  %v892 = vadd.s32 %v888, 1
  %v893 = vsel %vm891, %v892, %v888
  %v894 = vadd.s32 %v889, %v893
  %v895 = vadd.s32 %v894, 536870912
  %v896 = vshrl.u32 %v895, 30
  %v897 = vshll.u32 %v896, 30
  %v898 = vsub.s32 %v894, %v897
  %vm899 = vcmp.lt.s32.totalorder %v898, 0
  %v900 = vsub.s32 0, %v898
  %v901 = vsel %vm899, %v900, %v898
  %v902 = vclz %v901
  %v903 = vsub.s32 %v902, 2
  %vm904 = vcmp.gt.s32.totalorder 0, %v903
  %v905 = vsel %vm904, 0, %v903
  %v906 = vsub.s32 32, %v905
  %v907 = vshll.u32 %v898, %v905
  %v908 = vshrl.u32 %v890, %v906
  %v909 = vor.u32 %v907, %v908
  %v910 = vsub.s32 4294967266, %v905
  %v911 = vadd.s32 %v910, 127
  %v912 = vshll.u32 %v911, 23
  %v913 = vor.u32 4788187, %v912
  %v914 = vand.u32 2147483647, %v913
  %v916 = vcvt.s32.f32 %v909
  %v917 = vmul.f32 %v916, %v914
  %v918 = vxor.u32 %v917, 2147483648
  %v919 = vsel %vm836, %v918, %v917
  %v920 = vsub.s32 4, %v896
  %v921 = vsel %vm836, %v920, %v896
  %v922 = vsel %vm835, %v518, %v919
  %v923 = vsel %vm835, 0, %v921
  %v924 = vcosq.f32.pop %v922
  %v925 = vsinq.f32.pop %v922
  %vm926 = vweird.f32 %v518
  %v927 = vadd.s32 %v923, 3
  %v928 = vand.u32 %v927, 3
  %vm929 = vcmp.lt.s32.totalorder %v928, 2
  %vm930 = vcmp.eq.s32.totalorder %v928, 0
  %v931 = vxor.u32 %v925, 2147483648
  %v932 = vsel %vm930, %v924, %v931
  %vm933 = vcmp.eq.s32.totalorder %v928, 2
  %v934 = vxor.u32 %v924, 2147483648
  %v935 = vsel %vm933, %v934, %v925
  %v936 = vsel %vm929, %v932, %v935
  %v937 = vsel %vm926, nan, %v936
  %v938 = vand.u32 2147483647, %v519
  %vm939 = vcmp.le.f32.partialorder %v938, 0.7853982
  %vm940 = vcmp.lt.s32.totalorder %v519, 0
  %v941 = vand.u32 %v519, 2139095040
  %v942 = vshrl.u32 %v941, 23
  %v943 = vsub.s32 %v942, 127
  %v944 = vand.u32 2147483647, %v519
  %v945 = vand.u32 %v944, 8388607
  %v946 = vor.u32 %v945, 8388608
  %v947 = vsub.s32 0, %v946
  %v948 = vadd.s32 %v943, 1
  %vm949 = vcmp.gt.s32.totalorder %v948, 0
  %v950 = vsel %vm949, %v948, 0
  %v951 = vshrl.u32 %v950, 5
  %v952 = vand.u32 %v950, 31
  %v953 = vsub.s32 32, %v952
  %v954 = vshrl.u32 683565275, %v953
  %v955 = vshll.u32 683565275, %v952
  %v956 = vshrl.u32 2475754826, %v953
  %v957 = vor.u32 %v955, %v956
  %v958 = vshll.u32 2475754826, %v952
  %v959 = vshrl.u32 2131351028, %v953
  %v960 = vor.u32 %v958, %v959
  %v961 = vshll.u32 2131351028, %v952
  %v962 = vshrl.u32 2102212464, %v953
  %v963 = vor.u32 %v961, %v962
  %v964 = vshll.u32 2102212464, %v952
  %v965 = vshrl.u32 920167782, %v953
  %v966 = vor.u32 %v964, %v965
  %v967 = vshll.u32 920167782, %v952
  %v968 = vshrl.u32 1326507024, %v953
  %v969 = vor.u32 %v967, %v968
  %vm970 = vcmp.lt.s32.totalorder %v951, 1
  %vm971 = vcmp.lt.s32.totalorder %v951, 2
  %vm972 = vcmp.lt.s32.totalorder %v951, 3
  %vm973 = vcmp.lt.s32.totalorder %v951, 4
  %v974 = vsel %vm970, %v954, %v957
  %v975 = vsel %vm973, %v963, 2102212464
  %v976 = vsel %vm972, %v960, %v975
  %v977 = vsel %vm971, %v974, %v976
  %v978 = vsel %vm970, %v957, %v960
  %v979 = vsel %vm973, %v966, 920167782
  %v980 = vsel %vm972, %v963, %v979
  %v981 = vsel %vm971, %v978, %v980
  %v982 = vsel %vm970, %v960, %v963
  %v983 = vsel %vm973, %v969, 1326507024
  %v984 = vsel %vm972, %v966, %v983
  %v985 = vsel %vm971, %v982, %v984
  %v986 = vshll.u32 %v946, 8
  %v987 = vmul.u32.u64.compose %v986, %v985
  %v988 = vextract.low.u32 %v987
  %v989 = vextract.high.u32 %v987
  %v990 = vmul.u32.u64.compose %v986, %v981
  %v991 = vextract.low.u32 %v990
  %v992 = vextract.high.u32 %v990
  %v993 = vmul.u32 %v986, %v977
  %v994 = vadd.s32 %v989, %v991
  %vm995 = vc.u32 %v989, %v991
  %v996 = vadd.s32 %v992, 1
  %v997 = vsel %vm995, %v996, %v992
  %v998 = vadd.s32 %v993, %v997
  %v999 = vadd.s32 %v998, 536870912
  %v1000 = vshrl.u32 %v999, 30
  %v1001 = vshll.u32 %v1000, 30
  %v1002 = vsub.s32 %v998, %v1001
  %vm1003 = vcmp.lt.s32.totalorder %v1002, 0
  %v1004 = vsub.s32 0, %v1002
  %v1005 = vsel %vm1003, %v1004, %v1002
  %v1006 = vclz %v1005
  %v1007 = vsub.s32 %v1006, 2
  %vm1008 = vcmp.gt.s32.totalorder 0, %v1007
  %v1009 = vsel %vm1008, 0, %v1007
  %v1010 = vsub.s32 32, %v1009
  %v1011 = vshll.u32 %v1002, %v1009
  %v1012 = vshrl.u32 %v994, %v1010
  %v1013 = vor.u32 %v1011, %v1012
  %v1014 = vsub.s32 4294967266, %v1009
  %v1015 = vadd.s32 %v1014, 127
  %v1016 = vshll.u32 %v1015, 23
  %v1017 = vor.u32 4788187, %v1016
  %v1018 = vand.u32 2147483647, %v1017
  %v1020 = vcvt.s32.f32 %v1013
  %v1021 = vmul.f32 %v1020, %v1018
  %v1022 = vxor.u32 %v1021, 2147483648
  %v1023 = vsel %vm940, %v1022, %v1021
  %v1024 = vsub.s32 4, %v1000
  %v1025 = vsel %vm940, %v1024, %v1000
  %v1026 = vsel %vm939, %v519, %v1023
  %v1027 = vsel %vm939, 0, %v1025
  %v1028 = vcosq.f32.pop %v1026
  %v1029 = vsinq.f32.pop %v1026
  %vm1030 = vweird.f32 %v519
  %v1031 = vadd.s32 %v1027, 3
  %v1032 = vand.u32 %v1031, 3
  %vm1033 = vcmp.lt.s32.totalorder %v1032, 2
  %vm1034 = vcmp.eq.s32.totalorder %v1032, 0
  %v1035 = vxor.u32 %v1029, 2147483648
  %v1036 = vsel %vm1034, %v1028, %v1035
  %vm1037 = vcmp.eq.s32.totalorder %v1032, 2
  %v1038 = vxor.u32 %v1028, 2147483648
  %v1039 = vsel %vm1037, %v1038, %v1029
  %v1040 = vsel %vm1033, %v1036, %v1039
  %v1041 = vsel %vm1030, nan, %v1040
  %v1042 = vand.u32 2147483647, %v520
  %vm1043 = vcmp.le.f32.partialorder %v1042, 0.7853982
  %vm1044 = vcmp.lt.s32.totalorder %v520, 0
  %v1045 = vand.u32 %v520, 2139095040
  %v1046 = vshrl.u32 %v1045, 23
  %v1047 = vsub.s32 %v1046, 127
  %v1048 = vand.u32 2147483647, %v520
  %v1049 = vand.u32 %v1048, 8388607
  %v1050 = vor.u32 %v1049, 8388608
  %v1051 = vsub.s32 0, %v1050
  %v1052 = vadd.s32 %v1047, 1
  %vm1053 = vcmp.gt.s32.totalorder %v1052, 0
  %v1054 = vsel %vm1053, %v1052, 0
  %v1055 = vshrl.u32 %v1054, 5
  %v1056 = vand.u32 %v1054, 31
  %v1057 = vsub.s32 32, %v1056
  %v1058 = vshrl.u32 683565275, %v1057
  %v1059 = vshll.u32 683565275, %v1056
  %v1060 = vshrl.u32 2475754826, %v1057
  %v1061 = vor.u32 %v1059, %v1060
  %v1062 = vshll.u32 2475754826, %v1056
  %v1063 = vshrl.u32 2131351028, %v1057
  %v1064 = vor.u32 %v1062, %v1063
  %v1065 = vshll.u32 2131351028, %v1056
  %v1066 = vshrl.u32 2102212464, %v1057
  %v1067 = vor.u32 %v1065, %v1066
  %v1068 = vshll.u32 2102212464, %v1056
  %v1069 = vshrl.u32 920167782, %v1057
  %v1070 = vor.u32 %v1068, %v1069
  %v1071 = vshll.u32 920167782, %v1056
  %v1072 = vshrl.u32 1326507024, %v1057
  %v1073 = vor.u32 %v1071, %v1072
  %vm1074 = vcmp.lt.s32.totalorder %v1055, 1
  %vm1075 = vcmp.lt.s32.totalorder %v1055, 2
  %vm1076 = vcmp.lt.s32.totalorder %v1055, 3
  %vm1077 = vcmp.lt.s32.totalorder %v1055, 4
  %v1078 = vsel %vm1074, %v1058, %v1061
  %v1079 = vsel %vm1077, %v1067, 2102212464
  %v1080 = vsel %vm1076, %v1064, %v1079
  %v1081 = vsel %vm1075, %v1078, %v1080
  %v1082 = vsel %vm1074, %v1061, %v1064
  %v1083 = vsel %vm1077, %v1070, 920167782
  %v1084 = vsel %vm1076, %v1067, %v1083
  %v1085 = vsel %vm1075, %v1082, %v1084
  %v1086 = vsel %vm1074, %v1064, %v1067
  %v1087 = vsel %vm1077, %v1073, 1326507024
  %v1088 = vsel %vm1076, %v1070, %v1087
  %v1089 = vsel %vm1075, %v1086, %v1088
  %v1090 = vshll.u32 %v1050, 8
  %v1091 = vmul.u32.u64.compose %v1090, %v1089
  %v1092 = vextract.low.u32 %v1091
  %v1093 = vextract.high.u32 %v1091
  %v1094 = vmul.u32.u64.compose %v1090, %v1085
  %v1095 = vextract.low.u32 %v1094
  %v1096 = vextract.high.u32 %v1094
  %v1097 = vmul.u32 %v1090, %v1081
  %v1098 = vadd.s32 %v1093, %v1095
  %vm1099 = vc.u32 %v1093, %v1095
  %v1100 = vadd.s32 %v1096, 1
  %v1101 = vsel %vm1099, %v1100, %v1096
  %v1102 = vadd.s32 %v1097, %v1101
  %v1103 = vadd.s32 %v1102, 536870912
  %v1104 = vshrl.u32 %v1103, 30
  %v1105 = vshll.u32 %v1104, 30
  %v1106 = vsub.s32 %v1102, %v1105
  %vm1107 = vcmp.lt.s32.totalorder %v1106, 0
  %v1108 = vsub.s32 0, %v1106
  %v1109 = vsel %vm1107, %v1108, %v1106
  %v1110 = vclz %v1109
  %v1111 = vsub.s32 %v1110, 2
  %vm1112 = vcmp.gt.s32.totalorder 0, %v1111
  %v1113 = vsel %vm1112, 0, %v1111
  %v1114 = vsub.s32 32, %v1113
  %v1115 = vshll.u32 %v1106, %v1113
  %v1116 = vshrl.u32 %v1098, %v1114
  %v1117 = vor.u32 %v1115, %v1116
  %v1118 = vsub.s32 4294967266, %v1113
  %v1119 = vadd.s32 %v1118, 127
  %v1120 = vshll.u32 %v1119, 23
  %v1121 = vor.u32 4788187, %v1120
  %v1122 = vand.u32 2147483647, %v1121
  %v1124 = vcvt.s32.f32 %v1117
  %v1125 = vmul.f32 %v1124, %v1122
  %v1126 = vxor.u32 %v1125, 2147483648
  %v1127 = vsel %vm1044, %v1126, %v1125
  %v1128 = vsub.s32 4, %v1104
  %v1129 = vsel %vm1044, %v1128, %v1104
  %v1130 = vsel %vm1043, %v520, %v1127
  %v1131 = vsel %vm1043, 0, %v1129
  %v1132 = vcosq.f32.pop %v1130
  %v1133 = vsinq.f32.pop %v1130
  %vm1134 = vweird.f32 %v520
  %v1135 = vadd.s32 %v1131, 3
  %v1136 = vand.u32 %v1135, 3
  %vm1137 = vcmp.lt.s32.totalorder %v1136, 2
  %vm1138 = vcmp.eq.s32.totalorder %v1136, 0
  %v1139 = vxor.u32 %v1133, 2147483648
  %v1140 = vsel %vm1138, %v1132, %v1139
  %vm1141 = vcmp.eq.s32.totalorder %v1136, 2
  %v1142 = vxor.u32 %v1132, 2147483648
  %v1143 = vsel %vm1141, %v1142, %v1133
  %v1144 = vsel %vm1137, %v1140, %v1143
  %v1145 = vsel %vm1134, nan, %v1144
  %v1146 = vand.u32 2147483647, %v521
  %vm1147 = vcmp.le.f32.partialorder %v1146, 0.7853982
  %vm1148 = vcmp.lt.s32.totalorder %v521, 0
  %v1149 = vand.u32 %v521, 2139095040
  %v1150 = vshrl.u32 %v1149, 23
  %v1151 = vsub.s32 %v1150, 127
  %v1152 = vand.u32 2147483647, %v521
  %v1153 = vand.u32 %v1152, 8388607
  %v1154 = vor.u32 %v1153, 8388608
  %v1155 = vsub.s32 0, %v1154
  %v1156 = vadd.s32 %v1151, 1
  %vm1157 = vcmp.gt.s32.totalorder %v1156, 0
  %v1158 = vsel %vm1157, %v1156, 0
  %v1159 = vshrl.u32 %v1158, 5
  %v1160 = vand.u32 %v1158, 31
  %v1161 = vsub.s32 32, %v1160
  %v1162 = vshrl.u32 683565275, %v1161
  %v1163 = vshll.u32 683565275, %v1160
  %v1164 = vshrl.u32 2475754826, %v1161
  %v1165 = vor.u32 %v1163, %v1164
  %v1166 = vshll.u32 2475754826, %v1160
  %v1167 = vshrl.u32 2131351028, %v1161
  %v1168 = vor.u32 %v1166, %v1167
  %v1169 = vshll.u32 2131351028, %v1160
  %v1170 = vshrl.u32 2102212464, %v1161
  %v1171 = vor.u32 %v1169, %v1170
  %v1172 = vshll.u32 2102212464, %v1160
  %v1173 = vshrl.u32 920167782, %v1161
  %v1174 = vor.u32 %v1172, %v1173
  %v1175 = vshll.u32 920167782, %v1160
  %v1176 = vshrl.u32 1326507024, %v1161
  %v1177 = vor.u32 %v1175, %v1176
  %vm1178 = vcmp.lt.s32.totalorder %v1159, 1
  %vm1179 = vcmp.lt.s32.totalorder %v1159, 2
  %vm1180 = vcmp.lt.s32.totalorder %v1159, 3
  %vm1181 = vcmp.lt.s32.totalorder %v1159, 4
  %v1182 = vsel %vm1178, %v1162, %v1165
  %v1183 = vsel %vm1181, %v1171, 2102212464
  %v1184 = vsel %vm1180, %v1168, %v1183
  %v1185 = vsel %vm1179, %v1182, %v1184
  %v1186 = vsel %vm1178, %v1165, %v1168
  %v1187 = vsel %vm1181, %v1174, 920167782
  %v1188 = vsel %vm1180, %v1171, %v1187
  %v1189 = vsel %vm1179, %v1186, %v1188
  %v1190 = vsel %vm1178, %v1168, %v1171
  %v1191 = vsel %vm1181, %v1177, 1326507024
  %v1192 = vsel %vm1180, %v1174, %v1191
  %v1193 = vsel %vm1179, %v1190, %v1192
  %v1194 = vshll.u32 %v1154, 8
  %v1195 = vmul.u32.u64.compose %v1194, %v1193
  %v1196 = vextract.low.u32 %v1195
  %v1197 = vextract.high.u32 %v1195
  %v1198 = vmul.u32.u64.compose %v1194, %v1189
  %v1199 = vextract.low.u32 %v1198
  %v1200 = vextract.high.u32 %v1198
  %v1201 = vmul.u32 %v1194, %v1185
  %v1202 = vadd.s32 %v1197, %v1199
  %vm1203 = vc.u32 %v1197, %v1199
  %v1204 = vadd.s32 %v1200, 1
  %v1205 = vsel %vm1203, %v1204, %v1200
  %v1206 = vadd.s32 %v1201, %v1205
  %v1207 = vadd.s32 %v1206, 536870912
  %v1208 = vshrl.u32 %v1207, 30
  %v1209 = vshll.u32 %v1208, 30
  %v1210 = vsub.s32 %v1206, %v1209
  %vm1211 = vcmp.lt.s32.totalorder %v1210, 0
  %v1212 = vsub.s32 0, %v1210
  %v1213 = vsel %vm1211, %v1212, %v1210
  %v1214 = vclz %v1213
  %v1215 = vsub.s32 %v1214, 2
  %vm1216 = vcmp.gt.s32.totalorder 0, %v1215
  %v1217 = vsel %vm1216, 0, %v1215
  %v1218 = vsub.s32 32, %v1217
  %v1219 = vshll.u32 %v1210, %v1217
  %v1220 = vshrl.u32 %v1202, %v1218
  %v1221 = vor.u32 %v1219, %v1220
  %v1222 = vsub.s32 4294967266, %v1217
  %v1223 = vadd.s32 %v1222, 127
  %v1224 = vshll.u32 %v1223, 23
  %v1225 = vor.u32 4788187, %v1224
  %v1226 = vand.u32 2147483647, %v1225
  %v1228 = vcvt.s32.f32 %v1221
  %v1229 = vmul.f32 %v1228, %v1226
  %v1230 = vxor.u32 %v1229, 2147483648
  %v1231 = vsel %vm1148, %v1230, %v1229
  %v1232 = vsub.s32 4, %v1208
  %v1233 = vsel %vm1148, %v1232, %v1208
  %v1234 = vsel %vm1147, %v521, %v1231
  %v1235 = vsel %vm1147, 0, %v1233
  %v1236 = vcosq.f32.pop %v1234
  %v1237 = vsinq.f32.pop %v1234
  %vm1238 = vweird.f32 %v521
  %v1239 = vadd.s32 %v1235, 3
  %v1240 = vand.u32 %v1239, 3
  %vm1241 = vcmp.lt.s32.totalorder %v1240, 2
  %vm1242 = vcmp.eq.s32.totalorder %v1240, 0
  %v1243 = vxor.u32 %v1237, 2147483648
  %v1244 = vsel %vm1242, %v1236, %v1243
  %vm1245 = vcmp.eq.s32.totalorder %v1240, 2
  %v1246 = vxor.u32 %v1236, 2147483648
  %v1247 = vsel %vm1245, %v1246, %v1237
  %v1248 = vsel %vm1241, %v1244, %v1247
  %v1249 = vsel %vm1238, nan, %v1248
  %v1250 = vmul.f32 %v625, 0.8164966
  %v1251 = vmul.f32 %v729, 0.8164966
  %v1252 = vmul.f32 %v833, 0.8164966
  %v1253 = vmul.f32 %v937, 0.8164966
  %v1254 = vmul.f32 %v1041, 0.8164966
  %v1255 = vmul.f32 %v1145, 0.8164966
  %v1256 = vmul.f32 %v1249, 0.8164966
  %1257 = vset.pattern.permute.xlu0 0
  %1258 = vperm.xlu0 %1257, %v370
  %v1259 = vpop.permute.xlu0 %1258
  %1261 = vset.pattern.permute.xlu0 0
  %1262 = vperm.xlu0 %1261, %v372
  %v1263 = vpop.permute.xlu0 %1262
  %1265 = vset.pattern.permute.xlu0 0
  %1266 = vperm.xlu0 %1265, %v374
  %v1267 = vpop.permute.xlu0 %1266
  %1269 = vset.pattern.permute.xlu0 0
  %1270 = vperm.xlu0 %1269, %v376
  %v1271 = vpop.permute.xlu0 %1270
  %1273 = vset.pattern.permute.xlu0 0
  %1274 = vperm.xlu0 %1273, %v378
  %v1275 = vpop.permute.xlu0 %1274
  %1277 = vset.pattern.permute.xlu0 0
  %1278 = vperm.xlu0 %1277, %v380
  %v1279 = vpop.permute.xlu0 %1278
  %1281 = vset.pattern.permute.xlu0 0
  %1282 = vperm.xlu0 %1281, %v382
  %v1283 = vpop.permute.xlu0 %1282
  %v1285 = vmul.f32 %v1250, %v1259
  %v1286 = vmul.f32 %v1251, %v1263
  %v1287 = vmul.f32 %v1252, %v1267
  %v1288 = vmul.f32 %v1253, %v1271
  %v1289 = vmul.f32 %v1254, %v1275
  %v1290 = vmul.f32 %v1255, %v1279
  %v1291 = vmul.f32 %v1256, %v1283
  %v1292 = vmul.f32 %v1285, 0.33333334
  %v1293 = vmul.f32 %v1286, 0.33333334
  %v1294 = vmul.f32 %v1287, 0.33333334
  %v1295 = vmul.f32 %v1288, 0.33333334
  %v1296 = vmul.f32 %v1289, 0.33333334
  %v1297 = vmul.f32 %v1290, 0.33333334
  %v1298 = vmul.f32 %v1291, 0.33333334
  %v1299 = vmul.f32 %v1292, %v1292
  %v1300 = vmul.f32 %v1293, %v1293
  %v1301 = vmul.f32 %v1294, %v1294
  %v1302 = vmul.f32 %v1295, %v1295
  %v1303 = vmul.f32 %v1296, %v1296
  %v1304 = vmul.f32 %v1297, %v1297
  %v1305 = vmul.f32 %v1298, %v1298
  %v1306 = vmul.f32 %v1299, %v1299
  %v1307 = vmul.f32 %v1300, %v1300
  %v1308 = vmul.f32 %v1301, %v1301
  %v1309 = vmul.f32 %v1302, %v1302
  %v1310 = vmul.f32 %v1303, %v1303
  %v1311 = vmul.f32 %v1304, %v1304
  %v1312 = vmul.f32 %v1305, %v1305
  %v1313 = vmul.f32 %v1306, %v1299
  %v1314 = vmul.f32 %v1307, %v1300
  %v1315 = vmul.f32 %v1308, %v1301
  %v1316 = vmul.f32 %v1309, %v1302
  %v1317 = vmul.f32 %v1310, %v1303
  %v1318 = vmul.f32 %v1311, %v1304
  %v1319 = vmul.f32 %v1312, %v1305
  %v1320 = vmul.f32 %v1313, 28.0
  %v1321 = vmul.f32 %v1314, 28.0
  %v1322 = vmul.f32 %v1315, 28.0
  %v1323 = vmul.f32 %v1316, 28.0
  %v1324 = vmul.f32 %v1317, 28.0
  %v1325 = vmul.f32 %v1318, 28.0
  %v1326 = vmul.f32 %v1319, 28.0
  %v1327 = vsub.f32 1.0, %v1320
  %v1328 = vsub.f32 1.0, %v1321
  %v1329 = vsub.f32 1.0, %v1322
  %v1330 = vsub.f32 1.0, %v1323
  %v1331 = vsub.f32 1.0, %v1324
  %v1332 = vsub.f32 1.0, %v1325
  %v1333 = vsub.f32 1.0, %v1326
  %v1334 = vmul.f32 %v1313, 48.0
  %v1335 = vmul.f32 %v1314, 48.0
  %v1336 = vmul.f32 %v1315, 48.0
  %v1337 = vmul.f32 %v1316, 48.0
  %v1338 = vmul.f32 %v1317, 48.0
  %v1339 = vmul.f32 %v1318, 48.0
  %v1340 = vmul.f32 %v1319, 48.0
  %v1341 = vmul.f32 %v1334, %v1292
  %v1342 = vmul.f32 %v1335, %v1293
  %v1343 = vmul.f32 %v1336, %v1294
  %v1344 = vmul.f32 %v1337, %v1295
  %v1345 = vmul.f32 %v1338, %v1296
  %v1346 = vmul.f32 %v1339, %v1297
  %v1347 = vmul.f32 %v1340, %v1298
  %v1348 = vadd.f32 %v1327, %v1341
  %v1349 = vadd.f32 %v1328, %v1342
  %v1350 = vadd.f32 %v1329, %v1343
  %v1351 = vadd.f32 %v1330, %v1344
  %v1352 = vadd.f32 %v1331, %v1345
  %v1353 = vadd.f32 %v1332, %v1346
  %v1354 = vadd.f32 %v1333, %v1347
  %v1355 = vmul.f32 %v1313, 21.0
  %v1356 = vmul.f32 %v1314, 21.0
  %v1357 = vmul.f32 %v1315, 21.0
  %v1358 = vmul.f32 %v1316, 21.0
  %v1359 = vmul.f32 %v1317, 21.0
  %v1360 = vmul.f32 %v1318, 21.0
  %v1361 = vmul.f32 %v1319, 21.0
  %v1362 = vmul.f32 %v1355, %v1299
  %v1363 = vmul.f32 %v1356, %v1300
  %v1364 = vmul.f32 %v1357, %v1301
  %v1365 = vmul.f32 %v1358, %v1302
  %v1366 = vmul.f32 %v1359, %v1303
  %v1367 = vmul.f32 %v1360, %v1304
  %v1368 = vmul.f32 %v1361, %v1305
  %v1369 = vsub.f32 %v1348, %v1362
  %v1370 = vsub.f32 %v1349, %v1363
  %v1371 = vsub.f32 %v1350, %v1364
  %v1372 = vsub.f32 %v1351, %v1365
  %v1373 = vsub.f32 %v1352, %v1366
  %v1374 = vsub.f32 %v1353, %v1367
  %v1375 = vsub.f32 %v1354, %v1368
  %vm1376 = vcmp.lt.f32.partialorder %v1285, 3.0
  %vm1377 = vcmp.lt.f32.partialorder %v1286, 3.0
  %vm1378 = vcmp.lt.f32.partialorder %v1287, 3.0
  %vm1379 = vcmp.lt.f32.partialorder %v1288, 3.0
  %vm1380 = vcmp.lt.f32.partialorder %v1289, 3.0
  %vm1381 = vcmp.lt.f32.partialorder %v1290, 3.0
  %vm1382 = vcmp.lt.f32.partialorder %v1291, 3.0
  %v1383 = vsel %vm1376, 1, 0
  %v1384 = vsel %vm1377, 1, 0
  %v1385 = vsel %vm1378, 1, 0
  %v1386 = vsel %vm1379, 1, 0
  %v1387 = vsel %vm1380, 1, 0
  %v1388 = vsel %vm1381, 1, 0
  %v1389 = vsel %vm1382, 1, 0
  %v1390 = vcvt.s32.f32 %v1383
  %v1391 = vcvt.s32.f32 %v1384
  %v1392 = vcvt.s32.f32 %v1385
  %v1393 = vcvt.s32.f32 %v1386
  %v1394 = vcvt.s32.f32 %v1387
  %v1395 = vcvt.s32.f32 %v1388
  %v1396 = vcvt.s32.f32 %v1389
  %v1397 = vmul.f32 %v1369, %v1390
  %v1398 = vmul.f32 %v1370, %v1391
  %v1399 = vmul.f32 %v1371, %v1392
  %v1400 = vmul.f32 %v1372, %v1393
  %v1401 = vmul.f32 %v1373, %v1394
  %v1402 = vmul.f32 %v1374, %v1395
  %v1403 = vmul.f32 %v1375, %v1396
  %v1404 = vld [vmem:[%s8] sm:$0xff]
  %v1405 = vld [vmem:[%s9] sm:$0xff]
  %v1406 = vld [vmem:[%s9 + $0x8] sm:$0xff]
  %v1407 = vld [vmem:[%s9 + $0x10] sm:$0xff]
  %v1408 = vld [vmem:[%s9 + $0x18] sm:$0xff]
  %v1409 = vld [vmem:[%s9 + $0x20] sm:$0xff]
  %v1410 = vld [vmem:[%s9 + $0x28] sm:$0xff]
  %v1411 = vld [vmem:[%s9 + $0x30] sm:$0xff]
  %v1412 = vld [vmem:[%s9 + $0x38] sm:$0xff]
  %v1413 = vld [vmem:[%s10] sm:$0xff]
  %v1414 = vld [vmem:[%s10 + $0x8] sm:$0xff]
  %v1415 = vld [vmem:[%s10 + $0x10] sm:$0xff]
  %v1416 = vld [vmem:[%s10 + $0x18] sm:$0xff]
  %v1417 = vld [vmem:[%s10 + $0x20] sm:$0xff]
  %v1418 = vld [vmem:[%s10 + $0x28] sm:$0xff]
  %v1419 = vld [vmem:[%s10 + $0x30] sm:$0xff]
  %v1420 = vld [vmem:[%s10 + $0x38] sm:$0xff]
  %v1421 = vld [vmem:[%s11] sm:$0xff]
  %v1422 = vld [vmem:[%s11 + $0x8] sm:$0xff]
  %v1423 = vld [vmem:[%s11 + $0x10] sm:$0xff]
  %v1424 = vld [vmem:[%s11 + $0x18] sm:$0xff]
  %v1425 = vld [vmem:[%s11 + $0x20] sm:$0xff]
  %v1426 = vld [vmem:[%s11 + $0x28] sm:$0xff]
  %v1427 = vld [vmem:[%s11 + $0x30] sm:$0xff]
  %v1428 = vld [vmem:[%s11 + $0x38] sm:$0xff]
  %v1429 = vld [vmem:[%s11 + $0x40] sm:$0xff]
  %v1430 = vld [vmem:[%s11 + $0x48] sm:$0xff]
  %v1431 = vld [vmem:[%s11 + $0x50] sm:$0xff]
  %v1432 = vld [vmem:[%s11 + $0x58] sm:$0xff]
  %v1433 = vld [vmem:[%s11 + $0x60] sm:$0xff]
  %v1434 = vld [vmem:[%s11 + $0x68] sm:$0xff]
  %v1435 = vld [vmem:[%s11 + $0x70] sm:$0xff]
  %v1436 = vld [vmem:[%s11 + $0x78] sm:$0xff]
  %vm1437 = vcmask 64512
  %v1439 = vsel %vm1437, %v1397, 0
  %v1442 = vsel %vm1437, %v1398, 0
  %v1445 = vsel %vm1437, %v1399, 0
  %v1448 = vsel %vm1437, %v1400, 0
  %v1451 = vsel %vm1437, %v1401, 0
  %v1454 = vsel %vm1437, %v1402, 0
  %v1457 = vsel %vm1437, %v1403, 0
  %1459 = vmatprep.subr.mxu0 0.0
  %1460 = vmatpush1.msra.mxu0 %v1404
  %1461 = vmatprep.subr.mxu0 0.0
  %1462 = vmatpush1.msra.mxu0 0.0
  %1463 = vmatprep.subr.mxu0 0.0
  %1464 = vmatpush1.msra.mxu0 0.0
  %1465 = vmatprep.subr.mxu0 0.0
  %1466 = vmatpush1.msra.mxu0 0.0
  %1467 = vmatprep.subr.mxu0 0.0
  %1468 = vmatpush1.msra.mxu0 0.0
  %1469 = vmatprep.subr.mxu0 0.0
  %1470 = vmatpush1.msra.mxu0 0.0
  %1471 = vmatprep.subr.mxu0 0.0
  %1472 = vmatpush1.msra.mxu0 0.0
  %1473 = vmatprep.subr.mxu0 0.0
  %1474 = vmatpush1.msra.mxu0 0.0
  %1475 = vmatprep.subr.mxu0 0.0
  %1476 = vmatpush1.msra.mxu0 0.0
  %1477 = vmatprep.subr.mxu0 0.0
  %1478 = vmatpush1.msra.mxu0 0.0
  %1479 = vmatprep.subr.mxu0 0.0
  %1480 = vmatpush1.msra.mxu0 0.0
  %1481 = vmatprep.subr.mxu0 0.0
  %1482 = vmatpush1.msra.mxu0 0.0
  %1483 = vmatprep.subr.mxu0 0.0
  %1484 = vmatpush1.msra.mxu0 0.0
  %1485 = vmatprep.subr.mxu0 0.0
  %1486 = vmatpush1.msra.mxu0 0.0
  %1487 = vmatprep.subr.mxu0 0.0
  %1488 = vmatpush1.msra.mxu0 0.0
  %1489 = vmatprep.subr.mxu0 0.0
  %1490 = vmatpush1.msra.mxu0 0.0
  %1491 = vmatprep.subr.mxu0 0.0
  %1492 = vmatpush1.msra.mxu0 0.0
  %1493 = vmatprep.subr.mxu0 0.0
  %1494 = vmatpush1.msra.mxu0 0.0
  %1495 = vmatprep.subr.mxu0 0.0
  %1496 = vmatpush1.msra.mxu0 0.0
  %1497 = vmatprep.subr.mxu0 0.0
  %1498 = vmatpush1.msra.mxu0 0.0
  %1499 = vmatprep.subr.mxu0 0.0
  %1500 = vmatpush1.msra.mxu0 0.0
  %1501 = vmatprep.subr.mxu0 0.0
  %1502 = vmatpush1.msra.mxu0 0.0
  %1503 = vmatprep.subr.mxu0 0.0
  %1504 = vmatpush1.msra.mxu0 0.0
  %1505 = vmatprep.subr.mxu0 0.0
  %1506 = vmatpush1.msra.mxu0 0.0
  %1507 = vmatprep.subr.mxu0 0.0
  %1508 = vmatpush1.msra.mxu0 0.0
  %1509 = vmatprep.subr.mxu0 0.0
  %1510 = vmatpush1.msra.mxu0 0.0
  %1511 = vmatprep.subr.mxu0 0.0
  %1512 = vmatpush1.msra.mxu0 0.0
  %1513 = vmatprep.subr.mxu0 0.0
  %1514 = vmatpush1.msra.mxu0 0.0
  %1515 = vmatprep.subr.mxu0 0.0
  %1516 = vmatpush1.msra.mxu0 0.0
  %1517 = vmatprep.subr.mxu0 0.0
  %1518 = vmatpush1.msra.mxu0 0.0
  %1519 = vmatprep.subr.mxu0 0.0
  %1520 = vmatpush1.msra.mxu0 0.0
  %1521 = vmatprep.subr.mxu0 0.0
  %1522 = vmatpush1.msra.mxu0 0.0
  %1523 = vmatprep.mubr.f32.mxu0 0.0
  %1524 = vmatmul.mubr.f32.gmra.mrb[0].mxu0 %v1439
  %v1525 = vpop.f32.mrb[0].mxu0
  %v1526 = vadd.f32 0.0, %v1525
  %v1527 = vpop.f32.mrb[0].mxu0
  %1528 = vmatprep.mubr.f32.mxu0 0.0
  %1529 = vmatmul.mubr.f32.gmra.mrb[0].mxu0 %v1442
  %v1530 = vpop.f32.mrb[0].mxu0
  %v1531 = vadd.f32 0.0, %v1530
  %v1532 = vpop.f32.mrb[0].mxu0
  %1533 = vmatprep.mubr.f32.mxu0 0.0
  %1534 = vmatmul.mubr.f32.gmra.mrb[0].mxu0 %v1445
  %v1535 = vpop.f32.mrb[0].mxu0
  %v1536 = vadd.f32 0.0, %v1535
  %v1537 = vpop.f32.mrb[0].mxu0
  %1538 = vmatprep.mubr.f32.mxu0 0.0
  %1539 = vmatmul.mubr.f32.gmra.mrb[0].mxu0 %v1448
  %v1540 = vpop.f32.mrb[0].mxu0
  %v1541 = vadd.f32 0.0, %v1540
  %v1542 = vpop.f32.mrb[0].mxu0
  %1543 = vmatprep.mubr.f32.mxu0 0.0
  %1544 = vmatmul.mubr.f32.gmra.mrb[0].mxu0 %v1451
  %v1545 = vpop.f32.mrb[0].mxu0
  %v1546 = vadd.f32 0.0, %v1545
  %v1547 = vpop.f32.mrb[0].mxu0
  %1548 = vmatprep.mubr.f32.mxu0 0.0
  %1549 = vmatmul.mubr.f32.gmra.mrb[0].mxu0 %v1454
  %v1550 = vpop.f32.mrb[0].mxu0
  %v1551 = vadd.f32 0.0, %v1550
  %v1552 = vpop.f32.mrb[0].mxu0
  %1553 = vmatprep.mubr.f32.mxu0 0.0
  %1554 = vmatmul.mubr.f32.gmra.mrb[0].mxu0 %v1457
  %v1555 = vpop.f32.mrb[0].mxu0
  %v1556 = vadd.f32 0.0, %v1555
  %v1557 = vpop.f32.mrb[0].mxu0
  %1558 = vdwg.mxu0
  %v1559 = vxor.u32 %v1526, 2147483648
  %v1560 = vxor.u32 %v1531, 2147483648
  %v1561 = vxor.u32 %v1536, 2147483648
  %v1562 = vxor.u32 %v1541, 2147483648
  %v1563 = vxor.u32 %v1546, 2147483648
  %v1564 = vxor.u32 %v1551, 2147483648
  %v1565 = vxor.u32 %v1556, 2147483648
  %v1566 = vmul.f32 %v1559, 1.442695
  %v1567 = vpow.pop %v1566
  %v1568 = vmul.f32 %v1560, 1.442695
  %v1569 = vpow.pop %v1568
  %v1570 = vmul.f32 %v1561, 1.442695
  %v1571 = vpow.pop %v1570
  %v1572 = vmul.f32 %v1562, 1.442695
  %v1573 = vpow.pop %v1572
  %v1574 = vmul.f32 %v1563, 1.442695
  %v1575 = vpow.pop %v1574
  %v1576 = vmul.f32 %v1564, 1.442695
  %v1577 = vpow.pop %v1576
  %v1578 = vmul.f32 %v1565, 1.442695
  %v1579 = vpow.pop %v1578
  %v1580 = vadd.f32 %v1567, 1.0
  %v1581 = vadd.f32 %v1569, 1.0
  %v1582 = vadd.f32 %v1571, 1.0
  %v1583 = vadd.f32 %v1573, 1.0
  %v1584 = vadd.f32 %v1575, 1.0
  %v1585 = vadd.f32 %v1577, 1.0
  %v1586 = vadd.f32 %v1579, 1.0
  %v1587 = vrcp.pop %v1580
  %v1588 = vmul.f32 1.0, %v1587
  %v1589 = vrcp.pop %v1581
  %v1590 = vmul.f32 1.0, %v1589
  %v1591 = vrcp.pop %v1582
  %v1592 = vmul.f32 1.0, %v1591
  %v1593 = vrcp.pop %v1583
  %v1594 = vmul.f32 1.0, %v1593
  %v1595 = vrcp.pop %v1584
  %v1596 = vmul.f32 1.0, %v1595
  %v1597 = vrcp.pop %v1585
  %v1598 = vmul.f32 1.0, %v1597
  %v1599 = vrcp.pop %v1586
  %v1600 = vmul.f32 1.0, %v1599
  %v1601 = vmul.f32 %v1526, %v1588
  %v1602 = vmul.f32 %v1531, %v1590
  %v1603 = vmul.f32 %v1536, %v1592
  %v1604 = vmul.f32 %v1541, %v1594
  %v1605 = vmul.f32 %v1546, %v1596
  %v1606 = vmul.f32 %v1551, %v1598
  %v1607 = vmul.f32 %v1556, %v1600
  %vm1608 = vcmask 523264
  %v1610 = vsel %vm1608, %v1601, 0
  %v1613 = vsel %vm1608, %v1602, 0
  %v1616 = vsel %vm1608, %v1603, 0
  %v1619 = vsel %vm1608, %v1604, 0
  %v1622 = vsel %vm1608, %v1605, 0
  %v1625 = vsel %vm1608, %v1606, 0
  %v1628 = vsel %vm1608, %v1607, 0
  %1630 = vmatprep.subr.mxu0 0.0
  %1631 = vmatpush1.msra.mxu0 %v1405
  %1632 = vmatprep.subr.mxu0 0.0
  %1633 = vmatpush1.msra.mxu0 %v1406
  %1634 = vmatprep.subr.mxu0 0.0
  %1635 = vmatpush1.msra.mxu0 %v1407
  %1636 = vmatprep.subr.mxu0 0.0
  %1637 = vmatpush1.msra.mxu0 %v1408
  %1638 = vmatprep.subr.mxu0 0.0
  %1639 = vmatpush1.msra.mxu0 %v1409
  %1640 = vmatprep.subr.mxu0 0.0
  %1641 = vmatpush1.msra.mxu0 %v1410
  %1642 = vmatprep.subr.mxu0 0.0
  %1643 = vmatpush1.msra.mxu0 %v1411
  %1644 = vmatprep.subr.mxu0 0.0
  %1645 = vmatpush1.msra.mxu0 %v1412
  %1646 = vmatprep.subr.mxu0 0.0
  %1647 = vmatpush1.msra.mxu0 0.0
  %1648 = vmatprep.subr.mxu0 0.0
  %1649 = vmatpush1.msra.mxu0 0.0
  %1650 = vmatprep.subr.mxu0 0.0
  %1651 = vmatpush1.msra.mxu0 0.0
  %1652 = vmatprep.subr.mxu0 0.0
  %1653 = vmatpush1.msra.mxu0 0.0
  %1654 = vmatprep.subr.mxu0 0.0
  %1655 = vmatpush1.msra.mxu0 0.0
  %1656 = vmatprep.subr.mxu0 0.0
  %1657 = vmatpush1.msra.mxu0 0.0
  %1658 = vmatprep.subr.mxu0 0.0
  %1659 = vmatpush1.msra.mxu0 0.0
  %1660 = vmatprep.subr.mxu0 0.0
  %1661 = vmatpush1.msra.mxu0 0.0
  %1662 = vmatprep.subr.mxu0 0.0
  %1663 = vmatpush1.msra.mxu0 0.0
  %1664 = vmatprep.subr.mxu0 0.0
  %1665 = vmatpush1.msra.mxu0 0.0
  %1666 = vmatprep.subr.mxu0 0.0
  %1667 = vmatpush1.msra.mxu0 0.0
  %1668 = vmatprep.subr.mxu0 0.0
  %1669 = vmatpush1.msra.mxu0 0.0
  %1670 = vmatprep.subr.mxu0 0.0
  %1671 = vmatpush1.msra.mxu0 0.0
  %1672 = vmatprep.subr.mxu0 0.0
  %1673 = vmatpush1.msra.mxu0 0.0
  %1674 = vmatprep.subr.mxu0 0.0
  %1675 = vmatpush1.msra.mxu0 0.0
  %1676 = vmatprep.subr.mxu0 0.0
  %1677 = vmatpush1.msra.mxu0 0.0
  %1678 = vmatprep.subr.mxu0 0.0
  %1679 = vmatpush1.msra.mxu0 0.0
  %1680 = vmatprep.subr.mxu0 0.0
  %1681 = vmatpush1.msra.mxu0 0.0
  %1682 = vmatprep.subr.mxu0 0.0
  %1683 = vmatpush1.msra.mxu0 0.0
  %1684 = vmatprep.subr.mxu0 0.0
  %1685 = vmatpush1.msra.mxu0 0.0
  %1686 = vmatprep.subr.mxu0 0.0
  %1687 = vmatpush1.msra.mxu0 0.0
  %1688 = vmatprep.subr.mxu0 0.0
  %1689 = vmatpush1.msra.mxu0 0.0
  %1690 = vmatprep.subr.mxu0 0.0
  %1691 = vmatpush1.msra.mxu0 0.0
  %1692 = vmatprep.subr.mxu0 0.0
  %1693 = vmatpush1.msra.mxu0 0.0
  %1694 = vmatprep.mubr.f32.mxu0 0.0
  %1695 = vmatmul.mubr.f32.gmra.mrb[0].mxu0 %v1610
  %v1696 = vpop.f32.mrb[0].mxu0
  %v1697 = vadd.f32 0.0, %v1696
  %v1698 = vpop.f32.mrb[0].mxu0
  %1699 = vmatprep.mubr.f32.mxu0 0.0
  %1700 = vmatmul.mubr.f32.gmra.mrb[0].mxu0 %v1613
  %v1701 = vpop.f32.mrb[0].mxu0
  %v1702 = vadd.f32 0.0, %v1701
  %v1703 = vpop.f32.mrb[0].mxu0
  %1704 = vmatprep.mubr.f32.mxu0 0.0
  %1705 = vmatmul.mubr.f32.gmra.mrb[0].mxu0 %v1616
  %v1706 = vpop.f32.mrb[0].mxu0
  %v1707 = vadd.f32 0.0, %v1706
  %v1708 = vpop.f32.mrb[0].mxu0
  %1709 = vmatprep.mubr.f32.mxu0 0.0
  %1710 = vmatmul.mubr.f32.gmra.mrb[0].mxu0 %v1619
  %v1711 = vpop.f32.mrb[0].mxu0
  %v1712 = vadd.f32 0.0, %v1711
  %v1713 = vpop.f32.mrb[0].mxu0
  %1714 = vmatprep.mubr.f32.mxu0 0.0
  %1715 = vmatmul.mubr.f32.gmra.mrb[0].mxu0 %v1622
  %v1716 = vpop.f32.mrb[0].mxu0
  %v1717 = vadd.f32 0.0, %v1716
  %v1718 = vpop.f32.mrb[0].mxu0
  %1719 = vmatprep.mubr.f32.mxu0 0.0
  %1720 = vmatmul.mubr.f32.gmra.mrb[0].mxu0 %v1625
  %v1721 = vpop.f32.mrb[0].mxu0
  %v1722 = vadd.f32 0.0, %v1721
  %v1723 = vpop.f32.mrb[0].mxu0
  %1724 = vmatprep.mubr.f32.mxu0 0.0
  %1725 = vmatmul.mubr.f32.gmra.mrb[0].mxu0 %v1628
  %v1726 = vpop.f32.mrb[0].mxu0
  %v1727 = vadd.f32 0.0, %v1726
  %v1728 = vpop.f32.mrb[0].mxu0
  %1729 = vdwg.mxu0
  %v1730 = vxor.u32 %v1697, 2147483648
  %v1731 = vxor.u32 %v1702, 2147483648
  %v1732 = vxor.u32 %v1707, 2147483648
  %v1733 = vxor.u32 %v1712, 2147483648
  %v1734 = vxor.u32 %v1717, 2147483648
  %v1735 = vxor.u32 %v1722, 2147483648
  %v1736 = vxor.u32 %v1727, 2147483648
  %v1737 = vmul.f32 %v1730, 1.442695
  %v1738 = vpow.pop %v1737
  %v1739 = vmul.f32 %v1731, 1.442695
  %v1740 = vpow.pop %v1739
  %v1741 = vmul.f32 %v1732, 1.442695
  %v1742 = vpow.pop %v1741
  %v1743 = vmul.f32 %v1733, 1.442695
  %v1744 = vpow.pop %v1743
  %v1745 = vmul.f32 %v1734, 1.442695
  %v1746 = vpow.pop %v1745
  %v1747 = vmul.f32 %v1735, 1.442695
  %v1748 = vpow.pop %v1747
  %v1749 = vmul.f32 %v1736, 1.442695
  %v1750 = vpow.pop %v1749
  %v1751 = vadd.f32 %v1738, 1.0
  %v1752 = vadd.f32 %v1740, 1.0
  %v1753 = vadd.f32 %v1742, 1.0
  %v1754 = vadd.f32 %v1744, 1.0
  %v1755 = vadd.f32 %v1746, 1.0
  %v1756 = vadd.f32 %v1748, 1.0
  %v1757 = vadd.f32 %v1750, 1.0
  %v1758 = vrcp.pop %v1751
  %v1759 = vmul.f32 1.0, %v1758
  %v1760 = vrcp.pop %v1752
  %v1761 = vmul.f32 1.0, %v1760
  %v1762 = vrcp.pop %v1753
  %v1763 = vmul.f32 1.0, %v1762
  %v1764 = vrcp.pop %v1754
  %v1765 = vmul.f32 1.0, %v1764
  %v1766 = vrcp.pop %v1755
  %v1767 = vmul.f32 1.0, %v1766
  %v1768 = vrcp.pop %v1756
  %v1769 = vmul.f32 1.0, %v1768
  %v1770 = vrcp.pop %v1757
  %v1771 = vmul.f32 1.0, %v1770
  %v1772 = vmul.f32 %v1697, %v1759
  %v1773 = vmul.f32 %v1702, %v1761
  %v1774 = vmul.f32 %v1707, %v1763
  %v1775 = vmul.f32 %v1712, %v1765
  %v1776 = vmul.f32 %v1717, %v1767
  %v1777 = vmul.f32 %v1722, %v1769
  %v1778 = vmul.f32 %v1727, %v1771
  %v1780 = vsel %vm1608, %v1772, 0
  %v1783 = vsel %vm1608, %v1773, 0
  %v1786 = vsel %vm1608, %v1774, 0
  %v1789 = vsel %vm1608, %v1775, 0
  %v1792 = vsel %vm1608, %v1776, 0
  %v1795 = vsel %vm1608, %v1777, 0
  %v1798 = vsel %vm1608, %v1778, 0
  %1800 = vmatprep.subr.mxu0 0.0
  %1801 = vmatpush1.msra.mxu0 %v1413
  %1802 = vmatprep.subr.mxu0 0.0
  %1803 = vmatpush1.msra.mxu0 %v1414
  %1804 = vmatprep.subr.mxu0 0.0
  %1805 = vmatpush1.msra.mxu0 %v1415
  %1806 = vmatprep.subr.mxu0 0.0
  %1807 = vmatpush1.msra.mxu0 %v1416
  %1808 = vmatprep.subr.mxu0 0.0
  %1809 = vmatpush1.msra.mxu0 %v1417
  %1810 = vmatprep.subr.mxu0 0.0
  %1811 = vmatpush1.msra.mxu0 %v1418
  %1812 = vmatprep.subr.mxu0 0.0
  %1813 = vmatpush1.msra.mxu0 %v1419
  %1814 = vmatprep.subr.mxu0 0.0
  %1815 = vmatpush1.msra.mxu0 %v1420
  %1816 = vmatprep.subr.mxu0 0.0
  %1817 = vmatpush1.msra.mxu0 0.0
  %1818 = vmatprep.subr.mxu0 0.0
  %1819 = vmatpush1.msra.mxu0 0.0
  %1820 = vmatprep.subr.mxu0 0.0
  %1821 = vmatpush1.msra.mxu0 0.0
  %1822 = vmatprep.subr.mxu0 0.0
  %1823 = vmatpush1.msra.mxu0 0.0
  %1824 = vmatprep.subr.mxu0 0.0
  %1825 = vmatpush1.msra.mxu0 0.0
  %1826 = vmatprep.subr.mxu0 0.0
  %1827 = vmatpush1.msra.mxu0 0.0
  %1828 = vmatprep.subr.mxu0 0.0
  %1829 = vmatpush1.msra.mxu0 0.0
  %1830 = vmatprep.subr.mxu0 0.0
  %1831 = vmatpush1.msra.mxu0 0.0
  %1832 = vmatprep.subr.mxu0 0.0
  %1833 = vmatpush1.msra.mxu0 0.0
  %1834 = vmatprep.subr.mxu0 0.0
  %1835 = vmatpush1.msra.mxu0 0.0
  %1836 = vmatprep.subr.mxu0 0.0
  %1837 = vmatpush1.msra.mxu0 0.0
  %1838 = vmatprep.subr.mxu0 0.0
  %1839 = vmatpush1.msra.mxu0 0.0
  %1840 = vmatprep.subr.mxu0 0.0
  %1841 = vmatpush1.msra.mxu0 0.0
  %1842 = vmatprep.subr.mxu0 0.0
  %1843 = vmatpush1.msra.mxu0 0.0
  %1844 = vmatprep.subr.mxu0 0.0
  %1845 = vmatpush1.msra.mxu0 0.0
  %1846 = vmatprep.subr.mxu0 0.0
  %1847 = vmatpush1.msra.mxu0 0.0
  %1848 = vmatprep.subr.mxu0 0.0
  %1849 = vmatpush1.msra.mxu0 0.0
  %1850 = vmatprep.subr.mxu0 0.0
  %1851 = vmatpush1.msra.mxu0 0.0
  %1852 = vmatprep.subr.mxu0 0.0
  %1853 = vmatpush1.msra.mxu0 0.0
  %1854 = vmatprep.subr.mxu0 0.0
  %1855 = vmatpush1.msra.mxu0 0.0
  %1856 = vmatprep.subr.mxu0 0.0
  %1857 = vmatpush1.msra.mxu0 0.0
  %1858 = vmatprep.subr.mxu0 0.0
  %1859 = vmatpush1.msra.mxu0 0.0
  %1860 = vmatprep.subr.mxu0 0.0
  %1861 = vmatpush1.msra.mxu0 0.0
  %1862 = vmatprep.subr.mxu0 0.0
  %1863 = vmatpush1.msra.mxu0 0.0
  %1864 = vmatprep.mubr.f32.mxu0 0.0
  %1865 = vmatmul.mubr.f32.gmra.mrb[0].mxu0 %v1780
  %v1866 = vpop.f32.mrb[0].mxu0
  %v1867 = vadd.f32 0.0, %v1866
  %v1868 = vpop.f32.mrb[0].mxu0
  %1869 = vmatprep.mubr.f32.mxu0 0.0
  %1870 = vmatmul.mubr.f32.gmra.mrb[0].mxu0 %v1783
  %v1871 = vpop.f32.mrb[0].mxu0
  %v1872 = vadd.f32 0.0, %v1871
  %v1873 = vpop.f32.mrb[0].mxu0
  %1874 = vmatprep.mubr.f32.mxu0 0.0
  %1875 = vmatmul.mubr.f32.gmra.mrb[0].mxu0 %v1786
  %v1876 = vpop.f32.mrb[0].mxu0
  %v1877 = vadd.f32 0.0, %v1876
  %v1878 = vpop.f32.mrb[0].mxu0
  %1879 = vmatprep.mubr.f32.mxu0 0.0
  %1880 = vmatmul.mubr.f32.gmra.mrb[0].mxu0 %v1789
  %v1881 = vpop.f32.mrb[0].mxu0
  %v1882 = vadd.f32 0.0, %v1881
  %v1883 = vpop.f32.mrb[0].mxu0
  %1884 = vmatprep.mubr.f32.mxu0 0.0
  %1885 = vmatmul.mubr.f32.gmra.mrb[0].mxu0 %v1792
  %v1886 = vpop.f32.mrb[0].mxu0
  %v1887 = vadd.f32 0.0, %v1886
  %v1888 = vpop.f32.mrb[0].mxu0
  %1889 = vmatprep.mubr.f32.mxu0 0.0
  %1890 = vmatmul.mubr.f32.gmra.mrb[0].mxu0 %v1795
  %v1891 = vpop.f32.mrb[0].mxu0
  %v1892 = vadd.f32 0.0, %v1891
  %v1893 = vpop.f32.mrb[0].mxu0
  %1894 = vmatprep.mubr.f32.mxu0 0.0
  %1895 = vmatmul.mubr.f32.gmra.mrb[0].mxu0 %v1798
  %v1896 = vpop.f32.mrb[0].mxu0
  %v1897 = vadd.f32 0.0, %v1896
  %v1898 = vpop.f32.mrb[0].mxu0
  %1899 = vdwg.mxu0
  %v1900 = vxor.u32 %v1867, 2147483648
  %v1901 = vxor.u32 %v1872, 2147483648
  %v1902 = vxor.u32 %v1877, 2147483648
  %v1903 = vxor.u32 %v1882, 2147483648
  %v1904 = vxor.u32 %v1887, 2147483648
  %v1905 = vxor.u32 %v1892, 2147483648
  %v1906 = vxor.u32 %v1897, 2147483648
  %v1907 = vmul.f32 %v1900, 1.442695
  %v1908 = vpow.pop %v1907
  %v1909 = vmul.f32 %v1901, 1.442695
  %v1910 = vpow.pop %v1909
  %v1911 = vmul.f32 %v1902, 1.442695
  %v1912 = vpow.pop %v1911
  %v1913 = vmul.f32 %v1903, 1.442695
  %v1914 = vpow.pop %v1913
  %v1915 = vmul.f32 %v1904, 1.442695
  %v1916 = vpow.pop %v1915
  %v1917 = vmul.f32 %v1905, 1.442695
  %v1918 = vpow.pop %v1917
  %v1919 = vmul.f32 %v1906, 1.442695
  %v1920 = vpow.pop %v1919
  %v1921 = vadd.f32 %v1908, 1.0
  %v1922 = vadd.f32 %v1910, 1.0
  %v1923 = vadd.f32 %v1912, 1.0
  %v1924 = vadd.f32 %v1914, 1.0
  %v1925 = vadd.f32 %v1916, 1.0
  %v1926 = vadd.f32 %v1918, 1.0
  %v1927 = vadd.f32 %v1920, 1.0
  %v1928 = vrcp.pop %v1921
  %v1929 = vmul.f32 1.0, %v1928
  %v1930 = vrcp.pop %v1922
  %v1931 = vmul.f32 1.0, %v1930
  %v1932 = vrcp.pop %v1923
  %v1933 = vmul.f32 1.0, %v1932
  %v1934 = vrcp.pop %v1924
  %v1935 = vmul.f32 1.0, %v1934
  %v1936 = vrcp.pop %v1925
  %v1937 = vmul.f32 1.0, %v1936
  %v1938 = vrcp.pop %v1926
  %v1939 = vmul.f32 1.0, %v1938
  %v1940 = vrcp.pop %v1927
  %v1941 = vmul.f32 1.0, %v1940
  %v1942 = vmul.f32 %v1867, %v1929
  %v1943 = vmul.f32 %v1872, %v1931
  %v1944 = vmul.f32 %v1877, %v1933
  %v1945 = vmul.f32 %v1882, %v1935
  %v1946 = vmul.f32 %v1887, %v1937
  %v1947 = vmul.f32 %v1892, %v1939
  %v1948 = vmul.f32 %v1897, %v1941
  %v1950 = vsel %vm1608, %v1942, 0
  %v1953 = vsel %vm1608, %v1943, 0
  %v1956 = vsel %vm1608, %v1944, 0
  %v1959 = vsel %vm1608, %v1945, 0
  %v1962 = vsel %vm1608, %v1946, 0
  %v1965 = vsel %vm1608, %v1947, 0
  %v1968 = vsel %vm1608, %v1948, 0
  %1970 = vmatprep.subr.mxu0 %v1422
  %1971 = vmatpush1.msra.mxu0 %v1421
  %1972 = vmatprep.subr.mxu0 %v1424
  %1973 = vmatpush1.msra.mxu0 %v1423
  %1974 = vmatprep.subr.mxu0 %v1426
  %1975 = vmatpush1.msra.mxu0 %v1425
  %1976 = vmatprep.subr.mxu0 %v1428
  %1977 = vmatpush1.msra.mxu0 %v1427
  %1978 = vmatprep.subr.mxu0 %v1430
  %1979 = vmatpush1.msra.mxu0 %v1429
  %1980 = vmatprep.subr.mxu0 %v1432
  %1981 = vmatpush1.msra.mxu0 %v1431
  %1982 = vmatprep.subr.mxu0 %v1434
  %1983 = vmatpush1.msra.mxu0 %v1433
  %1984 = vmatprep.subr.mxu0 %v1436
  %1985 = vmatpush1.msra.mxu0 %v1435
  %1986 = vmatprep.subr.mxu0 0.0
  %1987 = vmatpush1.msra.mxu0 0.0
  %1988 = vmatprep.subr.mxu0 0.0
  %1989 = vmatpush1.msra.mxu0 0.0
  %1990 = vmatprep.subr.mxu0 0.0
  %1991 = vmatpush1.msra.mxu0 0.0
  %1992 = vmatprep.subr.mxu0 0.0
  %1993 = vmatpush1.msra.mxu0 0.0
  %1994 = vmatprep.subr.mxu0 0.0
  %1995 = vmatpush1.msra.mxu0 0.0
  %1996 = vmatprep.subr.mxu0 0.0
  %1997 = vmatpush1.msra.mxu0 0.0
  %1998 = vmatprep.subr.mxu0 0.0
  %1999 = vmatpush1.msra.mxu0 0.0
  %2000 = vmatprep.subr.mxu0 0.0
  %2001 = vmatpush1.msra.mxu0 0.0
  %2002 = vmatprep.subr.mxu0 0.0
  %2003 = vmatpush1.msra.mxu0 0.0
  %2004 = vmatprep.subr.mxu0 0.0
  %2005 = vmatpush1.msra.mxu0 0.0
  %2006 = vmatprep.subr.mxu0 0.0
  %2007 = vmatpush1.msra.mxu0 0.0
  %2008 = vmatprep.subr.mxu0 0.0
  %2009 = vmatpush1.msra.mxu0 0.0
  %2010 = vmatprep.subr.mxu0 0.0
  %2011 = vmatpush1.msra.mxu0 0.0
  %2012 = vmatprep.subr.mxu0 0.0
  %2013 = vmatpush1.msra.mxu0 0.0
  %2014 = vmatprep.subr.mxu0 0.0
  %2015 = vmatpush1.msra.mxu0 0.0
  %2016 = vmatprep.subr.mxu0 0.0
  %2017 = vmatpush1.msra.mxu0 0.0
  %2018 = vmatprep.subr.mxu0 0.0
  %2019 = vmatpush1.msra.mxu0 0.0
  %2020 = vmatprep.subr.mxu0 0.0
  %2021 = vmatpush1.msra.mxu0 0.0
  %2022 = vmatprep.subr.mxu0 0.0
  %2023 = vmatpush1.msra.mxu0 0.0
  %2024 = vmatprep.subr.mxu0 0.0
  %2025 = vmatpush1.msra.mxu0 0.0
  %2026 = vmatprep.subr.mxu0 0.0
  %2027 = vmatpush1.msra.mxu0 0.0
  %2028 = vmatprep.subr.mxu0 0.0
  %2029 = vmatpush1.msra.mxu0 0.0
  %2030 = vmatprep.subr.mxu0 0.0
  %2031 = vmatpush1.msra.mxu0 0.0
  %2032 = vmatprep.subr.mxu0 0.0
  %2033 = vmatpush1.msra.mxu0 0.0
  %2034 = vmatprep.mubr.f32.mxu0 0.0
  %2035 = vmatmul.mubr.f32.gmra.mrb[0].mxu0 %v1950
  %v2036 = vpop.f32.mrb[0].mxu0
  %v2037 = vadd.f32 0.0, %v2036
  %v2038 = vpop.f32.mrb[0].mxu0
  %v2039 = vadd.f32 0.0, %v2038
  %2040 = vmatprep.mubr.f32.mxu0 0.0
  %2041 = vmatmul.mubr.f32.gmra.mrb[0].mxu0 %v1953
  %v2042 = vpop.f32.mrb[0].mxu0
  %v2043 = vadd.f32 0.0, %v2042
  %v2044 = vpop.f32.mrb[0].mxu0
  %v2045 = vadd.f32 0.0, %v2044
  %2046 = vmatprep.mubr.f32.mxu0 0.0
  %2047 = vmatmul.mubr.f32.gmra.mrb[0].mxu0 %v1956
  %v2048 = vpop.f32.mrb[0].mxu0
  %v2049 = vadd.f32 0.0, %v2048
  %v2050 = vpop.f32.mrb[0].mxu0
  %v2051 = vadd.f32 0.0, %v2050
  %2052 = vmatprep.mubr.f32.mxu0 0.0
  %2053 = vmatmul.mubr.f32.gmra.mrb[0].mxu0 %v1959
  %v2054 = vpop.f32.mrb[0].mxu0
  %v2055 = vadd.f32 0.0, %v2054
  %v2056 = vpop.f32.mrb[0].mxu0
  %v2057 = vadd.f32 0.0, %v2056
  %2058 = vmatprep.mubr.f32.mxu0 0.0
  %2059 = vmatmul.mubr.f32.gmra.mrb[0].mxu0 %v1962
  %v2060 = vpop.f32.mrb[0].mxu0
  %v2061 = vadd.f32 0.0, %v2060
  %v2062 = vpop.f32.mrb[0].mxu0
  %v2063 = vadd.f32 0.0, %v2062
  %2064 = vmatprep.mubr.f32.mxu0 0.0
  %2065 = vmatmul.mubr.f32.gmra.mrb[0].mxu0 %v1965
  %v2066 = vpop.f32.mrb[0].mxu0
  %v2067 = vadd.f32 0.0, %v2066
  %v2068 = vpop.f32.mrb[0].mxu0
  %v2069 = vadd.f32 0.0, %v2068
  %2070 = vmatprep.mubr.f32.mxu0 0.0
  %2071 = vmatmul.mubr.f32.gmra.mrb[0].mxu0 %v1968
  %v2072 = vpop.f32.mrb[0].mxu0
  %v2073 = vadd.f32 0.0, %v2072
  %v2074 = vpop.f32.mrb[0].mxu0
  %v2075 = vadd.f32 0.0, %v2074
  %2076 = vdwg.mxu0
  %v2077 = vld [vmem:[%s4] sm:$0xff]
  %v2078 = vld [vmem:[%s4 + $0x8] sm:$0xff]
  %v2079 = vld [vmem:[%s4 + $0x10] sm:$0xff]
  %v2080 = vld [vmem:[%s4 + $0x18] sm:$0xff]
  %v2081 = vld [vmem:[%s4 + $0x20] sm:$0xff]
  %v2082 = vld [vmem:[%s4 + $0x28] sm:$0xff]
  %v2083 = vld [vmem:[%s4 + $0x30] sm:$0xff]
  %v2085 = vsel %vm1437, %v2077, 0
  %v2088 = vsel %vm1437, %v2078, 0
  %v2091 = vsel %vm1437, %v2079, 0
  %v2094 = vsel %vm1437, %v2080, 0
  %v2097 = vsel %vm1437, %v2081, 0
  %v2100 = vsel %vm1437, %v2082, 0
  %v2103 = vsel %vm1437, %v2083, 0
  %2105 = vmatprep.subr.mxu0 0.0
  %2106 = vmatpush1.msra.mxu0 %v132
  %2107 = vmatprep.subr.mxu0 0.0
  %2108 = vmatpush1.msra.mxu0 0.0
  %2109 = vmatprep.subr.mxu0 0.0
  %2110 = vmatpush1.msra.mxu0 0.0
  %2111 = vmatprep.subr.mxu0 0.0
  %2112 = vmatpush1.msra.mxu0 0.0
  %2113 = vmatprep.subr.mxu0 0.0
  %2114 = vmatpush1.msra.mxu0 0.0
  %2115 = vmatprep.subr.mxu0 0.0
  %2116 = vmatpush1.msra.mxu0 0.0
  %2117 = vmatprep.subr.mxu0 0.0
  %2118 = vmatpush1.msra.mxu0 0.0
  %2119 = vmatprep.subr.mxu0 0.0
  %2120 = vmatpush1.msra.mxu0 0.0
  %2121 = vmatprep.subr.mxu0 0.0
  %2122 = vmatpush1.msra.mxu0 0.0
  %2123 = vmatprep.subr.mxu0 0.0
  %2124 = vmatpush1.msra.mxu0 0.0
  %2125 = vmatprep.subr.mxu0 0.0
  %2126 = vmatpush1.msra.mxu0 0.0
  %2127 = vmatprep.subr.mxu0 0.0
  %2128 = vmatpush1.msra.mxu0 0.0
  %2129 = vmatprep.subr.mxu0 0.0
  %2130 = vmatpush1.msra.mxu0 0.0
  %2131 = vmatprep.subr.mxu0 0.0
  %2132 = vmatpush1.msra.mxu0 0.0
  %2133 = vmatprep.subr.mxu0 0.0
  %2134 = vmatpush1.msra.mxu0 0.0
  %2135 = vmatprep.subr.mxu0 0.0
  %2136 = vmatpush1.msra.mxu0 0.0
  %2137 = vmatprep.subr.mxu0 0.0
  %2138 = vmatpush1.msra.mxu0 0.0
  %2139 = vmatprep.subr.mxu0 0.0
  %2140 = vmatpush1.msra.mxu0 0.0
  %2141 = vmatprep.subr.mxu0 0.0
  %2142 = vmatpush1.msra.mxu0 0.0
  %2143 = vmatprep.subr.mxu0 0.0
  %2144 = vmatpush1.msra.mxu0 0.0
  %2145 = vmatprep.subr.mxu0 0.0
  %2146 = vmatpush1.msra.mxu0 0.0
  %2147 = vmatprep.subr.mxu0 0.0
  %2148 = vmatpush1.msra.mxu0 0.0
  %2149 = vmatprep.subr.mxu0 0.0
  %2150 = vmatpush1.msra.mxu0 0.0
  %2151 = vmatprep.subr.mxu0 0.0
  %2152 = vmatpush1.msra.mxu0 0.0
  %2153 = vmatprep.subr.mxu0 0.0
  %2154 = vmatpush1.msra.mxu0 0.0
  %2155 = vmatprep.subr.mxu0 0.0
  %2156 = vmatpush1.msra.mxu0 0.0
  %2157 = vmatprep.subr.mxu0 0.0
  %2158 = vmatpush1.msra.mxu0 0.0
  %2159 = vmatprep.subr.mxu0 0.0
  %2160 = vmatpush1.msra.mxu0 0.0
  %2161 = vmatprep.subr.mxu0 0.0
  %2162 = vmatpush1.msra.mxu0 0.0
  %2163 = vmatprep.subr.mxu0 0.0
  %2164 = vmatpush1.msra.mxu0 0.0
  %2165 = vmatprep.subr.mxu0 0.0
  %2166 = vmatpush1.msra.mxu0 0.0
  %2167 = vmatprep.subr.mxu0 0.0
  %2168 = vmatpush1.msra.mxu0 0.0
  %2169 = vmatprep.mubr.f32.mxu0 0.0
  %2170 = vmatmul.mubr.f32.gmra.mrb[0].mxu0 %v2085
  %v2171 = vpop.f32.mrb[0].mxu0
  %v2172 = vadd.f32 0.0, %v2171
  %v2173 = vpop.f32.mrb[0].mxu0
  %2174 = vmatprep.mubr.f32.mxu0 0.0
  %2175 = vmatmul.mubr.f32.gmra.mrb[0].mxu0 %v2088
  %v2176 = vpop.f32.mrb[0].mxu0
  %v2177 = vadd.f32 0.0, %v2176
  %v2178 = vpop.f32.mrb[0].mxu0
  %2179 = vmatprep.mubr.f32.mxu0 0.0
  %2180 = vmatmul.mubr.f32.gmra.mrb[0].mxu0 %v2091
  %v2181 = vpop.f32.mrb[0].mxu0
  %v2182 = vadd.f32 0.0, %v2181
  %v2183 = vpop.f32.mrb[0].mxu0
  %2184 = vmatprep.mubr.f32.mxu0 0.0
  %2185 = vmatmul.mubr.f32.gmra.mrb[0].mxu0 %v2094
  %v2186 = vpop.f32.mrb[0].mxu0
  %v2187 = vadd.f32 0.0, %v2186
  %v2188 = vpop.f32.mrb[0].mxu0
  %2189 = vmatprep.mubr.f32.mxu0 0.0
  %2190 = vmatmul.mubr.f32.gmra.mrb[0].mxu0 %v2097
  %v2191 = vpop.f32.mrb[0].mxu0
  %v2192 = vadd.f32 0.0, %v2191
  %v2193 = vpop.f32.mrb[0].mxu0
  %2194 = vmatprep.mubr.f32.mxu0 0.0
  %2195 = vmatmul.mubr.f32.gmra.mrb[0].mxu0 %v2100
  %v2196 = vpop.f32.mrb[0].mxu0
  %v2197 = vadd.f32 0.0, %v2196
  %v2198 = vpop.f32.mrb[0].mxu0
  %2199 = vmatprep.mubr.f32.mxu0 0.0
  %2200 = vmatmul.mubr.f32.gmra.mrb[0].mxu0 %v2103
  %v2201 = vpop.f32.mrb[0].mxu0
  %v2202 = vadd.f32 0.0, %v2201
  %v2203 = vpop.f32.mrb[0].mxu0
  %2204 = vdwg.mxu0
  %2205 = vmatprep.subr.mxu0 0.0
  %2206 = vmatpush1.msra.mxu0 %v210
  %2207 = vmatprep.subr.mxu0 0.0
  %2208 = vmatpush1.msra.mxu0 0.0
  %2209 = vmatprep.subr.mxu0 0.0
  %2210 = vmatpush1.msra.mxu0 0.0
  %2211 = vmatprep.subr.mxu0 0.0
  %2212 = vmatpush1.msra.mxu0 0.0
  %2213 = vmatprep.subr.mxu0 0.0
  %2214 = vmatpush1.msra.mxu0 0.0
  %2215 = vmatprep.subr.mxu0 0.0
  %2216 = vmatpush1.msra.mxu0 0.0
  %2217 = vmatprep.subr.mxu0 0.0
  %2218 = vmatpush1.msra.mxu0 0.0
  %2219 = vmatprep.subr.mxu0 0.0
  %2220 = vmatpush1.msra.mxu0 0.0
  %2221 = vmatprep.subr.mxu0 0.0
  %2222 = vmatpush1.msra.mxu0 0.0
  %2223 = vmatprep.subr.mxu0 0.0
  %2224 = vmatpush1.msra.mxu0 0.0
  %2225 = vmatprep.subr.mxu0 0.0
  %2226 = vmatpush1.msra.mxu0 0.0
  %2227 = vmatprep.subr.mxu0 0.0
  %2228 = vmatpush1.msra.mxu0 0.0
  %2229 = vmatprep.subr.mxu0 0.0
  %2230 = vmatpush1.msra.mxu0 0.0
  %2231 = vmatprep.subr.mxu0 0.0
  %2232 = vmatpush1.msra.mxu0 0.0
  %2233 = vmatprep.subr.mxu0 0.0
  %2234 = vmatpush1.msra.mxu0 0.0
  %2235 = vmatprep.subr.mxu0 0.0
  %2236 = vmatpush1.msra.mxu0 0.0
  %2237 = vmatprep.subr.mxu0 0.0
  %2238 = vmatpush1.msra.mxu0 0.0
  %2239 = vmatprep.subr.mxu0 0.0
  %2240 = vmatpush1.msra.mxu0 0.0
  %2241 = vmatprep.subr.mxu0 0.0
  %2242 = vmatpush1.msra.mxu0 0.0
  %2243 = vmatprep.subr.mxu0 0.0
  %2244 = vmatpush1.msra.mxu0 0.0
  %2245 = vmatprep.subr.mxu0 0.0
  %2246 = vmatpush1.msra.mxu0 0.0
  %2247 = vmatprep.subr.mxu0 0.0
  %2248 = vmatpush1.msra.mxu0 0.0
  %2249 = vmatprep.subr.mxu0 0.0
  %2250 = vmatpush1.msra.mxu0 0.0
  %2251 = vmatprep.subr.mxu0 0.0
  %2252 = vmatpush1.msra.mxu0 0.0
  %2253 = vmatprep.subr.mxu0 0.0
  %2254 = vmatpush1.msra.mxu0 0.0
  %2255 = vmatprep.subr.mxu0 0.0
  %2256 = vmatpush1.msra.mxu0 0.0
  %2257 = vmatprep.subr.mxu0 0.0
  %2258 = vmatpush1.msra.mxu0 0.0
  %2259 = vmatprep.subr.mxu0 0.0
  %2260 = vmatpush1.msra.mxu0 0.0
  %2261 = vmatprep.subr.mxu0 0.0
  %2262 = vmatpush1.msra.mxu0 0.0
  %2263 = vmatprep.subr.mxu0 0.0
  %2264 = vmatpush1.msra.mxu0 0.0
  %2265 = vmatprep.subr.mxu0 0.0
  %2266 = vmatpush1.msra.mxu0 0.0
  %2267 = vmatprep.subr.mxu0 0.0
  %2268 = vmatpush1.msra.mxu0 0.0
  %2269 = vmatprep.mubr.f32.mxu0 0.0
  %2270 = vmatmul.mubr.f32.gmra.mrb[0].mxu0 %v2085
  %v2271 = vpop.f32.mrb[0].mxu0
  %v2272 = vadd.f32 0.0, %v2271
  %v2273 = vpop.f32.mrb[0].mxu0
  %2274 = vmatprep.mubr.f32.mxu0 0.0
  %2275 = vmatmul.mubr.f32.gmra.mrb[0].mxu0 %v2088
  %v2276 = vpop.f32.mrb[0].mxu0
  %v2277 = vadd.f32 0.0, %v2276
  %v2278 = vpop.f32.mrb[0].mxu0
  %2279 = vmatprep.mubr.f32.mxu0 0.0
  %2280 = vmatmul.mubr.f32.gmra.mrb[0].mxu0 %v2091
  %v2281 = vpop.f32.mrb[0].mxu0
  %v2282 = vadd.f32 0.0, %v2281
  %v2283 = vpop.f32.mrb[0].mxu0
  %2284 = vmatprep.mubr.f32.mxu0 0.0
  %2285 = vmatmul.mubr.f32.gmra.mrb[0].mxu0 %v2094
  %v2286 = vpop.f32.mrb[0].mxu0
  %v2287 = vadd.f32 0.0, %v2286
  %v2288 = vpop.f32.mrb[0].mxu0
  %2289 = vmatprep.mubr.f32.mxu0 0.0
  %2290 = vmatmul.mubr.f32.gmra.mrb[0].mxu0 %v2097
  %v2291 = vpop.f32.mrb[0].mxu0
  %v2292 = vadd.f32 0.0, %v2291
  %v2293 = vpop.f32.mrb[0].mxu0
  %2294 = vmatprep.mubr.f32.mxu0 0.0
  %2295 = vmatmul.mubr.f32.gmra.mrb[0].mxu0 %v2100
  %v2296 = vpop.f32.mrb[0].mxu0
  %v2297 = vadd.f32 0.0, %v2296
  %v2298 = vpop.f32.mrb[0].mxu0
  %2299 = vmatprep.mubr.f32.mxu0 0.0
  %2300 = vmatmul.mubr.f32.gmra.mrb[0].mxu0 %v2103
  %v2301 = vpop.f32.mrb[0].mxu0
  %v2302 = vadd.f32 0.0, %v2301
  %v2303 = vpop.f32.mrb[0].mxu0
  %2304 = vdwg.mxu0
  %2305 = vmatprep.subr.mxu0 0.0
  %2306 = vmatpush1.msra.mxu0 %v284
  %2307 = vmatprep.subr.mxu0 0.0
  %2308 = vmatpush1.msra.mxu0 0.0
  %2309 = vmatprep.subr.mxu0 0.0
  %2310 = vmatpush1.msra.mxu0 0.0
  %2311 = vmatprep.subr.mxu0 0.0
  %2312 = vmatpush1.msra.mxu0 0.0
  %2313 = vmatprep.subr.mxu0 0.0
  %2314 = vmatpush1.msra.mxu0 0.0
  %2315 = vmatprep.subr.mxu0 0.0
  %2316 = vmatpush1.msra.mxu0 0.0
  %2317 = vmatprep.subr.mxu0 0.0
  %2318 = vmatpush1.msra.mxu0 0.0
  %2319 = vmatprep.subr.mxu0 0.0
  %2320 = vmatpush1.msra.mxu0 0.0
  %2321 = vmatprep.subr.mxu0 0.0
  %2322 = vmatpush1.msra.mxu0 0.0
  %2323 = vmatprep.subr.mxu0 0.0
  %2324 = vmatpush1.msra.mxu0 0.0
  %2325 = vmatprep.subr.mxu0 0.0
  %2326 = vmatpush1.msra.mxu0 0.0
  %2327 = vmatprep.subr.mxu0 0.0
  %2328 = vmatpush1.msra.mxu0 0.0
  %2329 = vmatprep.subr.mxu0 0.0
  %2330 = vmatpush1.msra.mxu0 0.0
  %2331 = vmatprep.subr.mxu0 0.0
  %2332 = vmatpush1.msra.mxu0 0.0
  %2333 = vmatprep.subr.mxu0 0.0
  %2334 = vmatpush1.msra.mxu0 0.0
  %2335 = vmatprep.subr.mxu0 0.0
  %2336 = vmatpush1.msra.mxu0 0.0
  %2337 = vmatprep.subr.mxu0 0.0
  %2338 = vmatpush1.msra.mxu0 0.0
  %2339 = vmatprep.subr.mxu0 0.0
  %2340 = vmatpush1.msra.mxu0 0.0
  %2341 = vmatprep.subr.mxu0 0.0
  %2342 = vmatpush1.msra.mxu0 0.0
  %2343 = vmatprep.subr.mxu0 0.0
  %2344 = vmatpush1.msra.mxu0 0.0
  %2345 = vmatprep.subr.mxu0 0.0
  %2346 = vmatpush1.msra.mxu0 0.0
  %2347 = vmatprep.subr.mxu0 0.0
  %2348 = vmatpush1.msra.mxu0 0.0
  %2349 = vmatprep.subr.mxu0 0.0
  %2350 = vmatpush1.msra.mxu0 0.0
  %2351 = vmatprep.subr.mxu0 0.0
  %2352 = vmatpush1.msra.mxu0 0.0
  %2353 = vmatprep.subr.mxu0 0.0
  %2354 = vmatpush1.msra.mxu0 0.0
  %2355 = vmatprep.subr.mxu0 0.0
  %2356 = vmatpush1.msra.mxu0 0.0
  %2357 = vmatprep.subr.mxu0 0.0
  %2358 = vmatpush1.msra.mxu0 0.0
  %2359 = vmatprep.subr.mxu0 0.0
  %2360 = vmatpush1.msra.mxu0 0.0
  %2361 = vmatprep.subr.mxu0 0.0
  %2362 = vmatpush1.msra.mxu0 0.0
  %2363 = vmatprep.subr.mxu0 0.0
  %2364 = vmatpush1.msra.mxu0 0.0
  %2365 = vmatprep.subr.mxu0 0.0
  %2366 = vmatpush1.msra.mxu0 0.0
  %2367 = vmatprep.subr.mxu0 0.0
  %2368 = vmatpush1.msra.mxu0 0.0
  %2369 = vmatprep.mubr.f32.mxu0 0.0
  %2370 = vmatmul.mubr.f32.gmra.mrb[0].mxu0 %v2085
  %v2371 = vpop.f32.mrb[0].mxu0
  %v2372 = vadd.f32 0.0, %v2371
  %v2373 = vpop.f32.mrb[0].mxu0
  %2374 = vmatprep.mubr.f32.mxu0 0.0
  %2375 = vmatmul.mubr.f32.gmra.mrb[0].mxu0 %v2088
  %v2376 = vpop.f32.mrb[0].mxu0
  %v2377 = vadd.f32 0.0, %v2376
  %v2378 = vpop.f32.mrb[0].mxu0
  %2379 = vmatprep.mubr.f32.mxu0 0.0
  %2380 = vmatmul.mubr.f32.gmra.mrb[0].mxu0 %v2091
  %v2381 = vpop.f32.mrb[0].mxu0
  %v2382 = vadd.f32 0.0, %v2381
  %v2383 = vpop.f32.mrb[0].mxu0
  %2384 = vmatprep.mubr.f32.mxu0 0.0
  %2385 = vmatmul.mubr.f32.gmra.mrb[0].mxu0 %v2094
  %v2386 = vpop.f32.mrb[0].mxu0
  %v2387 = vadd.f32 0.0, %v2386
  %v2388 = vpop.f32.mrb[0].mxu0
  %2389 = vmatprep.mubr.f32.mxu0 0.0
  %2390 = vmatmul.mubr.f32.gmra.mrb[0].mxu0 %v2097
  %v2391 = vpop.f32.mrb[0].mxu0
  %v2392 = vadd.f32 0.0, %v2391
  %v2393 = vpop.f32.mrb[0].mxu0
  %2394 = vmatprep.mubr.f32.mxu0 0.0
  %2395 = vmatmul.mubr.f32.gmra.mrb[0].mxu0 %v2100
  %v2396 = vpop.f32.mrb[0].mxu0
  %v2397 = vadd.f32 0.0, %v2396
  %v2398 = vpop.f32.mrb[0].mxu0
  %2399 = vmatprep.mubr.f32.mxu0 0.0
  %2400 = vmatmul.mubr.f32.gmra.mrb[0].mxu0 %v2103
  %v2401 = vpop.f32.mrb[0].mxu0
  %v2402 = vadd.f32 0.0, %v2401
  %v2403 = vpop.f32.mrb[0].mxu0
  %2404 = vdwg.mxu0
  %2405 = vmatprep.subr.mxu0 0.0
  %2406 = vmatpush1.msra.mxu0 %v358
  %2407 = vmatprep.subr.mxu0 0.0
  %2408 = vmatpush1.msra.mxu0 0.0
  %2409 = vmatprep.subr.mxu0 0.0
  %2410 = vmatpush1.msra.mxu0 0.0
  %2411 = vmatprep.subr.mxu0 0.0
  %2412 = vmatpush1.msra.mxu0 0.0
  %2413 = vmatprep.subr.mxu0 0.0
  %2414 = vmatpush1.msra.mxu0 0.0
  %2415 = vmatprep.subr.mxu0 0.0
  %2416 = vmatpush1.msra.mxu0 0.0
  %2417 = vmatprep.subr.mxu0 0.0
  %2418 = vmatpush1.msra.mxu0 0.0
  %2419 = vmatprep.subr.mxu0 0.0
  %2420 = vmatpush1.msra.mxu0 0.0
  %2421 = vmatprep.subr.mxu0 0.0
  %2422 = vmatpush1.msra.mxu0 0.0
  %2423 = vmatprep.subr.mxu0 0.0
  %2424 = vmatpush1.msra.mxu0 0.0
  %2425 = vmatprep.subr.mxu0 0.0
  %2426 = vmatpush1.msra.mxu0 0.0
  %2427 = vmatprep.subr.mxu0 0.0
  %2428 = vmatpush1.msra.mxu0 0.0
  %2429 = vmatprep.subr.mxu0 0.0
  %2430 = vmatpush1.msra.mxu0 0.0
  %2431 = vmatprep.subr.mxu0 0.0
  %2432 = vmatpush1.msra.mxu0 0.0
  %2433 = vmatprep.subr.mxu0 0.0
  %2434 = vmatpush1.msra.mxu0 0.0
  %2435 = vmatprep.subr.mxu0 0.0
  %2436 = vmatpush1.msra.mxu0 0.0
  %2437 = vmatprep.subr.mxu0 0.0
  %2438 = vmatpush1.msra.mxu0 0.0
  %2439 = vmatprep.subr.mxu0 0.0
  %2440 = vmatpush1.msra.mxu0 0.0
  %2441 = vmatprep.subr.mxu0 0.0
  %2442 = vmatpush1.msra.mxu0 0.0
  %2443 = vmatprep.subr.mxu0 0.0
  %2444 = vmatpush1.msra.mxu0 0.0
  %2445 = vmatprep.subr.mxu0 0.0
  %2446 = vmatpush1.msra.mxu0 0.0
  %2447 = vmatprep.subr.mxu0 0.0
  %2448 = vmatpush1.msra.mxu0 0.0
  %2449 = vmatprep.subr.mxu0 0.0
  %2450 = vmatpush1.msra.mxu0 0.0
  %2451 = vmatprep.subr.mxu0 0.0
  %2452 = vmatpush1.msra.mxu0 0.0
  %2453 = vmatprep.subr.mxu0 0.0
  %2454 = vmatpush1.msra.mxu0 0.0
  %2455 = vmatprep.subr.mxu0 0.0
  %2456 = vmatpush1.msra.mxu0 0.0
  %2457 = vmatprep.subr.mxu0 0.0
  %2458 = vmatpush1.msra.mxu0 0.0
  %2459 = vmatprep.subr.mxu0 0.0
  %2460 = vmatpush1.msra.mxu0 0.0
  %2461 = vmatprep.subr.mxu0 0.0
  %2462 = vmatpush1.msra.mxu0 0.0
  %2463 = vmatprep.subr.mxu0 0.0
  %2464 = vmatpush1.msra.mxu0 0.0
  %2465 = vmatprep.subr.mxu0 0.0
  %2466 = vmatpush1.msra.mxu0 0.0
  %2467 = vmatprep.subr.mxu0 0.0
  %2468 = vmatpush1.msra.mxu0 0.0
  %2469 = vmatprep.mubr.f32.mxu0 0.0
  %2470 = vmatmul.mubr.f32.gmra.mrb[0].mxu0 %v2085
  %v2471 = vpop.f32.mrb[0].mxu0
  %v2472 = vadd.f32 0.0, %v2471
  %v2473 = vpop.f32.mrb[0].mxu0
  %2474 = vmatprep.mubr.f32.mxu0 0.0
  %2475 = vmatmul.mubr.f32.gmra.mrb[0].mxu0 %v2088
  %v2476 = vpop.f32.mrb[0].mxu0
  %v2477 = vadd.f32 0.0, %v2476
  %v2478 = vpop.f32.mrb[0].mxu0
  %2479 = vmatprep.mubr.f32.mxu0 0.0
  %2480 = vmatmul.mubr.f32.gmra.mrb[0].mxu0 %v2091
  %v2481 = vpop.f32.mrb[0].mxu0
  %v2482 = vadd.f32 0.0, %v2481
  %v2483 = vpop.f32.mrb[0].mxu0
  %2484 = vmatprep.mubr.f32.mxu0 0.0
  %2485 = vmatmul.mubr.f32.gmra.mrb[0].mxu0 %v2094
  %v2486 = vpop.f32.mrb[0].mxu0
  %v2487 = vadd.f32 0.0, %v2486
  %v2488 = vpop.f32.mrb[0].mxu0
  %2489 = vmatprep.mubr.f32.mxu0 0.0
  %2490 = vmatmul.mubr.f32.gmra.mrb[0].mxu0 %v2097
  %v2491 = vpop.f32.mrb[0].mxu0
  %v2492 = vadd.f32 0.0, %v2491
  %v2493 = vpop.f32.mrb[0].mxu0
  %2494 = vmatprep.mubr.f32.mxu0 0.0
  %2495 = vmatmul.mubr.f32.gmra.mrb[0].mxu0 %v2100
  %v2496 = vpop.f32.mrb[0].mxu0
  %v2497 = vadd.f32 0.0, %v2496
  %v2498 = vpop.f32.mrb[0].mxu0
  %2499 = vmatprep.mubr.f32.mxu0 0.0
  %2500 = vmatmul.mubr.f32.gmra.mrb[0].mxu0 %v2103
  %v2501 = vpop.f32.mrb[0].mxu0
  %v2502 = vadd.f32 0.0, %v2501
  %v2503 = vpop.f32.mrb[0].mxu0
  %2504 = vdwg.mxu0
  %v2505 = vmul.f32 %v411, 0.48860252
  %v2506 = vmul.f32 %v412, 0.48860252
  %v2507 = vmul.f32 %v413, 0.48860252
  %v2508 = vmul.f32 %v414, 0.48860252
  %v2509 = vmul.f32 %v415, 0.48860252
  %v2510 = vmul.f32 %v416, 0.48860252
  %v2511 = vmul.f32 %v417, 0.48860252
  %2513 = vset.pattern.permute.xlu0 1
  %2514 = vperm.xlu0 %2513, %v2505
  %v2515 = vpop.permute.xlu0 %2514
  %2518 = vset.pattern.permute.xlu0 1
  %2519 = vperm.xlu0 %2518, %v2506
  %v2520 = vpop.permute.xlu0 %2519
  %2523 = vset.pattern.permute.xlu0 1
  %2524 = vperm.xlu0 %2523, %v2507
  %v2525 = vpop.permute.xlu0 %2524
  %2528 = vset.pattern.permute.xlu0 1
  %2529 = vperm.xlu0 %2528, %v2508
  %v2530 = vpop.permute.xlu0 %2529
  %2533 = vset.pattern.permute.xlu0 1
  %2534 = vperm.xlu0 %2533, %v2509
  %v2535 = vpop.permute.xlu0 %2534
  %2538 = vset.pattern.permute.xlu0 1
  %2539 = vperm.xlu0 %2538, %v2510
  %v2540 = vpop.permute.xlu0 %2539
  %2543 = vset.pattern.permute.xlu0 1
  %2544 = vperm.xlu0 %2543, %v2511
  %v2545 = vpop.permute.xlu0 %2544
  %v2547 = vmul.f32 %v439, 0.48860252
  %v2548 = vmul.f32 %v440, 0.48860252
  %v2549 = vmul.f32 %v441, 0.48860252
  %v2550 = vmul.f32 %v442, 0.48860252
  %v2551 = vmul.f32 %v443, 0.48860252
  %v2552 = vmul.f32 %v444, 0.48860252
  %v2553 = vmul.f32 %v445, 0.48860252
  %2555 = vset.pattern.permute.xlu0 2
  %2556 = vperm.xlu0 %2555, %v2547
  %v2557 = vpop.permute.xlu0 %2556
  %2560 = vset.pattern.permute.xlu0 2
  %2561 = vperm.xlu0 %2560, %v2548
  %v2562 = vpop.permute.xlu0 %2561
  %2565 = vset.pattern.permute.xlu0 2
  %2566 = vperm.xlu0 %2565, %v2549
  %v2567 = vpop.permute.xlu0 %2566
  %2570 = vset.pattern.permute.xlu0 2
  %2571 = vperm.xlu0 %2570, %v2550
  %v2572 = vpop.permute.xlu0 %2571
  %2575 = vset.pattern.permute.xlu0 2
  %2576 = vperm.xlu0 %2575, %v2551
  %v2577 = vpop.permute.xlu0 %2576
  %2580 = vset.pattern.permute.xlu0 2
  %2581 = vperm.xlu0 %2580, %v2552
  %v2582 = vpop.permute.xlu0 %2581
  %2585 = vset.pattern.permute.xlu0 2
  %2586 = vperm.xlu0 %2585, %v2553
  %v2587 = vpop.permute.xlu0 %2586
  %v2589 = vmul.f32 %v467, 0.48860252
  %v2590 = vmul.f32 %v468, 0.48860252
  %v2591 = vmul.f32 %v469, 0.48860252
  %v2592 = vmul.f32 %v470, 0.48860252
  %v2593 = vmul.f32 %v471, 0.48860252
  %v2594 = vmul.f32 %v472, 0.48860252
  %v2595 = vmul.f32 %v473, 0.48860252
  %2597 = vset.pattern.permute.xlu0 3
  %2598 = vperm.xlu0 %2597, %v2589
  %v2599 = vpop.permute.xlu0 %2598
  %2602 = vset.pattern.permute.xlu0 3
  %2603 = vperm.xlu0 %2602, %v2590
  %v2604 = vpop.permute.xlu0 %2603
  %2607 = vset.pattern.permute.xlu0 3
  %2608 = vperm.xlu0 %2607, %v2591
  %v2609 = vpop.permute.xlu0 %2608
  %2612 = vset.pattern.permute.xlu0 3
  %2613 = vperm.xlu0 %2612, %v2592
  %v2614 = vpop.permute.xlu0 %2613
  %2617 = vset.pattern.permute.xlu0 3
  %2618 = vperm.xlu0 %2617, %v2593
  %v2619 = vpop.permute.xlu0 %2618
  %2622 = vset.pattern.permute.xlu0 3
  %2623 = vperm.xlu0 %2622, %v2594
  %v2624 = vpop.permute.xlu0 %2623
  %2627 = vset.pattern.permute.xlu0 3
  %2628 = vperm.xlu0 %2627, %v2595
  %v2629 = vpop.permute.xlu0 %2628
  %v2631 = vmul.f32 %v2037, %v2172
  %v2632 = vmul.f32 %v2043, %v2177
  %v2633 = vmul.f32 %v2049, %v2182
  %v2634 = vmul.f32 %v2055, %v2187
  %v2635 = vmul.f32 %v2061, %v2192
  %v2636 = vmul.f32 %v2067, %v2197
  %v2637 = vmul.f32 %v2073, %v2202
  %v2638 = vmul.f32 %v2631, 0.2820948
  %v2639 = vmul.f32 %v2632, 0.2820948
  %v2640 = vmul.f32 %v2633, 0.2820948
  %v2641 = vmul.f32 %v2634, 0.2820948
  %v2642 = vmul.f32 %v2635, 0.2820948
  %v2643 = vmul.f32 %v2636, 0.2820948
  %v2644 = vmul.f32 %v2637, 0.2820948
  %v2645 = vmul.f32 %v2272, %v2515
  %v2646 = vmul.f32 %v2277, %v2520
  %v2647 = vmul.f32 %v2282, %v2525
  %v2648 = vmul.f32 %v2287, %v2530
  %v2649 = vmul.f32 %v2292, %v2535
  %v2650 = vmul.f32 %v2297, %v2540
  %v2651 = vmul.f32 %v2302, %v2545
  %v2652 = vmul.f32 %v2372, %v2557
  %v2653 = vmul.f32 %v2377, %v2562
  %v2654 = vmul.f32 %v2382, %v2567
  %v2655 = vmul.f32 %v2387, %v2572
  %v2656 = vmul.f32 %v2392, %v2577
  %v2657 = vmul.f32 %v2397, %v2582
  %v2658 = vmul.f32 %v2402, %v2587
  %v2659 = vadd.f32 %v2645, %v2652
  %v2660 = vadd.f32 %v2646, %v2653
  %v2661 = vadd.f32 %v2647, %v2654
  %v2662 = vadd.f32 %v2648, %v2655
  %v2663 = vadd.f32 %v2649, %v2656
  %v2664 = vadd.f32 %v2650, %v2657
  %v2665 = vadd.f32 %v2651, %v2658
  %v2666 = vmul.f32 %v2472, %v2599
  %v2667 = vmul.f32 %v2477, %v2604
  %v2668 = vmul.f32 %v2482, %v2609
  %v2669 = vmul.f32 %v2487, %v2614
  %v2670 = vmul.f32 %v2492, %v2619
  %v2671 = vmul.f32 %v2497, %v2624
  %v2672 = vmul.f32 %v2502, %v2629
  %v2673 = vadd.f32 %v2659, %v2666
  %v2674 = vadd.f32 %v2660, %v2667
  %v2675 = vadd.f32 %v2661, %v2668
  %v2676 = vadd.f32 %v2662, %v2669
  %v2677 = vadd.f32 %v2663, %v2670
  %v2678 = vadd.f32 %v2664, %v2671
  %v2679 = vadd.f32 %v2665, %v2672
  %2687 = vrot.lane.b32.xlu0 %v2673, 32
  %v2688 = vpop.permute.xlu0 %2687
  %2689 = vrot.lane.b32.xlu0 %v2674, 32
  %v2690 = vpop.permute.xlu0 %2689
  %2691 = vrot.lane.b32.xlu0 %v2675, 32
  %v2692 = vpop.permute.xlu0 %2691
  %2693 = vrot.lane.b32.xlu0 %v2676, 32
  %v2694 = vpop.permute.xlu0 %2693
  %2695 = vrot.lane.b32.xlu0 %v2677, 32
  %v2696 = vpop.permute.xlu0 %2695
  %2697 = vrot.lane.b32.xlu0 %v2678, 32
  %v2698 = vpop.permute.xlu0 %2697
  %2699 = vrot.lane.b32.xlu0 %v2679, 32
  %v2700 = vpop.permute.xlu0 %2699
  %v2708 = vmul.f32 %v2037, %v2688
  %v2709 = vmul.f32 %v2043, %v2690
  %v2710 = vmul.f32 %v2049, %v2692
  %v2711 = vmul.f32 %v2055, %v2694
  %v2712 = vmul.f32 %v2061, %v2696
  %v2713 = vmul.f32 %v2067, %v2698
  %v2714 = vmul.f32 %v2073, %v2700
  %v2715 = vmul.f32 %v2708, 0.57735026
  %v2716 = vmul.f32 %v2709, 0.57735026
  %v2717 = vmul.f32 %v2710, 0.57735026
  %v2718 = vmul.f32 %v2711, 0.57735026
  %v2719 = vmul.f32 %v2712, 0.57735026
  %v2720 = vmul.f32 %v2713, 0.57735026
  %v2721 = vmul.f32 %v2714, 0.57735026
  %2729 = vrot.lane.b32.xlu0 %v2172, 64
  %v2730 = vpop.permute.xlu0 %2729
  %2731 = vrot.lane.b32.xlu0 %v2177, 64
  %v2732 = vpop.permute.xlu0 %2731
  %2733 = vrot.lane.b32.xlu0 %v2182, 64
  %v2734 = vpop.permute.xlu0 %2733
  %2735 = vrot.lane.b32.xlu0 %v2187, 64
  %v2736 = vpop.permute.xlu0 %2735
  %2737 = vrot.lane.b32.xlu0 %v2192, 64
  %v2738 = vpop.permute.xlu0 %2737
  %2739 = vrot.lane.b32.xlu0 %v2197, 64
  %v2740 = vpop.permute.xlu0 %2739
  %2741 = vrot.lane.b32.xlu0 %v2202, 64
  %v2742 = vpop.permute.xlu0 %2741
  %v2750 = vmul.f32 %v2037, %v2730
  %v2751 = vmul.f32 %v2043, %v2732
  %v2752 = vmul.f32 %v2049, %v2734
  %v2753 = vmul.f32 %v2055, %v2736
  %v2754 = vmul.f32 %v2061, %v2738
  %v2755 = vmul.f32 %v2067, %v2740
  %v2756 = vmul.f32 %v2073, %v2742
  %v2757 = vmul.f32 %v2750, %v2515
  %v2758 = vmul.f32 %v2751, %v2520
  %v2759 = vmul.f32 %v2752, %v2525
  %v2760 = vmul.f32 %v2753, %v2530
  %v2761 = vmul.f32 %v2754, %v2535
  %v2762 = vmul.f32 %v2755, %v2540
  %v2763 = vmul.f32 %v2756, %v2545
  %v2764 = vmul.f32 %v2750, %v2557
  %v2765 = vmul.f32 %v2751, %v2562
  %v2766 = vmul.f32 %v2752, %v2567
  %v2767 = vmul.f32 %v2753, %v2572
  %v2768 = vmul.f32 %v2754, %v2577
  %v2769 = vmul.f32 %v2755, %v2582
  %v2770 = vmul.f32 %v2756, %v2587
  %v2771 = vmul.f32 %v2750, %v2599
  %v2772 = vmul.f32 %v2751, %v2604
  %v2773 = vmul.f32 %v2752, %v2609
  %v2774 = vmul.f32 %v2753, %v2614
  %v2775 = vmul.f32 %v2754, %v2619
  %v2776 = vmul.f32 %v2755, %v2624
  %v2777 = vmul.f32 %v2756, %v2629
  %v2778 = vmul.f32 %v2037, 0.2820948
  %v2779 = vmul.f32 %v2043, 0.2820948
  %v2780 = vmul.f32 %v2049, 0.2820948
  %v2781 = vmul.f32 %v2055, 0.2820948
  %v2782 = vmul.f32 %v2061, 0.2820948
  %v2783 = vmul.f32 %v2067, 0.2820948
  %v2784 = vmul.f32 %v2073, 0.2820948
  %2792 = vrot.lane.b32.xlu0 %v2272, 96
  %v2793 = vpop.permute.xlu0 %2792
  %2794 = vrot.lane.b32.xlu0 %v2277, 96
  %v2795 = vpop.permute.xlu0 %2794
  %2796 = vrot.lane.b32.xlu0 %v2282, 96
  %v2797 = vpop.permute.xlu0 %2796
  %2798 = vrot.lane.b32.xlu0 %v2287, 96
  %v2799 = vpop.permute.xlu0 %2798
  %2800 = vrot.lane.b32.xlu0 %v2292, 96
  %v2801 = vpop.permute.xlu0 %2800
  %2802 = vrot.lane.b32.xlu0 %v2297, 96
  %v2803 = vpop.permute.xlu0 %2802
  %2804 = vrot.lane.b32.xlu0 %v2302, 96
  %v2805 = vpop.permute.xlu0 %2804
  %v2813 = vmul.f32 %v2778, %v2793
  %v2814 = vmul.f32 %v2779, %v2795
  %v2815 = vmul.f32 %v2780, %v2797
  %v2816 = vmul.f32 %v2781, %v2799
  %v2817 = vmul.f32 %v2782, %v2801
  %v2818 = vmul.f32 %v2783, %v2803
  %v2819 = vmul.f32 %v2784, %v2805
  %2827 = vrot.lane.b32.xlu0 %v2372, 96
  %v2828 = vpop.permute.xlu0 %2827
  %2829 = vrot.lane.b32.xlu0 %v2377, 96
  %v2830 = vpop.permute.xlu0 %2829
  %2831 = vrot.lane.b32.xlu0 %v2382, 96
  %v2832 = vpop.permute.xlu0 %2831
  %2833 = vrot.lane.b32.xlu0 %v2387, 96
  %v2834 = vpop.permute.xlu0 %2833
  %2835 = vrot.lane.b32.xlu0 %v2392, 96
  %v2836 = vpop.permute.xlu0 %2835
  %2837 = vrot.lane.b32.xlu0 %v2397, 96
  %v2838 = vpop.permute.xlu0 %2837
  %2839 = vrot.lane.b32.xlu0 %v2402, 96
  %v2840 = vpop.permute.xlu0 %2839
  %v2848 = vmul.f32 %v2778, %v2828
  %v2849 = vmul.f32 %v2779, %v2830
  %v2850 = vmul.f32 %v2780, %v2832
  %v2851 = vmul.f32 %v2781, %v2834
  %v2852 = vmul.f32 %v2782, %v2836
  %v2853 = vmul.f32 %v2783, %v2838
  %v2854 = vmul.f32 %v2784, %v2840
  %2862 = vrot.lane.b32.xlu0 %v2472, 96
  %v2863 = vpop.permute.xlu0 %2862
  %2864 = vrot.lane.b32.xlu0 %v2477, 96
  %v2865 = vpop.permute.xlu0 %2864
  %2866 = vrot.lane.b32.xlu0 %v2482, 96
  %v2867 = vpop.permute.xlu0 %2866
  %2868 = vrot.lane.b32.xlu0 %v2487, 96
  %v2869 = vpop.permute.xlu0 %2868
  %2870 = vrot.lane.b32.xlu0 %v2492, 96
  %v2871 = vpop.permute.xlu0 %2870
  %2872 = vrot.lane.b32.xlu0 %v2497, 96
  %v2873 = vpop.permute.xlu0 %2872
  %2874 = vrot.lane.b32.xlu0 %v2502, 96
  %v2875 = vpop.permute.xlu0 %2874
  %v2883 = vmul.f32 %v2778, %v2863
  %v2884 = vmul.f32 %v2779, %v2865
  %v2885 = vmul.f32 %v2780, %v2867
  %v2886 = vmul.f32 %v2781, %v2869
  %v2887 = vmul.f32 %v2782, %v2871
  %v2888 = vmul.f32 %v2783, %v2873
  %v2889 = vmul.f32 %v2784, %v2875
  %v2890 = vmul.f32 %v2372, %v2599
  %v2891 = vmul.f32 %v2377, %v2604
  %v2892 = vmul.f32 %v2382, %v2609
  %v2893 = vmul.f32 %v2387, %v2614
  %v2894 = vmul.f32 %v2392, %v2619
  %v2895 = vmul.f32 %v2397, %v2624
  %v2896 = vmul.f32 %v2402, %v2629
  %v2897 = vmul.f32 %v2472, %v2557
  %v2898 = vmul.f32 %v2477, %v2562
  %v2899 = vmul.f32 %v2482, %v2567
  %v2900 = vmul.f32 %v2487, %v2572
  %v2901 = vmul.f32 %v2492, %v2577
  %v2902 = vmul.f32 %v2497, %v2582
  %v2903 = vmul.f32 %v2502, %v2587
  %v2904 = vsub.f32 %v2890, %v2897
  %v2905 = vsub.f32 %v2891, %v2898
  %v2906 = vsub.f32 %v2892, %v2899
  %v2907 = vsub.f32 %v2893, %v2900
  %v2908 = vsub.f32 %v2894, %v2901
  %v2909 = vsub.f32 %v2895, %v2902
  %v2910 = vsub.f32 %v2896, %v2903
  %v2911 = vmul.f32 %v2472, %v2515
  %v2912 = vmul.f32 %v2477, %v2520
  %v2913 = vmul.f32 %v2482, %v2525
  %v2914 = vmul.f32 %v2487, %v2530
  %v2915 = vmul.f32 %v2492, %v2535
  %v2916 = vmul.f32 %v2497, %v2540
  %v2917 = vmul.f32 %v2502, %v2545
  %v2918 = vmul.f32 %v2272, %v2599
  %v2919 = vmul.f32 %v2277, %v2604
  %v2920 = vmul.f32 %v2282, %v2609
  %v2921 = vmul.f32 %v2287, %v2614
  %v2922 = vmul.f32 %v2292, %v2619
  %v2923 = vmul.f32 %v2297, %v2624
  %v2924 = vmul.f32 %v2302, %v2629
  %v2925 = vsub.f32 %v2911, %v2918
  %v2926 = vsub.f32 %v2912, %v2919
  %v2927 = vsub.f32 %v2913, %v2920
  %v2928 = vsub.f32 %v2914, %v2921
  %v2929 = vsub.f32 %v2915, %v2922
  %v2930 = vsub.f32 %v2916, %v2923
  %v2931 = vsub.f32 %v2917, %v2924
  %v2932 = vmul.f32 %v2272, %v2557
  %v2933 = vmul.f32 %v2277, %v2562
  %v2934 = vmul.f32 %v2282, %v2567
  %v2935 = vmul.f32 %v2287, %v2572
  %v2936 = vmul.f32 %v2292, %v2577
  %v2937 = vmul.f32 %v2297, %v2582
  %v2938 = vmul.f32 %v2302, %v2587
  %v2939 = vmul.f32 %v2372, %v2515
  %v2940 = vmul.f32 %v2377, %v2520
  %v2941 = vmul.f32 %v2382, %v2525
  %v2942 = vmul.f32 %v2387, %v2530
  %v2943 = vmul.f32 %v2392, %v2535
  %v2944 = vmul.f32 %v2397, %v2540
  %v2945 = vmul.f32 %v2402, %v2545
  %v2946 = vsub.f32 %v2932, %v2939
  %v2947 = vsub.f32 %v2933, %v2940
  %v2948 = vsub.f32 %v2934, %v2941
  %v2949 = vsub.f32 %v2935, %v2942
  %v2950 = vsub.f32 %v2936, %v2943
  %v2951 = vsub.f32 %v2937, %v2944
  %v2952 = vsub.f32 %v2938, %v2945
  %v2953 = vmul.f32 %v2039, 0.70710677
  %v2954 = vmul.f32 %v2045, 0.70710677
  %v2955 = vmul.f32 %v2051, 0.70710677
  %v2956 = vmul.f32 %v2057, 0.70710677
  %v2957 = vmul.f32 %v2063, 0.70710677
  %v2958 = vmul.f32 %v2069, 0.70710677
  %v2959 = vmul.f32 %v2075, 0.70710677
  %v2960 = vmul.f32 %v2953, %v2904
  %v2961 = vmul.f32 %v2954, %v2905
  %v2962 = vmul.f32 %v2955, %v2906
  %v2963 = vmul.f32 %v2956, %v2907
  %v2964 = vmul.f32 %v2957, %v2908
  %v2965 = vmul.f32 %v2958, %v2909
  %v2966 = vmul.f32 %v2959, %v2910
  %v2967 = vmul.f32 %v2953, %v2925
  %v2968 = vmul.f32 %v2954, %v2926
  %v2969 = vmul.f32 %v2955, %v2927
  %v2970 = vmul.f32 %v2956, %v2928
  %v2971 = vmul.f32 %v2957, %v2929
  %v2972 = vmul.f32 %v2958, %v2930
  %v2973 = vmul.f32 %v2959, %v2931
  %v2974 = vmul.f32 %v2953, %v2946
  %v2975 = vmul.f32 %v2954, %v2947
  %v2976 = vmul.f32 %v2955, %v2948
  %v2977 = vmul.f32 %v2956, %v2949
  %v2978 = vmul.f32 %v2957, %v2950
  %v2979 = vmul.f32 %v2958, %v2951
  %v2980 = vmul.f32 %v2959, %v2952
  %v2981 = vld [vmem:[%s5] sm:$0xff]
  %v2982 = vld [vmem:[%s12] sm:$0xff]
  %v2983 = vld [vmem:[%s12 + $0x8] sm:$0xff]
  %v2984 = vld [vmem:[%s12 + $0x10] sm:$0xff]
  %v2985 = vld [vmem:[%s12 + $0x18] sm:$0xff]
  %v2986 = vld [vmem:[%s12 + $0x20] sm:$0xff]
  %v2987 = vld [vmem:[%s12 + $0x28] sm:$0xff]
  %v2988 = vld [vmem:[%s12 + $0x30] sm:$0xff]
  %v2989 = vld [vmem:[%s12 + $0x38] sm:$0xff]
  %v2990 = vld [vmem:[%s13] sm:$0xff]
  %v2991 = vld [vmem:[%s13 + $0x8] sm:$0xff]
  %v2992 = vld [vmem:[%s13 + $0x10] sm:$0xff]
  %v2993 = vld [vmem:[%s13 + $0x18] sm:$0xff]
  %v2994 = vld [vmem:[%s13 + $0x20] sm:$0xff]
  %v2995 = vld [vmem:[%s13 + $0x28] sm:$0xff]
  %v2996 = vld [vmem:[%s13 + $0x30] sm:$0xff]
  %v2997 = vld [vmem:[%s13 + $0x38] sm:$0xff]
  %v2998 = vld [vmem:[%s13 + $0x40] sm:$0xff]
  %v2999 = vld [vmem:[%s13 + $0x48] sm:$0xff]
  %v3000 = vld [vmem:[%s13 + $0x50] sm:$0xff]
  %v3001 = vld [vmem:[%s13 + $0x58] sm:$0xff]
  %vm3002 = vcmask 457728
  %v3004 = vsel %vm3002, %v2981, 0
  %3006 = vmatprep.subr.mxu0 0.0
  %3007 = vmatpush1.msra.mxu0 %v2638
  %3008 = vmatprep.subr.mxu0 0.0
  %3009 = vmatpush1.msra.mxu0 %v2639
  %3010 = vmatprep.subr.mxu0 0.0
  %3011 = vmatpush1.msra.mxu0 %v2640
  %3012 = vmatprep.subr.mxu0 0.0
  %3013 = vmatpush1.msra.mxu0 %v2641
  %3014 = vmatprep.subr.mxu0 0.0
  %3015 = vmatpush1.msra.mxu0 %v2642
  %3016 = vmatprep.subr.mxu0 0.0
  %3017 = vmatpush1.msra.mxu0 %v2643
  %3018 = vmatprep.subr.mxu0 0.0
  %3019 = vmatpush1.msra.mxu0 %v2644
  %3020 = vmatprep.subr.mxu0 0.0
  %3021 = vmatpush1.msra.mxu0 0.0
  %3022 = vmatprep.subr.mxu0 0.0
  %3023 = vmatpush1.msra.mxu0 0.0
  %3024 = vmatprep.subr.mxu0 0.0
  %3025 = vmatpush1.msra.mxu0 0.0
  %3026 = vmatprep.subr.mxu0 0.0
  %3027 = vmatpush1.msra.mxu0 0.0
  %3028 = vmatprep.subr.mxu0 0.0
  %3029 = vmatpush1.msra.mxu0 0.0
  %3030 = vmatprep.subr.mxu0 0.0
  %3031 = vmatpush1.msra.mxu0 0.0
  %3032 = vmatprep.subr.mxu0 0.0
  %3033 = vmatpush1.msra.mxu0 0.0
  %3034 = vmatprep.subr.mxu0 0.0
  %3035 = vmatpush1.msra.mxu0 0.0
  %3036 = vmatprep.subr.mxu0 0.0
  %3037 = vmatpush1.msra.mxu0 0.0
  %3038 = vmatprep.subr.mxu0 0.0
  %3039 = vmatpush1.msra.mxu0 0.0
  %3040 = vmatprep.subr.mxu0 0.0
  %3041 = vmatpush1.msra.mxu0 0.0
  %3042 = vmatprep.subr.mxu0 0.0
  %3043 = vmatpush1.msra.mxu0 0.0
  %3044 = vmatprep.subr.mxu0 0.0
  %3045 = vmatpush1.msra.mxu0 0.0
  %3046 = vmatprep.subr.mxu0 0.0
  %3047 = vmatpush1.msra.mxu0 0.0
  %3048 = vmatprep.subr.mxu0 0.0
  %3049 = vmatpush1.msra.mxu0 0.0
  %3050 = vmatprep.subr.mxu0 0.0
  %3051 = vmatpush1.msra.mxu0 0.0
  %3052 = vmatprep.subr.mxu0 0.0
  %3053 = vmatpush1.msra.mxu0 0.0
  %3054 = vmatprep.subr.mxu0 0.0
  %3055 = vmatpush1.msra.mxu0 0.0
  %3056 = vmatprep.subr.mxu0 0.0
  %3057 = vmatpush1.msra.mxu0 0.0
  %3058 = vmatprep.subr.mxu0 0.0
  %3059 = vmatpush1.msra.mxu0 0.0
  %3060 = vmatprep.subr.mxu0 0.0
  %3061 = vmatpush1.msra.mxu0 0.0
  %3062 = vmatprep.subr.mxu0 0.0
  %3063 = vmatpush1.msra.mxu0 0.0
  %3064 = vmatprep.subr.mxu0 0.0
  %3065 = vmatpush1.msra.mxu0 0.0
  %3066 = vmatprep.subr.mxu0 0.0
  %3067 = vmatpush1.msra.mxu0 0.0
  %3068 = vmatprep.subr.mxu0 0.0
  %3069 = vmatpush1.msra.mxu0 0.0
  %3070 = vmatprep.mubr.f32.mxu0 0.0
  %3071 = vmatmul.mubr.f32.gmra.mrb[0].mxu0 %v3004
  %v3072 = vpop.f32.mrb[0].mxu0
  %v3073 = vadd.f32 0.0, %v3072
  %v3074 = vpop.f32.mrb[0].mxu0
  %3075 = vdwg.mxu0
  %3083 = vrot.lane.b32.xlu0 %v2715, 96
  %v3084 = vpop.permute.xlu0 %3083
  %3085 = vrot.lane.b32.xlu0 %v2716, 96
  %v3086 = vpop.permute.xlu0 %3085
  %3087 = vrot.lane.b32.xlu0 %v2717, 96
  %v3088 = vpop.permute.xlu0 %3087
  %3089 = vrot.lane.b32.xlu0 %v2718, 96
  %v3090 = vpop.permute.xlu0 %3089
  %3091 = vrot.lane.b32.xlu0 %v2719, 96
  %v3092 = vpop.permute.xlu0 %3091
  %3093 = vrot.lane.b32.xlu0 %v2720, 96
  %v3094 = vpop.permute.xlu0 %3093
  %3095 = vrot.lane.b32.xlu0 %v2721, 96
  %v3096 = vpop.permute.xlu0 %3095
  %3104 = vmatprep.subr.mxu0 0.0
  %3105 = vmatpush1.msra.mxu0 %v3084
  %3106 = vmatprep.subr.mxu0 0.0
  %3107 = vmatpush1.msra.mxu0 %v3086
  %3108 = vmatprep.subr.mxu0 0.0
  %3109 = vmatpush1.msra.mxu0 %v3088
  %3110 = vmatprep.subr.mxu0 0.0
  %3111 = vmatpush1.msra.mxu0 %v3090
  %3112 = vmatprep.subr.mxu0 0.0
  %3113 = vmatpush1.msra.mxu0 %v3092
  %3114 = vmatprep.subr.mxu0 0.0
  %3115 = vmatpush1.msra.mxu0 %v3094
  %3116 = vmatprep.subr.mxu0 0.0
  %3117 = vmatpush1.msra.mxu0 %v3096
  %3118 = vmatprep.subr.mxu0 0.0
  %3119 = vmatpush1.msra.mxu0 0.0
  %3120 = vmatprep.subr.mxu0 0.0
  %3121 = vmatpush1.msra.mxu0 0.0
  %3122 = vmatprep.subr.mxu0 0.0
  %3123 = vmatpush1.msra.mxu0 0.0
  %3124 = vmatprep.subr.mxu0 0.0
  %3125 = vmatpush1.msra.mxu0 0.0
  %3126 = vmatprep.subr.mxu0 0.0
  %3127 = vmatpush1.msra.mxu0 0.0
  %3128 = vmatprep.subr.mxu0 0.0
  %3129 = vmatpush1.msra.mxu0 0.0
  %3130 = vmatprep.subr.mxu0 0.0
  %3131 = vmatpush1.msra.mxu0 0.0
  %3132 = vmatprep.subr.mxu0 0.0
  %3133 = vmatpush1.msra.mxu0 0.0
  %3134 = vmatprep.subr.mxu0 0.0
  %3135 = vmatpush1.msra.mxu0 0.0
  %3136 = vmatprep.subr.mxu0 0.0
  %3137 = vmatpush1.msra.mxu0 0.0
  %3138 = vmatprep.subr.mxu0 0.0
  %3139 = vmatpush1.msra.mxu0 0.0
  %3140 = vmatprep.subr.mxu0 0.0
  %3141 = vmatpush1.msra.mxu0 0.0
  %3142 = vmatprep.subr.mxu0 0.0
  %3143 = vmatpush1.msra.mxu0 0.0
  %3144 = vmatprep.subr.mxu0 0.0
  %3145 = vmatpush1.msra.mxu0 0.0
  %3146 = vmatprep.subr.mxu0 0.0
  %3147 = vmatpush1.msra.mxu0 0.0
  %3148 = vmatprep.subr.mxu0 0.0
  %3149 = vmatpush1.msra.mxu0 0.0
  %3150 = vmatprep.subr.mxu0 0.0
  %3151 = vmatpush1.msra.mxu0 0.0
  %3152 = vmatprep.subr.mxu0 0.0
  %3153 = vmatpush1.msra.mxu0 0.0
  %3154 = vmatprep.subr.mxu0 0.0
  %3155 = vmatpush1.msra.mxu0 0.0
  %3156 = vmatprep.subr.mxu0 0.0
  %3157 = vmatpush1.msra.mxu0 0.0
  %3158 = vmatprep.subr.mxu0 0.0
  %3159 = vmatpush1.msra.mxu0 0.0
  %3160 = vmatprep.subr.mxu0 0.0
  %3161 = vmatpush1.msra.mxu0 0.0
  %3162 = vmatprep.subr.mxu0 0.0
  %3163 = vmatpush1.msra.mxu0 0.0
  %3164 = vmatprep.subr.mxu0 0.0
  %3165 = vmatpush1.msra.mxu0 0.0
  %3166 = vmatprep.subr.mxu0 0.0
  %3167 = vmatpush1.msra.mxu0 0.0
  %3168 = vmatprep.mubr.f32.mxu0 0.0
  %3169 = vmatmul.mubr.f32.gmra.mrb[0].mxu0 %v3004
  %v3170 = vpop.f32.mrb[0].mxu0
  %v3171 = vadd.f32 0.0, %v3170
  %v3172 = vpop.f32.mrb[0].mxu0
  %3173 = vdwg.mxu0
  %v3175 = vsel %vm61, %v3171, 0
  %3177 = vmatprep.subr.mxu0 0.0
  %3178 = vmatpush1.msra.mxu0 %v2986
  %3179 = vmatprep.subr.mxu0 0.0
  %3180 = vmatpush1.msra.mxu0 %v2987
  %3181 = vmatprep.subr.mxu0 0.0
  %3182 = vmatpush1.msra.mxu0 %v2988
  %3183 = vmatprep.subr.mxu0 0.0
  %3184 = vmatpush1.msra.mxu0 %v2989
  %3185 = vmatprep.subr.mxu0 0.0
  %3186 = vmatpush1.msra.mxu0 0.0
  %3187 = vmatprep.subr.mxu0 0.0
  %3188 = vmatpush1.msra.mxu0 0.0
  %3189 = vmatprep.subr.mxu0 0.0
  %3190 = vmatpush1.msra.mxu0 0.0
  %3191 = vmatprep.subr.mxu0 0.0
  %3192 = vmatpush1.msra.mxu0 0.0
  %3193 = vmatprep.subr.mxu0 0.0
  %3194 = vmatpush1.msra.mxu0 0.0
  %3195 = vmatprep.subr.mxu0 0.0
  %3196 = vmatpush1.msra.mxu0 0.0
  %3197 = vmatprep.subr.mxu0 0.0
  %3198 = vmatpush1.msra.mxu0 0.0
  %3199 = vmatprep.subr.mxu0 0.0
  %3200 = vmatpush1.msra.mxu0 0.0
  %3201 = vmatprep.subr.mxu0 0.0
  %3202 = vmatpush1.msra.mxu0 0.0
  %3203 = vmatprep.subr.mxu0 0.0
  %3204 = vmatpush1.msra.mxu0 0.0
  %3205 = vmatprep.subr.mxu0 0.0
  %3206 = vmatpush1.msra.mxu0 0.0
  %3207 = vmatprep.subr.mxu0 0.0
  %3208 = vmatpush1.msra.mxu0 0.0
  %3209 = vmatprep.subr.mxu0 0.0
  %3210 = vmatpush1.msra.mxu0 0.0
  %3211 = vmatprep.subr.mxu0 0.0
  %3212 = vmatpush1.msra.mxu0 0.0
  %3213 = vmatprep.subr.mxu0 0.0
  %3214 = vmatpush1.msra.mxu0 0.0
  %3215 = vmatprep.subr.mxu0 0.0
  %3216 = vmatpush1.msra.mxu0 0.0
  %3217 = vmatprep.subr.mxu0 0.0
  %3218 = vmatpush1.msra.mxu0 0.0
  %3219 = vmatprep.subr.mxu0 0.0
  %3220 = vmatpush1.msra.mxu0 0.0
  %3221 = vmatprep.subr.mxu0 0.0
  %3222 = vmatpush1.msra.mxu0 0.0
  %3223 = vmatprep.subr.mxu0 0.0
  %3224 = vmatpush1.msra.mxu0 0.0
  %3225 = vmatprep.subr.mxu0 0.0
  %3226 = vmatpush1.msra.mxu0 0.0
  %3227 = vmatprep.subr.mxu0 0.0
  %3228 = vmatpush1.msra.mxu0 0.0
  %3229 = vmatprep.subr.mxu0 0.0
  %3230 = vmatpush1.msra.mxu0 0.0
  %3231 = vmatprep.subr.mxu0 0.0
  %3232 = vmatpush1.msra.mxu0 0.0
  %3233 = vmatprep.subr.mxu0 0.0
  %3234 = vmatpush1.msra.mxu0 0.0
  %3235 = vmatprep.subr.mxu0 0.0
  %3236 = vmatpush1.msra.mxu0 0.0
  %3237 = vmatprep.subr.mxu0 0.0
  %3238 = vmatpush1.msra.mxu0 0.0
  %3239 = vmatprep.subr.mxu0 0.0
  %3240 = vmatpush1.msra.mxu0 0.0
  %3241 = vmatprep.mubr.f32.mxu0 0.0
  %3242 = vmatmul.mubr.f32.gmra.mrb[0].mxu0 %v3175
  %v3243 = vpop.f32.mrb[0].mxu0
  %v3244 = vadd.f32 0.0, %v3243
  %v3245 = vpop.f32.mrb[0].mxu0
  %3246 = vdwg.mxu0
  %v3248 = vsel %vm61, %v3073, 0
  %3250 = vmatprep.subr.mxu0 0.0
  %3251 = vmatpush1.msra.mxu0 %v2982
  %3252 = vmatprep.subr.mxu0 0.0
  %3253 = vmatpush1.msra.mxu0 %v2983
  %3254 = vmatprep.subr.mxu0 0.0
  %3255 = vmatpush1.msra.mxu0 %v2984
  %3256 = vmatprep.subr.mxu0 0.0
  %3257 = vmatpush1.msra.mxu0 %v2985
  %3258 = vmatprep.subr.mxu0 0.0
  %3259 = vmatpush1.msra.mxu0 0.0
  %3260 = vmatprep.subr.mxu0 0.0
  %3261 = vmatpush1.msra.mxu0 0.0
  %3262 = vmatprep.subr.mxu0 0.0
  %3263 = vmatpush1.msra.mxu0 0.0
  %3264 = vmatprep.subr.mxu0 0.0
  %3265 = vmatpush1.msra.mxu0 0.0
  %3266 = vmatprep.subr.mxu0 0.0
  %3267 = vmatpush1.msra.mxu0 0.0
  %3268 = vmatprep.subr.mxu0 0.0
  %3269 = vmatpush1.msra.mxu0 0.0
  %3270 = vmatprep.subr.mxu0 0.0
  %3271 = vmatpush1.msra.mxu0 0.0
  %3272 = vmatprep.subr.mxu0 0.0
  %3273 = vmatpush1.msra.mxu0 0.0
  %3274 = vmatprep.subr.mxu0 0.0
  %3275 = vmatpush1.msra.mxu0 0.0
  %3276 = vmatprep.subr.mxu0 0.0
  %3277 = vmatpush1.msra.mxu0 0.0
  %3278 = vmatprep.subr.mxu0 0.0
  %3279 = vmatpush1.msra.mxu0 0.0
  %3280 = vmatprep.subr.mxu0 0.0
  %3281 = vmatpush1.msra.mxu0 0.0
  %3282 = vmatprep.subr.mxu0 0.0
  %3283 = vmatpush1.msra.mxu0 0.0
  %3284 = vmatprep.subr.mxu0 0.0
  %3285 = vmatpush1.msra.mxu0 0.0
  %3286 = vmatprep.subr.mxu0 0.0
  %3287 = vmatpush1.msra.mxu0 0.0
  %3288 = vmatprep.subr.mxu0 0.0
  %3289 = vmatpush1.msra.mxu0 0.0
  %3290 = vmatprep.subr.mxu0 0.0
  %3291 = vmatpush1.msra.mxu0 0.0
  %3292 = vmatprep.subr.mxu0 0.0
  %3293 = vmatpush1.msra.mxu0 0.0
  %3294 = vmatprep.subr.mxu0 0.0
  %3295 = vmatpush1.msra.mxu0 0.0
  %3296 = vmatprep.subr.mxu0 0.0
  %3297 = vmatpush1.msra.mxu0 0.0
  %3298 = vmatprep.subr.mxu0 0.0
  %3299 = vmatpush1.msra.mxu0 0.0
  %3300 = vmatprep.subr.mxu0 0.0
  %3301 = vmatpush1.msra.mxu0 0.0
  %3302 = vmatprep.subr.mxu0 0.0
  %3303 = vmatpush1.msra.mxu0 0.0
  %3304 = vmatprep.subr.mxu0 0.0
  %3305 = vmatpush1.msra.mxu0 0.0
  %3306 = vmatprep.subr.mxu0 0.0
  %3307 = vmatpush1.msra.mxu0 0.0
  %3308 = vmatprep.subr.mxu0 0.0
  %3309 = vmatpush1.msra.mxu0 0.0
  %3310 = vmatprep.subr.mxu0 0.0
  %3311 = vmatpush1.msra.mxu0 0.0
  %3312 = vmatprep.subr.mxu0 0.0
  %3313 = vmatpush1.msra.mxu0 0.0
  %3314 = vmatprep.mubr.f32.mxu0 0.0
  %3315 = vmatmul.mubr.f32.gmra.mrb[0].mxu0 %v3248
  %v3316 = vpop.f32.mrb[0].mxu0
  %v3317 = vadd.f32 %v3244, %v3316
  %v3318 = vpop.f32.mrb[0].mxu0
  %3319 = vdwg.mxu0
  %3327 = vrot.lane.b32.xlu0 %v2757, 64
  %v3328 = vpop.permute.xlu0 %3327
  %3329 = vrot.lane.b32.xlu0 %v2758, 64
  %v3330 = vpop.permute.xlu0 %3329
  %3331 = vrot.lane.b32.xlu0 %v2759, 64
  %v3332 = vpop.permute.xlu0 %3331
  %3333 = vrot.lane.b32.xlu0 %v2760, 64
  %v3334 = vpop.permute.xlu0 %3333
  %3335 = vrot.lane.b32.xlu0 %v2761, 64
  %v3336 = vpop.permute.xlu0 %3335
  %3337 = vrot.lane.b32.xlu0 %v2762, 64
  %v3338 = vpop.permute.xlu0 %3337
  %3339 = vrot.lane.b32.xlu0 %v2763, 64
  %v3340 = vpop.permute.xlu0 %3339
  %3348 = vmatprep.subr.mxu0 0.0
  %3349 = vmatpush1.msra.mxu0 %v3328
  %3350 = vmatprep.subr.mxu0 0.0
  %3351 = vmatpush1.msra.mxu0 %v3330
  %3352 = vmatprep.subr.mxu0 0.0
  %3353 = vmatpush1.msra.mxu0 %v3332
  %3354 = vmatprep.subr.mxu0 0.0
  %3355 = vmatpush1.msra.mxu0 %v3334
  %3356 = vmatprep.subr.mxu0 0.0
  %3357 = vmatpush1.msra.mxu0 %v3336
  %3358 = vmatprep.subr.mxu0 0.0
  %3359 = vmatpush1.msra.mxu0 %v3338
  %3360 = vmatprep.subr.mxu0 0.0
  %3361 = vmatpush1.msra.mxu0 %v3340
  %3362 = vmatprep.subr.mxu0 0.0
  %3363 = vmatpush1.msra.mxu0 0.0
  %3364 = vmatprep.subr.mxu0 0.0
  %3365 = vmatpush1.msra.mxu0 0.0
  %3366 = vmatprep.subr.mxu0 0.0
  %3367 = vmatpush1.msra.mxu0 0.0
  %3368 = vmatprep.subr.mxu0 0.0
  %3369 = vmatpush1.msra.mxu0 0.0
  %3370 = vmatprep.subr.mxu0 0.0
  %3371 = vmatpush1.msra.mxu0 0.0
  %3372 = vmatprep.subr.mxu0 0.0
  %3373 = vmatpush1.msra.mxu0 0.0
  %3374 = vmatprep.subr.mxu0 0.0
  %3375 = vmatpush1.msra.mxu0 0.0
  %3376 = vmatprep.subr.mxu0 0.0
  %3377 = vmatpush1.msra.mxu0 0.0
  %3378 = vmatprep.subr.mxu0 0.0
  %3379 = vmatpush1.msra.mxu0 0.0
  %3380 = vmatprep.subr.mxu0 0.0
  %3381 = vmatpush1.msra.mxu0 0.0
  %3382 = vmatprep.subr.mxu0 0.0
  %3383 = vmatpush1.msra.mxu0 0.0
  %3384 = vmatprep.subr.mxu0 0.0
  %3385 = vmatpush1.msra.mxu0 0.0
  %3386 = vmatprep.subr.mxu0 0.0
  %3387 = vmatpush1.msra.mxu0 0.0
  %3388 = vmatprep.subr.mxu0 0.0
  %3389 = vmatpush1.msra.mxu0 0.0
  %3390 = vmatprep.subr.mxu0 0.0
  %3391 = vmatpush1.msra.mxu0 0.0
  %3392 = vmatprep.subr.mxu0 0.0
  %3393 = vmatpush1.msra.mxu0 0.0
  %3394 = vmatprep.subr.mxu0 0.0
  %3395 = vmatpush1.msra.mxu0 0.0
  %3396 = vmatprep.subr.mxu0 0.0
  %3397 = vmatpush1.msra.mxu0 0.0
  %3398 = vmatprep.subr.mxu0 0.0
  %3399 = vmatpush1.msra.mxu0 0.0
  %3400 = vmatprep.subr.mxu0 0.0
  %3401 = vmatpush1.msra.mxu0 0.0
  %3402 = vmatprep.subr.mxu0 0.0
  %3403 = vmatpush1.msra.mxu0 0.0
  %3404 = vmatprep.subr.mxu0 0.0
  %3405 = vmatpush1.msra.mxu0 0.0
  %3406 = vmatprep.subr.mxu0 0.0
  %3407 = vmatpush1.msra.mxu0 0.0
  %3408 = vmatprep.subr.mxu0 0.0
  %3409 = vmatpush1.msra.mxu0 0.0
  %3410 = vmatprep.subr.mxu0 0.0
  %3411 = vmatpush1.msra.mxu0 0.0
  %3412 = vmatprep.mubr.f32.mxu0 0.0
  %3413 = vmatmul.mubr.f32.gmra.mrb[0].mxu0 %v3004
  %v3414 = vpop.f32.mrb[0].mxu0
  %v3415 = vadd.f32 0.0, %v3414
  %v3416 = vpop.f32.mrb[0].mxu0
  %3417 = vdwg.mxu0
  %3425 = vrot.lane.b32.xlu0 %v2813, 32
  %v3426 = vpop.permute.xlu0 %3425
  %3427 = vrot.lane.b32.xlu0 %v2814, 32
  %v3428 = vpop.permute.xlu0 %3427
  %3429 = vrot.lane.b32.xlu0 %v2815, 32
  %v3430 = vpop.permute.xlu0 %3429
  %3431 = vrot.lane.b32.xlu0 %v2816, 32
  %v3432 = vpop.permute.xlu0 %3431
  %3433 = vrot.lane.b32.xlu0 %v2817, 32
  %v3434 = vpop.permute.xlu0 %3433
  %3435 = vrot.lane.b32.xlu0 %v2818, 32
  %v3436 = vpop.permute.xlu0 %3435
  %3437 = vrot.lane.b32.xlu0 %v2819, 32
  %v3438 = vpop.permute.xlu0 %3437
  %3446 = vmatprep.subr.mxu0 0.0
  %3447 = vmatpush1.msra.mxu0 %v3426
  %3448 = vmatprep.subr.mxu0 0.0
  %3449 = vmatpush1.msra.mxu0 %v3428
  %3450 = vmatprep.subr.mxu0 0.0
  %3451 = vmatpush1.msra.mxu0 %v3430
  %3452 = vmatprep.subr.mxu0 0.0
  %3453 = vmatpush1.msra.mxu0 %v3432
  %3454 = vmatprep.subr.mxu0 0.0
  %3455 = vmatpush1.msra.mxu0 %v3434
  %3456 = vmatprep.subr.mxu0 0.0
  %3457 = vmatpush1.msra.mxu0 %v3436
  %3458 = vmatprep.subr.mxu0 0.0
  %3459 = vmatpush1.msra.mxu0 %v3438
  %3460 = vmatprep.subr.mxu0 0.0
  %3461 = vmatpush1.msra.mxu0 0.0
  %3462 = vmatprep.subr.mxu0 0.0
  %3463 = vmatpush1.msra.mxu0 0.0
  %3464 = vmatprep.subr.mxu0 0.0
  %3465 = vmatpush1.msra.mxu0 0.0
  %3466 = vmatprep.subr.mxu0 0.0
  %3467 = vmatpush1.msra.mxu0 0.0
  %3468 = vmatprep.subr.mxu0 0.0
  %3469 = vmatpush1.msra.mxu0 0.0
  %3470 = vmatprep.subr.mxu0 0.0
  %3471 = vmatpush1.msra.mxu0 0.0
  %3472 = vmatprep.subr.mxu0 0.0
  %3473 = vmatpush1.msra.mxu0 0.0
  %3474 = vmatprep.subr.mxu0 0.0
  %3475 = vmatpush1.msra.mxu0 0.0
  %3476 = vmatprep.subr.mxu0 0.0
  %3477 = vmatpush1.msra.mxu0 0.0
  %3478 = vmatprep.subr.mxu0 0.0
  %3479 = vmatpush1.msra.mxu0 0.0
  %3480 = vmatprep.subr.mxu0 0.0
  %3481 = vmatpush1.msra.mxu0 0.0
  %3482 = vmatprep.subr.mxu0 0.0
  %3483 = vmatpush1.msra.mxu0 0.0
  %3484 = vmatprep.subr.mxu0 0.0
  %3485 = vmatpush1.msra.mxu0 0.0
  %3486 = vmatprep.subr.mxu0 0.0
  %3487 = vmatpush1.msra.mxu0 0.0
  %3488 = vmatprep.subr.mxu0 0.0
  %3489 = vmatpush1.msra.mxu0 0.0
  %3490 = vmatprep.subr.mxu0 0.0
  %3491 = vmatpush1.msra.mxu0 0.0
  %3492 = vmatprep.subr.mxu0 0.0
  %3493 = vmatpush1.msra.mxu0 0.0
  %3494 = vmatprep.subr.mxu0 0.0
  %3495 = vmatpush1.msra.mxu0 0.0
  %3496 = vmatprep.subr.mxu0 0.0
  %3497 = vmatpush1.msra.mxu0 0.0
  %3498 = vmatprep.subr.mxu0 0.0
  %3499 = vmatpush1.msra.mxu0 0.0
  %3500 = vmatprep.subr.mxu0 0.0
  %3501 = vmatpush1.msra.mxu0 0.0
  %3502 = vmatprep.subr.mxu0 0.0
  %3503 = vmatpush1.msra.mxu0 0.0
  %3504 = vmatprep.subr.mxu0 0.0
  %3505 = vmatpush1.msra.mxu0 0.0
  %3506 = vmatprep.subr.mxu0 0.0
  %3507 = vmatpush1.msra.mxu0 0.0
  %3508 = vmatprep.subr.mxu0 0.0
  %3509 = vmatpush1.msra.mxu0 0.0
  %3510 = vmatprep.mubr.f32.mxu0 0.0
  %3511 = vmatmul.mubr.f32.gmra.mrb[0].mxu0 %v3004
  %v3512 = vpop.f32.mrb[0].mxu0
  %v3513 = vadd.f32 0.0, %v3512
  %v3514 = vpop.f32.mrb[0].mxu0
  %3515 = vdwg.mxu0
  %v3517 = vsel %vm61, %v3513, 0
  %3519 = vmatprep.subr.mxu0 0.0
  %3520 = vmatpush1.msra.mxu0 %v2994
  %3521 = vmatprep.subr.mxu0 0.0
  %3522 = vmatpush1.msra.mxu0 %v2995
  %3523 = vmatprep.subr.mxu0 0.0
  %3524 = vmatpush1.msra.mxu0 %v2996
  %3525 = vmatprep.subr.mxu0 0.0
  %3526 = vmatpush1.msra.mxu0 %v2997
  %3527 = vmatprep.subr.mxu0 0.0
  %3528 = vmatpush1.msra.mxu0 0.0
  %3529 = vmatprep.subr.mxu0 0.0
  %3530 = vmatpush1.msra.mxu0 0.0
  %3531 = vmatprep.subr.mxu0 0.0
  %3532 = vmatpush1.msra.mxu0 0.0
  %3533 = vmatprep.subr.mxu0 0.0
  %3534 = vmatpush1.msra.mxu0 0.0
  %3535 = vmatprep.subr.mxu0 0.0
  %3536 = vmatpush1.msra.mxu0 0.0
  %3537 = vmatprep.subr.mxu0 0.0
  %3538 = vmatpush1.msra.mxu0 0.0
  %3539 = vmatprep.subr.mxu0 0.0
  %3540 = vmatpush1.msra.mxu0 0.0
  %3541 = vmatprep.subr.mxu0 0.0
  %3542 = vmatpush1.msra.mxu0 0.0
  %3543 = vmatprep.subr.mxu0 0.0
  %3544 = vmatpush1.msra.mxu0 0.0
  %3545 = vmatprep.subr.mxu0 0.0
  %3546 = vmatpush1.msra.mxu0 0.0
  %3547 = vmatprep.subr.mxu0 0.0
  %3548 = vmatpush1.msra.mxu0 0.0
  %3549 = vmatprep.subr.mxu0 0.0
  %3550 = vmatpush1.msra.mxu0 0.0
  %3551 = vmatprep.subr.mxu0 0.0
  %3552 = vmatpush1.msra.mxu0 0.0
  %3553 = vmatprep.subr.mxu0 0.0
  %3554 = vmatpush1.msra.mxu0 0.0
  %3555 = vmatprep.subr.mxu0 0.0
  %3556 = vmatpush1.msra.mxu0 0.0
  %3557 = vmatprep.subr.mxu0 0.0
  %3558 = vmatpush1.msra.mxu0 0.0
  %3559 = vmatprep.subr.mxu0 0.0
  %3560 = vmatpush1.msra.mxu0 0.0
  %3561 = vmatprep.subr.mxu0 0.0
  %3562 = vmatpush1.msra.mxu0 0.0
  %3563 = vmatprep.subr.mxu0 0.0
  %3564 = vmatpush1.msra.mxu0 0.0
  %3565 = vmatprep.subr.mxu0 0.0
  %3566 = vmatpush1.msra.mxu0 0.0
  %3567 = vmatprep.subr.mxu0 0.0
  %3568 = vmatpush1.msra.mxu0 0.0
  %3569 = vmatprep.subr.mxu0 0.0
  %3570 = vmatpush1.msra.mxu0 0.0
  %3571 = vmatprep.subr.mxu0 0.0
  %3572 = vmatpush1.msra.mxu0 0.0
  %3573 = vmatprep.subr.mxu0 0.0
  %3574 = vmatpush1.msra.mxu0 0.0
  %3575 = vmatprep.subr.mxu0 0.0
  %3576 = vmatpush1.msra.mxu0 0.0
  %3577 = vmatprep.subr.mxu0 0.0
  %3578 = vmatpush1.msra.mxu0 0.0
  %3579 = vmatprep.subr.mxu0 0.0
  %3580 = vmatpush1.msra.mxu0 0.0
  %3581 = vmatprep.subr.mxu0 0.0
  %3582 = vmatpush1.msra.mxu0 0.0
  %3583 = vmatprep.mubr.f32.mxu0 0.0
  %3584 = vmatmul.mubr.f32.gmra.mrb[0].mxu0 %v3517
  %v3585 = vpop.f32.mrb[0].mxu0
  %v3586 = vadd.f32 0.0, %v3585
  %v3587 = vpop.f32.mrb[0].mxu0
  %3588 = vdwg.mxu0
  %v3590 = vsel %vm61, %v3415, 0
  %3592 = vmatprep.subr.mxu0 0.0
  %3593 = vmatpush1.msra.mxu0 %v2990
  %3594 = vmatprep.subr.mxu0 0.0
  %3595 = vmatpush1.msra.mxu0 %v2991
  %3596 = vmatprep.subr.mxu0 0.0
  %3597 = vmatpush1.msra.mxu0 %v2992
  %3598 = vmatprep.subr.mxu0 0.0
  %3599 = vmatpush1.msra.mxu0 %v2993
  %3600 = vmatprep.subr.mxu0 0.0
  %3601 = vmatpush1.msra.mxu0 0.0
  %3602 = vmatprep.subr.mxu0 0.0
  %3603 = vmatpush1.msra.mxu0 0.0
  %3604 = vmatprep.subr.mxu0 0.0
  %3605 = vmatpush1.msra.mxu0 0.0
  %3606 = vmatprep.subr.mxu0 0.0
  %3607 = vmatpush1.msra.mxu0 0.0
  %3608 = vmatprep.subr.mxu0 0.0
  %3609 = vmatpush1.msra.mxu0 0.0
  %3610 = vmatprep.subr.mxu0 0.0
  %3611 = vmatpush1.msra.mxu0 0.0
  %3612 = vmatprep.subr.mxu0 0.0
  %3613 = vmatpush1.msra.mxu0 0.0
  %3614 = vmatprep.subr.mxu0 0.0
  %3615 = vmatpush1.msra.mxu0 0.0
  %3616 = vmatprep.subr.mxu0 0.0
  %3617 = vmatpush1.msra.mxu0 0.0
  %3618 = vmatprep.subr.mxu0 0.0
  %3619 = vmatpush1.msra.mxu0 0.0
  %3620 = vmatprep.subr.mxu0 0.0
  %3621 = vmatpush1.msra.mxu0 0.0
  %3622 = vmatprep.subr.mxu0 0.0
  %3623 = vmatpush1.msra.mxu0 0.0
  %3624 = vmatprep.subr.mxu0 0.0
  %3625 = vmatpush1.msra.mxu0 0.0
  %3626 = vmatprep.subr.mxu0 0.0
  %3627 = vmatpush1.msra.mxu0 0.0
  %3628 = vmatprep.subr.mxu0 0.0
  %3629 = vmatpush1.msra.mxu0 0.0
  %3630 = vmatprep.subr.mxu0 0.0
  %3631 = vmatpush1.msra.mxu0 0.0
  %3632 = vmatprep.subr.mxu0 0.0
  %3633 = vmatpush1.msra.mxu0 0.0
  %3634 = vmatprep.subr.mxu0 0.0
  %3635 = vmatpush1.msra.mxu0 0.0
  %3636 = vmatprep.subr.mxu0 0.0
  %3637 = vmatpush1.msra.mxu0 0.0
  %3638 = vmatprep.subr.mxu0 0.0
  %3639 = vmatpush1.msra.mxu0 0.0
  %3640 = vmatprep.subr.mxu0 0.0
  %3641 = vmatpush1.msra.mxu0 0.0
  %3642 = vmatprep.subr.mxu0 0.0
  %3643 = vmatpush1.msra.mxu0 0.0
  %3644 = vmatprep.subr.mxu0 0.0
  %3645 = vmatpush1.msra.mxu0 0.0
  %3646 = vmatprep.subr.mxu0 0.0
  %3647 = vmatpush1.msra.mxu0 0.0
  %3648 = vmatprep.subr.mxu0 0.0
  %3649 = vmatpush1.msra.mxu0 0.0
  %3650 = vmatprep.subr.mxu0 0.0
  %3651 = vmatpush1.msra.mxu0 0.0
  %3652 = vmatprep.subr.mxu0 0.0
  %3653 = vmatpush1.msra.mxu0 0.0
  %3654 = vmatprep.subr.mxu0 0.0
  %3655 = vmatpush1.msra.mxu0 0.0
  %3656 = vmatprep.mubr.f32.mxu0 0.0
  %3657 = vmatmul.mubr.f32.gmra.mrb[0].mxu0 %v3590
  %v3658 = vpop.f32.mrb[0].mxu0
  %v3659 = vadd.f32 %v3586, %v3658
  %v3660 = vpop.f32.mrb[0].mxu0
  %3661 = vdwg.mxu0
  %3662 = vmatprep.subr.mxu0 0.0
  %3663 = vmatpush1.msra.mxu0 %v2960
  %3664 = vmatprep.subr.mxu0 0.0
  %3665 = vmatpush1.msra.mxu0 %v2961
  %3666 = vmatprep.subr.mxu0 0.0
  %3667 = vmatpush1.msra.mxu0 %v2962
  %3668 = vmatprep.subr.mxu0 0.0
  %3669 = vmatpush1.msra.mxu0 %v2963
  %3670 = vmatprep.subr.mxu0 0.0
  %3671 = vmatpush1.msra.mxu0 %v2964
  %3672 = vmatprep.subr.mxu0 0.0
  %3673 = vmatpush1.msra.mxu0 %v2965
  %3674 = vmatprep.subr.mxu0 0.0
  %3675 = vmatpush1.msra.mxu0 %v2966
  %3676 = vmatprep.subr.mxu0 0.0
  %3677 = vmatpush1.msra.mxu0 0.0
  %3678 = vmatprep.subr.mxu0 0.0
  %3679 = vmatpush1.msra.mxu0 0.0
  %3680 = vmatprep.subr.mxu0 0.0
  %3681 = vmatpush1.msra.mxu0 0.0
  %3682 = vmatprep.subr.mxu0 0.0
  %3683 = vmatpush1.msra.mxu0 0.0
  %3684 = vmatprep.subr.mxu0 0.0
  %3685 = vmatpush1.msra.mxu0 0.0
  %3686 = vmatprep.subr.mxu0 0.0
  %3687 = vmatpush1.msra.mxu0 0.0
  %3688 = vmatprep.subr.mxu0 0.0
  %3689 = vmatpush1.msra.mxu0 0.0
  %3690 = vmatprep.subr.mxu0 0.0
  %3691 = vmatpush1.msra.mxu0 0.0
  %3692 = vmatprep.subr.mxu0 0.0
  %3693 = vmatpush1.msra.mxu0 0.0
  %3694 = vmatprep.subr.mxu0 0.0
  %3695 = vmatpush1.msra.mxu0 0.0
  %3696 = vmatprep.subr.mxu0 0.0
  %3697 = vmatpush1.msra.mxu0 0.0
  %3698 = vmatprep.subr.mxu0 0.0
  %3699 = vmatpush1.msra.mxu0 0.0
  %3700 = vmatprep.subr.mxu0 0.0
  %3701 = vmatpush1.msra.mxu0 0.0
  %3702 = vmatprep.subr.mxu0 0.0
  %3703 = vmatpush1.msra.mxu0 0.0
  %3704 = vmatprep.subr.mxu0 0.0
  %3705 = vmatpush1.msra.mxu0 0.0
  %3706 = vmatprep.subr.mxu0 0.0
  %3707 = vmatpush1.msra.mxu0 0.0
  %3708 = vmatprep.subr.mxu0 0.0
  %3709 = vmatpush1.msra.mxu0 0.0
  %3710 = vmatprep.subr.mxu0 0.0
  %3711 = vmatpush1.msra.mxu0 0.0
  %3712 = vmatprep.subr.mxu0 0.0
  %3713 = vmatpush1.msra.mxu0 0.0
  %3714 = vmatprep.subr.mxu0 0.0
  %3715 = vmatpush1.msra.mxu0 0.0
  %3716 = vmatprep.subr.mxu0 0.0
  %3717 = vmatpush1.msra.mxu0 0.0
  %3718 = vmatprep.subr.mxu0 0.0
  %3719 = vmatpush1.msra.mxu0 0.0
  %3720 = vmatprep.subr.mxu0 0.0
  %3721 = vmatpush1.msra.mxu0 0.0
  %3722 = vmatprep.subr.mxu0 0.0
  %3723 = vmatpush1.msra.mxu0 0.0
  %3724 = vmatprep.subr.mxu0 0.0
  %3725 = vmatpush1.msra.mxu0 0.0
  %3726 = vmatprep.mubr.f32.mxu0 0.0
  %3727 = vmatmul.mubr.f32.gmra.mrb[0].mxu0 %v3004
  %v3728 = vpop.f32.mrb[0].mxu0
  %v3729 = vadd.f32 0.0, %v3728
  %v3730 = vpop.f32.mrb[0].mxu0
  %3731 = vdwg.mxu0
  %v3733 = vsel %vm61, %v3729, 0
  %3735 = vmatprep.subr.mxu0 0.0
  %3736 = vmatpush1.msra.mxu0 %v2998
  %3737 = vmatprep.subr.mxu0 0.0
  %3738 = vmatpush1.msra.mxu0 %v2999
  %3739 = vmatprep.subr.mxu0 0.0
  %3740 = vmatpush1.msra.mxu0 %v3000
  %3741 = vmatprep.subr.mxu0 0.0
  %3742 = vmatpush1.msra.mxu0 %v3001
  %3743 = vmatprep.subr.mxu0 0.0
  %3744 = vmatpush1.msra.mxu0 0.0
  %3745 = vmatprep.subr.mxu0 0.0
  %3746 = vmatpush1.msra.mxu0 0.0
  %3747 = vmatprep.subr.mxu0 0.0
  %3748 = vmatpush1.msra.mxu0 0.0
  %3749 = vmatprep.subr.mxu0 0.0
  %3750 = vmatpush1.msra.mxu0 0.0
  %3751 = vmatprep.subr.mxu0 0.0
  %3752 = vmatpush1.msra.mxu0 0.0
  %3753 = vmatprep.subr.mxu0 0.0
  %3754 = vmatpush1.msra.mxu0 0.0
  %3755 = vmatprep.subr.mxu0 0.0
  %3756 = vmatpush1.msra.mxu0 0.0
  %3757 = vmatprep.subr.mxu0 0.0
  %3758 = vmatpush1.msra.mxu0 0.0
  %3759 = vmatprep.subr.mxu0 0.0
  %3760 = vmatpush1.msra.mxu0 0.0
  %3761 = vmatprep.subr.mxu0 0.0
  %3762 = vmatpush1.msra.mxu0 0.0
  %3763 = vmatprep.subr.mxu0 0.0
  %3764 = vmatpush1.msra.mxu0 0.0
  %3765 = vmatprep.subr.mxu0 0.0
  %3766 = vmatpush1.msra.mxu0 0.0
  %3767 = vmatprep.subr.mxu0 0.0
  %3768 = vmatpush1.msra.mxu0 0.0
  %3769 = vmatprep.subr.mxu0 0.0
  %3770 = vmatpush1.msra.mxu0 0.0
  %3771 = vmatprep.subr.mxu0 0.0
  %3772 = vmatpush1.msra.mxu0 0.0
  %3773 = vmatprep.subr.mxu0 0.0
  %3774 = vmatpush1.msra.mxu0 0.0
  %3775 = vmatprep.subr.mxu0 0.0
  %3776 = vmatpush1.msra.mxu0 0.0
  %3777 = vmatprep.subr.mxu0 0.0
  %3778 = vmatpush1.msra.mxu0 0.0
  %3779 = vmatprep.subr.mxu0 0.0
  %3780 = vmatpush1.msra.mxu0 0.0
  %3781 = vmatprep.subr.mxu0 0.0
  %3782 = vmatpush1.msra.mxu0 0.0
  %3783 = vmatprep.subr.mxu0 0.0
  %3784 = vmatpush1.msra.mxu0 0.0
  %3785 = vmatprep.subr.mxu0 0.0
  %3786 = vmatpush1.msra.mxu0 0.0
  %3787 = vmatprep.subr.mxu0 0.0
  %3788 = vmatpush1.msra.mxu0 0.0
  %3789 = vmatprep.subr.mxu0 0.0
  %3790 = vmatpush1.msra.mxu0 0.0
  %3791 = vmatprep.subr.mxu0 0.0
  %3792 = vmatpush1.msra.mxu0 0.0
  %3793 = vmatprep.subr.mxu0 0.0
  %3794 = vmatpush1.msra.mxu0 0.0
  %3795 = vmatprep.subr.mxu0 0.0
  %3796 = vmatpush1.msra.mxu0 0.0
  %3797 = vmatprep.subr.mxu0 0.0
  %3798 = vmatpush1.msra.mxu0 0.0
  %3799 = vmatprep.mubr.f32.mxu0 0.0
  %3800 = vmatmul.mubr.f32.gmra.mrb[0].mxu0 %v3733
  %v3801 = vpop.f32.mrb[0].mxu0
  %v3802 = vadd.f32 0.0, %v3801
  %v3803 = vpop.f32.mrb[0].mxu0
  %3804 = vdwg.mxu0
  %v3805 = vadd.f32 %v3659, %v3802
  %3813 = vrot.lane.b32.xlu0 %v2764, 64
  %v3814 = vpop.permute.xlu0 %3813
  %3815 = vrot.lane.b32.xlu0 %v2765, 64
  %v3816 = vpop.permute.xlu0 %3815
  %3817 = vrot.lane.b32.xlu0 %v2766, 64
  %v3818 = vpop.permute.xlu0 %3817
  %3819 = vrot.lane.b32.xlu0 %v2767, 64
  %v3820 = vpop.permute.xlu0 %3819
  %3821 = vrot.lane.b32.xlu0 %v2768, 64
  %v3822 = vpop.permute.xlu0 %3821
  %3823 = vrot.lane.b32.xlu0 %v2769, 64
  %v3824 = vpop.permute.xlu0 %3823
  %3825 = vrot.lane.b32.xlu0 %v2770, 64
  %v3826 = vpop.permute.xlu0 %3825
  %3834 = vmatprep.subr.mxu0 0.0
  %3835 = vmatpush1.msra.mxu0 %v3814
  %3836 = vmatprep.subr.mxu0 0.0
  %3837 = vmatpush1.msra.mxu0 %v3816
  %3838 = vmatprep.subr.mxu0 0.0
  %3839 = vmatpush1.msra.mxu0 %v3818
  %3840 = vmatprep.subr.mxu0 0.0
  %3841 = vmatpush1.msra.mxu0 %v3820
  %3842 = vmatprep.subr.mxu0 0.0
  %3843 = vmatpush1.msra.mxu0 %v3822
  %3844 = vmatprep.subr.mxu0 0.0
  %3845 = vmatpush1.msra.mxu0 %v3824
  %3846 = vmatprep.subr.mxu0 0.0
  %3847 = vmatpush1.msra.mxu0 %v3826
  %3848 = vmatprep.subr.mxu0 0.0
  %3849 = vmatpush1.msra.mxu0 0.0
  %3850 = vmatprep.subr.mxu0 0.0
  %3851 = vmatpush1.msra.mxu0 0.0
  %3852 = vmatprep.subr.mxu0 0.0
  %3853 = vmatpush1.msra.mxu0 0.0
  %3854 = vmatprep.subr.mxu0 0.0
  %3855 = vmatpush1.msra.mxu0 0.0
  %3856 = vmatprep.subr.mxu0 0.0
  %3857 = vmatpush1.msra.mxu0 0.0
  %3858 = vmatprep.subr.mxu0 0.0
  %3859 = vmatpush1.msra.mxu0 0.0
  %3860 = vmatprep.subr.mxu0 0.0
  %3861 = vmatpush1.msra.mxu0 0.0
  %3862 = vmatprep.subr.mxu0 0.0
  %3863 = vmatpush1.msra.mxu0 0.0
  %3864 = vmatprep.subr.mxu0 0.0
  %3865 = vmatpush1.msra.mxu0 0.0
  %3866 = vmatprep.subr.mxu0 0.0
  %3867 = vmatpush1.msra.mxu0 0.0
  %3868 = vmatprep.subr.mxu0 0.0
  %3869 = vmatpush1.msra.mxu0 0.0
  %3870 = vmatprep.subr.mxu0 0.0
  %3871 = vmatpush1.msra.mxu0 0.0
  %3872 = vmatprep.subr.mxu0 0.0
  %3873 = vmatpush1.msra.mxu0 0.0
  %3874 = vmatprep.subr.mxu0 0.0
  %3875 = vmatpush1.msra.mxu0 0.0
  %3876 = vmatprep.subr.mxu0 0.0
  %3877 = vmatpush1.msra.mxu0 0.0
  %3878 = vmatprep.subr.mxu0 0.0
  %3879 = vmatpush1.msra.mxu0 0.0
  %3880 = vmatprep.subr.mxu0 0.0
  %3881 = vmatpush1.msra.mxu0 0.0
  %3882 = vmatprep.subr.mxu0 0.0
  %3883 = vmatpush1.msra.mxu0 0.0
  %3884 = vmatprep.subr.mxu0 0.0
  %3885 = vmatpush1.msra.mxu0 0.0
  %3886 = vmatprep.subr.mxu0 0.0
  %3887 = vmatpush1.msra.mxu0 0.0
  %3888 = vmatprep.subr.mxu0 0.0
  %3889 = vmatpush1.msra.mxu0 0.0
  %3890 = vmatprep.subr.mxu0 0.0
  %3891 = vmatpush1.msra.mxu0 0.0
  %3892 = vmatprep.subr.mxu0 0.0
  %3893 = vmatpush1.msra.mxu0 0.0
  %3894 = vmatprep.subr.mxu0 0.0
  %3895 = vmatpush1.msra.mxu0 0.0
  %3896 = vmatprep.subr.mxu0 0.0
  %3897 = vmatpush1.msra.mxu0 0.0
  %3898 = vmatprep.mubr.f32.mxu0 0.0
  %3899 = vmatmul.mubr.f32.gmra.mrb[0].mxu0 %v3004
  %v3900 = vpop.f32.mrb[0].mxu0
  %v3901 = vadd.f32 0.0, %v3900
  %v3902 = vpop.f32.mrb[0].mxu0
  %3903 = vdwg.mxu0
  %3911 = vrot.lane.b32.xlu0 %v2848, 32
  %v3912 = vpop.permute.xlu0 %3911
  %3913 = vrot.lane.b32.xlu0 %v2849, 32
  %v3914 = vpop.permute.xlu0 %3913
  %3915 = vrot.lane.b32.xlu0 %v2850, 32
  %v3916 = vpop.permute.xlu0 %3915
  %3917 = vrot.lane.b32.xlu0 %v2851, 32
  %v3918 = vpop.permute.xlu0 %3917
  %3919 = vrot.lane.b32.xlu0 %v2852, 32
  %v3920 = vpop.permute.xlu0 %3919
  %3921 = vrot.lane.b32.xlu0 %v2853, 32
  %v3922 = vpop.permute.xlu0 %3921
  %3923 = vrot.lane.b32.xlu0 %v2854, 32
  %v3924 = vpop.permute.xlu0 %3923
  %3932 = vmatprep.subr.mxu0 0.0
  %3933 = vmatpush1.msra.mxu0 %v3912
  %3934 = vmatprep.subr.mxu0 0.0
  %3935 = vmatpush1.msra.mxu0 %v3914
  %3936 = vmatprep.subr.mxu0 0.0
  %3937 = vmatpush1.msra.mxu0 %v3916
  %3938 = vmatprep.subr.mxu0 0.0
  %3939 = vmatpush1.msra.mxu0 %v3918
  %3940 = vmatprep.subr.mxu0 0.0
  %3941 = vmatpush1.msra.mxu0 %v3920
  %3942 = vmatprep.subr.mxu0 0.0
  %3943 = vmatpush1.msra.mxu0 %v3922
  %3944 = vmatprep.subr.mxu0 0.0
  %3945 = vmatpush1.msra.mxu0 %v3924
  %3946 = vmatprep.subr.mxu0 0.0
  %3947 = vmatpush1.msra.mxu0 0.0
  %3948 = vmatprep.subr.mxu0 0.0
  %3949 = vmatpush1.msra.mxu0 0.0
  %3950 = vmatprep.subr.mxu0 0.0
  %3951 = vmatpush1.msra.mxu0 0.0
  %3952 = vmatprep.subr.mxu0 0.0
  %3953 = vmatpush1.msra.mxu0 0.0
  %3954 = vmatprep.subr.mxu0 0.0
  %3955 = vmatpush1.msra.mxu0 0.0
  %3956 = vmatprep.subr.mxu0 0.0
  %3957 = vmatpush1.msra.mxu0 0.0
  %3958 = vmatprep.subr.mxu0 0.0
  %3959 = vmatpush1.msra.mxu0 0.0
  %3960 = vmatprep.subr.mxu0 0.0
  %3961 = vmatpush1.msra.mxu0 0.0
  %3962 = vmatprep.subr.mxu0 0.0
  %3963 = vmatpush1.msra.mxu0 0.0
  %3964 = vmatprep.subr.mxu0 0.0
  %3965 = vmatpush1.msra.mxu0 0.0
  %3966 = vmatprep.subr.mxu0 0.0
  %3967 = vmatpush1.msra.mxu0 0.0
  %3968 = vmatprep.subr.mxu0 0.0
  %3969 = vmatpush1.msra.mxu0 0.0
  %3970 = vmatprep.subr.mxu0 0.0
  %3971 = vmatpush1.msra.mxu0 0.0
  %3972 = vmatprep.subr.mxu0 0.0
  %3973 = vmatpush1.msra.mxu0 0.0
  %3974 = vmatprep.subr.mxu0 0.0
  %3975 = vmatpush1.msra.mxu0 0.0
  %3976 = vmatprep.subr.mxu0 0.0
  %3977 = vmatpush1.msra.mxu0 0.0
  %3978 = vmatprep.subr.mxu0 0.0
  %3979 = vmatpush1.msra.mxu0 0.0
  %3980 = vmatprep.subr.mxu0 0.0
  %3981 = vmatpush1.msra.mxu0 0.0
  %3982 = vmatprep.subr.mxu0 0.0
  %3983 = vmatpush1.msra.mxu0 0.0
  %3984 = vmatprep.subr.mxu0 0.0
  %3985 = vmatpush1.msra.mxu0 0.0
  %3986 = vmatprep.subr.mxu0 0.0
  %3987 = vmatpush1.msra.mxu0 0.0
  %3988 = vmatprep.subr.mxu0 0.0
  %3989 = vmatpush1.msra.mxu0 0.0
  %3990 = vmatprep.subr.mxu0 0.0
  %3991 = vmatpush1.msra.mxu0 0.0
  %3992 = vmatprep.subr.mxu0 0.0
  %3993 = vmatpush1.msra.mxu0 0.0
  %3994 = vmatprep.subr.mxu0 0.0
  %3995 = vmatpush1.msra.mxu0 0.0
  %3996 = vmatprep.mubr.f32.mxu0 0.0
  %3997 = vmatmul.mubr.f32.gmra.mrb[0].mxu0 %v3004
  %v3998 = vpop.f32.mrb[0].mxu0
  %v3999 = vadd.f32 0.0, %v3998
  %v4000 = vpop.f32.mrb[0].mxu0
  %4001 = vdwg.mxu0
  %v4003 = vsel %vm61, %v3999, 0
  %4005 = vmatprep.subr.mxu0 0.0
  %4006 = vmatpush1.msra.mxu0 %v2994
  %4007 = vmatprep.subr.mxu0 0.0
  %4008 = vmatpush1.msra.mxu0 %v2995
  %4009 = vmatprep.subr.mxu0 0.0
  %4010 = vmatpush1.msra.mxu0 %v2996
  %4011 = vmatprep.subr.mxu0 0.0
  %4012 = vmatpush1.msra.mxu0 %v2997
  %4013 = vmatprep.subr.mxu0 0.0
  %4014 = vmatpush1.msra.mxu0 0.0
  %4015 = vmatprep.subr.mxu0 0.0
  %4016 = vmatpush1.msra.mxu0 0.0
  %4017 = vmatprep.subr.mxu0 0.0
  %4018 = vmatpush1.msra.mxu0 0.0
  %4019 = vmatprep.subr.mxu0 0.0
  %4020 = vmatpush1.msra.mxu0 0.0
  %4021 = vmatprep.subr.mxu0 0.0
  %4022 = vmatpush1.msra.mxu0 0.0
  %4023 = vmatprep.subr.mxu0 0.0
  %4024 = vmatpush1.msra.mxu0 0.0
  %4025 = vmatprep.subr.mxu0 0.0
  %4026 = vmatpush1.msra.mxu0 0.0
  %4027 = vmatprep.subr.mxu0 0.0
  %4028 = vmatpush1.msra.mxu0 0.0
  %4029 = vmatprep.subr.mxu0 0.0
  %4030 = vmatpush1.msra.mxu0 0.0
  %4031 = vmatprep.subr.mxu0 0.0
  %4032 = vmatpush1.msra.mxu0 0.0
  %4033 = vmatprep.subr.mxu0 0.0
  %4034 = vmatpush1.msra.mxu0 0.0
  %4035 = vmatprep.subr.mxu0 0.0
  %4036 = vmatpush1.msra.mxu0 0.0
  %4037 = vmatprep.subr.mxu0 0.0
  %4038 = vmatpush1.msra.mxu0 0.0
  %4039 = vmatprep.subr.mxu0 0.0
  %4040 = vmatpush1.msra.mxu0 0.0
  %4041 = vmatprep.subr.mxu0 0.0
  %4042 = vmatpush1.msra.mxu0 0.0
  %4043 = vmatprep.subr.mxu0 0.0
  %4044 = vmatpush1.msra.mxu0 0.0
  %4045 = vmatprep.subr.mxu0 0.0
  %4046 = vmatpush1.msra.mxu0 0.0
  %4047 = vmatprep.subr.mxu0 0.0
  %4048 = vmatpush1.msra.mxu0 0.0
  %4049 = vmatprep.subr.mxu0 0.0
  %4050 = vmatpush1.msra.mxu0 0.0
  %4051 = vmatprep.subr.mxu0 0.0
  %4052 = vmatpush1.msra.mxu0 0.0
  %4053 = vmatprep.subr.mxu0 0.0
  %4054 = vmatpush1.msra.mxu0 0.0
  %4055 = vmatprep.subr.mxu0 0.0
  %4056 = vmatpush1.msra.mxu0 0.0
  %4057 = vmatprep.subr.mxu0 0.0
  %4058 = vmatpush1.msra.mxu0 0.0
  %4059 = vmatprep.subr.mxu0 0.0
  %4060 = vmatpush1.msra.mxu0 0.0
  %4061 = vmatprep.subr.mxu0 0.0
  %4062 = vmatpush1.msra.mxu0 0.0
  %4063 = vmatprep.subr.mxu0 0.0
  %4064 = vmatpush1.msra.mxu0 0.0
  %4065 = vmatprep.subr.mxu0 0.0
  %4066 = vmatpush1.msra.mxu0 0.0
  %4067 = vmatprep.subr.mxu0 0.0
  %4068 = vmatpush1.msra.mxu0 0.0
  %4069 = vmatprep.mubr.f32.mxu0 0.0
  %4070 = vmatmul.mubr.f32.gmra.mrb[0].mxu0 %v4003
  %v4071 = vpop.f32.mrb[0].mxu0
  %v4072 = vadd.f32 0.0, %v4071
  %v4073 = vpop.f32.mrb[0].mxu0
  %4074 = vdwg.mxu0
  %v4076 = vsel %vm61, %v3901, 0
  %4078 = vmatprep.subr.mxu0 0.0
  %4079 = vmatpush1.msra.mxu0 %v2990
  %4080 = vmatprep.subr.mxu0 0.0
  %4081 = vmatpush1.msra.mxu0 %v2991
  %4082 = vmatprep.subr.mxu0 0.0
  %4083 = vmatpush1.msra.mxu0 %v2992
  %4084 = vmatprep.subr.mxu0 0.0
  %4085 = vmatpush1.msra.mxu0 %v2993
  %4086 = vmatprep.subr.mxu0 0.0
  %4087 = vmatpush1.msra.mxu0 0.0
  %4088 = vmatprep.subr.mxu0 0.0
  %4089 = vmatpush1.msra.mxu0 0.0
  %4090 = vmatprep.subr.mxu0 0.0
  %4091 = vmatpush1.msra.mxu0 0.0
  %4092 = vmatprep.subr.mxu0 0.0
  %4093 = vmatpush1.msra.mxu0 0.0
  %4094 = vmatprep.subr.mxu0 0.0
  %4095 = vmatpush1.msra.mxu0 0.0
  %4096 = vmatprep.subr.mxu0 0.0
  %4097 = vmatpush1.msra.mxu0 0.0
  %4098 = vmatprep.subr.mxu0 0.0
  %4099 = vmatpush1.msra.mxu0 0.0
  %4100 = vmatprep.subr.mxu0 0.0
  %4101 = vmatpush1.msra.mxu0 0.0
  %4102 = vmatprep.subr.mxu0 0.0
  %4103 = vmatpush1.msra.mxu0 0.0
  %4104 = vmatprep.subr.mxu0 0.0
  %4105 = vmatpush1.msra.mxu0 0.0
  %4106 = vmatprep.subr.mxu0 0.0
  %4107 = vmatpush1.msra.mxu0 0.0
  %4108 = vmatprep.subr.mxu0 0.0
  %4109 = vmatpush1.msra.mxu0 0.0
  %4110 = vmatprep.subr.mxu0 0.0
  %4111 = vmatpush1.msra.mxu0 0.0
  %4112 = vmatprep.subr.mxu0 0.0
  %4113 = vmatpush1.msra.mxu0 0.0
  %4114 = vmatprep.subr.mxu0 0.0
  %4115 = vmatpush1.msra.mxu0 0.0
  %4116 = vmatprep.subr.mxu0 0.0
  %4117 = vmatpush1.msra.mxu0 0.0
  %4118 = vmatprep.subr.mxu0 0.0
  %4119 = vmatpush1.msra.mxu0 0.0
  %4120 = vmatprep.subr.mxu0 0.0
  %4121 = vmatpush1.msra.mxu0 0.0
  %4122 = vmatprep.subr.mxu0 0.0
  %4123 = vmatpush1.msra.mxu0 0.0
  %4124 = vmatprep.subr.mxu0 0.0
  %4125 = vmatpush1.msra.mxu0 0.0
  %4126 = vmatprep.subr.mxu0 0.0
  %4127 = vmatpush1.msra.mxu0 0.0
  %4128 = vmatprep.subr.mxu0 0.0
  %4129 = vmatpush1.msra.mxu0 0.0
  %4130 = vmatprep.subr.mxu0 0.0
  %4131 = vmatpush1.msra.mxu0 0.0
  %4132 = vmatprep.subr.mxu0 0.0
  %4133 = vmatpush1.msra.mxu0 0.0
  %4134 = vmatprep.subr.mxu0 0.0
  %4135 = vmatpush1.msra.mxu0 0.0
  %4136 = vmatprep.subr.mxu0 0.0
  %4137 = vmatpush1.msra.mxu0 0.0
  %4138 = vmatprep.subr.mxu0 0.0
  %4139 = vmatpush1.msra.mxu0 0.0
  %4140 = vmatprep.subr.mxu0 0.0
  %4141 = vmatpush1.msra.mxu0 0.0
  %4142 = vmatprep.mubr.f32.mxu0 0.0
  %4143 = vmatmul.mubr.f32.gmra.mrb[0].mxu0 %v4076
  %v4144 = vpop.f32.mrb[0].mxu0
  %v4145 = vadd.f32 %v4072, %v4144
  %v4146 = vpop.f32.mrb[0].mxu0
  %4147 = vdwg.mxu0
  %4148 = vmatprep.subr.mxu0 0.0
  %4149 = vmatpush1.msra.mxu0 %v2967
  %4150 = vmatprep.subr.mxu0 0.0
  %4151 = vmatpush1.msra.mxu0 %v2968
  %4152 = vmatprep.subr.mxu0 0.0
  %4153 = vmatpush1.msra.mxu0 %v2969
  %4154 = vmatprep.subr.mxu0 0.0
  %4155 = vmatpush1.msra.mxu0 %v2970
  %4156 = vmatprep.subr.mxu0 0.0
  %4157 = vmatpush1.msra.mxu0 %v2971
  %4158 = vmatprep.subr.mxu0 0.0
  %4159 = vmatpush1.msra.mxu0 %v2972
  %4160 = vmatprep.subr.mxu0 0.0
  %4161 = vmatpush1.msra.mxu0 %v2973
  %4162 = vmatprep.subr.mxu0 0.0
  %4163 = vmatpush1.msra.mxu0 0.0
  %4164 = vmatprep.subr.mxu0 0.0
  %4165 = vmatpush1.msra.mxu0 0.0
  %4166 = vmatprep.subr.mxu0 0.0
  %4167 = vmatpush1.msra.mxu0 0.0
  %4168 = vmatprep.subr.mxu0 0.0
  %4169 = vmatpush1.msra.mxu0 0.0
  %4170 = vmatprep.subr.mxu0 0.0
  %4171 = vmatpush1.msra.mxu0 0.0
  %4172 = vmatprep.subr.mxu0 0.0
  %4173 = vmatpush1.msra.mxu0 0.0
  %4174 = vmatprep.subr.mxu0 0.0
  %4175 = vmatpush1.msra.mxu0 0.0
  %4176 = vmatprep.subr.mxu0 0.0
  %4177 = vmatpush1.msra.mxu0 0.0
  %4178 = vmatprep.subr.mxu0 0.0
  %4179 = vmatpush1.msra.mxu0 0.0
  %4180 = vmatprep.subr.mxu0 0.0
  %4181 = vmatpush1.msra.mxu0 0.0
  %4182 = vmatprep.subr.mxu0 0.0
  %4183 = vmatpush1.msra.mxu0 0.0
  %4184 = vmatprep.subr.mxu0 0.0
  %4185 = vmatpush1.msra.mxu0 0.0
  %4186 = vmatprep.subr.mxu0 0.0
  %4187 = vmatpush1.msra.mxu0 0.0
  %4188 = vmatprep.subr.mxu0 0.0
  %4189 = vmatpush1.msra.mxu0 0.0
  %4190 = vmatprep.subr.mxu0 0.0
  %4191 = vmatpush1.msra.mxu0 0.0
  %4192 = vmatprep.subr.mxu0 0.0
  %4193 = vmatpush1.msra.mxu0 0.0
  %4194 = vmatprep.subr.mxu0 0.0
  %4195 = vmatpush1.msra.mxu0 0.0
  %4196 = vmatprep.subr.mxu0 0.0
  %4197 = vmatpush1.msra.mxu0 0.0
  %4198 = vmatprep.subr.mxu0 0.0
  %4199 = vmatpush1.msra.mxu0 0.0
  %4200 = vmatprep.subr.mxu0 0.0
  %4201 = vmatpush1.msra.mxu0 0.0
  %4202 = vmatprep.subr.mxu0 0.0
  %4203 = vmatpush1.msra.mxu0 0.0
  %4204 = vmatprep.subr.mxu0 0.0
  %4205 = vmatpush1.msra.mxu0 0.0
  %4206 = vmatprep.subr.mxu0 0.0
  %4207 = vmatpush1.msra.mxu0 0.0
  %4208 = vmatprep.subr.mxu0 0.0
  %4209 = vmatpush1.msra.mxu0 0.0
  %4210 = vmatprep.subr.mxu0 0.0
  %4211 = vmatpush1.msra.mxu0 0.0
  %4212 = vmatprep.mubr.f32.mxu0 0.0
  %4213 = vmatmul.mubr.f32.gmra.mrb[0].mxu0 %v3004
  %v4214 = vpop.f32.mrb[0].mxu0
  %v4215 = vadd.f32 0.0, %v4214
  %v4216 = vpop.f32.mrb[0].mxu0
  %4217 = vdwg.mxu0
  %v4219 = vsel %vm61, %v4215, 0
  %4221 = vmatprep.subr.mxu0 0.0
  %4222 = vmatpush1.msra.mxu0 %v2998
  %4223 = vmatprep.subr.mxu0 0.0
  %4224 = vmatpush1.msra.mxu0 %v2999
  %4225 = vmatprep.subr.mxu0 0.0
  %4226 = vmatpush1.msra.mxu0 %v3000
  %4227 = vmatprep.subr.mxu0 0.0
  %4228 = vmatpush1.msra.mxu0 %v3001
  %4229 = vmatprep.subr.mxu0 0.0
  %4230 = vmatpush1.msra.mxu0 0.0
  %4231 = vmatprep.subr.mxu0 0.0
  %4232 = vmatpush1.msra.mxu0 0.0
  %4233 = vmatprep.subr.mxu0 0.0
  %4234 = vmatpush1.msra.mxu0 0.0
  %4235 = vmatprep.subr.mxu0 0.0
  %4236 = vmatpush1.msra.mxu0 0.0
  %4237 = vmatprep.subr.mxu0 0.0
  %4238 = vmatpush1.msra.mxu0 0.0
  %4239 = vmatprep.subr.mxu0 0.0
  %4240 = vmatpush1.msra.mxu0 0.0
  %4241 = vmatprep.subr.mxu0 0.0
  %4242 = vmatpush1.msra.mxu0 0.0
  %4243 = vmatprep.subr.mxu0 0.0
  %4244 = vmatpush1.msra.mxu0 0.0
  %4245 = vmatprep.subr.mxu0 0.0
  %4246 = vmatpush1.msra.mxu0 0.0
  %4247 = vmatprep.subr.mxu0 0.0
  %4248 = vmatpush1.msra.mxu0 0.0
  %4249 = vmatprep.subr.mxu0 0.0
  %4250 = vmatpush1.msra.mxu0 0.0
  %4251 = vmatprep.subr.mxu0 0.0
  %4252 = vmatpush1.msra.mxu0 0.0
  %4253 = vmatprep.subr.mxu0 0.0
  %4254 = vmatpush1.msra.mxu0 0.0
  %4255 = vmatprep.subr.mxu0 0.0
  %4256 = vmatpush1.msra.mxu0 0.0
  %4257 = vmatprep.subr.mxu0 0.0
  %4258 = vmatpush1.msra.mxu0 0.0
  %4259 = vmatprep.subr.mxu0 0.0
  %4260 = vmatpush1.msra.mxu0 0.0
  %4261 = vmatprep.subr.mxu0 0.0
  %4262 = vmatpush1.msra.mxu0 0.0
  %4263 = vmatprep.subr.mxu0 0.0
  %4264 = vmatpush1.msra.mxu0 0.0
  %4265 = vmatprep.subr.mxu0 0.0
  %4266 = vmatpush1.msra.mxu0 0.0
  %4267 = vmatprep.subr.mxu0 0.0
  %4268 = vmatpush1.msra.mxu0 0.0
  %4269 = vmatprep.subr.mxu0 0.0
  %4270 = vmatpush1.msra.mxu0 0.0
  %4271 = vmatprep.subr.mxu0 0.0
  %4272 = vmatpush1.msra.mxu0 0.0
  %4273 = vmatprep.subr.mxu0 0.0
  %4274 = vmatpush1.msra.mxu0 0.0
  %4275 = vmatprep.subr.mxu0 0.0
  %4276 = vmatpush1.msra.mxu0 0.0
  %4277 = vmatprep.subr.mxu0 0.0
  %4278 = vmatpush1.msra.mxu0 0.0
  %4279 = vmatprep.subr.mxu0 0.0
  %4280 = vmatpush1.msra.mxu0 0.0
  %4281 = vmatprep.subr.mxu0 0.0
  %4282 = vmatpush1.msra.mxu0 0.0
  %4283 = vmatprep.subr.mxu0 0.0
  %4284 = vmatpush1.msra.mxu0 0.0
  %4285 = vmatprep.mubr.f32.mxu0 0.0
  %4286 = vmatmul.mubr.f32.gmra.mrb[0].mxu0 %v4219
  %v4287 = vpop.f32.mrb[0].mxu0
  %v4288 = vadd.f32 0.0, %v4287
  %v4289 = vpop.f32.mrb[0].mxu0
  %4290 = vdwg.mxu0
  %v4291 = vadd.f32 %v4145, %v4288
  %4299 = vrot.lane.b32.xlu0 %v2771, 64
  %v4300 = vpop.permute.xlu0 %4299
  %4301 = vrot.lane.b32.xlu0 %v2772, 64
  %v4302 = vpop.permute.xlu0 %4301
  %4303 = vrot.lane.b32.xlu0 %v2773, 64
  %v4304 = vpop.permute.xlu0 %4303
  %4305 = vrot.lane.b32.xlu0 %v2774, 64
  %v4306 = vpop.permute.xlu0 %4305
  %4307 = vrot.lane.b32.xlu0 %v2775, 64
  %v4308 = vpop.permute.xlu0 %4307
  %4309 = vrot.lane.b32.xlu0 %v2776, 64
  %v4310 = vpop.permute.xlu0 %4309
  %4311 = vrot.lane.b32.xlu0 %v2777, 64
  %v4312 = vpop.permute.xlu0 %4311
  %4320 = vmatprep.subr.mxu0 0.0
  %4321 = vmatpush1.msra.mxu0 %v4300
  %4322 = vmatprep.subr.mxu0 0.0
  %4323 = vmatpush1.msra.mxu0 %v4302
  %4324 = vmatprep.subr.mxu0 0.0
  %4325 = vmatpush1.msra.mxu0 %v4304
  %4326 = vmatprep.subr.mxu0 0.0
  %4327 = vmatpush1.msra.mxu0 %v4306
  %4328 = vmatprep.subr.mxu0 0.0
  %4329 = vmatpush1.msra.mxu0 %v4308
  %4330 = vmatprep.subr.mxu0 0.0
  %4331 = vmatpush1.msra.mxu0 %v4310
  %4332 = vmatprep.subr.mxu0 0.0
  %4333 = vmatpush1.msra.mxu0 %v4312
  %4334 = vmatprep.subr.mxu0 0.0
  %4335 = vmatpush1.msra.mxu0 0.0
  %4336 = vmatprep.subr.mxu0 0.0
  %4337 = vmatpush1.msra.mxu0 0.0
  %4338 = vmatprep.subr.mxu0 0.0
  %4339 = vmatpush1.msra.mxu0 0.0
  %4340 = vmatprep.subr.mxu0 0.0
  %4341 = vmatpush1.msra.mxu0 0.0
  %4342 = vmatprep.subr.mxu0 0.0
  %4343 = vmatpush1.msra.mxu0 0.0
  %4344 = vmatprep.subr.mxu0 0.0
  %4345 = vmatpush1.msra.mxu0 0.0
  %4346 = vmatprep.subr.mxu0 0.0
  %4347 = vmatpush1.msra.mxu0 0.0
  %4348 = vmatprep.subr.mxu0 0.0
  %4349 = vmatpush1.msra.mxu0 0.0
  %4350 = vmatprep.subr.mxu0 0.0
  %4351 = vmatpush1.msra.mxu0 0.0
  %4352 = vmatprep.subr.mxu0 0.0
  %4353 = vmatpush1.msra.mxu0 0.0
  %4354 = vmatprep.subr.mxu0 0.0
  %4355 = vmatpush1.msra.mxu0 0.0
  %4356 = vmatprep.subr.mxu0 0.0
  %4357 = vmatpush1.msra.mxu0 0.0
  %4358 = vmatprep.subr.mxu0 0.0
  %4359 = vmatpush1.msra.mxu0 0.0
  %4360 = vmatprep.subr.mxu0 0.0
  %4361 = vmatpush1.msra.mxu0 0.0
  %4362 = vmatprep.subr.mxu0 0.0
  %4363 = vmatpush1.msra.mxu0 0.0
  %4364 = vmatprep.subr.mxu0 0.0
  %4365 = vmatpush1.msra.mxu0 0.0
  %4366 = vmatprep.subr.mxu0 0.0
  %4367 = vmatpush1.msra.mxu0 0.0
  %4368 = vmatprep.subr.mxu0 0.0
  %4369 = vmatpush1.msra.mxu0 0.0
  %4370 = vmatprep.subr.mxu0 0.0
  %4371 = vmatpush1.msra.mxu0 0.0
  %4372 = vmatprep.subr.mxu0 0.0
  %4373 = vmatpush1.msra.mxu0 0.0
  %4374 = vmatprep.subr.mxu0 0.0
  %4375 = vmatpush1.msra.mxu0 0.0
  %4376 = vmatprep.subr.mxu0 0.0
  %4377 = vmatpush1.msra.mxu0 0.0
  %4378 = vmatprep.subr.mxu0 0.0
  %4379 = vmatpush1.msra.mxu0 0.0
  %4380 = vmatprep.subr.mxu0 0.0
  %4381 = vmatpush1.msra.mxu0 0.0
  %4382 = vmatprep.subr.mxu0 0.0
  %4383 = vmatpush1.msra.mxu0 0.0
  %4384 = vmatprep.mubr.f32.mxu0 0.0
  %4385 = vmatmul.mubr.f32.gmra.mrb[0].mxu0 %v3004
  %v4386 = vpop.f32.mrb[0].mxu0
  %v4387 = vadd.f32 0.0, %v4386
  %v4388 = vpop.f32.mrb[0].mxu0
  %4389 = vdwg.mxu0
  %4397 = vrot.lane.b32.xlu0 %v2883, 32
  %v4398 = vpop.permute.xlu0 %4397
  %4399 = vrot.lane.b32.xlu0 %v2884, 32
  %v4400 = vpop.permute.xlu0 %4399
  %4401 = vrot.lane.b32.xlu0 %v2885, 32
  %v4402 = vpop.permute.xlu0 %4401
  %4403 = vrot.lane.b32.xlu0 %v2886, 32
  %v4404 = vpop.permute.xlu0 %4403
  %4405 = vrot.lane.b32.xlu0 %v2887, 32
  %v4406 = vpop.permute.xlu0 %4405
  %4407 = vrot.lane.b32.xlu0 %v2888, 32
  %v4408 = vpop.permute.xlu0 %4407
  %4409 = vrot.lane.b32.xlu0 %v2889, 32
  %v4410 = vpop.permute.xlu0 %4409
  %4418 = vmatprep.subr.mxu0 0.0
  %4419 = vmatpush1.msra.mxu0 %v4398
  %4420 = vmatprep.subr.mxu0 0.0
  %4421 = vmatpush1.msra.mxu0 %v4400
  %4422 = vmatprep.subr.mxu0 0.0
  %4423 = vmatpush1.msra.mxu0 %v4402
  %4424 = vmatprep.subr.mxu0 0.0
  %4425 = vmatpush1.msra.mxu0 %v4404
  %4426 = vmatprep.subr.mxu0 0.0
  %4427 = vmatpush1.msra.mxu0 %v4406
  %4428 = vmatprep.subr.mxu0 0.0
  %4429 = vmatpush1.msra.mxu0 %v4408
  %4430 = vmatprep.subr.mxu0 0.0
  %4431 = vmatpush1.msra.mxu0 %v4410
  %4432 = vmatprep.subr.mxu0 0.0
  %4433 = vmatpush1.msra.mxu0 0.0
  %4434 = vmatprep.subr.mxu0 0.0
  %4435 = vmatpush1.msra.mxu0 0.0
  %4436 = vmatprep.subr.mxu0 0.0
  %4437 = vmatpush1.msra.mxu0 0.0
  %4438 = vmatprep.subr.mxu0 0.0
  %4439 = vmatpush1.msra.mxu0 0.0
  %4440 = vmatprep.subr.mxu0 0.0
  %4441 = vmatpush1.msra.mxu0 0.0
  %4442 = vmatprep.subr.mxu0 0.0
  %4443 = vmatpush1.msra.mxu0 0.0
  %4444 = vmatprep.subr.mxu0 0.0
  %4445 = vmatpush1.msra.mxu0 0.0
  %4446 = vmatprep.subr.mxu0 0.0
  %4447 = vmatpush1.msra.mxu0 0.0
  %4448 = vmatprep.subr.mxu0 0.0
  %4449 = vmatpush1.msra.mxu0 0.0
  %4450 = vmatprep.subr.mxu0 0.0
  %4451 = vmatpush1.msra.mxu0 0.0
  %4452 = vmatprep.subr.mxu0 0.0
  %4453 = vmatpush1.msra.mxu0 0.0
  %4454 = vmatprep.subr.mxu0 0.0
  %4455 = vmatpush1.msra.mxu0 0.0
  %4456 = vmatprep.subr.mxu0 0.0
  %4457 = vmatpush1.msra.mxu0 0.0
  %4458 = vmatprep.subr.mxu0 0.0
  %4459 = vmatpush1.msra.mxu0 0.0
  %4460 = vmatprep.subr.mxu0 0.0
  %4461 = vmatpush1.msra.mxu0 0.0
  %4462 = vmatprep.subr.mxu0 0.0
  %4463 = vmatpush1.msra.mxu0 0.0
  %4464 = vmatprep.subr.mxu0 0.0
  %4465 = vmatpush1.msra.mxu0 0.0
  %4466 = vmatprep.subr.mxu0 0.0
  %4467 = vmatpush1.msra.mxu0 0.0
  %4468 = vmatprep.subr.mxu0 0.0
  %4469 = vmatpush1.msra.mxu0 0.0
  %4470 = vmatprep.subr.mxu0 0.0
  %4471 = vmatpush1.msra.mxu0 0.0
  %4472 = vmatprep.subr.mxu0 0.0
  %4473 = vmatpush1.msra.mxu0 0.0
  %4474 = vmatprep.subr.mxu0 0.0
  %4475 = vmatpush1.msra.mxu0 0.0
  %4476 = vmatprep.subr.mxu0 0.0
  %4477 = vmatpush1.msra.mxu0 0.0
  %4478 = vmatprep.subr.mxu0 0.0
  %4479 = vmatpush1.msra.mxu0 0.0
  %4480 = vmatprep.subr.mxu0 0.0
  %4481 = vmatpush1.msra.mxu0 0.0
  %4482 = vmatprep.mubr.f32.mxu0 0.0
  %4483 = vmatmul.mubr.f32.gmra.mrb[0].mxu0 %v3004
  %v4484 = vpop.f32.mrb[0].mxu0
  %v4485 = vadd.f32 0.0, %v4484
  %v4486 = vpop.f32.mrb[0].mxu0
  %4487 = vdwg.mxu0
  %v4489 = vsel %vm61, %v4485, 0
  %4491 = vmatprep.subr.mxu0 0.0
  %4492 = vmatpush1.msra.mxu0 %v2994
  %4493 = vmatprep.subr.mxu0 0.0
  %4494 = vmatpush1.msra.mxu0 %v2995
  %4495 = vmatprep.subr.mxu0 0.0
  %4496 = vmatpush1.msra.mxu0 %v2996
  %4497 = vmatprep.subr.mxu0 0.0
  %4498 = vmatpush1.msra.mxu0 %v2997
  %4499 = vmatprep.subr.mxu0 0.0
  %4500 = vmatpush1.msra.mxu0 0.0
  %4501 = vmatprep.subr.mxu0 0.0
  %4502 = vmatpush1.msra.mxu0 0.0
  %4503 = vmatprep.subr.mxu0 0.0
  %4504 = vmatpush1.msra.mxu0 0.0
  %4505 = vmatprep.subr.mxu0 0.0
  %4506 = vmatpush1.msra.mxu0 0.0
  %4507 = vmatprep.subr.mxu0 0.0
  %4508 = vmatpush1.msra.mxu0 0.0
  %4509 = vmatprep.subr.mxu0 0.0
  %4510 = vmatpush1.msra.mxu0 0.0
  %4511 = vmatprep.subr.mxu0 0.0
  %4512 = vmatpush1.msra.mxu0 0.0
  %4513 = vmatprep.subr.mxu0 0.0
  %4514 = vmatpush1.msra.mxu0 0.0
  %4515 = vmatprep.subr.mxu0 0.0
  %4516 = vmatpush1.msra.mxu0 0.0
  %4517 = vmatprep.subr.mxu0 0.0
  %4518 = vmatpush1.msra.mxu0 0.0
  %4519 = vmatprep.subr.mxu0 0.0
  %4520 = vmatpush1.msra.mxu0 0.0
  %4521 = vmatprep.subr.mxu0 0.0
  %4522 = vmatpush1.msra.mxu0 0.0
  %4523 = vmatprep.subr.mxu0 0.0
  %4524 = vmatpush1.msra.mxu0 0.0
  %4525 = vmatprep.subr.mxu0 0.0
  %4526 = vmatpush1.msra.mxu0 0.0
  %4527 = vmatprep.subr.mxu0 0.0
  %4528 = vmatpush1.msra.mxu0 0.0
  %4529 = vmatprep.subr.mxu0 0.0
  %4530 = vmatpush1.msra.mxu0 0.0
  %4531 = vmatprep.subr.mxu0 0.0
  %4532 = vmatpush1.msra.mxu0 0.0
  %4533 = vmatprep.subr.mxu0 0.0
  %4534 = vmatpush1.msra.mxu0 0.0
  %4535 = vmatprep.subr.mxu0 0.0
  %4536 = vmatpush1.msra.mxu0 0.0
  %4537 = vmatprep.subr.mxu0 0.0
  %4538 = vmatpush1.msra.mxu0 0.0
  %4539 = vmatprep.subr.mxu0 0.0
  %4540 = vmatpush1.msra.mxu0 0.0
  %4541 = vmatprep.subr.mxu0 0.0
  %4542 = vmatpush1.msra.mxu0 0.0
  %4543 = vmatprep.subr.mxu0 0.0
  %4544 = vmatpush1.msra.mxu0 0.0
  %4545 = vmatprep.subr.mxu0 0.0
  %4546 = vmatpush1.msra.mxu0 0.0
  %4547 = vmatprep.subr.mxu0 0.0
  %4548 = vmatpush1.msra.mxu0 0.0
  %4549 = vmatprep.subr.mxu0 0.0
  %4550 = vmatpush1.msra.mxu0 0.0
  %4551 = vmatprep.subr.mxu0 0.0
  %4552 = vmatpush1.msra.mxu0 0.0
  %4553 = vmatprep.subr.mxu0 0.0
  %4554 = vmatpush1.msra.mxu0 0.0
  %4555 = vmatprep.mubr.f32.mxu0 0.0
  %4556 = vmatmul.mubr.f32.gmra.mrb[0].mxu0 %v4489
  %v4557 = vpop.f32.mrb[0].mxu0
  %v4558 = vadd.f32 0.0, %v4557
  %v4559 = vpop.f32.mrb[0].mxu0
  %4560 = vdwg.mxu0
  %v4562 = vsel %vm61, %v4387, 0
  %4564 = vmatprep.subr.mxu0 0.0
  %4565 = vmatpush1.msra.mxu0 %v2990
  %4566 = vmatprep.subr.mxu0 0.0
  %4567 = vmatpush1.msra.mxu0 %v2991
  %4568 = vmatprep.subr.mxu0 0.0
  %4569 = vmatpush1.msra.mxu0 %v2992
  %4570 = vmatprep.subr.mxu0 0.0
  %4571 = vmatpush1.msra.mxu0 %v2993
  %4572 = vmatprep.subr.mxu0 0.0
  %4573 = vmatpush1.msra.mxu0 0.0
  %4574 = vmatprep.subr.mxu0 0.0
  %4575 = vmatpush1.msra.mxu0 0.0
  %4576 = vmatprep.subr.mxu0 0.0
  %4577 = vmatpush1.msra.mxu0 0.0
  %4578 = vmatprep.subr.mxu0 0.0
  %4579 = vmatpush1.msra.mxu0 0.0
  %4580 = vmatprep.subr.mxu0 0.0
  %4581 = vmatpush1.msra.mxu0 0.0
  %4582 = vmatprep.subr.mxu0 0.0
  %4583 = vmatpush1.msra.mxu0 0.0
  %4584 = vmatprep.subr.mxu0 0.0
  %4585 = vmatpush1.msra.mxu0 0.0
  %4586 = vmatprep.subr.mxu0 0.0
  %4587 = vmatpush1.msra.mxu0 0.0
  %4588 = vmatprep.subr.mxu0 0.0
  %4589 = vmatpush1.msra.mxu0 0.0
  %4590 = vmatprep.subr.mxu0 0.0
  %4591 = vmatpush1.msra.mxu0 0.0
  %4592 = vmatprep.subr.mxu0 0.0
  %4593 = vmatpush1.msra.mxu0 0.0
  %4594 = vmatprep.subr.mxu0 0.0
  %4595 = vmatpush1.msra.mxu0 0.0
  %4596 = vmatprep.subr.mxu0 0.0
  %4597 = vmatpush1.msra.mxu0 0.0
  %4598 = vmatprep.subr.mxu0 0.0
  %4599 = vmatpush1.msra.mxu0 0.0
  %4600 = vmatprep.subr.mxu0 0.0
  %4601 = vmatpush1.msra.mxu0 0.0
  %4602 = vmatprep.subr.mxu0 0.0
  %4603 = vmatpush1.msra.mxu0 0.0
  %4604 = vmatprep.subr.mxu0 0.0
  %4605 = vmatpush1.msra.mxu0 0.0
  %4606 = vmatprep.subr.mxu0 0.0
  %4607 = vmatpush1.msra.mxu0 0.0
  %4608 = vmatprep.subr.mxu0 0.0
  %4609 = vmatpush1.msra.mxu0 0.0
  %4610 = vmatprep.subr.mxu0 0.0
  %4611 = vmatpush1.msra.mxu0 0.0
  %4612 = vmatprep.subr.mxu0 0.0
  %4613 = vmatpush1.msra.mxu0 0.0
  %4614 = vmatprep.subr.mxu0 0.0
  %4615 = vmatpush1.msra.mxu0 0.0
  %4616 = vmatprep.subr.mxu0 0.0
  %4617 = vmatpush1.msra.mxu0 0.0
  %4618 = vmatprep.subr.mxu0 0.0
  %4619 = vmatpush1.msra.mxu0 0.0
  %4620 = vmatprep.subr.mxu0 0.0
  %4621 = vmatpush1.msra.mxu0 0.0
  %4622 = vmatprep.subr.mxu0 0.0
  %4623 = vmatpush1.msra.mxu0 0.0
  %4624 = vmatprep.subr.mxu0 0.0
  %4625 = vmatpush1.msra.mxu0 0.0
  %4626 = vmatprep.subr.mxu0 0.0
  %4627 = vmatpush1.msra.mxu0 0.0
  %4628 = vmatprep.mubr.f32.mxu0 0.0
  %4629 = vmatmul.mubr.f32.gmra.mrb[0].mxu0 %v4562
  %v4630 = vpop.f32.mrb[0].mxu0
  %v4631 = vadd.f32 %v4558, %v4630
  %v4632 = vpop.f32.mrb[0].mxu0
  %4633 = vdwg.mxu0
  %4634 = vmatprep.subr.mxu0 0.0
  %4635 = vmatpush1.msra.mxu0 %v2974
  %4636 = vmatprep.subr.mxu0 0.0
  %4637 = vmatpush1.msra.mxu0 %v2975
  %4638 = vmatprep.subr.mxu0 0.0
  %4639 = vmatpush1.msra.mxu0 %v2976
  %4640 = vmatprep.subr.mxu0 0.0
  %4641 = vmatpush1.msra.mxu0 %v2977
  %4642 = vmatprep.subr.mxu0 0.0
  %4643 = vmatpush1.msra.mxu0 %v2978
  %4644 = vmatprep.subr.mxu0 0.0
  %4645 = vmatpush1.msra.mxu0 %v2979
  %4646 = vmatprep.subr.mxu0 0.0
  %4647 = vmatpush1.msra.mxu0 %v2980
  %4648 = vmatprep.subr.mxu0 0.0
  %4649 = vmatpush1.msra.mxu0 0.0
  %4650 = vmatprep.subr.mxu0 0.0
  %4651 = vmatpush1.msra.mxu0 0.0
  %4652 = vmatprep.subr.mxu0 0.0
  %4653 = vmatpush1.msra.mxu0 0.0
  %4654 = vmatprep.subr.mxu0 0.0
  %4655 = vmatpush1.msra.mxu0 0.0
  %4656 = vmatprep.subr.mxu0 0.0
  %4657 = vmatpush1.msra.mxu0 0.0
  %4658 = vmatprep.subr.mxu0 0.0
  %4659 = vmatpush1.msra.mxu0 0.0
  %4660 = vmatprep.subr.mxu0 0.0
  %4661 = vmatpush1.msra.mxu0 0.0
  %4662 = vmatprep.subr.mxu0 0.0
  %4663 = vmatpush1.msra.mxu0 0.0
  %4664 = vmatprep.subr.mxu0 0.0
  %4665 = vmatpush1.msra.mxu0 0.0
  %4666 = vmatprep.subr.mxu0 0.0
  %4667 = vmatpush1.msra.mxu0 0.0
  %4668 = vmatprep.subr.mxu0 0.0
  %4669 = vmatpush1.msra.mxu0 0.0
  %4670 = vmatprep.subr.mxu0 0.0
  %4671 = vmatpush1.msra.mxu0 0.0
  %4672 = vmatprep.subr.mxu0 0.0
  %4673 = vmatpush1.msra.mxu0 0.0
  %4674 = vmatprep.subr.mxu0 0.0
  %4675 = vmatpush1.msra.mxu0 0.0
  %4676 = vmatprep.subr.mxu0 0.0
  %4677 = vmatpush1.msra.mxu0 0.0
  %4678 = vmatprep.subr.mxu0 0.0
  %4679 = vmatpush1.msra.mxu0 0.0
  %4680 = vmatprep.subr.mxu0 0.0
  %4681 = vmatpush1.msra.mxu0 0.0
  %4682 = vmatprep.subr.mxu0 0.0
  %4683 = vmatpush1.msra.mxu0 0.0
  %4684 = vmatprep.subr.mxu0 0.0
  %4685 = vmatpush1.msra.mxu0 0.0
  %4686 = vmatprep.subr.mxu0 0.0
  %4687 = vmatpush1.msra.mxu0 0.0
  %4688 = vmatprep.subr.mxu0 0.0
  %4689 = vmatpush1.msra.mxu0 0.0
  %4690 = vmatprep.subr.mxu0 0.0
  %4691 = vmatpush1.msra.mxu0 0.0
  %4692 = vmatprep.subr.mxu0 0.0
  %4693 = vmatpush1.msra.mxu0 0.0
  %4694 = vmatprep.subr.mxu0 0.0
  %4695 = vmatpush1.msra.mxu0 0.0
  %4696 = vmatprep.subr.mxu0 0.0
  %4697 = vmatpush1.msra.mxu0 0.0
  %4698 = vmatprep.mubr.f32.mxu0 0.0
  %4699 = vmatmul.mubr.f32.gmra.mrb[0].mxu0 %v3004
  %v4700 = vpop.f32.mrb[0].mxu0
  %v4701 = vadd.f32 0.0, %v4700
  %v4702 = vpop.f32.mrb[0].mxu0
  %4703 = vdwg.mxu0
  %v4705 = vsel %vm61, %v4701, 0
  %4707 = vmatprep.subr.mxu0 0.0
  %4708 = vmatpush1.msra.mxu0 %v2998
  %4709 = vmatprep.subr.mxu0 0.0
  %4710 = vmatpush1.msra.mxu0 %v2999
  %4711 = vmatprep.subr.mxu0 0.0
  %4712 = vmatpush1.msra.mxu0 %v3000
  %4713 = vmatprep.subr.mxu0 0.0
  %4714 = vmatpush1.msra.mxu0 %v3001
  %4715 = vmatprep.subr.mxu0 0.0
  %4716 = vmatpush1.msra.mxu0 0.0
  %4717 = vmatprep.subr.mxu0 0.0
  %4718 = vmatpush1.msra.mxu0 0.0
  %4719 = vmatprep.subr.mxu0 0.0
  %4720 = vmatpush1.msra.mxu0 0.0
  %4721 = vmatprep.subr.mxu0 0.0
  %4722 = vmatpush1.msra.mxu0 0.0
  %4723 = vmatprep.subr.mxu0 0.0
  %4724 = vmatpush1.msra.mxu0 0.0
  %4725 = vmatprep.subr.mxu0 0.0
  %4726 = vmatpush1.msra.mxu0 0.0
  %4727 = vmatprep.subr.mxu0 0.0
  %4728 = vmatpush1.msra.mxu0 0.0
  %4729 = vmatprep.subr.mxu0 0.0
  %4730 = vmatpush1.msra.mxu0 0.0
  %4731 = vmatprep.subr.mxu0 0.0
  %4732 = vmatpush1.msra.mxu0 0.0
  %4733 = vmatprep.subr.mxu0 0.0
  %4734 = vmatpush1.msra.mxu0 0.0
  %4735 = vmatprep.subr.mxu0 0.0
  %4736 = vmatpush1.msra.mxu0 0.0
  %4737 = vmatprep.subr.mxu0 0.0
  %4738 = vmatpush1.msra.mxu0 0.0
  %4739 = vmatprep.subr.mxu0 0.0
  %4740 = vmatpush1.msra.mxu0 0.0
  %4741 = vmatprep.subr.mxu0 0.0
  %4742 = vmatpush1.msra.mxu0 0.0
  %4743 = vmatprep.subr.mxu0 0.0
  %4744 = vmatpush1.msra.mxu0 0.0
  %4745 = vmatprep.subr.mxu0 0.0
  %4746 = vmatpush1.msra.mxu0 0.0
  %4747 = vmatprep.subr.mxu0 0.0
  %4748 = vmatpush1.msra.mxu0 0.0
  %4749 = vmatprep.subr.mxu0 0.0
  %4750 = vmatpush1.msra.mxu0 0.0
  %4751 = vmatprep.subr.mxu0 0.0
  %4752 = vmatpush1.msra.mxu0 0.0
  %4753 = vmatprep.subr.mxu0 0.0
  %4754 = vmatpush1.msra.mxu0 0.0
  %4755 = vmatprep.subr.mxu0 0.0
  %4756 = vmatpush1.msra.mxu0 0.0
  %4757 = vmatprep.subr.mxu0 0.0
  %4758 = vmatpush1.msra.mxu0 0.0
  %4759 = vmatprep.subr.mxu0 0.0
  %4760 = vmatpush1.msra.mxu0 0.0
  %4761 = vmatprep.subr.mxu0 0.0
  %4762 = vmatpush1.msra.mxu0 0.0
  %4763 = vmatprep.subr.mxu0 0.0
  %4764 = vmatpush1.msra.mxu0 0.0
  %4765 = vmatprep.subr.mxu0 0.0
  %4766 = vmatpush1.msra.mxu0 0.0
  %4767 = vmatprep.subr.mxu0 0.0
  %4768 = vmatpush1.msra.mxu0 0.0
  %4769 = vmatprep.subr.mxu0 0.0
  %4770 = vmatpush1.msra.mxu0 0.0
  %4771 = vmatprep.mubr.f32.mxu0 0.0
  %4772 = vmatmul.mubr.f32.gmra.mrb[0].mxu0 %v4705
  %v4773 = vpop.f32.mrb[0].mxu0
  %v4774 = vadd.f32 0.0, %v4773
  %v4775 = vpop.f32.mrb[0].mxu0
  %4776 = vdwg.mxu0
  %v4777 = vadd.f32 %v4631, %v4774
  %v4778 = vld [vmem:[%s1] sm:$0xff]
  %v4779 = vld [vmem:[%s14] sm:$0xff]
  %v4780 = vld [vmem:[%s14 + $0x8] sm:$0xf]
  %v4781 = vld [vmem:[%s15] sm:$0xff]
  %v4782 = vld [vmem:[%s15 + $0x8] sm:$0xff]
  %v4783 = vld [vmem:[%s15 + $0x10] sm:$0xff]
  %v4784 = vld [vmem:[%s15 + $0x18] sm:$0xff]
  %v4785 = vld [vmem:[%s16] sm:$0xff]
  %v4786 = vld [vmem:[%s16 + $0x8] sm:$0xff]
  %v4787 = vld [vmem:[%s16 + $0x10] sm:$0xff]
  %v4788 = vld [vmem:[%s16 + $0x18] sm:$0xff]
  %v4791 = vcombine.high %v4779, %v4779
  %vm4792 = vcmask 31744
  %v4794 = vsel %vm4792, %v4778, 0
  %vm4796 = vcmask 1043456
  %v4797 = vsel %vm4796, %v4779, 0
  %v4799 = vsel %vm4796, %v4791, 0
  %v4801 = vsel %vm4796, %v4780, 0
  %4803 = vmatprep.subr.mxu0 %v4799
  %4804 = vmatpush1.msra.mxu0 %v4797
  %4805 = vmatprep.subr.mxu0 0.0
  %4806 = vmatpush1.msra.mxu0 0.0
  %4807 = vmatprep.subr.mxu0 0.0
  %4808 = vmatpush1.msra.mxu0 0.0
  %4809 = vmatprep.subr.mxu0 0.0
  %4810 = vmatpush1.msra.mxu0 0.0
  %4811 = vmatprep.subr.mxu0 0.0
  %4812 = vmatpush1.msra.mxu0 0.0
  %4813 = vmatprep.subr.mxu0 0.0
  %4814 = vmatpush1.msra.mxu0 0.0
  %4815 = vmatprep.subr.mxu0 0.0
  %4816 = vmatpush1.msra.mxu0 0.0
  %4817 = vmatprep.subr.mxu0 0.0
  %4818 = vmatpush1.msra.mxu0 0.0
  %4819 = vmatprep.subr.mxu0 0.0
  %4820 = vmatpush1.msra.mxu0 0.0
  %4821 = vmatprep.subr.mxu0 0.0
  %4822 = vmatpush1.msra.mxu0 0.0
  %4823 = vmatprep.subr.mxu0 0.0
  %4824 = vmatpush1.msra.mxu0 0.0
  %4825 = vmatprep.subr.mxu0 0.0
  %4826 = vmatpush1.msra.mxu0 0.0
  %4827 = vmatprep.subr.mxu0 0.0
  %4828 = vmatpush1.msra.mxu0 0.0
  %4829 = vmatprep.subr.mxu0 0.0
  %4830 = vmatpush1.msra.mxu0 0.0
  %4831 = vmatprep.subr.mxu0 0.0
  %4832 = vmatpush1.msra.mxu0 0.0
  %4833 = vmatprep.subr.mxu0 0.0
  %4834 = vmatpush1.msra.mxu0 0.0
  %4835 = vmatprep.subr.mxu0 0.0
  %4836 = vmatpush1.msra.mxu0 0.0
  %4837 = vmatprep.subr.mxu0 0.0
  %4838 = vmatpush1.msra.mxu0 0.0
  %4839 = vmatprep.subr.mxu0 0.0
  %4840 = vmatpush1.msra.mxu0 0.0
  %4841 = vmatprep.subr.mxu0 0.0
  %4842 = vmatpush1.msra.mxu0 0.0
  %4843 = vmatprep.subr.mxu0 0.0
  %4844 = vmatpush1.msra.mxu0 0.0
  %4845 = vmatprep.subr.mxu0 0.0
  %4846 = vmatpush1.msra.mxu0 0.0
  %4847 = vmatprep.subr.mxu0 0.0
  %4848 = vmatpush1.msra.mxu0 0.0
  %4849 = vmatprep.subr.mxu0 0.0
  %4850 = vmatpush1.msra.mxu0 0.0
  %4851 = vmatprep.subr.mxu0 0.0
  %4852 = vmatpush1.msra.mxu0 0.0
  %4853 = vmatprep.subr.mxu0 0.0
  %4854 = vmatpush1.msra.mxu0 0.0
  %4855 = vmatprep.subr.mxu0 0.0
  %4856 = vmatpush1.msra.mxu0 0.0
  %4857 = vmatprep.subr.mxu0 0.0
  %4858 = vmatpush1.msra.mxu0 0.0
  %4859 = vmatprep.subr.mxu0 0.0
  %4860 = vmatpush1.msra.mxu0 0.0
  %4861 = vmatprep.subr.mxu0 0.0
  %4862 = vmatpush1.msra.mxu0 0.0
  %4863 = vmatprep.subr.mxu0 0.0
  %4864 = vmatpush1.msra.mxu0 0.0
  %4865 = vmatprep.subr.mxu0 0.0
  %4866 = vmatpush1.msra.mxu0 0.0
  %4867 = vmatprep.mubr.f32.mxu0 0.0
  %4868 = vmatmul.mubr.f32.gmra.mrb[0].mxu0 %v4794
  %v4869 = vpop.f32.mrb[0].mxu0
  %v4870 = vadd.f32 0.0, %v4869
  %v4871 = vpop.f32.mrb[0].mxu0
  %v4872 = vadd.f32 0.0, %v4871
  %4873 = vdwg.mxu0
  %4874 = vmatprep.subr.mxu0 0.0
  %4875 = vmatpush1.msra.mxu0 %v4801
  %4876 = vmatprep.subr.mxu0 0.0
  %4877 = vmatpush1.msra.mxu0 0.0
  %4878 = vmatprep.subr.mxu0 0.0
  %4879 = vmatpush1.msra.mxu0 0.0
  %4880 = vmatprep.subr.mxu0 0.0
  %4881 = vmatpush1.msra.mxu0 0.0
  %4882 = vmatprep.subr.mxu0 0.0
  %4883 = vmatpush1.msra.mxu0 0.0
  %4884 = vmatprep.subr.mxu0 0.0
  %4885 = vmatpush1.msra.mxu0 0.0
  %4886 = vmatprep.subr.mxu0 0.0
  %4887 = vmatpush1.msra.mxu0 0.0
  %4888 = vmatprep.subr.mxu0 0.0
  %4889 = vmatpush1.msra.mxu0 0.0
  %4890 = vmatprep.subr.mxu0 0.0
  %4891 = vmatpush1.msra.mxu0 0.0
  %4892 = vmatprep.subr.mxu0 0.0
  %4893 = vmatpush1.msra.mxu0 0.0
  %4894 = vmatprep.subr.mxu0 0.0
  %4895 = vmatpush1.msra.mxu0 0.0
  %4896 = vmatprep.subr.mxu0 0.0
  %4897 = vmatpush1.msra.mxu0 0.0
  %4898 = vmatprep.subr.mxu0 0.0
  %4899 = vmatpush1.msra.mxu0 0.0
  %4900 = vmatprep.subr.mxu0 0.0
  %4901 = vmatpush1.msra.mxu0 0.0
  %4902 = vmatprep.subr.mxu0 0.0
  %4903 = vmatpush1.msra.mxu0 0.0
  %4904 = vmatprep.subr.mxu0 0.0
  %4905 = vmatpush1.msra.mxu0 0.0
  %4906 = vmatprep.subr.mxu0 0.0
  %4907 = vmatpush1.msra.mxu0 0.0
  %4908 = vmatprep.subr.mxu0 0.0
  %4909 = vmatpush1.msra.mxu0 0.0
  %4910 = vmatprep.subr.mxu0 0.0
  %4911 = vmatpush1.msra.mxu0 0.0
  %4912 = vmatprep.subr.mxu0 0.0
  %4913 = vmatpush1.msra.mxu0 0.0
  %4914 = vmatprep.subr.mxu0 0.0
  %4915 = vmatpush1.msra.mxu0 0.0
  %4916 = vmatprep.subr.mxu0 0.0
  %4917 = vmatpush1.msra.mxu0 0.0
  %4918 = vmatprep.subr.mxu0 0.0
  %4919 = vmatpush1.msra.mxu0 0.0
  %4920 = vmatprep.subr.mxu0 0.0
  %4921 = vmatpush1.msra.mxu0 0.0
  %4922 = vmatprep.subr.mxu0 0.0
  %4923 = vmatpush1.msra.mxu0 0.0
  %4924 = vmatprep.subr.mxu0 0.0
  %4925 = vmatpush1.msra.mxu0 0.0
  %4926 = vmatprep.subr.mxu0 0.0
  %4927 = vmatpush1.msra.mxu0 0.0
  %4928 = vmatprep.subr.mxu0 0.0
  %4929 = vmatpush1.msra.mxu0 0.0
  %4930 = vmatprep.subr.mxu0 0.0
  %4931 = vmatpush1.msra.mxu0 0.0
  %4932 = vmatprep.subr.mxu0 0.0
  %4933 = vmatpush1.msra.mxu0 0.0
  %4934 = vmatprep.subr.mxu0 0.0
  %4935 = vmatpush1.msra.mxu0 0.0
  %4936 = vmatprep.subr.mxu0 0.0
  %4937 = vmatpush1.msra.mxu0 0.0
  %4938 = vmatprep.mubr.f32.mxu0 0.0
  %4939 = vmatmul.mubr.f32.gmra.mrb[0].mxu0 %v4794
  %v4940 = vpop.f32.mrb[0].mxu0
  %v4941 = vadd.f32 0.0, %v4940
  %v4942 = vpop.f32.mrb[0].mxu0
  %4943 = vdwg.mxu0
  %v4944 = vmul.f32 %v3805, %v3805
  %v4945 = vmul.f32 %v4291, %v4291
  %v4946 = vadd.f32 %v4944, %v4945
  %v4947 = vmul.f32 %v4777, %v4777
  %v4948 = vadd.f32 %v4946, %v4947
  %v4949 = vmul.f32 %v3317, %v3317
  %v4950 = vmul.f32 %v4870, %v3317
  %4952 = vrot.lane.b32.xlu0 %v4949, 32
  %v4953 = vpop.permute.xlu0 %4952
  %v4955 = vmul.f32 %v4870, %v4953
  %4957 = vrot.lane.b32.xlu0 %v4955, 96
  %v4958 = vpop.permute.xlu0 %4957
  %v4960 = vadd.f32 %v4950, %v4958
  %4962 = vrot.lane.b32.xlu0 %v4948, 64
  %v4963 = vpop.permute.xlu0 %4962
  %v4965 = vmul.f32 %v4870, %v4963
  %4967 = vrot.lane.b32.xlu0 %v4965, 64
  %v4968 = vpop.permute.xlu0 %4967
  %v4970 = vadd.f32 %v4960, %v4968
  %4971 = vrot.lane.b32.xlu0 %v4949, 96
  %v4972 = vpop.permute.xlu0 %4971
  %v4974 = vmul.f32 %v4870, %v4972
  %4976 = vrot.lane.b32.xlu0 %v3317, 96
  %v4977 = vpop.permute.xlu0 %4976
  %v4979 = vmul.f32 %v4974, %v4977
  %4981 = vrot.lane.b32.xlu0 %v4979, 32
  %v4982 = vpop.permute.xlu0 %4981
  %v4984 = vadd.f32 %v4970, %v4982
  %v4985 = vmul.f32 %v4872, %v3317
  %v4986 = vmul.f32 %v4985, %v4948
  %v4987 = vadd.f32 %v4984, %v4986
  %4988 = vrot.lane.b32.xlu0 %v3317, 64
  %v4989 = vpop.permute.xlu0 %4988
  %v4991 = vmul.f32 %v4872, %v4989
  %4993 = vrot.lane.b32.xlu0 %v4991, 96
  %v4994 = vpop.permute.xlu0 %4993
  %v4996 = vadd.f32 %v4872, %v4994
  %v4997 = vmul.f32 %v4872, %v4972
  %4999 = vrot.lane.b32.xlu0 %v4997, 64
  %v5000 = vpop.permute.xlu0 %4999
  %v5002 = vadd.f32 %v4996, %v5000
  %v5003 = vmul.f32 %v4941, %v4948
  %5005 = vrot.lane.b32.xlu0 %v5003, 32
  %v5006 = vpop.permute.xlu0 %5005
  %v5008 = vadd.f32 %v5002, %v5006
  %5010 = vrot.lane.b32.xlu0 %v3805, 32
  %v5011 = vpop.permute.xlu0 %5010
  %v5013 = vmul.f32 %v5008, %v5011
  %5015 = vrot.lane.b32.xlu0 %v4291, 32
  %v5016 = vpop.permute.xlu0 %5015
  %v5018 = vmul.f32 %v5008, %v5016
  %5020 = vrot.lane.b32.xlu0 %v4777, 32
  %v5021 = vpop.permute.xlu0 %5020
  %v5023 = vmul.f32 %v5008, %v5021
  %v5025 = vsel %vm61, %v4987, 0
  %5027 = vmatprep.subr.mxu0 0.0
  %5028 = vmatpush1.msra.mxu0 %v4781
  %5029 = vmatprep.subr.mxu0 0.0
  %5030 = vmatpush1.msra.mxu0 %v4782
  %5031 = vmatprep.subr.mxu0 0.0
  %5032 = vmatpush1.msra.mxu0 %v4783
  %5033 = vmatprep.subr.mxu0 0.0
  %5034 = vmatpush1.msra.mxu0 %v4784
  %5035 = vmatprep.subr.mxu0 0.0
  %5036 = vmatpush1.msra.mxu0 0.0
  %5037 = vmatprep.subr.mxu0 0.0
  %5038 = vmatpush1.msra.mxu0 0.0
  %5039 = vmatprep.subr.mxu0 0.0
  %5040 = vmatpush1.msra.mxu0 0.0
  %5041 = vmatprep.subr.mxu0 0.0
  %5042 = vmatpush1.msra.mxu0 0.0
  %5043 = vmatprep.subr.mxu0 0.0
  %5044 = vmatpush1.msra.mxu0 0.0
  %5045 = vmatprep.subr.mxu0 0.0
  %5046 = vmatpush1.msra.mxu0 0.0
  %5047 = vmatprep.subr.mxu0 0.0
  %5048 = vmatpush1.msra.mxu0 0.0
  %5049 = vmatprep.subr.mxu0 0.0
  %5050 = vmatpush1.msra.mxu0 0.0
  %5051 = vmatprep.subr.mxu0 0.0
  %5052 = vmatpush1.msra.mxu0 0.0
  %5053 = vmatprep.subr.mxu0 0.0
  %5054 = vmatpush1.msra.mxu0 0.0
  %5055 = vmatprep.subr.mxu0 0.0
  %5056 = vmatpush1.msra.mxu0 0.0
  %5057 = vmatprep.subr.mxu0 0.0
  %5058 = vmatpush1.msra.mxu0 0.0
  %5059 = vmatprep.subr.mxu0 0.0
  %5060 = vmatpush1.msra.mxu0 0.0
  %5061 = vmatprep.subr.mxu0 0.0
  %5062 = vmatpush1.msra.mxu0 0.0
  %5063 = vmatprep.subr.mxu0 0.0
  %5064 = vmatpush1.msra.mxu0 0.0
  %5065 = vmatprep.subr.mxu0 0.0
  %5066 = vmatpush1.msra.mxu0 0.0
  %5067 = vmatprep.subr.mxu0 0.0
  %5068 = vmatpush1.msra.mxu0 0.0
  %5069 = vmatprep.subr.mxu0 0.0
  %5070 = vmatpush1.msra.mxu0 0.0
  %5071 = vmatprep.subr.mxu0 0.0
  %5072 = vmatpush1.msra.mxu0 0.0
  %5073 = vmatprep.subr.mxu0 0.0
  %5074 = vmatpush1.msra.mxu0 0.0
  %5075 = vmatprep.subr.mxu0 0.0
  %5076 = vmatpush1.msra.mxu0 0.0
  %5077 = vmatprep.subr.mxu0 0.0
  %5078 = vmatpush1.msra.mxu0 0.0
  %5079 = vmatprep.subr.mxu0 0.0
  %5080 = vmatpush1.msra.mxu0 0.0
  %5081 = vmatprep.subr.mxu0 0.0
  %5082 = vmatpush1.msra.mxu0 0.0
  %5083 = vmatprep.subr.mxu0 0.0
  %5084 = vmatpush1.msra.mxu0 0.0
  %5085 = vmatprep.subr.mxu0 0.0
  %5086 = vmatpush1.msra.mxu0 0.0
  %5087 = vmatprep.subr.mxu0 0.0
  %5088 = vmatpush1.msra.mxu0 0.0
  %5089 = vmatprep.subr.mxu0 0.0
  %5090 = vmatpush1.msra.mxu0 0.0
  %5091 = vmatprep.mubr.f32.mxu0 0.0
  %5092 = vmatmul.mubr.f32.gmra.mrb[0].mxu0 %v5025
  %v5093 = vpop.f32.mrb[0].mxu0
  %v5094 = vadd.f32 0.0, %v5093
  %v5095 = vpop.f32.mrb[0].mxu0
  %5096 = vdwg.mxu0
  %5097 = vst.msk [vmem:[%s17] sm:$0xff] %vm61, %v5094
  %5099 = vrot.lane.b32.xlu0 %v5013, 96
  %v5100 = vpop.permute.xlu0 %5099
  %v5101 = vsel %vm61, %v5100, 0
  %5103 = vmatprep.subr.mxu0 0.0
  %5104 = vmatpush1.msra.mxu0 %v4785
  %5105 = vmatprep.subr.mxu0 0.0
  %5106 = vmatpush1.msra.mxu0 %v4786
  %5107 = vmatprep.subr.mxu0 0.0
  %5108 = vmatpush1.msra.mxu0 %v4787
  %5109 = vmatprep.subr.mxu0 0.0
  %5110 = vmatpush1.msra.mxu0 %v4788
  %5111 = vmatprep.subr.mxu0 0.0
  %5112 = vmatpush1.msra.mxu0 0.0
  %5113 = vmatprep.subr.mxu0 0.0
  %5114 = vmatpush1.msra.mxu0 0.0
  %5115 = vmatprep.subr.mxu0 0.0
  %5116 = vmatpush1.msra.mxu0 0.0
  %5117 = vmatprep.subr.mxu0 0.0
  %5118 = vmatpush1.msra.mxu0 0.0
  %5119 = vmatprep.subr.mxu0 0.0
  %5120 = vmatpush1.msra.mxu0 0.0
  %5121 = vmatprep.subr.mxu0 0.0
  %5122 = vmatpush1.msra.mxu0 0.0
  %5123 = vmatprep.subr.mxu0 0.0
  %5124 = vmatpush1.msra.mxu0 0.0
  %5125 = vmatprep.subr.mxu0 0.0
  %5126 = vmatpush1.msra.mxu0 0.0
  %5127 = vmatprep.subr.mxu0 0.0
  %5128 = vmatpush1.msra.mxu0 0.0
  %5129 = vmatprep.subr.mxu0 0.0
  %5130 = vmatpush1.msra.mxu0 0.0
  %5131 = vmatprep.subr.mxu0 0.0
  %5132 = vmatpush1.msra.mxu0 0.0
  %5133 = vmatprep.subr.mxu0 0.0
  %5134 = vmatpush1.msra.mxu0 0.0
  %5135 = vmatprep.subr.mxu0 0.0
  %5136 = vmatpush1.msra.mxu0 0.0
  %5137 = vmatprep.subr.mxu0 0.0
  %5138 = vmatpush1.msra.mxu0 0.0
  %5139 = vmatprep.subr.mxu0 0.0
  %5140 = vmatpush1.msra.mxu0 0.0
  %5141 = vmatprep.subr.mxu0 0.0
  %5142 = vmatpush1.msra.mxu0 0.0
  %5143 = vmatprep.subr.mxu0 0.0
  %5144 = vmatpush1.msra.mxu0 0.0
  %5145 = vmatprep.subr.mxu0 0.0
  %5146 = vmatpush1.msra.mxu0 0.0
  %5147 = vmatprep.subr.mxu0 0.0
  %5148 = vmatpush1.msra.mxu0 0.0
  %5149 = vmatprep.subr.mxu0 0.0
  %5150 = vmatpush1.msra.mxu0 0.0
  %5151 = vmatprep.subr.mxu0 0.0
  %5152 = vmatpush1.msra.mxu0 0.0
  %5153 = vmatprep.subr.mxu0 0.0
  %5154 = vmatpush1.msra.mxu0 0.0
  %5155 = vmatprep.subr.mxu0 0.0
  %5156 = vmatpush1.msra.mxu0 0.0
  %5157 = vmatprep.subr.mxu0 0.0
  %5158 = vmatpush1.msra.mxu0 0.0
  %5159 = vmatprep.subr.mxu0 0.0
  %5160 = vmatpush1.msra.mxu0 0.0
  %5161 = vmatprep.subr.mxu0 0.0
  %5162 = vmatpush1.msra.mxu0 0.0
  %5163 = vmatprep.subr.mxu0 0.0
  %5164 = vmatpush1.msra.mxu0 0.0
  %5165 = vmatprep.subr.mxu0 0.0
  %5166 = vmatpush1.msra.mxu0 0.0
  %5167 = vmatprep.mubr.f32.mxu0 0.0
  %5168 = vmatmul.mubr.f32.gmra.mrb[0].mxu0 %v5101
  %v5169 = vpop.f32.mrb[0].mxu0
  %v5170 = vadd.f32 0.0, %v5169
  %v5171 = vpop.f32.mrb[0].mxu0
  %5172 = vdwg.mxu0
  %5174 = vrot.lane.b32.xlu0 %v5170, 32
  %v5175 = vpop.permute.xlu0 %5174
  %vm5177 = vcmask 523520
  %5178 = vst.msk [vmem:[%s17] sm:$0xff] %vm5177, %v5175
  %5180 = vrot.lane.b32.xlu0 %v5018, 96
  %v5181 = vpop.permute.xlu0 %5180
  %v5182 = vsel %vm61, %v5181, 0
  %5184 = vmatprep.subr.mxu0 0.0
  %5185 = vmatpush1.msra.mxu0 %v4785
  %5186 = vmatprep.subr.mxu0 0.0
  %5187 = vmatpush1.msra.mxu0 %v4786
  %5188 = vmatprep.subr.mxu0 0.0
  %5189 = vmatpush1.msra.mxu0 %v4787
  %5190 = vmatprep.subr.mxu0 0.0
  %5191 = vmatpush1.msra.mxu0 %v4788
  %5192 = vmatprep.subr.mxu0 0.0
  %5193 = vmatpush1.msra.mxu0 0.0
  %5194 = vmatprep.subr.mxu0 0.0
  %5195 = vmatpush1.msra.mxu0 0.0
  %5196 = vmatprep.subr.mxu0 0.0
  %5197 = vmatpush1.msra.mxu0 0.0
  %5198 = vmatprep.subr.mxu0 0.0
  %5199 = vmatpush1.msra.mxu0 0.0
  %5200 = vmatprep.subr.mxu0 0.0
  %5201 = vmatpush1.msra.mxu0 0.0
  %5202 = vmatprep.subr.mxu0 0.0
  %5203 = vmatpush1.msra.mxu0 0.0
  %5204 = vmatprep.subr.mxu0 0.0
  %5205 = vmatpush1.msra.mxu0 0.0
  %5206 = vmatprep.subr.mxu0 0.0
  %5207 = vmatpush1.msra.mxu0 0.0
  %5208 = vmatprep.subr.mxu0 0.0
  %5209 = vmatpush1.msra.mxu0 0.0
  %5210 = vmatprep.subr.mxu0 0.0
  %5211 = vmatpush1.msra.mxu0 0.0
  %5212 = vmatprep.subr.mxu0 0.0
  %5213 = vmatpush1.msra.mxu0 0.0
  %5214 = vmatprep.subr.mxu0 0.0
  %5215 = vmatpush1.msra.mxu0 0.0
  %5216 = vmatprep.subr.mxu0 0.0
  %5217 = vmatpush1.msra.mxu0 0.0
  %5218 = vmatprep.subr.mxu0 0.0
  %5219 = vmatpush1.msra.mxu0 0.0
  %5220 = vmatprep.subr.mxu0 0.0
  %5221 = vmatpush1.msra.mxu0 0.0
  %5222 = vmatprep.subr.mxu0 0.0
  %5223 = vmatpush1.msra.mxu0 0.0
  %5224 = vmatprep.subr.mxu0 0.0
  %5225 = vmatpush1.msra.mxu0 0.0
  %5226 = vmatprep.subr.mxu0 0.0
  %5227 = vmatpush1.msra.mxu0 0.0
  %5228 = vmatprep.subr.mxu0 0.0
  %5229 = vmatpush1.msra.mxu0 0.0
  %5230 = vmatprep.subr.mxu0 0.0
  %5231 = vmatpush1.msra.mxu0 0.0
  %5232 = vmatprep.subr.mxu0 0.0
  %5233 = vmatpush1.msra.mxu0 0.0
  %5234 = vmatprep.subr.mxu0 0.0
  %5235 = vmatpush1.msra.mxu0 0.0
  %5236 = vmatprep.subr.mxu0 0.0
  %5237 = vmatpush1.msra.mxu0 0.0
  %5238 = vmatprep.subr.mxu0 0.0
  %5239 = vmatpush1.msra.mxu0 0.0
  %5240 = vmatprep.subr.mxu0 0.0
  %5241 = vmatpush1.msra.mxu0 0.0
  %5242 = vmatprep.subr.mxu0 0.0
  %5243 = vmatpush1.msra.mxu0 0.0
  %5244 = vmatprep.subr.mxu0 0.0
  %5245 = vmatpush1.msra.mxu0 0.0
  %5246 = vmatprep.subr.mxu0 0.0
  %5247 = vmatpush1.msra.mxu0 0.0
  %5248 = vmatprep.mubr.f32.mxu0 0.0
  %5249 = vmatmul.mubr.f32.gmra.mrb[0].mxu0 %v5182
  %v5250 = vpop.f32.mrb[0].mxu0
  %v5251 = vadd.f32 0.0, %v5250
  %v5252 = vpop.f32.mrb[0].mxu0
  %5253 = vdwg.mxu0
  %5255 = vrot.lane.b32.xlu0 %v5251, 64
  %v5256 = vpop.permute.xlu0 %5255
  %vm5258 = vcmask 785920
  %5259 = vst.msk [vmem:[%s17] sm:$0xff] %vm5258, %v5256
  %5261 = vrot.lane.b32.xlu0 %v5023, 96
  %v5262 = vpop.permute.xlu0 %5261
  %v5263 = vsel %vm61, %v5262, 0
  %5265 = vmatprep.subr.mxu0 0.0
  %5266 = vmatpush1.msra.mxu0 %v4785
  %5267 = vmatprep.subr.mxu0 0.0
  %5268 = vmatpush1.msra.mxu0 %v4786
  %5269 = vmatprep.subr.mxu0 0.0
  %5270 = vmatpush1.msra.mxu0 %v4787
  %5271 = vmatprep.subr.mxu0 0.0
  %5272 = vmatpush1.msra.mxu0 %v4788
  %5273 = vmatprep.subr.mxu0 0.0
  %5274 = vmatpush1.msra.mxu0 0.0
  %5275 = vmatprep.subr.mxu0 0.0
  %5276 = vmatpush1.msra.mxu0 0.0
  %5277 = vmatprep.subr.mxu0 0.0
  %5278 = vmatpush1.msra.mxu0 0.0
  %5279 = vmatprep.subr.mxu0 0.0
  %5280 = vmatpush1.msra.mxu0 0.0
  %5281 = vmatprep.subr.mxu0 0.0
  %5282 = vmatpush1.msra.mxu0 0.0
  %5283 = vmatprep.subr.mxu0 0.0
  %5284 = vmatpush1.msra.mxu0 0.0
  %5285 = vmatprep.subr.mxu0 0.0
  %5286 = vmatpush1.msra.mxu0 0.0
  %5287 = vmatprep.subr.mxu0 0.0
  %5288 = vmatpush1.msra.mxu0 0.0
  %5289 = vmatprep.subr.mxu0 0.0
  %5290 = vmatpush1.msra.mxu0 0.0
  %5291 = vmatprep.subr.mxu0 0.0
  %5292 = vmatpush1.msra.mxu0 0.0
  %5293 = vmatprep.subr.mxu0 0.0
  %5294 = vmatpush1.msra.mxu0 0.0
  %5295 = vmatprep.subr.mxu0 0.0
  %5296 = vmatpush1.msra.mxu0 0.0
  %5297 = vmatprep.subr.mxu0 0.0
  %5298 = vmatpush1.msra.mxu0 0.0
  %5299 = vmatprep.subr.mxu0 0.0
  %5300 = vmatpush1.msra.mxu0 0.0
  %5301 = vmatprep.subr.mxu0 0.0
  %5302 = vmatpush1.msra.mxu0 0.0
  %5303 = vmatprep.subr.mxu0 0.0
  %5304 = vmatpush1.msra.mxu0 0.0
  %5305 = vmatprep.subr.mxu0 0.0
  %5306 = vmatpush1.msra.mxu0 0.0
  %5307 = vmatprep.subr.mxu0 0.0
  %5308 = vmatpush1.msra.mxu0 0.0
  %5309 = vmatprep.subr.mxu0 0.0
  %5310 = vmatpush1.msra.mxu0 0.0
  %5311 = vmatprep.subr.mxu0 0.0
  %5312 = vmatpush1.msra.mxu0 0.0
  %5313 = vmatprep.subr.mxu0 0.0
  %5314 = vmatpush1.msra.mxu0 0.0
  %5315 = vmatprep.subr.mxu0 0.0
  %5316 = vmatpush1.msra.mxu0 0.0
  %5317 = vmatprep.subr.mxu0 0.0
  %5318 = vmatpush1.msra.mxu0 0.0
  %5319 = vmatprep.subr.mxu0 0.0
  %5320 = vmatpush1.msra.mxu0 0.0
  %5321 = vmatprep.subr.mxu0 0.0
  %5322 = vmatpush1.msra.mxu0 0.0
  %5323 = vmatprep.subr.mxu0 0.0
  %5324 = vmatpush1.msra.mxu0 0.0
  %5325 = vmatprep.subr.mxu0 0.0
  %5326 = vmatpush1.msra.mxu0 0.0
  %5327 = vmatprep.subr.mxu0 0.0
  %5328 = vmatpush1.msra.mxu0 0.0
  %5329 = vmatprep.mubr.f32.mxu0 0.0
  %5330 = vmatmul.mubr.f32.gmra.mrb[0].mxu0 %v5263
  %v5331 = vpop.f32.mrb[0].mxu0
  %v5332 = vadd.f32 0.0, %v5331
  %v5333 = vpop.f32.mrb[0].mxu0
  %5334 = vdwg.mxu0
  %5336 = vrot.lane.b32.xlu0 %v5332, 96
  %v5337 = vpop.permute.xlu0 %5336
  %vm5339 = vcmask 1048320
  %5340 = vst.msk [vmem:[%s17] sm:$0xff] %vm5339, %v5337
  // Predicated region
  $region70: #{mymace_forward.4} parent=0 // pred_check
    _
  $region71: #{mymace_forward.4} parent=0 // pred_check_branch
    %5342 = sbr.rel (0) target = $region73
  $region72: #{mymace_forward.4} parent=0 // pred_region
    _
  $region73: #{mymace_forward.4} parent=0 // pred_fallthru
    _
  // Predicated region
  $region74: #{mymace_forward.4} parent=0 // pred_check
    _
  $region75: #{mymace_forward.4} parent=0 // pred_check_branch
    %5344 = sbr.rel (0) target = $region77
  $region76: #{mymace_forward.4} parent=0 // pred_region
    _
  $region77: #{mymace_forward.4} parent=0 // pred_fallthru
    _

</llo_original>
